<compile_context>
chip_gen: v6e
topology: v6e:2x2x1
jax: 0.10.0
libtpu: 0.0.40
codegen_flags: <defaults>
</compile_context>

<pallas_src>
import numpy as np
import jax
import jax.numpy as jnp
from jax.experimental import pallas as pl
from jax.experimental.pallas import tpu as pltpu

K = 3                                              # Conv3d kernel size (all layers)
STRIDES = ((1, 1, 2), (1, 1, 1), (1, 1, 2), (1, 1, 1))
CHANNELS = (1, 12, 12, 12, 6)                      # Cin -> conv1..conv4 Cout


def encoder_layers(d0, h0, w0):
    """Static per-layer geometry of the encoder for a (D, H, W) input."""
    layers, d, h, w, c_in = [], d0, h0, w0, CHANNELS[0]
    for (sd, sh, sw), c_out in zip(STRIDES, CHANNELS[1:]):
        assert sd == 1 and sh == 1, "row-pitch trick assumes unit D/H strides"
        d_out, h_out, w_out = d - K + 1, h - K + 1, (w - K) // sw + 1
        assert min(d_out, h_out, w_out) >= 1, "input too small for Encoder3D"
        layers.append(dict(d_in=d, h_in=h, w_in=w, c_in=c_in, sw=sw,
                           d_out=d_out, h_out=h_out, w_out=w_out, c_out=c_out))
        d, h, w, c_in = d_out, h_out, w_out, c_out
    return layers


# ---------------------------------------------------------------------------
# Parameters
# ---------------------------------------------------------------------------
def init_params(key):
    """Deterministic synthetic parameters (PyTorch Conv3d layouts/shapes)."""
    keys = jax.random.split(key, 8)
    it = iter(range(8))

    def rnd(shape, scale=0.1):
        return (scale * jax.random.normal(keys[next(it)], shape)).astype(jnp.float32)

    return {
        "conv1_w": rnd((12, 1, K, K, K)),  "conv1_b": rnd((12,)),
        "conv2_w": rnd((12, 12, K, K, K)), "conv2_b": rnd((12,)),
        "conv3_w": rnd((12, 12, K, K, K)), "conv3_b": rnd((12,)),
        "conv4_w": rnd((6, 12, K, K, K)),  "conv4_b": rnd((6,)),
    }


def prepare_params(params, input_dhw):
    """One-time weight preparation (no per-forward transpose/pad/cast glue).

    For each layer builds a bf16 "banded" weight tensor of shape
    (K*K, W_in*C_in, W_out*C_out): for tap t = kd*K + kh,
        banded[t, w_in*Cin + ci, w_out*Cout + co]
            = W_torch[co, ci, kd, kh, w_in - sw*w_out]   (0 outside the window)
    which folds the kw taps and the W stride into the GEMM so the kernel needs
    no strided loads.  Biases are tiled over W_out as f32 (1, W_out*Cout).
    """
    layers = encoder_layers(*input_dhw)
    prepped = []
    for i, L in enumerate(layers):
        w = np.asarray(params[f"conv{i + 1}_w"], np.float32)   # (Cout, Cin, K, K, K)
        b = np.asarray(params[f"conv{i + 1}_b"], np.float32)   # (Cout,)
        ci, co = L["c_in"], L["c_out"]
        w_in, w_out, sw = L["w_in"], L["w_out"], L["sw"]
        banded = np.zeros((K * K, w_in * ci, w_out * co), np.float32)
        for kd in range(K):
            for kh in range(K):
                t = kd * K + kh
                for wo in range(w_out):
                    for kw in range(K):
                        wi = wo * sw + kw
                        banded[t, wi * ci:(wi + 1) * ci, wo * co:(wo + 1) * co] = \
                            w[:, :, kd, kh, kw].T               # (Cin, Cout)
        bias = np.tile(b, w_out).reshape(1, w_out * co)
        prepped.append((jnp.asarray(banded, jnp.bfloat16),
                        jnp.asarray(bias, jnp.float32)))
    return prepped


# ---------------------------------------------------------------------------
# Fused Pallas kernel: conv1+ELU -> conv2+ELU -> conv3+ELU -> conv4+ELU
# ---------------------------------------------------------------------------
def _make_encoder_kernel(layers, pitch):
    n_layers = len(layers)
    last = layers[-1]

    def kernel(*refs):
        x_ref = refs[0]
        w_refs = refs[1:1 + 2 * n_layers:2]
        b_refs = refs[2:2 + 2 * n_layers:2]
        o_ref = refs[1 + 2 * n_layers]
        scratch = refs[2 + 2 * n_layers:]

        def conv_elu(idx, load_slab):
            """One Conv3d+ELU: 9 row-slab matmuls against banded weights."""
            L = layers[idx]
            m_ext = L["d_out"] * pitch - 2          # covers every valid output row
            acc = None
            for kd in range(K):
                for kh in range(K):
                    t = kd * K + kh
                    slab = load_slab(kd * pitch + kh, m_ext)   # (m_ext, Win*Cin) bf16
                    part = jnp.dot(slab, w_refs[idx][t],
                                   preferred_element_type=jnp.float32)
                    acc = part if acc is None else acc + part
            z = acc + b_refs[idx][...]                         # f32 bias
            # ELU(alpha=1), f32 epilogue (v5e has no bf16 VPU/EUP).
            return jnp.where(z > 0.0, z, jnp.exp(jnp.minimum(z, 0.0)) - 1.0), m_ext

        # Layer 1 reads its taps straight from the (bf16) input block.
        z, m_ext = conv_elu(0, lambda s, m: x_ref[0, pl.ds(s, m), :])

        # Layers 2..n read taps from the previous layer's bf16 VMEM scratch.
        for idx in range(1, n_layers):
            s_prev = scratch[idx - 1]
            s_prev[pl.ds(0, m_ext), :] = z.astype(s_prev.dtype)
            # The 2 trailing rows complete the d_in*pitch row pitch; they are
            # only ever read while producing garbage ("wrap") rows, but zero
            # them so no stale VMEM leaks across layers / grid steps.
            s_prev[pl.ds(m_ext, 2), :] = jnp.zeros((2, z.shape[1]), s_prev.dtype)
            z, m_ext = conv_elu(idx, lambda s, m, _r=s_prev: _r[pl.ds(s, m), :])

        # Only conv4's valid rows (h_o < H_out) are written back to HBM.
        s_last = scratch[n_layers - 1]
        s_last[...] = z
        for d in range(last["d_out"]):
            o_ref[0, pl.ds(d * last["h_out"], last["h_out"]), :] = \
                s_last[pl.ds(d * pitch, last["h_out"]), :]

    return kernel


def encoder3d_forward(x, prepped):
    """x: (N, 1, D, H, W) NCDHW f32; prepped: prepare_params(params, (D, H, W))."""
    n, c0, d0, h0, w0 = x.shape
    assert c0 == CHANNELS[0]
    layers = encoder_layers(d0, h0, w0)
    assert len(prepped) == len(layers)
    for (wb, _), L in zip(prepped, layers):
        assert wb.shape == (K * K, L["w_in"] * L["c_in"], L["w_out"] * L["c_out"]), \
            "prepare_params() was built for a different input size"

    pitch = h0
    last = layers[-1]
    out_rows = last["d_out"] * last["h_out"]
    out_lanes = last["w_out"] * last["c_out"]

    # NCDHW -> rows (d*pitch + h), lanes (w*c); bf16 MXU input.
    x2d = jnp.transpose(x, (0, 2, 3, 4, 1)).reshape(n, d0 * h0, w0 * c0)
    x2d = x2d.astype(jnp.bfloat16)

    in_specs = [pl.BlockSpec((1, d0 * h0, w0 * c0), lambda i: (i, 0, 0))]
    operands = [x2d]
    for wb, bt in prepped:
        in_specs.append(pl.BlockSpec(wb.shape, lambda i: (0, 0, 0)))
        in_specs.append(pl.BlockSpec(bt.shape, lambda i: (0, 0)))
        operands += [wb, bt]

    scratch_shapes = []
    for idx, L in enumerate(layers):
        wc = L["w_out"] * L["c_out"]
        if idx < len(layers) - 1:
            # bf16 intermediate activation, full d_out*pitch row pitch.
            scratch_shapes.append(pltpu.VMEM((L["d_out"] * pitch, wc), jnp.bfloat16))
        else:
            # f32 staging for the final layer before the valid-row copy-out.
            scratch_shapes.append(pltpu.VMEM((L["d_out"] * pitch - 2, wc), jnp.float32))

    out = pl.pallas_call(
        _make_encoder_kernel(layers, pitch),
        out_shape=jax.ShapeDtypeStruct((n, out_rows, out_lanes), jnp.float32),
        grid=(n,),
        in_specs=in_specs,
        out_specs=pl.BlockSpec((1, out_rows, out_lanes), lambda i: (i, 0, 0)),
        scratch_shapes=scratch_shapes,
        compiler_params=pltpu.CompilerParams(dimension_semantics=("parallel",)),
    )(*operands)

    # rows = d*H_out + h, lanes = w*C_out + c  ->  NCDHW (PyTorch output layout)
    out = out.reshape(n, last["d_out"], last["h_out"], last["w_out"], last["c_out"])
    return jnp.transpose(out, (0, 4, 1, 2, 3))


# ---------------------------------------------------------------------------
# Pure-XLA f32 reference (for validation only)
# ---------------------------------------------------------------------------
def reference_forward(x, params):
    def conv_elu(h, w, b, strides):
        z = jax.lax.conv_general_dilated(
            h, w, window_strides=strides, padding="VALID",
            dimension_numbers=("NCDHW", "OIDHW", "NCDHW"))
        z = z + b.reshape(1, -1, 1, 1, 1)
        return jnp.where(z > 0.0, z, jnp.exp(jnp.minimum(z, 0.0)) - 1.0)

    h = x
    for i, strides in enumerate(STRIDES):
        h = conv_elu(h, params[f"conv{i + 1}_w"], params[f"conv{i + 1}_b"], strides)
    return h


if __name__ == "__main__":
    key = jax.random.PRNGKey(0)
    k_in, k_par = jax.random.split(key)
    N, D, H, W = 2, 12, 12, 32
    x = jax.random.normal(k_in, (N, 1, D, H, W), dtype=jnp.float32)
    params = init_params(k_par)

    prepped = prepare_params(params, (D, H, W))      # one-time weight prep
    fwd = jax.jit(encoder3d_forward)
    out = fwd(x, prepped)
    jax.block_until_ready(out)

    # (12,12,32) -> conv1 (10,10,15) -> conv2 (8,8,13) -> conv3 (6,6,6)
    # -> conv4 (4,4,4), 6 output channels.
    assert out.shape == (N, 6, 4, 4, 4), out.shape
    assert bool(jnp.all(jnp.isfinite(out)))

    # Validate against the f32 XLA reference.  The kernel feeds the MXU bf16
    # inputs and keeps bf16 intermediates (f32 accumulate + epilogue), so
    # allow ~1e-2-level deviation.
    ref = reference_forward(x, params)
    max_err = float(jnp.max(jnp.abs(out - ref)))
    assert max_err < 0.1, f"max |kernel - reference| = {max_err}"
    print("KERNEL_OK")
</pallas_src>

<mosaic_0001>
module attributes {stable_mosaic.version = 11 : i64} {
  func.func @kernel(%arg0: i32, %arg1: memref<1x144x32xbf16, #tpu.memory_space<vmem>>, %arg2: memref<9x32x180xbf16, #tpu.memory_space<vmem>>, %arg3: memref<1x180xf32, #tpu.memory_space<vmem>>, %arg4: memref<9x180x156xbf16, #tpu.memory_space<vmem>>, %arg5: memref<1x156xf32, #tpu.memory_space<vmem>>, %arg6: memref<9x156x72xbf16, #tpu.memory_space<vmem>>, %arg7: memref<1x72xf32, #tpu.memory_space<vmem>>, %arg8: memref<9x72x24xbf16, #tpu.memory_space<vmem>>, %arg9: memref<1x24xf32, #tpu.memory_space<vmem>>, %arg10: memref<1x16x24xf32, #tpu.memory_space<vmem>>, %arg11: memref<120x180xbf16, #tpu.memory_space<vmem>>, %arg12: memref<96x156xbf16, #tpu.memory_space<vmem>>, %arg13: memref<72x72xbf16, #tpu.memory_space<vmem>>, %arg14: memref<46x24xf32, #tpu.memory_space<vmem>>) attributes {dimension_semantics = [#tpu.dimension_semantics<parallel>], iteration_bounds = array<i64: 2>, scalar_prefetch = 0 : i64, scratch_operands = 4 : i64, tpu.core_type = #tpu.core_type<tc>, window_params = [{transform_indices = @transform_0, window_bounds = array<i64: 1, 144, 32>}, {pipeline_mode = #tpu.pipeline_mode<synchronous>, transform_indices = @transform_1, window_bounds = array<i64: 9, 32, 180>}, {pipeline_mode = #tpu.pipeline_mode<synchronous>, transform_indices = @transform_2, window_bounds = array<i64: 1, 180>}, {pipeline_mode = #tpu.pipeline_mode<synchronous>, transform_indices = @transform_3, window_bounds = array<i64: 9, 180, 156>}, {pipeline_mode = #tpu.pipeline_mode<synchronous>, transform_indices = @transform_4, window_bounds = array<i64: 1, 156>}, {pipeline_mode = #tpu.pipeline_mode<synchronous>, transform_indices = @transform_5, window_bounds = array<i64: 9, 156, 72>}, {pipeline_mode = #tpu.pipeline_mode<synchronous>, transform_indices = @transform_6, window_bounds = array<i64: 1, 72>}, {pipeline_mode = #tpu.pipeline_mode<synchronous>, transform_indices = @transform_7, window_bounds = array<i64: 9, 72, 24>}, {pipeline_mode = #tpu.pipeline_mode<synchronous>, transform_indices = @transform_8, window_bounds = array<i64: 1, 24>}, {transform_indices = @transform_9, window_bounds = array<i64: 1, 16, 24>}]} {
    %c0 = arith.constant 0 : index
    %c0_0 = arith.constant 0 : index
    %c0_1 = arith.constant 0 : index
    %0 = vector.load %arg1[%c0, %c0_0, %c0_1] : memref<1x144x32xbf16, #tpu.memory_space<vmem>>, vector<1x118x32xbf16>
    %1 = vector.shape_cast %0 : vector<1x118x32xbf16> to vector<118x32xbf16>
    %c0_2 = arith.constant 0 : index
    %c0_3 = arith.constant 0 : index
    %c0_4 = arith.constant 0 : index
    %2 = vector.load %arg2[%c0_2, %c0_3, %c0_4] : memref<9x32x180xbf16, #tpu.memory_space<vmem>>, vector<1x32x180xbf16>
    %3 = vector.shape_cast %2 : vector<1x32x180xbf16> to vector<32x180xbf16>
    %cst = arith.constant dense<0.000000e+00> : vector<118x180xf32>
    %4 = tpu.matmul %1, %3, %cst {dimension_numbers = #tpu.dot_dimension_numbers<[1], [0], [0], [1], [0, 0, 1, 1], [], []>} : vector<118x32xbf16>, vector<32x180xbf16>, vector<118x180xf32> -> vector<118x180xf32>
    %c0_5 = arith.constant 0 : index
    %c1 = arith.constant 1 : index
    %c0_6 = arith.constant 0 : index
    %5 = vector.load %arg1[%c0_5, %c1, %c0_6] : memref<1x144x32xbf16, #tpu.memory_space<vmem>>, vector<1x118x32xbf16>
    %6 = vector.shape_cast %5 : vector<1x118x32xbf16> to vector<118x32xbf16>
    %c1_7 = arith.constant 1 : index
    %c0_8 = arith.constant 0 : index
    %c0_9 = arith.constant 0 : index
    %7 = vector.load %arg2[%c1_7, %c0_8, %c0_9] : memref<9x32x180xbf16, #tpu.memory_space<vmem>>, vector<1x32x180xbf16>
    %8 = vector.shape_cast %7 : vector<1x32x180xbf16> to vector<32x180xbf16>
    %cst_10 = arith.constant dense<0.000000e+00> : vector<118x180xf32>
    %9 = tpu.matmul %6, %8, %cst_10 {dimension_numbers = #tpu.dot_dimension_numbers<[1], [0], [0], [1], [0, 0, 1, 1], [], []>} : vector<118x32xbf16>, vector<32x180xbf16>, vector<118x180xf32> -> vector<118x180xf32>
    %10 = arith.addf %4, %9 : vector<118x180xf32>
    %c0_11 = arith.constant 0 : index
    %c2 = arith.constant 2 : index
    %c0_12 = arith.constant 0 : index
    %11 = vector.load %arg1[%c0_11, %c2, %c0_12] : memref<1x144x32xbf16, #tpu.memory_space<vmem>>, vector<1x118x32xbf16>
    %12 = vector.shape_cast %11 : vector<1x118x32xbf16> to vector<118x32xbf16>
    %c2_13 = arith.constant 2 : index
    %c0_14 = arith.constant 0 : index
    %c0_15 = arith.constant 0 : index
    %13 = vector.load %arg2[%c2_13, %c0_14, %c0_15] : memref<9x32x180xbf16, #tpu.memory_space<vmem>>, vector<1x32x180xbf16>
    %14 = vector.shape_cast %13 : vector<1x32x180xbf16> to vector<32x180xbf16>
    %cst_16 = arith.constant dense<0.000000e+00> : vector<118x180xf32>
    %15 = tpu.matmul %12, %14, %cst_16 {dimension_numbers = #tpu.dot_dimension_numbers<[1], [0], [0], [1], [0, 0, 1, 1], [], []>} : vector<118x32xbf16>, vector<32x180xbf16>, vector<118x180xf32> -> vector<118x180xf32>
    %16 = arith.addf %10, %15 : vector<118x180xf32>
    %c0_17 = arith.constant 0 : index
    %c12 = arith.constant 12 : index
    %c0_18 = arith.constant 0 : index
    %17 = vector.load %arg1[%c0_17, %c12, %c0_18] : memref<1x144x32xbf16, #tpu.memory_space<vmem>>, vector<1x118x32xbf16>
    %18 = vector.shape_cast %17 : vector<1x118x32xbf16> to vector<118x32xbf16>
    %c3 = arith.constant 3 : index
    %c0_19 = arith.constant 0 : index
    %c0_20 = arith.constant 0 : index
    %19 = vector.load %arg2[%c3, %c0_19, %c0_20] : memref<9x32x180xbf16, #tpu.memory_space<vmem>>, vector<1x32x180xbf16>
    %20 = vector.shape_cast %19 : vector<1x32x180xbf16> to vector<32x180xbf16>
    %cst_21 = arith.constant dense<0.000000e+00> : vector<118x180xf32>
    %21 = tpu.matmul %18, %20, %cst_21 {dimension_numbers = #tpu.dot_dimension_numbers<[1], [0], [0], [1], [0, 0, 1, 1], [], []>} : vector<118x32xbf16>, vector<32x180xbf16>, vector<118x180xf32> -> vector<118x180xf32>
    %22 = arith.addf %16, %21 : vector<118x180xf32>
    %c0_22 = arith.constant 0 : index
    %c13 = arith.constant 13 : index
    %c0_23 = arith.constant 0 : index
    %23 = vector.load %arg1[%c0_22, %c13, %c0_23] : memref<1x144x32xbf16, #tpu.memory_space<vmem>>, vector<1x118x32xbf16>
    %24 = vector.shape_cast %23 : vector<1x118x32xbf16> to vector<118x32xbf16>
    %c4 = arith.constant 4 : index
    %c0_24 = arith.constant 0 : index
    %c0_25 = arith.constant 0 : index
    %25 = vector.load %arg2[%c4, %c0_24, %c0_25] : memref<9x32x180xbf16, #tpu.memory_space<vmem>>, vector<1x32x180xbf16>
    %26 = vector.shape_cast %25 : vector<1x32x180xbf16> to vector<32x180xbf16>
    %cst_26 = arith.constant dense<0.000000e+00> : vector<118x180xf32>
    %27 = tpu.matmul %24, %26, %cst_26 {dimension_numbers = #tpu.dot_dimension_numbers<[1], [0], [0], [1], [0, 0, 1, 1], [], []>} : vector<118x32xbf16>, vector<32x180xbf16>, vector<118x180xf32> -> vector<118x180xf32>
    %28 = arith.addf %22, %27 : vector<118x180xf32>
    %c0_27 = arith.constant 0 : index
    %c14 = arith.constant 14 : index
    %c0_28 = arith.constant 0 : index
    %29 = vector.load %arg1[%c0_27, %c14, %c0_28] : memref<1x144x32xbf16, #tpu.memory_space<vmem>>, vector<1x118x32xbf16>
    %30 = vector.shape_cast %29 : vector<1x118x32xbf16> to vector<118x32xbf16>
    %c5 = arith.constant 5 : index
    %c0_29 = arith.constant 0 : index
    %c0_30 = arith.constant 0 : index
    %31 = vector.load %arg2[%c5, %c0_29, %c0_30] : memref<9x32x180xbf16, #tpu.memory_space<vmem>>, vector<1x32x180xbf16>
    %32 = vector.shape_cast %31 : vector<1x32x180xbf16> to vector<32x180xbf16>
    %cst_31 = arith.constant dense<0.000000e+00> : vector<118x180xf32>
    %33 = tpu.matmul %30, %32, %cst_31 {dimension_numbers = #tpu.dot_dimension_numbers<[1], [0], [0], [1], [0, 0, 1, 1], [], []>} : vector<118x32xbf16>, vector<32x180xbf16>, vector<118x180xf32> -> vector<118x180xf32>
    %34 = arith.addf %28, %33 : vector<118x180xf32>
    %c0_32 = arith.constant 0 : index
    %c24 = arith.constant 24 : index
    %c0_33 = arith.constant 0 : index
    %35 = vector.load %arg1[%c0_32, %c24, %c0_33] : memref<1x144x32xbf16, #tpu.memory_space<vmem>>, vector<1x118x32xbf16>
    %36 = vector.shape_cast %35 : vector<1x118x32xbf16> to vector<118x32xbf16>
    %c6 = arith.constant 6 : index
    %c0_34 = arith.constant 0 : index
    %c0_35 = arith.constant 0 : index
    %37 = vector.load %arg2[%c6, %c0_34, %c0_35] : memref<9x32x180xbf16, #tpu.memory_space<vmem>>, vector<1x32x180xbf16>
    %38 = vector.shape_cast %37 : vector<1x32x180xbf16> to vector<32x180xbf16>
    %cst_36 = arith.constant dense<0.000000e+00> : vector<118x180xf32>
    %39 = tpu.matmul %36, %38, %cst_36 {dimension_numbers = #tpu.dot_dimension_numbers<[1], [0], [0], [1], [0, 0, 1, 1], [], []>} : vector<118x32xbf16>, vector<32x180xbf16>, vector<118x180xf32> -> vector<118x180xf32>
    %40 = arith.addf %34, %39 : vector<118x180xf32>
    %c0_37 = arith.constant 0 : index
    %c25 = arith.constant 25 : index
    %c0_38 = arith.constant 0 : index
    %41 = vector.load %arg1[%c0_37, %c25, %c0_38] : memref<1x144x32xbf16, #tpu.memory_space<vmem>>, vector<1x118x32xbf16>
    %42 = vector.shape_cast %41 : vector<1x118x32xbf16> to vector<118x32xbf16>
    %c7 = arith.constant 7 : index
    %c0_39 = arith.constant 0 : index
    %c0_40 = arith.constant 0 : index
    %43 = vector.load %arg2[%c7, %c0_39, %c0_40] : memref<9x32x180xbf16, #tpu.memory_space<vmem>>, vector<1x32x180xbf16>
    %44 = vector.shape_cast %43 : vector<1x32x180xbf16> to vector<32x180xbf16>
    %cst_41 = arith.constant dense<0.000000e+00> : vector<118x180xf32>
    %45 = tpu.matmul %42, %44, %cst_41 {dimension_numbers = #tpu.dot_dimension_numbers<[1], [0], [0], [1], [0, 0, 1, 1], [], []>} : vector<118x32xbf16>, vector<32x180xbf16>, vector<118x180xf32> -> vector<118x180xf32>
    %46 = arith.addf %40, %45 : vector<118x180xf32>
    %c0_42 = arith.constant 0 : index
    %c26 = arith.constant 26 : index
    %c0_43 = arith.constant 0 : index
    %47 = vector.load %arg1[%c0_42, %c26, %c0_43] : memref<1x144x32xbf16, #tpu.memory_space<vmem>>, vector<1x118x32xbf16>
    %48 = vector.shape_cast %47 : vector<1x118x32xbf16> to vector<118x32xbf16>
    %c8 = arith.constant 8 : index
    %c0_44 = arith.constant 0 : index
    %c0_45 = arith.constant 0 : index
    %49 = vector.load %arg2[%c8, %c0_44, %c0_45] : memref<9x32x180xbf16, #tpu.memory_space<vmem>>, vector<1x32x180xbf16>
    %50 = vector.shape_cast %49 : vector<1x32x180xbf16> to vector<32x180xbf16>
    %cst_46 = arith.constant dense<0.000000e+00> : vector<118x180xf32>
    %51 = tpu.matmul %48, %50, %cst_46 {dimension_numbers = #tpu.dot_dimension_numbers<[1], [0], [0], [1], [0, 0, 1, 1], [], []>} : vector<118x32xbf16>, vector<32x180xbf16>, vector<118x180xf32> -> vector<118x180xf32>
    %52 = arith.addf %46, %51 : vector<118x180xf32>
    %c0_47 = arith.constant 0 : index
    %c0_48 = arith.constant 0 : index
    %53 = vector.load %arg3[%c0_47, %c0_48] : memref<1x180xf32, #tpu.memory_space<vmem>>, vector<1x180xf32>
    %54 = vector.broadcast %53 : vector<1x180xf32> to vector<118x180xf32>
    %55 = arith.addf %52, %54 : vector<118x180xf32>
    %cst_49 = arith.constant 0.000000e+00 : f32
    %56 = vector.broadcast %cst_49 : f32 to vector<118x180xf32>
    %57 = arith.cmpf ogt, %55, %56 : vector<118x180xf32>
    %cst_50 = arith.constant 0.000000e+00 : f32
    %58 = vector.broadcast %cst_50 : f32 to vector<118x180xf32>
    %59 = arith.minimumf %55, %58 : vector<118x180xf32>
    %60 = math.exp %59 : vector<118x180xf32>
    %cst_51 = arith.constant 1.000000e+00 : f32
    %61 = vector.broadcast %cst_51 : f32 to vector<118x180xf32>
    %62 = arith.subf %60, %61 : vector<118x180xf32>
    %63 = arith.select %57, %55, %62 : vector<118x180xi1>, vector<118x180xf32>
    %64 = arith.truncf %63 : vector<118x180xf32> to vector<118x180xbf16>
    %c0_52 = arith.constant 0 : index
    %c0_53 = arith.constant 0 : index
    %65 = vector.load %arg11[%c0_52, %c0_53] : memref<120x180xbf16, #tpu.memory_space<vmem>>, vector<118x180xbf16>
    tpu.vector_store %arg11[%c0_52, %c0_53], %64 {strides = array<i32>} : memref<120x180xbf16, #tpu.memory_space<vmem>>, vector<118x180xbf16>,
    %cst_54 = arith.constant 0.000000e+00 : bf16
    %66 = vector.broadcast %cst_54 : bf16 to vector<2x180xbf16>
    %c118 = arith.constant 118 : index
    %c0_55 = arith.constant 0 : index
    %67 = vector.load %arg11[%c118, %c0_55] : memref<120x180xbf16, #tpu.memory_space<vmem>>, vector<2x180xbf16>
    tpu.vector_store %arg11[%c118, %c0_55], %66 {strides = array<i32>} : memref<120x180xbf16, #tpu.memory_space<vmem>>, vector<2x180xbf16>,
    %c0_56 = arith.constant 0 : index
    %c0_57 = arith.constant 0 : index
    %68 = vector.load %arg11[%c0_56, %c0_57] : memref<120x180xbf16, #tpu.memory_space<vmem>>, vector<94x180xbf16>
    %c0_58 = arith.constant 0 : index
    %c0_59 = arith.constant 0 : index
    %c0_60 = arith.constant 0 : index
    %69 = vector.load %arg4[%c0_58, %c0_59, %c0_60] : memref<9x180x156xbf16, #tpu.memory_space<vmem>>, vector<1x180x156xbf16>
    %70 = vector.shape_cast %69 : vector<1x180x156xbf16> to vector<180x156xbf16>
    %cst_61 = arith.constant dense<0.000000e+00> : vector<94x156xf32>
    %71 = tpu.matmul %68, %70, %cst_61 {dimension_numbers = #tpu.dot_dimension_numbers<[1], [0], [0], [1], [0, 0, 1, 1], [], []>} : vector<94x180xbf16>, vector<180x156xbf16>, vector<94x156xf32> -> vector<94x156xf32>
    %c1_62 = arith.constant 1 : index
    %c0_63 = arith.constant 0 : index
    %72 = vector.load %arg11[%c1_62, %c0_63] : memref<120x180xbf16, #tpu.memory_space<vmem>>, vector<94x180xbf16>
    %c1_64 = arith.constant 1 : index
    %c0_65 = arith.constant 0 : index
    %c0_66 = arith.constant 0 : index
    %73 = vector.load %arg4[%c1_64, %c0_65, %c0_66] : memref<9x180x156xbf16, #tpu.memory_space<vmem>>, vector<1x180x156xbf16>
    %74 = vector.shape_cast %73 : vector<1x180x156xbf16> to vector<180x156xbf16>
    %cst_67 = arith.constant dense<0.000000e+00> : vector<94x156xf32>
    %75 = tpu.matmul %72, %74, %cst_67 {dimension_numbers = #tpu.dot_dimension_numbers<[1], [0], [0], [1], [0, 0, 1, 1], [], []>} : vector<94x180xbf16>, vector<180x156xbf16>, vector<94x156xf32> -> vector<94x156xf32>
    %76 = arith.addf %71, %75 : vector<94x156xf32>
    %c2_68 = arith.constant 2 : index
    %c0_69 = arith.constant 0 : index
    %77 = vector.load %arg11[%c2_68, %c0_69] : memref<120x180xbf16, #tpu.memory_space<vmem>>, vector<94x180xbf16>
    %c2_70 = arith.constant 2 : index
    %c0_71 = arith.constant 0 : index
    %c0_72 = arith.constant 0 : index
    %78 = vector.load %arg4[%c2_70, %c0_71, %c0_72] : memref<9x180x156xbf16, #tpu.memory_space<vmem>>, vector<1x180x156xbf16>
    %79 = vector.shape_cast %78 : vector<1x180x156xbf16> to vector<180x156xbf16>
    %cst_73 = arith.constant dense<0.000000e+00> : vector<94x156xf32>
    %80 = tpu.matmul %77, %79, %cst_73 {dimension_numbers = #tpu.dot_dimension_numbers<[1], [0], [0], [1], [0, 0, 1, 1], [], []>} : vector<94x180xbf16>, vector<180x156xbf16>, vector<94x156xf32> -> vector<94x156xf32>
    %81 = arith.addf %76, %80 : vector<94x156xf32>
    %c12_74 = arith.constant 12 : index
    %c0_75 = arith.constant 0 : index
    %82 = vector.load %arg11[%c12_74, %c0_75] : memref<120x180xbf16, #tpu.memory_space<vmem>>, vector<94x180xbf16>
    %c3_76 = arith.constant 3 : index
    %c0_77 = arith.constant 0 : index
    %c0_78 = arith.constant 0 : index
    %83 = vector.load %arg4[%c3_76, %c0_77, %c0_78] : memref<9x180x156xbf16, #tpu.memory_space<vmem>>, vector<1x180x156xbf16>
    %84 = vector.shape_cast %83 : vector<1x180x156xbf16> to vector<180x156xbf16>
    %cst_79 = arith.constant dense<0.000000e+00> : vector<94x156xf32>
    %85 = tpu.matmul %82, %84, %cst_79 {dimension_numbers = #tpu.dot_dimension_numbers<[1], [0], [0], [1], [0, 0, 1, 1], [], []>} : vector<94x180xbf16>, vector<180x156xbf16>, vector<94x156xf32> -> vector<94x156xf32>
    %86 = arith.addf %81, %85 : vector<94x156xf32>
    %c13_80 = arith.constant 13 : index
    %c0_81 = arith.constant 0 : index
    %87 = vector.load %arg11[%c13_80, %c0_81] : memref<120x180xbf16, #tpu.memory_space<vmem>>, vector<94x180xbf16>
    %c4_82 = arith.constant 4 : index
    %c0_83 = arith.constant 0 : index
    %c0_84 = arith.constant 0 : index
    %88 = vector.load %arg4[%c4_82, %c0_83, %c0_84] : memref<9x180x156xbf16, #tpu.memory_space<vmem>>, vector<1x180x156xbf16>
    %89 = vector.shape_cast %88 : vector<1x180x156xbf16> to vector<180x156xbf16>
    %cst_85 = arith.constant dense<0.000000e+00> : vector<94x156xf32>
    %90 = tpu.matmul %87, %89, %cst_85 {dimension_numbers = #tpu.dot_dimension_numbers<[1], [0], [0], [1], [0, 0, 1, 1], [], []>} : vector<94x180xbf16>, vector<180x156xbf16>, vector<94x156xf32> -> vector<94x156xf32>
    %91 = arith.addf %86, %90 : vector<94x156xf32>
    %c14_86 = arith.constant 14 : index
    %c0_87 = arith.constant 0 : index
    %92 = vector.load %arg11[%c14_86, %c0_87] : memref<120x180xbf16, #tpu.memory_space<vmem>>, vector<94x180xbf16>
    %c5_88 = arith.constant 5 : index
    %c0_89 = arith.constant 0 : index
    %c0_90 = arith.constant 0 : index
    %93 = vector.load %arg4[%c5_88, %c0_89, %c0_90] : memref<9x180x156xbf16, #tpu.memory_space<vmem>>, vector<1x180x156xbf16>
    %94 = vector.shape_cast %93 : vector<1x180x156xbf16> to vector<180x156xbf16>
    %cst_91 = arith.constant dense<0.000000e+00> : vector<94x156xf32>
    %95 = tpu.matmul %92, %94, %cst_91 {dimension_numbers = #tpu.dot_dimension_numbers<[1], [0], [0], [1], [0, 0, 1, 1], [], []>} : vector<94x180xbf16>, vector<180x156xbf16>, vector<94x156xf32> -> vector<94x156xf32>
    %96 = arith.addf %91, %95 : vector<94x156xf32>
    %c24_92 = arith.constant 24 : index
    %c0_93 = arith.constant 0 : index
    %97 = vector.load %arg11[%c24_92, %c0_93] : memref<120x180xbf16, #tpu.memory_space<vmem>>, vector<94x180xbf16>
    %c6_94 = arith.constant 6 : index
    %c0_95 = arith.constant 0 : index
    %c0_96 = arith.constant 0 : index
    %98 = vector.load %arg4[%c6_94, %c0_95, %c0_96] : memref<9x180x156xbf16, #tpu.memory_space<vmem>>, vector<1x180x156xbf16>
    %99 = vector.shape_cast %98 : vector<1x180x156xbf16> to vector<180x156xbf16>
    %cst_97 = arith.constant dense<0.000000e+00> : vector<94x156xf32>
    %100 = tpu.matmul %97, %99, %cst_97 {dimension_numbers = #tpu.dot_dimension_numbers<[1], [0], [0], [1], [0, 0, 1, 1], [], []>} : vector<94x180xbf16>, vector<180x156xbf16>, vector<94x156xf32> -> vector<94x156xf32>
    %101 = arith.addf %96, %100 : vector<94x156xf32>
    %c25_98 = arith.constant 25 : index
    %c0_99 = arith.constant 0 : index
    %102 = vector.load %arg11[%c25_98, %c0_99] : memref<120x180xbf16, #tpu.memory_space<vmem>>, vector<94x180xbf16>
    %c7_100 = arith.constant 7 : index
    %c0_101 = arith.constant 0 : index
    %c0_102 = arith.constant 0 : index
    %103 = vector.load %arg4[%c7_100, %c0_101, %c0_102] : memref<9x180x156xbf16, #tpu.memory_space<vmem>>, vector<1x180x156xbf16>
    %104 = vector.shape_cast %103 : vector<1x180x156xbf16> to vector<180x156xbf16>
    %cst_103 = arith.constant dense<0.000000e+00> : vector<94x156xf32>
    %105 = tpu.matmul %102, %104, %cst_103 {dimension_numbers = #tpu.dot_dimension_numbers<[1], [0], [0], [1], [0, 0, 1, 1], [], []>} : vector<94x180xbf16>, vector<180x156xbf16>, vector<94x156xf32> -> vector<94x156xf32>
    %106 = arith.addf %101, %105 : vector<94x156xf32>
    %c26_104 = arith.constant 26 : index
    %c0_105 = arith.constant 0 : index
    %107 = vector.load %arg11[%c26_104, %c0_105] : memref<120x180xbf16, #tpu.memory_space<vmem>>, vector<94x180xbf16>
    %c8_106 = arith.constant 8 : index
    %c0_107 = arith.constant 0 : index
    %c0_108 = arith.constant 0 : index
    %108 = vector.load %arg4[%c8_106, %c0_107, %c0_108] : memref<9x180x156xbf16, #tpu.memory_space<vmem>>, vector<1x180x156xbf16>
    %109 = vector.shape_cast %108 : vector<1x180x156xbf16> to vector<180x156xbf16>
    %cst_109 = arith.constant dense<0.000000e+00> : vector<94x156xf32>
    %110 = tpu.matmul %107, %109, %cst_109 {dimension_numbers = #tpu.dot_dimension_numbers<[1], [0], [0], [1], [0, 0, 1, 1], [], []>} : vector<94x180xbf16>, vector<180x156xbf16>, vector<94x156xf32> -> vector<94x156xf32>
    %111 = arith.addf %106, %110 : vector<94x156xf32>
    %c0_110 = arith.constant 0 : index
    %c0_111 = arith.constant 0 : index
    %112 = vector.load %arg5[%c0_110, %c0_111] : memref<1x156xf32, #tpu.memory_space<vmem>>, vector<1x156xf32>
    %113 = vector.broadcast %112 : vector<1x156xf32> to vector<94x156xf32>
    %114 = arith.addf %111, %113 : vector<94x156xf32>
    %cst_112 = arith.constant 0.000000e+00 : f32
    %115 = vector.broadcast %cst_112 : f32 to vector<94x156xf32>
    %116 = arith.cmpf ogt, %114, %115 : vector<94x156xf32>
    %cst_113 = arith.constant 0.000000e+00 : f32
    %117 = vector.broadcast %cst_113 : f32 to vector<94x156xf32>
    %118 = arith.minimumf %114, %117 : vector<94x156xf32>
    %119 = math.exp %118 : vector<94x156xf32>
    %cst_114 = arith.constant 1.000000e+00 : f32
    %120 = vector.broadcast %cst_114 : f32 to vector<94x156xf32>
    %121 = arith.subf %119, %120 : vector<94x156xf32>
    %122 = arith.select %116, %114, %121 : vector<94x156xi1>, vector<94x156xf32>
    %123 = arith.truncf %122 : vector<94x156xf32> to vector<94x156xbf16>
    %c0_115 = arith.constant 0 : index
    %c0_116 = arith.constant 0 : index
    %124 = vector.load %arg12[%c0_115, %c0_116] : memref<96x156xbf16, #tpu.memory_space<vmem>>, vector<94x156xbf16>
    tpu.vector_store %arg12[%c0_115, %c0_116], %123 {strides = array<i32>} : memref<96x156xbf16, #tpu.memory_space<vmem>>, vector<94x156xbf16>,
    %cst_117 = arith.constant 0.000000e+00 : bf16
    %125 = vector.broadcast %cst_117 : bf16 to vector<2x156xbf16>
    %c94 = arith.constant 94 : index
    %c0_118 = arith.constant 0 : index
    %126 = vector.load %arg12[%c94, %c0_118] : memref<96x156xbf16, #tpu.memory_space<vmem>>, vector<2x156xbf16>
    tpu.vector_store %arg12[%c94, %c0_118], %125 {strides = array<i32>} : memref<96x156xbf16, #tpu.memory_space<vmem>>, vector<2x156xbf16>,
    %c0_119 = arith.constant 0 : index
    %c0_120 = arith.constant 0 : index
    %127 = vector.load %arg12[%c0_119, %c0_120] : memref<96x156xbf16, #tpu.memory_space<vmem>>, vector<70x156xbf16>
    %c0_121 = arith.constant 0 : index
    %c0_122 = arith.constant 0 : index
    %c0_123 = arith.constant 0 : index
    %128 = vector.load %arg6[%c0_121, %c0_122, %c0_123] : memref<9x156x72xbf16, #tpu.memory_space<vmem>>, vector<1x156x72xbf16>
    %129 = vector.shape_cast %128 : vector<1x156x72xbf16> to vector<156x72xbf16>
    %cst_124 = arith.constant dense<0.000000e+00> : vector<70x72xf32>
    %130 = tpu.matmul %127, %129, %cst_124 {dimension_numbers = #tpu.dot_dimension_numbers<[1], [0], [0], [1], [0, 0, 1, 1], [], []>} : vector<70x156xbf16>, vector<156x72xbf16>, vector<70x72xf32> -> vector<70x72xf32>
    %c1_125 = arith.constant 1 : index
    %c0_126 = arith.constant 0 : index
    %131 = vector.load %arg12[%c1_125, %c0_126] : memref<96x156xbf16, #tpu.memory_space<vmem>>, vector<70x156xbf16>
    %c1_127 = arith.constant 1 : index
    %c0_128 = arith.constant 0 : index
    %c0_129 = arith.constant 0 : index
    %132 = vector.load %arg6[%c1_127, %c0_128, %c0_129] : memref<9x156x72xbf16, #tpu.memory_space<vmem>>, vector<1x156x72xbf16>
    %133 = vector.shape_cast %132 : vector<1x156x72xbf16> to vector<156x72xbf16>
    %cst_130 = arith.constant dense<0.000000e+00> : vector<70x72xf32>
    %134 = tpu.matmul %131, %133, %cst_130 {dimension_numbers = #tpu.dot_dimension_numbers<[1], [0], [0], [1], [0, 0, 1, 1], [], []>} : vector<70x156xbf16>, vector<156x72xbf16>, vector<70x72xf32> -> vector<70x72xf32>
    %135 = arith.addf %130, %134 : vector<70x72xf32>
    %c2_131 = arith.constant 2 : index
    %c0_132 = arith.constant 0 : index
    %136 = vector.load %arg12[%c2_131, %c0_132] : memref<96x156xbf16, #tpu.memory_space<vmem>>, vector<70x156xbf16>
    %c2_133 = arith.constant 2 : index
    %c0_134 = arith.constant 0 : index
    %c0_135 = arith.constant 0 : index
    %137 = vector.load %arg6[%c2_133, %c0_134, %c0_135] : memref<9x156x72xbf16, #tpu.memory_space<vmem>>, vector<1x156x72xbf16>
    %138 = vector.shape_cast %137 : vector<1x156x72xbf16> to vector<156x72xbf16>
    %cst_136 = arith.constant dense<0.000000e+00> : vector<70x72xf32>
    %139 = tpu.matmul %136, %138, %cst_136 {dimension_numbers = #tpu.dot_dimension_numbers<[1], [0], [0], [1], [0, 0, 1, 1], [], []>} : vector<70x156xbf16>, vector<156x72xbf16>, vector<70x72xf32> -> vector<70x72xf32>
    %140 = arith.addf %135, %139 : vector<70x72xf32>
    %c12_137 = arith.constant 12 : index
    %c0_138 = arith.constant 0 : index
    %141 = vector.load %arg12[%c12_137, %c0_138] : memref<96x156xbf16, #tpu.memory_space<vmem>>, vector<70x156xbf16>
    %c3_139 = arith.constant 3 : index
    %c0_140 = arith.constant 0 : index
    %c0_141 = arith.constant 0 : index
    %142 = vector.load %arg6[%c3_139, %c0_140, %c0_141] : memref<9x156x72xbf16, #tpu.memory_space<vmem>>, vector<1x156x72xbf16>
    %143 = vector.shape_cast %142 : vector<1x156x72xbf16> to vector<156x72xbf16>
    %cst_142 = arith.constant dense<0.000000e+00> : vector<70x72xf32>
    %144 = tpu.matmul %141, %143, %cst_142 {dimension_numbers = #tpu.dot_dimension_numbers<[1], [0], [0], [1], [0, 0, 1, 1], [], []>} : vector<70x156xbf16>, vector<156x72xbf16>, vector<70x72xf32> -> vector<70x72xf32>
    %145 = arith.addf %140, %144 : vector<70x72xf32>
    %c13_143 = arith.constant 13 : index
    %c0_144 = arith.constant 0 : index
    %146 = vector.load %arg12[%c13_143, %c0_144] : memref<96x156xbf16, #tpu.memory_space<vmem>>, vector<70x156xbf16>
    %c4_145 = arith.constant 4 : index
    %c0_146 = arith.constant 0 : index
    %c0_147 = arith.constant 0 : index
    %147 = vector.load %arg6[%c4_145, %c0_146, %c0_147] : memref<9x156x72xbf16, #tpu.memory_space<vmem>>, vector<1x156x72xbf16>
    %148 = vector.shape_cast %147 : vector<1x156x72xbf16> to vector<156x72xbf16>
    %cst_148 = arith.constant dense<0.000000e+00> : vector<70x72xf32>
    %149 = tpu.matmul %146, %148, %cst_148 {dimension_numbers = #tpu.dot_dimension_numbers<[1], [0], [0], [1], [0, 0, 1, 1], [], []>} : vector<70x156xbf16>, vector<156x72xbf16>, vector<70x72xf32> -> vector<70x72xf32>
    %150 = arith.addf %145, %149 : vector<70x72xf32>
    %c14_149 = arith.constant 14 : index
    %c0_150 = arith.constant 0 : index
    %151 = vector.load %arg12[%c14_149, %c0_150] : memref<96x156xbf16, #tpu.memory_space<vmem>>, vector<70x156xbf16>
    %c5_151 = arith.constant 5 : index
    %c0_152 = arith.constant 0 : index
    %c0_153 = arith.constant 0 : index
    %152 = vector.load %arg6[%c5_151, %c0_152, %c0_153] : memref<9x156x72xbf16, #tpu.memory_space<vmem>>, vector<1x156x72xbf16>
    %153 = vector.shape_cast %152 : vector<1x156x72xbf16> to vector<156x72xbf16>
    %cst_154 = arith.constant dense<0.000000e+00> : vector<70x72xf32>
    %154 = tpu.matmul %151, %153, %cst_154 {dimension_numbers = #tpu.dot_dimension_numbers<[1], [0], [0], [1], [0, 0, 1, 1], [], []>} : vector<70x156xbf16>, vector<156x72xbf16>, vector<70x72xf32> -> vector<70x72xf32>
    %155 = arith.addf %150, %154 : vector<70x72xf32>
    %c24_155 = arith.constant 24 : index
    %c0_156 = arith.constant 0 : index
    %156 = vector.load %arg12[%c24_155, %c0_156] : memref<96x156xbf16, #tpu.memory_space<vmem>>, vector<70x156xbf16>
    %c6_157 = arith.constant 6 : index
    %c0_158 = arith.constant 0 : index
    %c0_159 = arith.constant 0 : index
    %157 = vector.load %arg6[%c6_157, %c0_158, %c0_159] : memref<9x156x72xbf16, #tpu.memory_space<vmem>>, vector<1x156x72xbf16>
    %158 = vector.shape_cast %157 : vector<1x156x72xbf16> to vector<156x72xbf16>
    %cst_160 = arith.constant dense<0.000000e+00> : vector<70x72xf32>
    %159 = tpu.matmul %156, %158, %cst_160 {dimension_numbers = #tpu.dot_dimension_numbers<[1], [0], [0], [1], [0, 0, 1, 1], [], []>} : vector<70x156xbf16>, vector<156x72xbf16>, vector<70x72xf32> -> vector<70x72xf32>
    %160 = arith.addf %155, %159 : vector<70x72xf32>
    %c25_161 = arith.constant 25 : index
    %c0_162 = arith.constant 0 : index
    %161 = vector.load %arg12[%c25_161, %c0_162] : memref<96x156xbf16, #tpu.memory_space<vmem>>, vector<70x156xbf16>
    %c7_163 = arith.constant 7 : index
    %c0_164 = arith.constant 0 : index
    %c0_165 = arith.constant 0 : index
    %162 = vector.load %arg6[%c7_163, %c0_164, %c0_165] : memref<9x156x72xbf16, #tpu.memory_space<vmem>>, vector<1x156x72xbf16>
    %163 = vector.shape_cast %162 : vector<1x156x72xbf16> to vector<156x72xbf16>
    %cst_166 = arith.constant dense<0.000000e+00> : vector<70x72xf32>
    %164 = tpu.matmul %161, %163, %cst_166 {dimension_numbers = #tpu.dot_dimension_numbers<[1], [0], [0], [1], [0, 0, 1, 1], [], []>} : vector<70x156xbf16>, vector<156x72xbf16>, vector<70x72xf32> -> vector<70x72xf32>
    %165 = arith.addf %160, %164 : vector<70x72xf32>
    %c26_167 = arith.constant 26 : index
    %c0_168 = arith.constant 0 : index
    %166 = vector.load %arg12[%c26_167, %c0_168] : memref<96x156xbf16, #tpu.memory_space<vmem>>, vector<70x156xbf16>
    %c8_169 = arith.constant 8 : index
    %c0_170 = arith.constant 0 : index
    %c0_171 = arith.constant 0 : index
    %167 = vector.load %arg6[%c8_169, %c0_170, %c0_171] : memref<9x156x72xbf16, #tpu.memory_space<vmem>>, vector<1x156x72xbf16>
    %168 = vector.shape_cast %167 : vector<1x156x72xbf16> to vector<156x72xbf16>
    %cst_172 = arith.constant dense<0.000000e+00> : vector<70x72xf32>
    %169 = tpu.matmul %166, %168, %cst_172 {dimension_numbers = #tpu.dot_dimension_numbers<[1], [0], [0], [1], [0, 0, 1, 1], [], []>} : vector<70x156xbf16>, vector<156x72xbf16>, vector<70x72xf32> -> vector<70x72xf32>
    %170 = arith.addf %165, %169 : vector<70x72xf32>
    %c0_173 = arith.constant 0 : index
    %c0_174 = arith.constant 0 : index
    %171 = vector.load %arg7[%c0_173, %c0_174] : memref<1x72xf32, #tpu.memory_space<vmem>>, vector<1x72xf32>
    %172 = vector.broadcast %171 : vector<1x72xf32> to vector<70x72xf32>
    %173 = arith.addf %170, %172 : vector<70x72xf32>
    %cst_175 = arith.constant 0.000000e+00 : f32
    %174 = vector.broadcast %cst_175 : f32 to vector<70x72xf32>
    %175 = arith.cmpf ogt, %173, %174 : vector<70x72xf32>
    %cst_176 = arith.constant 0.000000e+00 : f32
    %176 = vector.broadcast %cst_176 : f32 to vector<70x72xf32>
    %177 = arith.minimumf %173, %176 : vector<70x72xf32>
    %178 = math.exp %177 : vector<70x72xf32>
    %cst_177 = arith.constant 1.000000e+00 : f32
    %179 = vector.broadcast %cst_177 : f32 to vector<70x72xf32>
    %180 = arith.subf %178, %179 : vector<70x72xf32>
    %181 = arith.select %175, %173, %180 : vector<70x72xi1>, vector<70x72xf32>
    %182 = arith.truncf %181 : vector<70x72xf32> to vector<70x72xbf16>
    %c0_178 = arith.constant 0 : index
    %c0_179 = arith.constant 0 : index
    %183 = vector.load %arg13[%c0_178, %c0_179] : memref<72x72xbf16, #tpu.memory_space<vmem>>, vector<70x72xbf16>
    tpu.vector_store %arg13[%c0_178, %c0_179], %182 {strides = array<i32>} : memref<72x72xbf16, #tpu.memory_space<vmem>>, vector<70x72xbf16>,
    %cst_180 = arith.constant 0.000000e+00 : bf16
    %184 = vector.broadcast %cst_180 : bf16 to vector<2x72xbf16>
    %c70 = arith.constant 70 : index
    %c0_181 = arith.constant 0 : index
    %185 = vector.load %arg13[%c70, %c0_181] : memref<72x72xbf16, #tpu.memory_space<vmem>>, vector<2x72xbf16>
    tpu.vector_store %arg13[%c70, %c0_181], %184 {strides = array<i32>} : memref<72x72xbf16, #tpu.memory_space<vmem>>, vector<2x72xbf16>,
    %c0_182 = arith.constant 0 : index
    %c0_183 = arith.constant 0 : index
    %186 = vector.load %arg13[%c0_182, %c0_183] : memref<72x72xbf16, #tpu.memory_space<vmem>>, vector<46x72xbf16>
    %c0_184 = arith.constant 0 : index
    %c0_185 = arith.constant 0 : index
    %c0_186 = arith.constant 0 : index
    %187 = vector.load %arg8[%c0_184, %c0_185, %c0_186] : memref<9x72x24xbf16, #tpu.memory_space<vmem>>, vector<1x72x24xbf16>
    %188 = vector.shape_cast %187 : vector<1x72x24xbf16> to vector<72x24xbf16>
    %cst_187 = arith.constant dense<0.000000e+00> : vector<46x24xf32>
    %189 = tpu.matmul %186, %188, %cst_187 {dimension_numbers = #tpu.dot_dimension_numbers<[1], [0], [0], [1], [0, 0, 1, 1], [], []>} : vector<46x72xbf16>, vector<72x24xbf16>, vector<46x24xf32> -> vector<46x24xf32>
    %c1_188 = arith.constant 1 : index
    %c0_189 = arith.constant 0 : index
    %190 = vector.load %arg13[%c1_188, %c0_189] : memref<72x72xbf16, #tpu.memory_space<vmem>>, vector<46x72xbf16>
    %c1_190 = arith.constant 1 : index
    %c0_191 = arith.constant 0 : index
    %c0_192 = arith.constant 0 : index
    %191 = vector.load %arg8[%c1_190, %c0_191, %c0_192] : memref<9x72x24xbf16, #tpu.memory_space<vmem>>, vector<1x72x24xbf16>
    %192 = vector.shape_cast %191 : vector<1x72x24xbf16> to vector<72x24xbf16>
    %cst_193 = arith.constant dense<0.000000e+00> : vector<46x24xf32>
    %193 = tpu.matmul %190, %192, %cst_193 {dimension_numbers = #tpu.dot_dimension_numbers<[1], [0], [0], [1], [0, 0, 1, 1], [], []>} : vector<46x72xbf16>, vector<72x24xbf16>, vector<46x24xf32> -> vector<46x24xf32>
    %194 = arith.addf %189, %193 : vector<46x24xf32>
    %c2_194 = arith.constant 2 : index
    %c0_195 = arith.constant 0 : index
    %195 = vector.load %arg13[%c2_194, %c0_195] : memref<72x72xbf16, #tpu.memory_space<vmem>>, vector<46x72xbf16>
    %c2_196 = arith.constant 2 : index
    %c0_197 = arith.constant 0 : index
    %c0_198 = arith.constant 0 : index
    %196 = vector.load %arg8[%c2_196, %c0_197, %c0_198] : memref<9x72x24xbf16, #tpu.memory_space<vmem>>, vector<1x72x24xbf16>
    %197 = vector.shape_cast %196 : vector<1x72x24xbf16> to vector<72x24xbf16>
    %cst_199 = arith.constant dense<0.000000e+00> : vector<46x24xf32>
    %198 = tpu.matmul %195, %197, %cst_199 {dimension_numbers = #tpu.dot_dimension_numbers<[1], [0], [0], [1], [0, 0, 1, 1], [], []>} : vector<46x72xbf16>, vector<72x24xbf16>, vector<46x24xf32> -> vector<46x24xf32>
    %199 = arith.addf %194, %198 : vector<46x24xf32>
    %c12_200 = arith.constant 12 : index
    %c0_201 = arith.constant 0 : index
    %200 = vector.load %arg13[%c12_200, %c0_201] : memref<72x72xbf16, #tpu.memory_space<vmem>>, vector<46x72xbf16>
    %c3_202 = arith.constant 3 : index
    %c0_203 = arith.constant 0 : index
    %c0_204 = arith.constant 0 : index
    %201 = vector.load %arg8[%c3_202, %c0_203, %c0_204] : memref<9x72x24xbf16, #tpu.memory_space<vmem>>, vector<1x72x24xbf16>
    %202 = vector.shape_cast %201 : vector<1x72x24xbf16> to vector<72x24xbf16>
    %cst_205 = arith.constant dense<0.000000e+00> : vector<46x24xf32>
    %203 = tpu.matmul %200, %202, %cst_205 {dimension_numbers = #tpu.dot_dimension_numbers<[1], [0], [0], [1], [0, 0, 1, 1], [], []>} : vector<46x72xbf16>, vector<72x24xbf16>, vector<46x24xf32> -> vector<46x24xf32>
    %204 = arith.addf %199, %203 : vector<46x24xf32>
    %c13_206 = arith.constant 13 : index
    %c0_207 = arith.constant 0 : index
    %205 = vector.load %arg13[%c13_206, %c0_207] : memref<72x72xbf16, #tpu.memory_space<vmem>>, vector<46x72xbf16>
    %c4_208 = arith.constant 4 : index
    %c0_209 = arith.constant 0 : index
    %c0_210 = arith.constant 0 : index
    %206 = vector.load %arg8[%c4_208, %c0_209, %c0_210] : memref<9x72x24xbf16, #tpu.memory_space<vmem>>, vector<1x72x24xbf16>
    %207 = vector.shape_cast %206 : vector<1x72x24xbf16> to vector<72x24xbf16>
    %cst_211 = arith.constant dense<0.000000e+00> : vector<46x24xf32>
    %208 = tpu.matmul %205, %207, %cst_211 {dimension_numbers = #tpu.dot_dimension_numbers<[1], [0], [0], [1], [0, 0, 1, 1], [], []>} : vector<46x72xbf16>, vector<72x24xbf16>, vector<46x24xf32> -> vector<46x24xf32>
    %209 = arith.addf %204, %208 : vector<46x24xf32>
    %c14_212 = arith.constant 14 : index
    %c0_213 = arith.constant 0 : index
    %210 = vector.load %arg13[%c14_212, %c0_213] : memref<72x72xbf16, #tpu.memory_space<vmem>>, vector<46x72xbf16>
    %c5_214 = arith.constant 5 : index
    %c0_215 = arith.constant 0 : index
    %c0_216 = arith.constant 0 : index
    %211 = vector.load %arg8[%c5_214, %c0_215, %c0_216] : memref<9x72x24xbf16, #tpu.memory_space<vmem>>, vector<1x72x24xbf16>
    %212 = vector.shape_cast %211 : vector<1x72x24xbf16> to vector<72x24xbf16>
    %cst_217 = arith.constant dense<0.000000e+00> : vector<46x24xf32>
    %213 = tpu.matmul %210, %212, %cst_217 {dimension_numbers = #tpu.dot_dimension_numbers<[1], [0], [0], [1], [0, 0, 1, 1], [], []>} : vector<46x72xbf16>, vector<72x24xbf16>, vector<46x24xf32> -> vector<46x24xf32>
    %214 = arith.addf %209, %213 : vector<46x24xf32>
    %c24_218 = arith.constant 24 : index
    %c0_219 = arith.constant 0 : index
    %215 = vector.load %arg13[%c24_218, %c0_219] : memref<72x72xbf16, #tpu.memory_space<vmem>>, vector<46x72xbf16>
    %c6_220 = arith.constant 6 : index
    %c0_221 = arith.constant 0 : index
    %c0_222 = arith.constant 0 : index
    %216 = vector.load %arg8[%c6_220, %c0_221, %c0_222] : memref<9x72x24xbf16, #tpu.memory_space<vmem>>, vector<1x72x24xbf16>
    %217 = vector.shape_cast %216 : vector<1x72x24xbf16> to vector<72x24xbf16>
    %cst_223 = arith.constant dense<0.000000e+00> : vector<46x24xf32>
    %218 = tpu.matmul %215, %217, %cst_223 {dimension_numbers = #tpu.dot_dimension_numbers<[1], [0], [0], [1], [0, 0, 1, 1], [], []>} : vector<46x72xbf16>, vector<72x24xbf16>, vector<46x24xf32> -> vector<46x24xf32>
    %219 = arith.addf %214, %218 : vector<46x24xf32>
    %c25_224 = arith.constant 25 : index
    %c0_225 = arith.constant 0 : index
    %220 = vector.load %arg13[%c25_224, %c0_225] : memref<72x72xbf16, #tpu.memory_space<vmem>>, vector<46x72xbf16>
    %c7_226 = arith.constant 7 : index
    %c0_227 = arith.constant 0 : index
    %c0_228 = arith.constant 0 : index
    %221 = vector.load %arg8[%c7_226, %c0_227, %c0_228] : memref<9x72x24xbf16, #tpu.memory_space<vmem>>, vector<1x72x24xbf16>
    %222 = vector.shape_cast %221 : vector<1x72x24xbf16> to vector<72x24xbf16>
    %cst_229 = arith.constant dense<0.000000e+00> : vector<46x24xf32>
    %223 = tpu.matmul %220, %222, %cst_229 {dimension_numbers = #tpu.dot_dimension_numbers<[1], [0], [0], [1], [0, 0, 1, 1], [], []>} : vector<46x72xbf16>, vector<72x24xbf16>, vector<46x24xf32> -> vector<46x24xf32>
    %224 = arith.addf %219, %223 : vector<46x24xf32>
    %c26_230 = arith.constant 26 : index
    %c0_231 = arith.constant 0 : index
    %225 = vector.load %arg13[%c26_230, %c0_231] : memref<72x72xbf16, #tpu.memory_space<vmem>>, vector<46x72xbf16>
    %c8_232 = arith.constant 8 : index
    %c0_233 = arith.constant 0 : index
    %c0_234 = arith.constant 0 : index
    %226 = vector.load %arg8[%c8_232, %c0_233, %c0_234] : memref<9x72x24xbf16, #tpu.memory_space<vmem>>, vector<1x72x24xbf16>
    %227 = vector.shape_cast %226 : vector<1x72x24xbf16> to vector<72x24xbf16>
    %cst_235 = arith.constant dense<0.000000e+00> : vector<46x24xf32>
    %228 = tpu.matmul %225, %227, %cst_235 {dimension_numbers = #tpu.dot_dimension_numbers<[1], [0], [0], [1], [0, 0, 1, 1], [], []>} : vector<46x72xbf16>, vector<72x24xbf16>, vector<46x24xf32> -> vector<46x24xf32>
    %229 = arith.addf %224, %228 : vector<46x24xf32>
    %c0_236 = arith.constant 0 : index
    %c0_237 = arith.constant 0 : index
    %230 = vector.load %arg9[%c0_236, %c0_237] : memref<1x24xf32, #tpu.memory_space<vmem>>, vector<1x24xf32>
    %231 = vector.broadcast %230 : vector<1x24xf32> to vector<46x24xf32>
    %232 = arith.addf %229, %231 : vector<46x24xf32>
    %cst_238 = arith.constant 0.000000e+00 : f32
    %233 = vector.broadcast %cst_238 : f32 to vector<46x24xf32>
    %234 = arith.cmpf ogt, %232, %233 : vector<46x24xf32>
    %cst_239 = arith.constant 0.000000e+00 : f32
    %235 = vector.broadcast %cst_239 : f32 to vector<46x24xf32>
    %236 = arith.minimumf %232, %235 : vector<46x24xf32>
    %237 = math.exp %236 : vector<46x24xf32>
    %cst_240 = arith.constant 1.000000e+00 : f32
    %238 = vector.broadcast %cst_240 : f32 to vector<46x24xf32>
    %239 = arith.subf %237, %238 : vector<46x24xf32>
    %240 = arith.select %234, %232, %239 : vector<46x24xi1>, vector<46x24xf32>
    %c0_241 = arith.constant 0 : index
    %c0_242 = arith.constant 0 : index
    %241 = vector.load %arg14[%c0_241, %c0_242] : memref<46x24xf32, #tpu.memory_space<vmem>>, vector<46x24xf32>
    tpu.vector_store %arg14[%c0_241, %c0_242], %240 {strides = array<i32>} : memref<46x24xf32, #tpu.memory_space<vmem>>, vector<46x24xf32>,
    %c0_243 = arith.constant 0 : index
    %c0_244 = arith.constant 0 : index
    %242 = vector.load %arg14[%c0_243, %c0_244] : memref<46x24xf32, #tpu.memory_space<vmem>>, vector<4x24xf32>
    %c0_245 = arith.constant 0 : index
    %c0_246 = arith.constant 0 : index
    %c0_247 = arith.constant 0 : index
    %243 = vector.load %arg10[%c0_245, %c0_246, %c0_247] : memref<1x16x24xf32, #tpu.memory_space<vmem>>, vector<1x4x24xf32>
    %244 = vector.shape_cast %243 : vector<1x4x24xf32> to vector<4x24xf32>
    %245 = vector.shape_cast %242 : vector<4x24xf32> to vector<1x4x24xf32>
    tpu.vector_store %arg10[%c0_245, %c0_246, %c0_247], %245 {strides = array<i32>} : memref<1x16x24xf32, #tpu.memory_space<vmem>>, vector<1x4x24xf32>,
    %c12_248 = arith.constant 12 : index
    %c0_249 = arith.constant 0 : index
    %246 = vector.load %arg14[%c12_248, %c0_249] : memref<46x24xf32, #tpu.memory_space<vmem>>, vector<4x24xf32>
    %c0_250 = arith.constant 0 : index
    %c4_251 = arith.constant 4 : index
    %c0_252 = arith.constant 0 : index
    %247 = vector.load %arg10[%c0_250, %c4_251, %c0_252] : memref<1x16x24xf32, #tpu.memory_space<vmem>>, vector<1x4x24xf32>
    %248 = vector.shape_cast %247 : vector<1x4x24xf32> to vector<4x24xf32>
    %249 = vector.shape_cast %246 : vector<4x24xf32> to vector<1x4x24xf32>
    tpu.vector_store %arg10[%c0_250, %c4_251, %c0_252], %249 {strides = array<i32>} : memref<1x16x24xf32, #tpu.memory_space<vmem>>, vector<1x4x24xf32>,
    %c24_253 = arith.constant 24 : index
    %c0_254 = arith.constant 0 : index
    %250 = vector.load %arg14[%c24_253, %c0_254] : memref<46x24xf32, #tpu.memory_space<vmem>>, vector<4x24xf32>
    %c0_255 = arith.constant 0 : index
    %c8_256 = arith.constant 8 : index
    %c0_257 = arith.constant 0 : index
    %251 = vector.load %arg10[%c0_255, %c8_256, %c0_257] : memref<1x16x24xf32, #tpu.memory_space<vmem>>, vector<1x4x24xf32>
    %252 = vector.shape_cast %251 : vector<1x4x24xf32> to vector<4x24xf32>
    %253 = vector.shape_cast %250 : vector<4x24xf32> to vector<1x4x24xf32>
    tpu.vector_store %arg10[%c0_255, %c8_256, %c0_257], %253 {strides = array<i32>} : memref<1x16x24xf32, #tpu.memory_space<vmem>>, vector<1x4x24xf32>,
    %c36 = arith.constant 36 : index
    %c0_258 = arith.constant 0 : index
    %254 = vector.load %arg14[%c36, %c0_258] : memref<46x24xf32, #tpu.memory_space<vmem>>, vector<4x24xf32>
    %c0_259 = arith.constant 0 : index
    %c12_260 = arith.constant 12 : index
    %c0_261 = arith.constant 0 : index
    %255 = vector.load %arg10[%c0_259, %c12_260, %c0_261] : memref<1x16x24xf32, #tpu.memory_space<vmem>>, vector<1x4x24xf32>
    %256 = vector.shape_cast %255 : vector<1x4x24xf32> to vector<4x24xf32>
    %257 = vector.shape_cast %254 : vector<4x24xf32> to vector<1x4x24xf32>
    tpu.vector_store %arg10[%c0_259, %c12_260, %c0_261], %257 {strides = array<i32>} : memref<1x16x24xf32, #tpu.memory_space<vmem>>, vector<1x4x24xf32>,
    return
  }
  func.func @transform_0(%arg0: i32) -> (i32, i32, i32) {
    %c0_i32 = arith.constant 0 : i32
    %c0_i32_0 = arith.constant 0 : i32
    %c0_i32_1 = arith.constant 0 : i32
    return %arg0, %c0_i32, %c0_i32_0 : i32, i32, i32
  }
  func.func @transform_1(%arg0: i32) -> (i32, i32, i32) {
    %c0_i32 = arith.constant 0 : i32
    %c0_i32_0 = arith.constant 0 : i32
    %c0_i32_1 = arith.constant 0 : i32
    %c0_i32_2 = arith.constant 0 : i32
    return %c0_i32, %c0_i32_0, %c0_i32_1 : i32, i32, i32
  }
  func.func @transform_2(%arg0: i32) -> (i32, i32) {
    %c0_i32 = arith.constant 0 : i32
    %c0_i32_0 = arith.constant 0 : i32
    %c0_i32_1 = arith.constant 0 : i32
    return %c0_i32, %c0_i32_0 : i32, i32
  }
  func.func @transform_3(%arg0: i32) -> (i32, i32, i32) {
    %c0_i32 = arith.constant 0 : i32
    %c0_i32_0 = arith.constant 0 : i32
    %c0_i32_1 = arith.constant 0 : i32
    %c0_i32_2 = arith.constant 0 : i32
    return %c0_i32, %c0_i32_0, %c0_i32_1 : i32, i32, i32
  }
  func.func @transform_4(%arg0: i32) -> (i32, i32) {
    %c0_i32 = arith.constant 0 : i32
    %c0_i32_0 = arith.constant 0 : i32
    %c0_i32_1 = arith.constant 0 : i32
    return %c0_i32, %c0_i32_0 : i32, i32
  }
  func.func @transform_5(%arg0: i32) -> (i32, i32, i32) {
    %c0_i32 = arith.constant 0 : i32
    %c0_i32_0 = arith.constant 0 : i32
    %c0_i32_1 = arith.constant 0 : i32
    %c0_i32_2 = arith.constant 0 : i32
    return %c0_i32, %c0_i32_0, %c0_i32_1 : i32, i32, i32
  }
  func.func @transform_6(%arg0: i32) -> (i32, i32) {
    %c0_i32 = arith.constant 0 : i32
    %c0_i32_0 = arith.constant 0 : i32
    %c0_i32_1 = arith.constant 0 : i32
    return %c0_i32, %c0_i32_0 : i32, i32
  }
  func.func @transform_7(%arg0: i32) -> (i32, i32, i32) {
    %c0_i32 = arith.constant 0 : i32
    %c0_i32_0 = arith.constant 0 : i32
    %c0_i32_1 = arith.constant 0 : i32
    %c0_i32_2 = arith.constant 0 : i32
    return %c0_i32, %c0_i32_0, %c0_i32_1 : i32, i32, i32
  }
  func.func @transform_8(%arg0: i32) -> (i32, i32) {
    %c0_i32 = arith.constant 0 : i32
    %c0_i32_0 = arith.constant 0 : i32
    %c0_i32_1 = arith.constant 0 : i32
    return %c0_i32, %c0_i32_0 : i32, i32
  }
  func.func @transform_9(%arg0: i32) -> (i32, i32, i32) {
    %c0_i32 = arith.constant 0 : i32
    %c0_i32_0 = arith.constant 0 : i32
    %c0_i32_1 = arith.constant 0 : i32
    return %arg0, %c0_i32, %c0_i32_0 : i32, i32, i32
  }
}

</mosaic_0001>

<llo_original>
// kernel: encoder3d_forward.1
$region0: #{encoder3d_forward.1}
  #allocation0 [shape = 'u32[]', space=smem, size = 0x4, offset = 0x4, fixed_abs, tag = 'smem constant byte address 0x4 - core index']
  #allocation1 [shape = 'u32[144,128]{1,0:T(1,128)}', space=vmem, size = 0x12000, scoped, tag = 'internal scratch']
  #allocation2 [shape = 'bf16[120,180]{1,0:T(8,128)(2,1)}', space=vmem, size = 0xf000, scoped, tag = 'scratch operand']
  #allocation3 [shape = 'bf16[96,156]{1,0:T(8,128)(2,1)}', space=vmem, size = 0xc000, scoped, tag = 'scratch operand']
  #allocation4 [shape = 'bf16[72,72]{1,0:T(8,128)(2,1)}', space=vmem, size = 0x4800, scoped, tag = 'scratch operand']
  #allocation5 [shape = 'f32[46,24]{1,0:T(8,128)}', space=vmem, size = 0x6000, scoped, tag = 'scratch operand']
  %s0 = inlined_call_operand.vmem [shape: bf16[2,144,32], index: 0, kind: input, shape index: {}]
  %s1 = inlined_call_operand.vmem [shape: bf16[9,32,180], index: 1, kind: input, shape index: {}]
  %s2 = inlined_call_operand.vmem [shape: f32[1,180], index: 2, kind: input, shape index: {}]
  %s3 = inlined_call_operand.vmem [shape: bf16[9,180,156], index: 3, kind: input, shape index: {}]
  %s4 = inlined_call_operand.vmem [shape: f32[1,156], index: 4, kind: input, shape index: {}]
  %s5 = inlined_call_operand.vmem [shape: bf16[9,156,72], index: 5, kind: input, shape index: {}]
  %s6 = inlined_call_operand.vmem [shape: f32[1,72], index: 6, kind: input, shape index: {}]
  %s7 = inlined_call_operand.vmem [shape: bf16[9,72,24], index: 7, kind: input, shape index: {}]
  %s8 = inlined_call_operand.vmem [shape: f32[1,24], index: 8, kind: input, shape index: {}]
  %s9 = inlined_call_operand.vmem [shape: f32[2,16,24], index: 9, kind: output, shape index: {}]
  %s10 = sld [smem:[#allocation0]]
  $region69: #{encoder3d_forward.1} parent=0
    _
  %s12 = ssub.s32 1, %s10
  %s13 = scalar_select 0, %s12, %s10
  loop: start=0, step=1, limit=4
  $region2: #{encoder3d_forward.1} parent=0 // loop_pre_header
    _
  $region3: #{encoder3d_forward.1} parent=0 // loop_header
    %s15 = sphi 0, %s19
    %p16 = scmp.ge.s32.totalorder %s15, 4
    %s25 = sphi 0, %s27
    %s28 = sphi 0, %s25
    %s29 = sphi 0, %s28
    %s45 = sphi 0, %s29
    %s49 = sphi 0, %s49
    %s51 = sphi 0, %s49
    %s52 = sphi 0, %s51
    %s66 = sphi 0, %s52
    %s70 = sphi 0, %s70
    %s72 = sphi 0, %s70
    %s73 = sphi 0, %s72
    %s87 = sphi 0, %s73
    %s91 = sphi 0, %s91
    %s93 = sphi 0, %s91
    %s94 = sphi 0, %s93
    %s108 = sphi 0, %s94
    %s112 = sphi 0, %s112
    %s114 = sphi 0, %s112
    %s115 = sphi 0, %s114
    %s129 = sphi 0, %s115
    %s133 = sphi 0, %s133
    %s135 = sphi 0, %s133
    %s136 = sphi 0, %s135
    %s150 = sphi 0, %s136
    %s154 = sphi 0, %s154
    %s156 = sphi 0, %s154
    %s157 = sphi 0, %s156
    %s171 = sphi 0, %s157
    %s175 = sphi 0, %s175
    %s177 = sphi 0, %s175
    %s178 = sphi 0, %s177
    %s192 = sphi 0, %s178
    %s196 = sphi 0, %s196
    %s198 = sphi 0, %s196
    %s199 = sphi 0, %s198
    %s213 = sphi 0, %s199
    %s219 = sphi 0, %s221
    %s222 = sphi 0, %s219
    %s223 = sphi 0, %s222
    %s239 = sphi 0, %s223
  $region4: #{encoder3d_forward.1} parent=0 // loop_header_branch
    %18 = sbr.rel (%p16) target = $region8
  $region5: #{encoder3d_forward.1} parent=0 // loop_body
    %s20 = ssub.s32 %s15, 1
    %s21 = ssub.s32 %s15, 2
    %s22 = sadd.s32 %s15, 1
    %s23 = ssub.s32 %s15, %s22
    %p24 = scmp.eq.s32.totalorder %s23, 0
    %s26 = sadd.s32 %s25, 1
    %s27 = scalar_select %p24, %s25, %s26
    %p30 = pneg %p24
    %p31 = scmp.eq.s32.totalorder %s15, 1
    %p32 = por %p30, %p31
    %p33 = scmp.ne.s32.totalorder %s25, %s28
    %p34 = scmp.eq.s32.totalorder %s15, 0
    %p35 = por %p33, %p34
    %p36 = scmp.ne.s32.totalorder %s25, %s28
    %p37 = scmp.eq.s32.totalorder %s20, 1
    %p38 = por %p36, %p37
    %p39 = scmp.ne.s32.totalorder %s28, %s29
    %p40 = scmp.eq.s32.totalorder %s20, 0
    %p41 = por %p39, %p40
    %p42 = scmp.ne.s32.totalorder %s28, %s29
    %p43 = scmp.eq.s32.totalorder %s21, 1
    %p44 = por %p42, %p43
    %p46 = scmp.ne.s32.totalorder %s29, %s45
    %p47 = scmp.eq.s32.totalorder %s21, 0
    %p48 = por %p46, %p47
    %s50 = sadd.s32 %s49, 1
    %p53 = scmp.eq.s32.totalorder %s15, 1
    %p54 = scmp.ne.s32.totalorder %s49, %s51
    %p55 = scmp.eq.s32.totalorder %s15, 0
    %p56 = por %p54, %p55
    %p57 = scmp.ne.s32.totalorder %s49, %s51
    %p58 = scmp.eq.s32.totalorder %s20, 1
    %p59 = por %p57, %p58
    %p60 = scmp.ne.s32.totalorder %s51, %s52
    %p61 = scmp.eq.s32.totalorder %s20, 0
    %p62 = por %p60, %p61
    %p63 = scmp.ne.s32.totalorder %s51, %s52
    %p64 = scmp.eq.s32.totalorder %s21, 1
    %p65 = por %p63, %p64
    %p67 = scmp.ne.s32.totalorder %s52, %s66
    %p68 = scmp.eq.s32.totalorder %s21, 0
    %p69 = por %p67, %p68
    %s71 = sadd.s32 %s70, 1
    %p74 = scmp.eq.s32.totalorder %s15, 1
    %p75 = scmp.ne.s32.totalorder %s70, %s72
    %p76 = scmp.eq.s32.totalorder %s15, 0
    %p77 = por %p75, %p76
    %p78 = scmp.ne.s32.totalorder %s70, %s72
    %p79 = scmp.eq.s32.totalorder %s20, 1
    %p80 = por %p78, %p79
    %p81 = scmp.ne.s32.totalorder %s72, %s73
    %p82 = scmp.eq.s32.totalorder %s20, 0
    %p83 = por %p81, %p82
    %p84 = scmp.ne.s32.totalorder %s72, %s73
    %p85 = scmp.eq.s32.totalorder %s21, 1
    %p86 = por %p84, %p85
    %p88 = scmp.ne.s32.totalorder %s73, %s87
    %p89 = scmp.eq.s32.totalorder %s21, 0
    %p90 = por %p88, %p89
    %s92 = sadd.s32 %s91, 1
    %p95 = scmp.eq.s32.totalorder %s15, 1
    %p96 = scmp.ne.s32.totalorder %s91, %s93
    %p97 = scmp.eq.s32.totalorder %s15, 0
    %p98 = por %p96, %p97
    %p99 = scmp.ne.s32.totalorder %s91, %s93
    %p100 = scmp.eq.s32.totalorder %s20, 1
    %p101 = por %p99, %p100
    %p102 = scmp.ne.s32.totalorder %s93, %s94
    %p103 = scmp.eq.s32.totalorder %s20, 0
    %p104 = por %p102, %p103
    %p105 = scmp.ne.s32.totalorder %s93, %s94
    %p106 = scmp.eq.s32.totalorder %s21, 1
    %p107 = por %p105, %p106
    %p109 = scmp.ne.s32.totalorder %s94, %s108
    %p110 = scmp.eq.s32.totalorder %s21, 0
    %p111 = por %p109, %p110
    %s113 = sadd.s32 %s112, 1
    %p116 = scmp.eq.s32.totalorder %s15, 1
    %p117 = scmp.ne.s32.totalorder %s112, %s114
    %p118 = scmp.eq.s32.totalorder %s15, 0
    %p119 = por %p117, %p118
    %p120 = scmp.ne.s32.totalorder %s112, %s114
    %p121 = scmp.eq.s32.totalorder %s20, 1
    %p122 = por %p120, %p121
    %p123 = scmp.ne.s32.totalorder %s114, %s115
    %p124 = scmp.eq.s32.totalorder %s20, 0
    %p125 = por %p123, %p124
    %p126 = scmp.ne.s32.totalorder %s114, %s115
    %p127 = scmp.eq.s32.totalorder %s21, 1
    %p128 = por %p126, %p127
    %p130 = scmp.ne.s32.totalorder %s115, %s129
    %p131 = scmp.eq.s32.totalorder %s21, 0
    %p132 = por %p130, %p131
    %s134 = sadd.s32 %s133, 1
    %p137 = scmp.eq.s32.totalorder %s15, 1
    %p138 = scmp.ne.s32.totalorder %s133, %s135
    %p139 = scmp.eq.s32.totalorder %s15, 0
    %p140 = por %p138, %p139
    %p141 = scmp.ne.s32.totalorder %s133, %s135
    %p142 = scmp.eq.s32.totalorder %s20, 1
    %p143 = por %p141, %p142
    %p144 = scmp.ne.s32.totalorder %s135, %s136
    %p145 = scmp.eq.s32.totalorder %s20, 0
    %p146 = por %p144, %p145
    %p147 = scmp.ne.s32.totalorder %s135, %s136
    %p148 = scmp.eq.s32.totalorder %s21, 1
    %p149 = por %p147, %p148
    %p151 = scmp.ne.s32.totalorder %s136, %s150
    %p152 = scmp.eq.s32.totalorder %s21, 0
    %p153 = por %p151, %p152
    %s155 = sadd.s32 %s154, 1
    %p158 = scmp.eq.s32.totalorder %s15, 1
    %p159 = scmp.ne.s32.totalorder %s154, %s156
    %p160 = scmp.eq.s32.totalorder %s15, 0
    %p161 = por %p159, %p160
    %p162 = scmp.ne.s32.totalorder %s154, %s156
    %p163 = scmp.eq.s32.totalorder %s20, 1
    %p164 = por %p162, %p163
    %p165 = scmp.ne.s32.totalorder %s156, %s157
    %p166 = scmp.eq.s32.totalorder %s20, 0
    %p167 = por %p165, %p166
    %p168 = scmp.ne.s32.totalorder %s156, %s157
    %p169 = scmp.eq.s32.totalorder %s21, 1
    %p170 = por %p168, %p169
    %p172 = scmp.ne.s32.totalorder %s157, %s171
    %p173 = scmp.eq.s32.totalorder %s21, 0
    %p174 = por %p172, %p173
    %s176 = sadd.s32 %s175, 1
    %p179 = scmp.eq.s32.totalorder %s15, 1
    %p180 = scmp.ne.s32.totalorder %s175, %s177
    %p181 = scmp.eq.s32.totalorder %s15, 0
    %p182 = por %p180, %p181
    %p183 = scmp.ne.s32.totalorder %s175, %s177
    %p184 = scmp.eq.s32.totalorder %s20, 1
    %p185 = por %p183, %p184
    %p186 = scmp.ne.s32.totalorder %s177, %s178
    %p187 = scmp.eq.s32.totalorder %s20, 0
    %p188 = por %p186, %p187
    %p189 = scmp.ne.s32.totalorder %s177, %s178
    %p190 = scmp.eq.s32.totalorder %s21, 1
    %p191 = por %p189, %p190
    %p193 = scmp.ne.s32.totalorder %s178, %s192
    %p194 = scmp.eq.s32.totalorder %s21, 0
    %p195 = por %p193, %p194
    %s197 = sadd.s32 %s196, 1
    %p200 = scmp.eq.s32.totalorder %s15, 1
    %p201 = scmp.ne.s32.totalorder %s196, %s198
    %p202 = scmp.eq.s32.totalorder %s15, 0
    %p203 = por %p201, %p202
    %p204 = scmp.ne.s32.totalorder %s196, %s198
    %p205 = scmp.eq.s32.totalorder %s20, 1
    %p206 = por %p204, %p205
    %p207 = scmp.ne.s32.totalorder %s198, %s199
    %p208 = scmp.eq.s32.totalorder %s20, 0
    %p209 = por %p207, %p208
    %p210 = scmp.ne.s32.totalorder %s198, %s199
    %p211 = scmp.eq.s32.totalorder %s21, 1
    %p212 = por %p210, %p211
    %p214 = scmp.ne.s32.totalorder %s199, %s213
    %p215 = scmp.eq.s32.totalorder %s21, 0
    %p216 = por %p214, %p215
    %s217 = ssub.s32 %s15, %s22
    %p218 = scmp.eq.s32.totalorder %s217, 0
    %s220 = sadd.s32 %s219, 1
    %s221 = scalar_select %p218, %s219, %s220
    %p224 = pneg %p218
    %p225 = scmp.eq.s32.totalorder %s15, 1
    %p226 = por %p224, %p225
    %p227 = scmp.ne.s32.totalorder %s219, %s222
    %p228 = scmp.eq.s32.totalorder %s15, 0
    %p229 = por %p227, %p228
    %p230 = scmp.ne.s32.totalorder %s219, %s222
    %p231 = scmp.eq.s32.totalorder %s20, 1
    %p232 = por %p230, %p231
    %p233 = scmp.ne.s32.totalorder %s222, %s223
    %p234 = scmp.eq.s32.totalorder %s20, 0
    %p235 = por %p233, %p234
    %p236 = scmp.ne.s32.totalorder %s222, %s223
    %p237 = scmp.eq.s32.totalorder %s21, 1
    %p238 = por %p236, %p237
    %p240 = scmp.ne.s32.totalorder %s223, %s239
    %p241 = scmp.eq.s32.totalorder %s21, 0
    %p242 = por %p240, %p241
    %p243 = scmp.le.s32.totalorder 1, %s15
    %p244 = scmp.lt.s32.totalorder %s15, 3
    %p245 = pnand %p243, %p244
    %p246 = pneg %p245
    // Predicated region
    $region9: #{encoder3d_forward.1} parent=5 // pred_check
      _
    $region10: #{encoder3d_forward.1} parent=5 // pred_check_branch
      %248 = sbr.rel (%p245) target = $region12
    $region11: #{encoder3d_forward.1} parent=5 // pred_region
      %s249 = ssub.s32 %s15, 1
      // Predicated region
      $region13: #{encoder3d_forward.1} parent=11 // pred_check
        %p250 = pneg %p62
      $region14: #{encoder3d_forward.1} parent=11 // pred_check_branch
        %252 = sbr.rel (%p250) target = $region16
      $region15: #{encoder3d_forward.1} parent=11 // pred_region
        _
      $region16: #{encoder3d_forward.1} parent=11 // pred_fallthru
        _
      // Predicated region
      $region17: #{encoder3d_forward.1} parent=11 // pred_check
        %p253 = pneg %p83
      $region18: #{encoder3d_forward.1} parent=11 // pred_check_branch
        %255 = sbr.rel (%p253) target = $region20
      $region19: #{encoder3d_forward.1} parent=11 // pred_region
        _
      $region20: #{encoder3d_forward.1} parent=11 // pred_fallthru
        _
      // Predicated region
      $region21: #{encoder3d_forward.1} parent=11 // pred_check
        %p256 = pneg %p104
      $region22: #{encoder3d_forward.1} parent=11 // pred_check_branch
        %258 = sbr.rel (%p256) target = $region24
      $region23: #{encoder3d_forward.1} parent=11 // pred_region
        _
      $region24: #{encoder3d_forward.1} parent=11 // pred_fallthru
        _
      // Predicated region
      $region25: #{encoder3d_forward.1} parent=11 // pred_check
        %p259 = pneg %p125
      $region26: #{encoder3d_forward.1} parent=11 // pred_check_branch
        %261 = sbr.rel (%p259) target = $region28
      $region27: #{encoder3d_forward.1} parent=11 // pred_region
        _
      $region28: #{encoder3d_forward.1} parent=11 // pred_fallthru
        _
      // Predicated region
      $region29: #{encoder3d_forward.1} parent=11 // pred_check
        %p262 = pneg %p146
      $region30: #{encoder3d_forward.1} parent=11 // pred_check_branch
        %264 = sbr.rel (%p262) target = $region32
      $region31: #{encoder3d_forward.1} parent=11 // pred_region
        _
      $region32: #{encoder3d_forward.1} parent=11 // pred_fallthru
        _
      // Predicated region
      $region33: #{encoder3d_forward.1} parent=11 // pred_check
        %p265 = pneg %p167
      $region34: #{encoder3d_forward.1} parent=11 // pred_check_branch
        %267 = sbr.rel (%p265) target = $region36
      $region35: #{encoder3d_forward.1} parent=11 // pred_region
        _
      $region36: #{encoder3d_forward.1} parent=11 // pred_fallthru
        _
      // Predicated region
      $region37: #{encoder3d_forward.1} parent=11 // pred_check
        %p268 = pneg %p188
      $region38: #{encoder3d_forward.1} parent=11 // pred_check_branch
        %270 = sbr.rel (%p268) target = $region40
      $region39: #{encoder3d_forward.1} parent=11 // pred_region
        _
      $region40: #{encoder3d_forward.1} parent=11 // pred_fallthru
        _
      // Predicated region
      $region41: #{encoder3d_forward.1} parent=11 // pred_check
        %p271 = pneg %p209
      $region42: #{encoder3d_forward.1} parent=11 // pred_check_branch
        %273 = sbr.rel (%p271) target = $region44
      $region43: #{encoder3d_forward.1} parent=11 // pred_region
        _
      $region44: #{encoder3d_forward.1} parent=11 // pred_fallthru
        _
    $region12: #{encoder3d_forward.1} parent=5 // pred_fallthru
      _
    %p274 = scmp.lt.s32.totalorder %s15, 2
    // Predicated region
    $region45: #{encoder3d_forward.1} parent=5 // pred_check
      %p275 = pneg %p274
    $region46: #{encoder3d_forward.1} parent=5 // pred_check_branch
      %277 = sbr.rel (%p275) target = $region48
    $region47: #{encoder3d_forward.1} parent=5 // pred_region
      // Predicated region
      $region49: #{encoder3d_forward.1} parent=47 // pred_check
        %p278 = pneg %p35
      $region50: #{encoder3d_forward.1} parent=47 // pred_check_branch
        %280 = sbr.rel (%p278) target = $region52
      $region51: #{encoder3d_forward.1} parent=47 // pred_region
        %p281 = scmp.lt.s32.totalorder %s15, 1
        %s282 = scalar_select %p281, %s15, 1
        %s283 = smul.addr %s282, 18
        %s284 = smul.addr %s283, 4
        %s285 = scalar_lea.vmem %s0, %s284
      $region52: #{encoder3d_forward.1} parent=47 // pred_fallthru
        _
    $region48: #{encoder3d_forward.1} parent=5 // pred_fallthru
      _
    %p286 = scmp.le.s32.totalorder 1, %s15
    %p287 = scmp.lt.s32.totalorder %s15, 3
    %p288 = pnand %p286, %p287
    %p289 = pneg %p288
    // Predicated region
    $region53: #{encoder3d_forward.1} parent=5 // pred_check
      _
    $region54: #{encoder3d_forward.1} parent=5 // pred_check_branch
      %291 = sbr.rel (%p288) target = $region56
    $region55: #{encoder3d_forward.1} parent=5 // pred_region
      %s292 = ssub.s32 %s15, 1
      %p293 = scmp.lt.s32.totalorder %s20, 1
      %s294 = scalar_select %p293, %s20, 1
      %s295 = smul.addr %s294, 18
      %s296 = smul.addr %s295, 4
      %s297 = scalar_lea.vmem %s0, %s296
      %p298 = pneg %p41
      %p299 = pneg %p38
      %p300 = pneg %p62
      %p301 = pneg %p59
      %p302 = pneg %p83
      %p303 = pneg %p80
      %p304 = pneg %p104
      %p305 = pneg %p101
      %p306 = pneg %p125
      %p307 = pneg %p122
      %p308 = pneg %p146
      %p309 = pneg %p143
      %p310 = pneg %p167
      %p311 = pneg %p164
      %p312 = pneg %p188
      %p313 = pneg %p185
      %p314 = pneg %p209
      %p315 = pneg %p206
      %p316 = pneg %p235
      %p317 = pneg %p232
      %p318 = scmp.lt.s32.totalorder %s20, 1
      %s319 = scalar_select %p318, %s20, 1
      %s320 = smul.addr %s319, 2
      %s321 = smul.addr %s320, 8
      %s322 = scalar_lea.vmem %s9, %s321
      %p323 = scmp.lt.s32.totalorder %s20, 1
      %s324 = scalar_select %p323, %s20, 1
      %s325 = smul.addr %s324, 18
      %s326 = smul.addr %s325, 4
      %s327 = scalar_lea.vmem %s0, %s326
      %p328 = scmp.lt.s32.totalorder %s20, 1
      %s329 = scalar_select %p328, %s20, 1
      %s330 = smul.addr %s329, 2
      %s331 = smul.addr %s330, 8
      %s332 = scalar_lea.vmem %s9, %s331
      %v334 = vld [vmem:[%s327] sm:$0xf]
      %v335 = vld [vmem:[%s327 + $0x4] sm:$0xf]
      %v336 = vld [vmem:[%s327 + $0x8] sm:$0xf]
      %v337 = vld [vmem:[%s327 + $0xc] sm:$0xf]
      %v338 = vld [vmem:[%s327 + $0x10] sm:$0xf]
      %v339 = vld [vmem:[%s327 + $0x14] sm:$0xf]
      %v340 = vld [vmem:[%s327 + $0x18] sm:$0xf]
      %v341 = vld [vmem:[%s327 + $0x1c] sm:$0xf]
      %v342 = vld [vmem:[%s327 + $0x20] sm:$0xf]
      %v343 = vld [vmem:[%s327 + $0x24] sm:$0xf]
      %v344 = vld [vmem:[%s327 + $0x28] sm:$0xf]
      %v345 = vld [vmem:[%s327 + $0x2c] sm:$0xf]
      %v346 = vld [vmem:[%s327 + $0x30] sm:$0xf]
      %v347 = vld [vmem:[%s327 + $0x34] sm:$0xf]
      %v348 = vld [vmem:[%s327 + $0x38] sm:$0x7]
      %v349 = vld [vmem:[%s1] sm:$0xff]
      %v350 = vld [vmem:[%s1 + $0x8] sm:$0xff]
      %v351 = vld [vmem:[%s1 + $0x10] sm:$0xff]
      %v352 = vld [vmem:[%s1 + $0x18] sm:$0xff]
      %v353 = vld [vmem:[%s327 + $0x38] sm:$0xf]
      %s354 = scalar_lea.vmem %s1, 32
      %v355 = vld [vmem:[%s354] sm:$0xff]
      %v356 = vld [vmem:[%s354 + $0x8] sm:$0xff]
      %v357 = vld [vmem:[%s354 + $0x10] sm:$0xff]
      %v358 = vld [vmem:[%s354 + $0x18] sm:$0xff]
      %v374 = vunpack.c.l.b16 %v334
      %v375 = vunpack.c.l.b16 %v335
      %v376 = vunpack.c.l.b16 %v336
      %v377 = vunpack.c.l.b16 %v337
      %v378 = vunpack.c.l.b16 %v338
      %v379 = vunpack.c.l.b16 %v339
      %v380 = vunpack.c.l.b16 %v340
      %v381 = vunpack.c.l.b16 %v341
      %v382 = vunpack.c.l.b16 %v342
      %v383 = vunpack.c.l.b16 %v343
      %v384 = vunpack.c.l.b16 %v344
      %v385 = vunpack.c.l.b16 %v345
      %v386 = vunpack.c.l.b16 %v346
      %v387 = vunpack.c.l.b16 %v347
      %v388 = vunpack.c.l.b16 %v353
      %v389 = vpack.c.b16 %v375, %v374
      %v390 = vpack.c.b16 %v377, %v376
      %v391 = vpack.c.b16 %v379, %v378
      %v392 = vpack.c.b16 %v381, %v380
      %v393 = vpack.c.b16 %v383, %v382
      %v394 = vpack.c.b16 %v385, %v384
      %v395 = vpack.c.b16 %v387, %v386
      %v396 = vpack.c.b16 %v388, %v388
      %vm397 = vsmask.f32 7424
      %v399 = vshrl.u32 %v389, 16
      %v401 = vshll.u32 %v389, 16
      %v403 = vrot.slane %v401, 1
      %v404 = vor.u32 %v399, %v403
      %v406 = vshll.u32 %v390, 16
      %v408 = vrot.slane %v406, 1
      %v409 = vsel %vm397, %v404, %v408
      %v410 = vshrl.u32 %v390, 16
      %v412 = vor.u32 %v410, %v408
      %v414 = vshll.u32 %v391, 16
      %v416 = vrot.slane %v414, 1
      %v417 = vsel %vm397, %v412, %v416
      %v418 = vshrl.u32 %v391, 16
      %v420 = vor.u32 %v418, %v416
      %v422 = vshll.u32 %v392, 16
      %v424 = vrot.slane %v422, 1
      %v425 = vsel %vm397, %v420, %v424
      %v426 = vshrl.u32 %v392, 16
      %v428 = vor.u32 %v426, %v424
      %v430 = vshll.u32 %v393, 16
      %v432 = vrot.slane %v430, 1
      %v433 = vsel %vm397, %v428, %v432
      %v434 = vshrl.u32 %v393, 16
      %v436 = vor.u32 %v434, %v432
      %v438 = vshll.u32 %v394, 16
      %v440 = vrot.slane %v438, 1
      %v441 = vsel %vm397, %v436, %v440
      %v442 = vshrl.u32 %v394, 16
      %v444 = vor.u32 %v442, %v440
      %v446 = vshll.u32 %v395, 16
      %v448 = vrot.slane %v446, 1
      %v449 = vsel %vm397, %v444, %v448
      %v450 = vshrl.u32 %v395, 16
      %v452 = vor.u32 %v450, %v448
      %v454 = vshll.u32 %v396, 16
      %v456 = vrot.slane %v454, 1
      %v457 = vsel %vm397, %v452, %v456
      %v458 = vshrl.u32 %v396, 16
      %v460 = vor.u32 %v458, %v456
      %v465 = vunpack.c.l.b16 %v355
      %v466 = vunpack.c.h.b16 %v355
      %v467 = vunpack.c.l.b16 %v356
      %v468 = vunpack.c.h.b16 %v356
      %v469 = vunpack.c.l.b16 %v357
      %v470 = vunpack.c.h.b16 %v357
      %v471 = vunpack.c.l.b16 %v358
      %v472 = vunpack.c.h.b16 %v358
      %v473 = vpack.c.b16 %v467, %v465
      %v474 = vpack.c.b16 %v468, %v466
      %v475 = vpack.c.b16 %v471, %v469
      %v476 = vpack.c.b16 %v472, %v470
      %vm481 = vcmask 261120
      %v483 = vsel %vm481, %v409, 0
      %v486 = vsel %vm481, %v417, 0
      %v489 = vsel %vm481, %v425, 0
      %v492 = vsel %vm481, %v433, 0
      %v495 = vsel %vm481, %v441, 0
      %v498 = vsel %vm481, %v449, 0
      %v501 = vsel %vm481, %v457, 0
      %v504 = vsel %vm481, %v460, 0
      %506 = vmatprep.subr.bf16.mxu0 0
      %507 = vmatpush1.bf16.msra.mxu0 0
      %508 = vmatprep.subr.bf16.mxu0 0
      %509 = vmatpush1.bf16.msra.mxu0 0
      %510 = vmatprep.subr.bf16.mxu0 0
      %511 = vmatpush1.bf16.msra.mxu0 0
      %512 = vmatprep.subr.bf16.mxu0 0
      %513 = vmatpush1.bf16.msra.mxu0 0
      %514 = vmatprep.subr.bf16.mxu0 0
      %515 = vmatpush1.bf16.msra.mxu0 0
      %516 = vmatprep.subr.bf16.mxu0 0
      %517 = vmatpush1.bf16.msra.mxu0 0
      %518 = vmatprep.subr.bf16.mxu0 %v476
      %519 = vmatpush1.bf16.msra.mxu0 %v475
      %520 = vmatprep.subr.bf16.mxu0 %v474
      %521 = vmatpush1.bf16.msra.mxu0 %v473
      %522 = vmatprep.subr.bf16.mxu0 0
      %523 = vmatpush2.bf16.msra.mxu0 0
      %524 = vmatprep.subr.bf16.mxu0 0
      %525 = vmatpush2.bf16.msra.mxu0 0
      %526 = vmatprep.subr.bf16.mxu0 0
      %527 = vmatpush2.bf16.msra.mxu0 0
      %528 = vmatprep.subr.bf16.mxu0 0
      %529 = vmatpush2.bf16.msra.mxu0 0
      %530 = vmatprep.subr.bf16.mxu0 0
      %531 = vmatpush2.bf16.msra.mxu0 0
      %532 = vmatprep.subr.bf16.mxu0 0
      %533 = vmatpush2.bf16.msra.mxu0 0
      %534 = vmatprep.subr.bf16.mxu0 0
      %535 = vmatpush2.bf16.msra.mxu0 0
      %536 = vmatprep.subr.bf16.mxu0 0
      %537 = vmatpush2.bf16.msra.mxu0 0
      %538 = vmatprep.mubr.bf16.mxu0 0
      %539 = vmatmul.mubr.bf16.gmra.mxu0 %v483
      %v540 = vpop.f32.mrf.mxu0
      %v541 = vadd.f32 0.0, %v540
      %v542 = vpop.f32.mrf.mxu0
      %v543 = vadd.f32 0.0, %v542
      %v544 = vpop.f32.mrf.mxu0
      %v545 = vadd.f32 0.0, %v544
      %v546 = vpop.f32.mrf.mxu0
      %v547 = vadd.f32 0.0, %v546
      %548 = vmatprep.mubr.bf16.mxu0 0
      %549 = vmatmul.mubr.bf16.gmra.mxu0 %v486
      %v550 = vpop.f32.mrf.mxu0
      %v551 = vadd.f32 0.0, %v550
      %v552 = vpop.f32.mrf.mxu0
      %v553 = vadd.f32 0.0, %v552
      %v554 = vpop.f32.mrf.mxu0
      %v555 = vadd.f32 0.0, %v554
      %v556 = vpop.f32.mrf.mxu0
      %v557 = vadd.f32 0.0, %v556
      %558 = vmatprep.mubr.bf16.mxu0 0
      %559 = vmatmul.mubr.bf16.gmra.mxu0 %v489
      %v560 = vpop.f32.mrf.mxu0
      %v561 = vadd.f32 0.0, %v560
      %v562 = vpop.f32.mrf.mxu0
      %v563 = vadd.f32 0.0, %v562
      %v564 = vpop.f32.mrf.mxu0
      %v565 = vadd.f32 0.0, %v564
      %v566 = vpop.f32.mrf.mxu0
      %v567 = vadd.f32 0.0, %v566
      %568 = vmatprep.mubr.bf16.mxu0 0
      %569 = vmatmul.mubr.bf16.gmra.mxu0 %v492
      %v570 = vpop.f32.mrf.mxu0
      %v571 = vadd.f32 0.0, %v570
      %v572 = vpop.f32.mrf.mxu0
      %v573 = vadd.f32 0.0, %v572
      %v574 = vpop.f32.mrf.mxu0
      %v575 = vadd.f32 0.0, %v574
      %v576 = vpop.f32.mrf.mxu0
      %v577 = vadd.f32 0.0, %v576
      %578 = vmatprep.mubr.bf16.mxu0 0
      %579 = vmatmul.mubr.bf16.gmra.mxu0 %v495
      %v580 = vpop.f32.mrf.mxu0
      %v581 = vadd.f32 0.0, %v580
      %v582 = vpop.f32.mrf.mxu0
      %v583 = vadd.f32 0.0, %v582
      %v584 = vpop.f32.mrf.mxu0
      %v585 = vadd.f32 0.0, %v584
      %v586 = vpop.f32.mrf.mxu0
      %v587 = vadd.f32 0.0, %v586
      %588 = vmatprep.mubr.bf16.mxu0 0
      %589 = vmatmul.mubr.bf16.gmra.mxu0 %v498
      %v590 = vpop.f32.mrf.mxu0
      %v591 = vadd.f32 0.0, %v590
      %v592 = vpop.f32.mrf.mxu0
      %v593 = vadd.f32 0.0, %v592
      %v594 = vpop.f32.mrf.mxu0
      %v595 = vadd.f32 0.0, %v594
      %v596 = vpop.f32.mrf.mxu0
      %v597 = vadd.f32 0.0, %v596
      %598 = vmatprep.mubr.bf16.mxu0 0
      %599 = vmatmul.mubr.bf16.gmra.mxu0 %v501
      %v600 = vpop.f32.mrf.mxu0
      %v601 = vadd.f32 0.0, %v600
      %v602 = vpop.f32.mrf.mxu0
      %v603 = vadd.f32 0.0, %v602
      %v604 = vpop.f32.mrf.mxu0
      %v605 = vadd.f32 0.0, %v604
      %v606 = vpop.f32.mrf.mxu0
      %v607 = vadd.f32 0.0, %v606
      %608 = vmatprep.mubr.bf16.mxu0 0
      %609 = vmatmul.mubr.bf16.gmra.mxu0 %v504
      %v610 = vpop.f32.mrf.mxu0
      %v611 = vadd.f32 0.0, %v610
      %v612 = vpop.f32.mrf.mxu0
      %v613 = vadd.f32 0.0, %v612
      %v614 = vpop.f32.mrf.mxu0
      %v615 = vpop.f32.mrf.mxu0
      %616 = vdwg.mxu0
      %v618 = vunpack.c.l.b16 %v348
      %v619 = vpack.c.b16 %v618, %v618
      %v624 = vunpack.c.l.b16 %v349
      %v625 = vunpack.c.h.b16 %v349
      %v626 = vunpack.c.l.b16 %v350
      %v627 = vunpack.c.h.b16 %v350
      %v628 = vunpack.c.l.b16 %v351
      %v629 = vunpack.c.h.b16 %v351
      %v630 = vunpack.c.l.b16 %v352
      %v631 = vunpack.c.h.b16 %v352
      %v632 = vpack.c.b16 %v626, %v624
      %v633 = vpack.c.b16 %v627, %v625
      %v634 = vpack.c.b16 %v630, %v628
      %v635 = vpack.c.b16 %v631, %v629
      %v640 = vsel %vm481, %v389, 0
      %v642 = vsel %vm481, %v390, 0
      %v644 = vsel %vm481, %v391, 0
      %v646 = vsel %vm481, %v392, 0
      %v648 = vsel %vm481, %v393, 0
      %v650 = vsel %vm481, %v394, 0
      %v652 = vsel %vm481, %v395, 0
      %v655 = vsel %vm481, %v619, 0
      %657 = vmatprep.subr.bf16.mxu0 0
      %658 = vmatpush1.bf16.msra.mxu0 0
      %659 = vmatprep.subr.bf16.mxu0 0
      %660 = vmatpush1.bf16.msra.mxu0 0
      %661 = vmatprep.subr.bf16.mxu0 0
      %662 = vmatpush1.bf16.msra.mxu0 0
      %663 = vmatprep.subr.bf16.mxu0 0
      %664 = vmatpush1.bf16.msra.mxu0 0
      %665 = vmatprep.subr.bf16.mxu0 0
      %666 = vmatpush1.bf16.msra.mxu0 0
      %667 = vmatprep.subr.bf16.mxu0 0
      %668 = vmatpush1.bf16.msra.mxu0 0
      %669 = vmatprep.subr.bf16.mxu0 %v635
      %670 = vmatpush1.bf16.msra.mxu0 %v634
      %671 = vmatprep.subr.bf16.mxu0 %v633
      %672 = vmatpush1.bf16.msra.mxu0 %v632
      %673 = vmatprep.subr.bf16.mxu0 0
      %674 = vmatpush2.bf16.msra.mxu0 0
      %675 = vmatprep.subr.bf16.mxu0 0
      %676 = vmatpush2.bf16.msra.mxu0 0
      %677 = vmatprep.subr.bf16.mxu0 0
      %678 = vmatpush2.bf16.msra.mxu0 0
      %679 = vmatprep.subr.bf16.mxu0 0
      %680 = vmatpush2.bf16.msra.mxu0 0
      %681 = vmatprep.subr.bf16.mxu0 0
      %682 = vmatpush2.bf16.msra.mxu0 0
      %683 = vmatprep.subr.bf16.mxu0 0
      %684 = vmatpush2.bf16.msra.mxu0 0
      %685 = vmatprep.subr.bf16.mxu0 0
      %686 = vmatpush2.bf16.msra.mxu0 0
      %687 = vmatprep.subr.bf16.mxu0 0
      %688 = vmatpush2.bf16.msra.mxu0 0
      %689 = vmatprep.mubr.bf16.mxu0 0
      %690 = vmatmul.mubr.bf16.gmra.mxu0 %v640
      %v691 = vpop.f32.mrf.mxu0
      %v692 = vadd.f32 %v541, %v691
      %v693 = vpop.f32.mrf.mxu0
      %v694 = vadd.f32 %v543, %v693
      %v695 = vpop.f32.mrf.mxu0
      %v696 = vadd.f32 %v545, %v695
      %v697 = vpop.f32.mrf.mxu0
      %v698 = vadd.f32 %v547, %v697
      %699 = vmatprep.mubr.bf16.mxu0 0
      %700 = vmatmul.mubr.bf16.gmra.mxu0 %v642
      %v701 = vpop.f32.mrf.mxu0
      %v702 = vadd.f32 %v551, %v701
      %v703 = vpop.f32.mrf.mxu0
      %v704 = vadd.f32 %v553, %v703
      %v705 = vpop.f32.mrf.mxu0
      %v706 = vadd.f32 %v555, %v705
      %v707 = vpop.f32.mrf.mxu0
      %v708 = vadd.f32 %v557, %v707
      %709 = vmatprep.mubr.bf16.mxu0 0
      %710 = vmatmul.mubr.bf16.gmra.mxu0 %v644
      %v711 = vpop.f32.mrf.mxu0
      %v712 = vadd.f32 %v561, %v711
      %v713 = vpop.f32.mrf.mxu0
      %v714 = vadd.f32 %v563, %v713
      %v715 = vpop.f32.mrf.mxu0
      %v716 = vadd.f32 %v565, %v715
      %v717 = vpop.f32.mrf.mxu0
      %v718 = vadd.f32 %v567, %v717
      %719 = vmatprep.mubr.bf16.mxu0 0
      %720 = vmatmul.mubr.bf16.gmra.mxu0 %v646
      %v721 = vpop.f32.mrf.mxu0
      %v722 = vadd.f32 %v571, %v721
      %v723 = vpop.f32.mrf.mxu0
      %v724 = vadd.f32 %v573, %v723
      %v725 = vpop.f32.mrf.mxu0
      %v726 = vadd.f32 %v575, %v725
      %v727 = vpop.f32.mrf.mxu0
      %v728 = vadd.f32 %v577, %v727
      %729 = vmatprep.mubr.bf16.mxu0 0
      %730 = vmatmul.mubr.bf16.gmra.mxu0 %v648
      %v731 = vpop.f32.mrf.mxu0
      %v732 = vadd.f32 %v581, %v731
      %v733 = vpop.f32.mrf.mxu0
      %v734 = vadd.f32 %v583, %v733
      %v735 = vpop.f32.mrf.mxu0
      %v736 = vadd.f32 %v585, %v735
      %v737 = vpop.f32.mrf.mxu0
      %v738 = vadd.f32 %v587, %v737
      %739 = vmatprep.mubr.bf16.mxu0 0
      %740 = vmatmul.mubr.bf16.gmra.mxu0 %v650
      %v741 = vpop.f32.mrf.mxu0
      %v742 = vadd.f32 %v591, %v741
      %v743 = vpop.f32.mrf.mxu0
      %v744 = vadd.f32 %v593, %v743
      %v745 = vpop.f32.mrf.mxu0
      %v746 = vadd.f32 %v595, %v745
      %v747 = vpop.f32.mrf.mxu0
      %v748 = vadd.f32 %v597, %v747
      %749 = vmatprep.mubr.bf16.mxu0 0
      %750 = vmatmul.mubr.bf16.gmra.mxu0 %v652
      %v751 = vpop.f32.mrf.mxu0
      %v752 = vadd.f32 %v601, %v751
      %v753 = vpop.f32.mrf.mxu0
      %v754 = vadd.f32 %v603, %v753
      %v755 = vpop.f32.mrf.mxu0
      %v756 = vadd.f32 %v605, %v755
      %v757 = vpop.f32.mrf.mxu0
      %v758 = vadd.f32 %v607, %v757
      %759 = vmatprep.mubr.bf16.mxu0 0
      %760 = vmatmul.mubr.bf16.gmra.mxu0 %v655
      %v761 = vpop.f32.mrf.mxu0
      %v762 = vadd.f32 %v611, %v761
      %v763 = vpop.f32.mrf.mxu0
      %v764 = vadd.f32 %v613, %v763
      %v765 = vpop.f32.mrf.mxu0
      %v766 = vpop.f32.mrf.mxu0
      %767 = vdwg.mxu0
      %v768 = vld [vmem:[%s327] sm:$0xe]
      %s769 = scalar_lea.vmem %s1, 64
      %v770 = vld [vmem:[%s769] sm:$0xff]
      %v771 = vld [vmem:[%s769 + $0x8] sm:$0xff]
      %v772 = vld [vmem:[%s769 + $0x10] sm:$0xff]
      %v773 = vld [vmem:[%s769 + $0x18] sm:$0xff]
      %v775 = vunpack.c.l.b16 %v768
      %v776 = vpack.c.b16 %v375, %v775
      %vm777 = vcmask 1046528
      %v778 = vrot.slane %v776, 1
      %v779 = vrot.slane %v390, 1
      %v780 = vsel %vm777, %v778, %v779
      %v781 = vrot.slane %v391, 1
      %v782 = vsel %vm777, %v779, %v781
      %v783 = vrot.slane %v392, 1
      %v784 = vsel %vm777, %v781, %v783
      %v785 = vrot.slane %v393, 1
      %v786 = vsel %vm777, %v783, %v785
      %v787 = vrot.slane %v394, 1
      %v788 = vsel %vm777, %v785, %v787
      %v789 = vrot.slane %v395, 1
      %v790 = vsel %vm777, %v787, %v789
      %v791 = vrot.slane %v396, 1
      %v792 = vsel %vm777, %v789, %v791
      %v797 = vunpack.c.l.b16 %v770
      %v798 = vunpack.c.h.b16 %v770
      %v799 = vunpack.c.l.b16 %v771
      %v800 = vunpack.c.h.b16 %v771
      %v801 = vunpack.c.l.b16 %v772
      %v802 = vunpack.c.h.b16 %v772
      %v803 = vunpack.c.l.b16 %v773
      %v804 = vunpack.c.h.b16 %v773
      %v805 = vpack.c.b16 %v799, %v797
      %v806 = vpack.c.b16 %v800, %v798
      %v807 = vpack.c.b16 %v803, %v801
      %v808 = vpack.c.b16 %v804, %v802
      %v814 = vsel %vm481, %v780, 0
      %v817 = vsel %vm481, %v782, 0
      %v820 = vsel %vm481, %v784, 0
      %v823 = vsel %vm481, %v786, 0
      %v826 = vsel %vm481, %v788, 0
      %v829 = vsel %vm481, %v790, 0
      %v832 = vsel %vm481, %v792, 0
      %v835 = vsel %vm481, %v791, 0
      %837 = vmatprep.subr.bf16.mxu0 0
      %838 = vmatpush1.bf16.msra.mxu0 0
      %839 = vmatprep.subr.bf16.mxu0 0
      %840 = vmatpush1.bf16.msra.mxu0 0
      %841 = vmatprep.subr.bf16.mxu0 0
      %842 = vmatpush1.bf16.msra.mxu0 0
      %843 = vmatprep.subr.bf16.mxu0 0
      %844 = vmatpush1.bf16.msra.mxu0 0
      %845 = vmatprep.subr.bf16.mxu0 0
      %846 = vmatpush1.bf16.msra.mxu0 0
      %847 = vmatprep.subr.bf16.mxu0 0
      %848 = vmatpush1.bf16.msra.mxu0 0
      %849 = vmatprep.subr.bf16.mxu0 %v808
      %850 = vmatpush1.bf16.msra.mxu0 %v807
      %851 = vmatprep.subr.bf16.mxu0 %v806
      %852 = vmatpush1.bf16.msra.mxu0 %v805
      %853 = vmatprep.subr.bf16.mxu0 0
      %854 = vmatpush2.bf16.msra.mxu0 0
      %855 = vmatprep.subr.bf16.mxu0 0
      %856 = vmatpush2.bf16.msra.mxu0 0
      %857 = vmatprep.subr.bf16.mxu0 0
      %858 = vmatpush2.bf16.msra.mxu0 0
      %859 = vmatprep.subr.bf16.mxu0 0
      %860 = vmatpush2.bf16.msra.mxu0 0
      %861 = vmatprep.subr.bf16.mxu0 0
      %862 = vmatpush2.bf16.msra.mxu0 0
      %863 = vmatprep.subr.bf16.mxu0 0
      %864 = vmatpush2.bf16.msra.mxu0 0
      %865 = vmatprep.subr.bf16.mxu0 0
      %866 = vmatpush2.bf16.msra.mxu0 0
      %867 = vmatprep.subr.bf16.mxu0 0
      %868 = vmatpush2.bf16.msra.mxu0 0
      %869 = vmatprep.mubr.bf16.mxu0 0
      %870 = vmatmul.mubr.bf16.gmra.mxu0 %v814
      %v871 = vpop.f32.mrf.mxu0
      %v872 = vadd.f32 0.0, %v871
      %v873 = vpop.f32.mrf.mxu0
      %v874 = vadd.f32 0.0, %v873
      %v875 = vpop.f32.mrf.mxu0
      %v876 = vadd.f32 0.0, %v875
      %v877 = vpop.f32.mrf.mxu0
      %v878 = vadd.f32 0.0, %v877
      %879 = vmatprep.mubr.bf16.mxu0 0
      %880 = vmatmul.mubr.bf16.gmra.mxu0 %v817
      %v881 = vpop.f32.mrf.mxu0
      %v882 = vadd.f32 0.0, %v881
      %v883 = vpop.f32.mrf.mxu0
      %v884 = vadd.f32 0.0, %v883
      %v885 = vpop.f32.mrf.mxu0
      %v886 = vadd.f32 0.0, %v885
      %v887 = vpop.f32.mrf.mxu0
      %v888 = vadd.f32 0.0, %v887
      %889 = vmatprep.mubr.bf16.mxu0 0
      %890 = vmatmul.mubr.bf16.gmra.mxu0 %v820
      %v891 = vpop.f32.mrf.mxu0
      %v892 = vadd.f32 0.0, %v891
      %v893 = vpop.f32.mrf.mxu0
      %v894 = vadd.f32 0.0, %v893
      %v895 = vpop.f32.mrf.mxu0
      %v896 = vadd.f32 0.0, %v895
      %v897 = vpop.f32.mrf.mxu0
      %v898 = vadd.f32 0.0, %v897
      %899 = vmatprep.mubr.bf16.mxu0 0
      %900 = vmatmul.mubr.bf16.gmra.mxu0 %v823
      %v901 = vpop.f32.mrf.mxu0
      %v902 = vadd.f32 0.0, %v901
      %v903 = vpop.f32.mrf.mxu0
      %v904 = vadd.f32 0.0, %v903
      %v905 = vpop.f32.mrf.mxu0
      %v906 = vadd.f32 0.0, %v905
      %v907 = vpop.f32.mrf.mxu0
      %v908 = vadd.f32 0.0, %v907
      %909 = vmatprep.mubr.bf16.mxu0 0
      %910 = vmatmul.mubr.bf16.gmra.mxu0 %v826
      %v911 = vpop.f32.mrf.mxu0
      %v912 = vadd.f32 0.0, %v911
      %v913 = vpop.f32.mrf.mxu0
      %v914 = vadd.f32 0.0, %v913
      %v915 = vpop.f32.mrf.mxu0
      %v916 = vadd.f32 0.0, %v915
      %v917 = vpop.f32.mrf.mxu0
      %v918 = vadd.f32 0.0, %v917
      %919 = vmatprep.mubr.bf16.mxu0 0
      %920 = vmatmul.mubr.bf16.gmra.mxu0 %v829
      %v921 = vpop.f32.mrf.mxu0
      %v922 = vadd.f32 0.0, %v921
      %v923 = vpop.f32.mrf.mxu0
      %v924 = vadd.f32 0.0, %v923
      %v925 = vpop.f32.mrf.mxu0
      %v926 = vadd.f32 0.0, %v925
      %v927 = vpop.f32.mrf.mxu0
      %v928 = vadd.f32 0.0, %v927
      %929 = vmatprep.mubr.bf16.mxu0 0
      %930 = vmatmul.mubr.bf16.gmra.mxu0 %v832
      %v931 = vpop.f32.mrf.mxu0
      %v932 = vadd.f32 0.0, %v931
      %v933 = vpop.f32.mrf.mxu0
      %v934 = vadd.f32 0.0, %v933
      %v935 = vpop.f32.mrf.mxu0
      %v936 = vadd.f32 0.0, %v935
      %v937 = vpop.f32.mrf.mxu0
      %v938 = vadd.f32 0.0, %v937
      %939 = vmatprep.mubr.bf16.mxu0 0
      %940 = vmatmul.mubr.bf16.gmra.mxu0 %v835
      %v941 = vpop.f32.mrf.mxu0
      %v942 = vadd.f32 0.0, %v941
      %v943 = vpop.f32.mrf.mxu0
      %v944 = vadd.f32 0.0, %v943
      %v945 = vpop.f32.mrf.mxu0
      %v946 = vpop.f32.mrf.mxu0
      %947 = vdwg.mxu0
      %v948 = vadd.f32 %v692, %v872
      %v949 = vadd.f32 %v694, %v874
      %v950 = vadd.f32 %v696, %v876
      %v951 = vadd.f32 %v698, %v878
      %v952 = vadd.f32 %v702, %v882
      %v953 = vadd.f32 %v704, %v884
      %v954 = vadd.f32 %v706, %v886
      %v955 = vadd.f32 %v708, %v888
      %v956 = vadd.f32 %v712, %v892
      %v957 = vadd.f32 %v714, %v894
      %v958 = vadd.f32 %v716, %v896
      %v959 = vadd.f32 %v718, %v898
      %v960 = vadd.f32 %v722, %v902
      %v961 = vadd.f32 %v724, %v904
      %v962 = vadd.f32 %v726, %v906
      %v963 = vadd.f32 %v728, %v908
      %v964 = vadd.f32 %v732, %v912
      %v965 = vadd.f32 %v734, %v914
      %v966 = vadd.f32 %v736, %v916
      %v967 = vadd.f32 %v738, %v918
      %v968 = vadd.f32 %v742, %v922
      %v969 = vadd.f32 %v744, %v924
      %v970 = vadd.f32 %v746, %v926
      %v971 = vadd.f32 %v748, %v928
      %v972 = vadd.f32 %v752, %v932
      %v973 = vadd.f32 %v754, %v934
      %v974 = vadd.f32 %v756, %v936
      %v975 = vadd.f32 %v758, %v938
      %v976 = vadd.f32 %v762, %v942
      %v977 = vadd.f32 %v764, %v944
      %v978 = vld [vmem:[%s327 + $0x4] sm:$0xc]
      %v979 = vld [vmem:[%s327 + $0x8] sm:$0xf]
      %v980 = vld [vmem:[%s327 + $0xc] sm:$0xf]
      %v981 = vld [vmem:[%s327 + $0x10] sm:$0xf]
      %v982 = vld [vmem:[%s327 + $0x14] sm:$0xf]
      %v983 = vld [vmem:[%s327 + $0x18] sm:$0xf]
      %v984 = vld [vmem:[%s327 + $0x1c] sm:$0xf]
      %v985 = vld [vmem:[%s327 + $0x20] sm:$0xf]
      %v986 = vld [vmem:[%s327 + $0x24] sm:$0xf]
      %v987 = vld [vmem:[%s327 + $0x28] sm:$0xf]
      %v988 = vld [vmem:[%s327 + $0x2c] sm:$0xf]
      %v989 = vld [vmem:[%s327 + $0x30] sm:$0xf]
      %v990 = vld [vmem:[%s327 + $0x34] sm:$0xf]
      %v991 = vld [vmem:[%s327 + $0x38] sm:$0xf]
      %v992 = vld [vmem:[%s327 + $0x3c] sm:$0xf]
      %v993 = vld [vmem:[%s327 + $0x40] sm:$0x1]
      %s994 = scalar_lea.vmem %s1, 96
      %v995 = vld [vmem:[%s994] sm:$0xff]
      %v996 = vld [vmem:[%s994 + $0x8] sm:$0xff]
      %v997 = vld [vmem:[%s994 + $0x10] sm:$0xff]
      %v998 = vld [vmem:[%s994 + $0x18] sm:$0xff]
      %v1015 = vunpack.c.l.b16 %v978
      %v1016 = vunpack.c.l.b16 %v979
      %v1017 = vunpack.c.l.b16 %v980
      %v1018 = vunpack.c.l.b16 %v981
      %v1019 = vunpack.c.l.b16 %v982
      %v1020 = vunpack.c.l.b16 %v983
      %v1021 = vunpack.c.l.b16 %v984
      %v1022 = vunpack.c.l.b16 %v985
      %v1023 = vunpack.c.l.b16 %v986
      %v1024 = vunpack.c.l.b16 %v987
      %v1025 = vunpack.c.l.b16 %v988
      %v1026 = vunpack.c.l.b16 %v989
      %v1027 = vunpack.c.l.b16 %v990
      %v1028 = vunpack.c.l.b16 %v991
      %v1029 = vunpack.c.l.b16 %v992
      %v1030 = vunpack.c.l.b16 %v993
      %v1031 = vpack.c.b16 %v1016, %v1015
      %v1032 = vpack.c.b16 %v1018, %v1017
      %v1033 = vpack.c.b16 %v1020, %v1019
      %v1034 = vpack.c.b16 %v1022, %v1021
      %v1035 = vpack.c.b16 %v1024, %v1023
      %v1036 = vpack.c.b16 %v1026, %v1025
      %v1037 = vpack.c.b16 %v1028, %v1027
      %v1038 = vpack.c.b16 %v1030, %v1029
      %vm1039 = vcmask 1045504
      %v1040 = vrot.slane %v1031, 2
      %v1041 = vrot.slane %v1032, 2
      %v1042 = vsel %vm1039, %v1040, %v1041
      %v1043 = vrot.slane %v1033, 2
      %v1044 = vsel %vm1039, %v1041, %v1043
      %v1045 = vrot.slane %v1034, 2
      %v1046 = vsel %vm1039, %v1043, %v1045
      %v1047 = vrot.slane %v1035, 2
      %v1048 = vsel %vm1039, %v1045, %v1047
      %v1049 = vrot.slane %v1036, 2
      %v1050 = vsel %vm1039, %v1047, %v1049
      %v1051 = vrot.slane %v1037, 2
      %v1052 = vsel %vm1039, %v1049, %v1051
      %v1053 = vrot.slane %v1038, 2
      %v1054 = vsel %vm1039, %v1051, %v1053
      %v1059 = vunpack.c.l.b16 %v995
      %v1060 = vunpack.c.h.b16 %v995
      %v1061 = vunpack.c.l.b16 %v996
      %v1062 = vunpack.c.h.b16 %v996
      %v1063 = vunpack.c.l.b16 %v997
      %v1064 = vunpack.c.h.b16 %v997
      %v1065 = vunpack.c.l.b16 %v998
      %v1066 = vunpack.c.h.b16 %v998
      %v1067 = vpack.c.b16 %v1061, %v1059
      %v1068 = vpack.c.b16 %v1062, %v1060
      %v1069 = vpack.c.b16 %v1065, %v1063
      %v1070 = vpack.c.b16 %v1066, %v1064
      %v1076 = vsel %vm481, %v1042, 0
      %v1079 = vsel %vm481, %v1044, 0
      %v1082 = vsel %vm481, %v1046, 0
      %v1085 = vsel %vm481, %v1048, 0
      %v1088 = vsel %vm481, %v1050, 0
      %v1091 = vsel %vm481, %v1052, 0
      %v1094 = vsel %vm481, %v1054, 0
      %v1097 = vsel %vm481, %v1053, 0
      %1099 = vmatprep.subr.bf16.mxu0 0
      %1100 = vmatpush1.bf16.msra.mxu0 0
      %1101 = vmatprep.subr.bf16.mxu0 0
      %1102 = vmatpush1.bf16.msra.mxu0 0
      %1103 = vmatprep.subr.bf16.mxu0 0
      %1104 = vmatpush1.bf16.msra.mxu0 0
      %1105 = vmatprep.subr.bf16.mxu0 0
      %1106 = vmatpush1.bf16.msra.mxu0 0
      %1107 = vmatprep.subr.bf16.mxu0 0
      %1108 = vmatpush1.bf16.msra.mxu0 0
      %1109 = vmatprep.subr.bf16.mxu0 0
      %1110 = vmatpush1.bf16.msra.mxu0 0
      %1111 = vmatprep.subr.bf16.mxu0 %v1070
      %1112 = vmatpush1.bf16.msra.mxu0 %v1069
      %1113 = vmatprep.subr.bf16.mxu0 %v1068
      %1114 = vmatpush1.bf16.msra.mxu0 %v1067
      %1115 = vmatprep.subr.bf16.mxu0 0
      %1116 = vmatpush2.bf16.msra.mxu0 0
      %1117 = vmatprep.subr.bf16.mxu0 0
      %1118 = vmatpush2.bf16.msra.mxu0 0
      %1119 = vmatprep.subr.bf16.mxu0 0
      %1120 = vmatpush2.bf16.msra.mxu0 0
      %1121 = vmatprep.subr.bf16.mxu0 0
      %1122 = vmatpush2.bf16.msra.mxu0 0
      %1123 = vmatprep.subr.bf16.mxu0 0
      %1124 = vmatpush2.bf16.msra.mxu0 0
      %1125 = vmatprep.subr.bf16.mxu0 0
      %1126 = vmatpush2.bf16.msra.mxu0 0
      %1127 = vmatprep.subr.bf16.mxu0 0
      %1128 = vmatpush2.bf16.msra.mxu0 0
      %1129 = vmatprep.subr.bf16.mxu0 0
      %1130 = vmatpush2.bf16.msra.mxu0 0
      %1131 = vmatprep.mubr.bf16.mxu0 0
      %1132 = vmatmul.mubr.bf16.gmra.mxu0 %v1076
      %v1133 = vpop.f32.mrf.mxu0
      %v1134 = vadd.f32 0.0, %v1133
      %v1135 = vpop.f32.mrf.mxu0
      %v1136 = vadd.f32 0.0, %v1135
      %v1137 = vpop.f32.mrf.mxu0
      %v1138 = vadd.f32 0.0, %v1137
      %v1139 = vpop.f32.mrf.mxu0
      %v1140 = vadd.f32 0.0, %v1139
      %1141 = vmatprep.mubr.bf16.mxu0 0
      %1142 = vmatmul.mubr.bf16.gmra.mxu0 %v1079
      %v1143 = vpop.f32.mrf.mxu0
      %v1144 = vadd.f32 0.0, %v1143
      %v1145 = vpop.f32.mrf.mxu0
      %v1146 = vadd.f32 0.0, %v1145
      %v1147 = vpop.f32.mrf.mxu0
      %v1148 = vadd.f32 0.0, %v1147
      %v1149 = vpop.f32.mrf.mxu0
      %v1150 = vadd.f32 0.0, %v1149
      %1151 = vmatprep.mubr.bf16.mxu0 0
      %1152 = vmatmul.mubr.bf16.gmra.mxu0 %v1082
      %v1153 = vpop.f32.mrf.mxu0
      %v1154 = vadd.f32 0.0, %v1153
      %v1155 = vpop.f32.mrf.mxu0
      %v1156 = vadd.f32 0.0, %v1155
      %v1157 = vpop.f32.mrf.mxu0
      %v1158 = vadd.f32 0.0, %v1157
      %v1159 = vpop.f32.mrf.mxu0
      %v1160 = vadd.f32 0.0, %v1159
      %1161 = vmatprep.mubr.bf16.mxu0 0
      %1162 = vmatmul.mubr.bf16.gmra.mxu0 %v1085
      %v1163 = vpop.f32.mrf.mxu0
      %v1164 = vadd.f32 0.0, %v1163
      %v1165 = vpop.f32.mrf.mxu0
      %v1166 = vadd.f32 0.0, %v1165
      %v1167 = vpop.f32.mrf.mxu0
      %v1168 = vadd.f32 0.0, %v1167
      %v1169 = vpop.f32.mrf.mxu0
      %v1170 = vadd.f32 0.0, %v1169
      %1171 = vmatprep.mubr.bf16.mxu0 0
      %1172 = vmatmul.mubr.bf16.gmra.mxu0 %v1088
      %v1173 = vpop.f32.mrf.mxu0
      %v1174 = vadd.f32 0.0, %v1173
      %v1175 = vpop.f32.mrf.mxu0
      %v1176 = vadd.f32 0.0, %v1175
      %v1177 = vpop.f32.mrf.mxu0
      %v1178 = vadd.f32 0.0, %v1177
      %v1179 = vpop.f32.mrf.mxu0
      %v1180 = vadd.f32 0.0, %v1179
      %1181 = vmatprep.mubr.bf16.mxu0 0
      %1182 = vmatmul.mubr.bf16.gmra.mxu0 %v1091
      %v1183 = vpop.f32.mrf.mxu0
      %v1184 = vadd.f32 0.0, %v1183
      %v1185 = vpop.f32.mrf.mxu0
      %v1186 = vadd.f32 0.0, %v1185
      %v1187 = vpop.f32.mrf.mxu0
      %v1188 = vadd.f32 0.0, %v1187
      %v1189 = vpop.f32.mrf.mxu0
      %v1190 = vadd.f32 0.0, %v1189
      %1191 = vmatprep.mubr.bf16.mxu0 0
      %1192 = vmatmul.mubr.bf16.gmra.mxu0 %v1094
      %v1193 = vpop.f32.mrf.mxu0
      %v1194 = vadd.f32 0.0, %v1193
      %v1195 = vpop.f32.mrf.mxu0
      %v1196 = vadd.f32 0.0, %v1195
      %v1197 = vpop.f32.mrf.mxu0
      %v1198 = vadd.f32 0.0, %v1197
      %v1199 = vpop.f32.mrf.mxu0
      %v1200 = vadd.f32 0.0, %v1199
      %1201 = vmatprep.mubr.bf16.mxu0 0
      %1202 = vmatmul.mubr.bf16.gmra.mxu0 %v1097
      %v1203 = vpop.f32.mrf.mxu0
      %v1204 = vadd.f32 0.0, %v1203
      %v1205 = vpop.f32.mrf.mxu0
      %v1206 = vadd.f32 0.0, %v1205
      %v1207 = vpop.f32.mrf.mxu0
      %v1208 = vpop.f32.mrf.mxu0
      %1209 = vdwg.mxu0
      %v1210 = vadd.f32 %v948, %v1134
      %v1211 = vadd.f32 %v949, %v1136
      %v1212 = vadd.f32 %v950, %v1138
      %v1213 = vadd.f32 %v951, %v1140
      %v1214 = vadd.f32 %v952, %v1144
      %v1215 = vadd.f32 %v953, %v1146
      %v1216 = vadd.f32 %v954, %v1148
      %v1217 = vadd.f32 %v955, %v1150
      %v1218 = vadd.f32 %v956, %v1154
      %v1219 = vadd.f32 %v957, %v1156
      %v1220 = vadd.f32 %v958, %v1158
      %v1221 = vadd.f32 %v959, %v1160
      %v1222 = vadd.f32 %v960, %v1164
      %v1223 = vadd.f32 %v961, %v1166
      %v1224 = vadd.f32 %v962, %v1168
      %v1225 = vadd.f32 %v963, %v1170
      %v1226 = vadd.f32 %v964, %v1174
      %v1227 = vadd.f32 %v965, %v1176
      %v1228 = vadd.f32 %v966, %v1178
      %v1229 = vadd.f32 %v967, %v1180
      %v1230 = vadd.f32 %v968, %v1184
      %v1231 = vadd.f32 %v969, %v1186
      %v1232 = vadd.f32 %v970, %v1188
      %v1233 = vadd.f32 %v971, %v1190
      %v1234 = vadd.f32 %v972, %v1194
      %v1235 = vadd.f32 %v973, %v1196
      %v1236 = vadd.f32 %v974, %v1198
      %v1237 = vadd.f32 %v975, %v1200
      %v1238 = vadd.f32 %v976, %v1204
      %v1239 = vadd.f32 %v977, %v1206
      %v1240 = vld [vmem:[%s327 + $0x40] sm:$0x3]
      %s1241 = scalar_lea.vmem %s1, 128
      %v1242 = vld [vmem:[%s1241] sm:$0xff]
      %v1243 = vld [vmem:[%s1241 + $0x8] sm:$0xff]
      %v1244 = vld [vmem:[%s1241 + $0x10] sm:$0xff]
      %v1245 = vld [vmem:[%s1241 + $0x18] sm:$0xff]
      %v1247 = vunpack.c.l.b16 %v1240
      %v1248 = vpack.c.b16 %v1247, %v1029
      %vm1249 = vsmask.f32 5376
      %v1251 = vshrl.u32 %v1031, 16
      %v1253 = vrot.slane %v1251, 2
      %v1254 = vshll.u32 %v1031, 16
      %v1256 = vrot.slane %v1254, 3
      %v1257 = vor.u32 %v1253, %v1256
      %v1259 = vshrl.u32 %v1032, 16
      %v1261 = vrot.slane %v1259, 2
      %v1262 = vshll.u32 %v1032, 16
      %v1264 = vrot.slane %v1262, 3
      %v1265 = vor.u32 %v1261, %v1264
      %v1266 = vsel %vm1249, %v1257, %v1265
      %v1268 = vshrl.u32 %v1033, 16
      %v1270 = vrot.slane %v1268, 2
      %v1271 = vshll.u32 %v1033, 16
      %v1273 = vrot.slane %v1271, 3
      %v1274 = vor.u32 %v1270, %v1273
      %v1275 = vsel %vm1249, %v1265, %v1274
      %v1277 = vshrl.u32 %v1034, 16
      %v1279 = vrot.slane %v1277, 2
      %v1280 = vshll.u32 %v1034, 16
      %v1282 = vrot.slane %v1280, 3
      %v1283 = vor.u32 %v1279, %v1282
      %v1284 = vsel %vm1249, %v1274, %v1283
      %v1286 = vshrl.u32 %v1035, 16
      %v1288 = vrot.slane %v1286, 2
      %v1289 = vshll.u32 %v1035, 16
      %v1291 = vrot.slane %v1289, 3
      %v1292 = vor.u32 %v1288, %v1291
      %v1293 = vsel %vm1249, %v1283, %v1292
      %v1295 = vshrl.u32 %v1036, 16
      %v1297 = vrot.slane %v1295, 2
      %v1298 = vshll.u32 %v1036, 16
      %v1300 = vrot.slane %v1298, 3
      %v1301 = vor.u32 %v1297, %v1300
      %v1302 = vsel %vm1249, %v1292, %v1301
      %v1304 = vshrl.u32 %v1037, 16
      %v1306 = vrot.slane %v1304, 2
      %v1307 = vshll.u32 %v1037, 16
      %v1309 = vrot.slane %v1307, 3
      %v1310 = vor.u32 %v1306, %v1309
      %v1311 = vsel %vm1249, %v1301, %v1310
      %v1313 = vshrl.u32 %v1248, 16
      %v1315 = vrot.slane %v1313, 2
      %v1316 = vshll.u32 %v1248, 16
      %v1318 = vrot.slane %v1316, 3
      %v1319 = vor.u32 %v1315, %v1318
      %v1320 = vsel %vm1249, %v1310, %v1319
      %v1325 = vunpack.c.l.b16 %v1242
      %v1326 = vunpack.c.h.b16 %v1242
      %v1327 = vunpack.c.l.b16 %v1243
      %v1328 = vunpack.c.h.b16 %v1243
      %v1329 = vunpack.c.l.b16 %v1244
      %v1330 = vunpack.c.h.b16 %v1244
      %v1331 = vunpack.c.l.b16 %v1245
      %v1332 = vunpack.c.h.b16 %v1245
      %v1333 = vpack.c.b16 %v1327, %v1325
      %v1334 = vpack.c.b16 %v1328, %v1326
      %v1335 = vpack.c.b16 %v1331, %v1329
      %v1336 = vpack.c.b16 %v1332, %v1330
      %v1342 = vsel %vm481, %v1266, 0
      %v1345 = vsel %vm481, %v1275, 0
      %v1348 = vsel %vm481, %v1284, 0
      %v1351 = vsel %vm481, %v1293, 0
      %v1354 = vsel %vm481, %v1302, 0
      %v1357 = vsel %vm481, %v1311, 0
      %v1360 = vsel %vm481, %v1320, 0
      %v1363 = vsel %vm481, %v1319, 0
      %1365 = vmatprep.subr.bf16.mxu0 0
      %1366 = vmatpush1.bf16.msra.mxu0 0
      %1367 = vmatprep.subr.bf16.mxu0 0
      %1368 = vmatpush1.bf16.msra.mxu0 0
      %1369 = vmatprep.subr.bf16.mxu0 0
      %1370 = vmatpush1.bf16.msra.mxu0 0
      %1371 = vmatprep.subr.bf16.mxu0 0
      %1372 = vmatpush1.bf16.msra.mxu0 0
      %1373 = vmatprep.subr.bf16.mxu0 0
      %1374 = vmatpush1.bf16.msra.mxu0 0
      %1375 = vmatprep.subr.bf16.mxu0 0
      %1376 = vmatpush1.bf16.msra.mxu0 0
      %1377 = vmatprep.subr.bf16.mxu0 %v1336
      %1378 = vmatpush1.bf16.msra.mxu0 %v1335
      %1379 = vmatprep.subr.bf16.mxu0 %v1334
      %1380 = vmatpush1.bf16.msra.mxu0 %v1333
      %1381 = vmatprep.subr.bf16.mxu0 0
      %1382 = vmatpush2.bf16.msra.mxu0 0
      %1383 = vmatprep.subr.bf16.mxu0 0
      %1384 = vmatpush2.bf16.msra.mxu0 0
      %1385 = vmatprep.subr.bf16.mxu0 0
      %1386 = vmatpush2.bf16.msra.mxu0 0
      %1387 = vmatprep.subr.bf16.mxu0 0
      %1388 = vmatpush2.bf16.msra.mxu0 0
      %1389 = vmatprep.subr.bf16.mxu0 0
      %1390 = vmatpush2.bf16.msra.mxu0 0
      %1391 = vmatprep.subr.bf16.mxu0 0
      %1392 = vmatpush2.bf16.msra.mxu0 0
      %1393 = vmatprep.subr.bf16.mxu0 0
      %1394 = vmatpush2.bf16.msra.mxu0 0
      %1395 = vmatprep.subr.bf16.mxu0 0
      %1396 = vmatpush2.bf16.msra.mxu0 0
      %1397 = vmatprep.mubr.bf16.mxu0 0
      %1398 = vmatmul.mubr.bf16.gmra.mxu0 %v1342
      %v1399 = vpop.f32.mrf.mxu0
      %v1400 = vadd.f32 0.0, %v1399
      %v1401 = vpop.f32.mrf.mxu0
      %v1402 = vadd.f32 0.0, %v1401
      %v1403 = vpop.f32.mrf.mxu0
      %v1404 = vadd.f32 0.0, %v1403
      %v1405 = vpop.f32.mrf.mxu0
      %v1406 = vadd.f32 0.0, %v1405
      %1407 = vmatprep.mubr.bf16.mxu0 0
      %1408 = vmatmul.mubr.bf16.gmra.mxu0 %v1345
      %v1409 = vpop.f32.mrf.mxu0
      %v1410 = vadd.f32 0.0, %v1409
      %v1411 = vpop.f32.mrf.mxu0
      %v1412 = vadd.f32 0.0, %v1411
      %v1413 = vpop.f32.mrf.mxu0
      %v1414 = vadd.f32 0.0, %v1413
      %v1415 = vpop.f32.mrf.mxu0
      %v1416 = vadd.f32 0.0, %v1415
      %1417 = vmatprep.mubr.bf16.mxu0 0
      %1418 = vmatmul.mubr.bf16.gmra.mxu0 %v1348
      %v1419 = vpop.f32.mrf.mxu0
      %v1420 = vadd.f32 0.0, %v1419
      %v1421 = vpop.f32.mrf.mxu0
      %v1422 = vadd.f32 0.0, %v1421
      %v1423 = vpop.f32.mrf.mxu0
      %v1424 = vadd.f32 0.0, %v1423
      %v1425 = vpop.f32.mrf.mxu0
      %v1426 = vadd.f32 0.0, %v1425
      %1427 = vmatprep.mubr.bf16.mxu0 0
      %1428 = vmatmul.mubr.bf16.gmra.mxu0 %v1351
      %v1429 = vpop.f32.mrf.mxu0
      %v1430 = vadd.f32 0.0, %v1429
      %v1431 = vpop.f32.mrf.mxu0
      %v1432 = vadd.f32 0.0, %v1431
      %v1433 = vpop.f32.mrf.mxu0
      %v1434 = vadd.f32 0.0, %v1433
      %v1435 = vpop.f32.mrf.mxu0
      %v1436 = vadd.f32 0.0, %v1435
      %1437 = vmatprep.mubr.bf16.mxu0 0
      %1438 = vmatmul.mubr.bf16.gmra.mxu0 %v1354
      %v1439 = vpop.f32.mrf.mxu0
      %v1440 = vadd.f32 0.0, %v1439
      %v1441 = vpop.f32.mrf.mxu0
      %v1442 = vadd.f32 0.0, %v1441
      %v1443 = vpop.f32.mrf.mxu0
      %v1444 = vadd.f32 0.0, %v1443
      %v1445 = vpop.f32.mrf.mxu0
      %v1446 = vadd.f32 0.0, %v1445
      %1447 = vmatprep.mubr.bf16.mxu0 0
      %1448 = vmatmul.mubr.bf16.gmra.mxu0 %v1357
      %v1449 = vpop.f32.mrf.mxu0
      %v1450 = vadd.f32 0.0, %v1449
      %v1451 = vpop.f32.mrf.mxu0
      %v1452 = vadd.f32 0.0, %v1451
      %v1453 = vpop.f32.mrf.mxu0
      %v1454 = vadd.f32 0.0, %v1453
      %v1455 = vpop.f32.mrf.mxu0
      %v1456 = vadd.f32 0.0, %v1455
      %1457 = vmatprep.mubr.bf16.mxu0 0
      %1458 = vmatmul.mubr.bf16.gmra.mxu0 %v1360
      %v1459 = vpop.f32.mrf.mxu0
      %v1460 = vadd.f32 0.0, %v1459
      %v1461 = vpop.f32.mrf.mxu0
      %v1462 = vadd.f32 0.0, %v1461
      %v1463 = vpop.f32.mrf.mxu0
      %v1464 = vadd.f32 0.0, %v1463
      %v1465 = vpop.f32.mrf.mxu0
      %v1466 = vadd.f32 0.0, %v1465
      %1467 = vmatprep.mubr.bf16.mxu0 0
      %1468 = vmatmul.mubr.bf16.gmra.mxu0 %v1363
      %v1469 = vpop.f32.mrf.mxu0
      %v1470 = vadd.f32 0.0, %v1469
      %v1471 = vpop.f32.mrf.mxu0
      %v1472 = vadd.f32 0.0, %v1471
      %v1473 = vpop.f32.mrf.mxu0
      %v1474 = vpop.f32.mrf.mxu0
      %1475 = vdwg.mxu0
      %v1476 = vadd.f32 %v1210, %v1400
      %v1477 = vadd.f32 %v1211, %v1402
      %v1478 = vadd.f32 %v1212, %v1404
      %v1479 = vadd.f32 %v1213, %v1406
      %v1480 = vadd.f32 %v1214, %v1410
      %v1481 = vadd.f32 %v1215, %v1412
      %v1482 = vadd.f32 %v1216, %v1414
      %v1483 = vadd.f32 %v1217, %v1416
      %v1484 = vadd.f32 %v1218, %v1420
      %v1485 = vadd.f32 %v1219, %v1422
      %v1486 = vadd.f32 %v1220, %v1424
      %v1487 = vadd.f32 %v1221, %v1426
      %v1488 = vadd.f32 %v1222, %v1430
      %v1489 = vadd.f32 %v1223, %v1432
      %v1490 = vadd.f32 %v1224, %v1434
      %v1491 = vadd.f32 %v1225, %v1436
      %v1492 = vadd.f32 %v1226, %v1440
      %v1493 = vadd.f32 %v1227, %v1442
      %v1494 = vadd.f32 %v1228, %v1444
      %v1495 = vadd.f32 %v1229, %v1446
      %v1496 = vadd.f32 %v1230, %v1450
      %v1497 = vadd.f32 %v1231, %v1452
      %v1498 = vadd.f32 %v1232, %v1454
      %v1499 = vadd.f32 %v1233, %v1456
      %v1500 = vadd.f32 %v1234, %v1460
      %v1501 = vadd.f32 %v1235, %v1462
      %v1502 = vadd.f32 %v1236, %v1464
      %v1503 = vadd.f32 %v1237, %v1466
      %v1504 = vadd.f32 %v1238, %v1470
      %v1505 = vadd.f32 %v1239, %v1472
      %v1506 = vld [vmem:[%s327 + $0x4] sm:$0x8]
      %s1507 = scalar_lea.vmem %s1, 160
      %v1508 = vld [vmem:[%s1507] sm:$0xff]
      %v1509 = vld [vmem:[%s1507 + $0x8] sm:$0xff]
      %v1510 = vld [vmem:[%s1507 + $0x10] sm:$0xff]
      %v1511 = vld [vmem:[%s1507 + $0x18] sm:$0xff]
      %v1513 = vunpack.c.l.b16 %v1506
      %v1514 = vpack.c.b16 %v1016, %v1513
      %vm1515 = vcmask 1044480
      %v1516 = vrot.slane %v1514, 3
      %v1517 = vrot.slane %v1032, 3
      %v1518 = vsel %vm1515, %v1516, %v1517
      %v1519 = vrot.slane %v1033, 3
      %v1520 = vsel %vm1515, %v1517, %v1519
      %v1521 = vrot.slane %v1034, 3
      %v1522 = vsel %vm1515, %v1519, %v1521
      %v1523 = vrot.slane %v1035, 3
      %v1524 = vsel %vm1515, %v1521, %v1523
      %v1525 = vrot.slane %v1036, 3
      %v1526 = vsel %vm1515, %v1523, %v1525
      %v1527 = vrot.slane %v1037, 3
      %v1528 = vsel %vm1515, %v1525, %v1527
      %v1529 = vrot.slane %v1248, 3
      %v1530 = vsel %vm1515, %v1527, %v1529
      %v1535 = vunpack.c.l.b16 %v1508
      %v1536 = vunpack.c.h.b16 %v1508
      %v1537 = vunpack.c.l.b16 %v1509
      %v1538 = vunpack.c.h.b16 %v1509
      %v1539 = vunpack.c.l.b16 %v1510
      %v1540 = vunpack.c.h.b16 %v1510
      %v1541 = vunpack.c.l.b16 %v1511
      %v1542 = vunpack.c.h.b16 %v1511
      %v1543 = vpack.c.b16 %v1537, %v1535
      %v1544 = vpack.c.b16 %v1538, %v1536
      %v1545 = vpack.c.b16 %v1541, %v1539
      %v1546 = vpack.c.b16 %v1542, %v1540
      %v1552 = vsel %vm481, %v1518, 0
      %v1555 = vsel %vm481, %v1520, 0
      %v1558 = vsel %vm481, %v1522, 0
      %v1561 = vsel %vm481, %v1524, 0
      %v1564 = vsel %vm481, %v1526, 0
      %v1567 = vsel %vm481, %v1528, 0
      %v1570 = vsel %vm481, %v1530, 0
      %v1573 = vsel %vm481, %v1529, 0
      %1575 = vmatprep.subr.bf16.mxu0 0
      %1576 = vmatpush1.bf16.msra.mxu0 0
      %1577 = vmatprep.subr.bf16.mxu0 0
      %1578 = vmatpush1.bf16.msra.mxu0 0
      %1579 = vmatprep.subr.bf16.mxu0 0
      %1580 = vmatpush1.bf16.msra.mxu0 0
      %1581 = vmatprep.subr.bf16.mxu0 0
      %1582 = vmatpush1.bf16.msra.mxu0 0
      %1583 = vmatprep.subr.bf16.mxu0 0
      %1584 = vmatpush1.bf16.msra.mxu0 0
      %1585 = vmatprep.subr.bf16.mxu0 0
      %1586 = vmatpush1.bf16.msra.mxu0 0
      %1587 = vmatprep.subr.bf16.mxu0 %v1546
      %1588 = vmatpush1.bf16.msra.mxu0 %v1545
      %1589 = vmatprep.subr.bf16.mxu0 %v1544
      %1590 = vmatpush1.bf16.msra.mxu0 %v1543
      %1591 = vmatprep.subr.bf16.mxu0 0
      %1592 = vmatpush2.bf16.msra.mxu0 0
      %1593 = vmatprep.subr.bf16.mxu0 0
      %1594 = vmatpush2.bf16.msra.mxu0 0
      %1595 = vmatprep.subr.bf16.mxu0 0
      %1596 = vmatpush2.bf16.msra.mxu0 0
      %1597 = vmatprep.subr.bf16.mxu0 0
      %1598 = vmatpush2.bf16.msra.mxu0 0
      %1599 = vmatprep.subr.bf16.mxu0 0
      %1600 = vmatpush2.bf16.msra.mxu0 0
      %1601 = vmatprep.subr.bf16.mxu0 0
      %1602 = vmatpush2.bf16.msra.mxu0 0
      %1603 = vmatprep.subr.bf16.mxu0 0
      %1604 = vmatpush2.bf16.msra.mxu0 0
      %1605 = vmatprep.subr.bf16.mxu0 0
      %1606 = vmatpush2.bf16.msra.mxu0 0
      %1607 = vmatprep.mubr.bf16.mxu0 0
      %1608 = vmatmul.mubr.bf16.gmra.mxu0 %v1552
      %v1609 = vpop.f32.mrf.mxu0
      %v1610 = vadd.f32 0.0, %v1609
      %v1611 = vpop.f32.mrf.mxu0
      %v1612 = vadd.f32 0.0, %v1611
      %v1613 = vpop.f32.mrf.mxu0
      %v1614 = vadd.f32 0.0, %v1613
      %v1615 = vpop.f32.mrf.mxu0
      %v1616 = vadd.f32 0.0, %v1615
      %1617 = vmatprep.mubr.bf16.mxu0 0
      %1618 = vmatmul.mubr.bf16.gmra.mxu0 %v1555
      %v1619 = vpop.f32.mrf.mxu0
      %v1620 = vadd.f32 0.0, %v1619
      %v1621 = vpop.f32.mrf.mxu0
      %v1622 = vadd.f32 0.0, %v1621
      %v1623 = vpop.f32.mrf.mxu0
      %v1624 = vadd.f32 0.0, %v1623
      %v1625 = vpop.f32.mrf.mxu0
      %v1626 = vadd.f32 0.0, %v1625
      %1627 = vmatprep.mubr.bf16.mxu0 0
      %1628 = vmatmul.mubr.bf16.gmra.mxu0 %v1558
      %v1629 = vpop.f32.mrf.mxu0
      %v1630 = vadd.f32 0.0, %v1629
      %v1631 = vpop.f32.mrf.mxu0
      %v1632 = vadd.f32 0.0, %v1631
      %v1633 = vpop.f32.mrf.mxu0
      %v1634 = vadd.f32 0.0, %v1633
      %v1635 = vpop.f32.mrf.mxu0
      %v1636 = vadd.f32 0.0, %v1635
      %1637 = vmatprep.mubr.bf16.mxu0 0
      %1638 = vmatmul.mubr.bf16.gmra.mxu0 %v1561
      %v1639 = vpop.f32.mrf.mxu0
      %v1640 = vadd.f32 0.0, %v1639
      %v1641 = vpop.f32.mrf.mxu0
      %v1642 = vadd.f32 0.0, %v1641
      %v1643 = vpop.f32.mrf.mxu0
      %v1644 = vadd.f32 0.0, %v1643
      %v1645 = vpop.f32.mrf.mxu0
      %v1646 = vadd.f32 0.0, %v1645
      %1647 = vmatprep.mubr.bf16.mxu0 0
      %1648 = vmatmul.mubr.bf16.gmra.mxu0 %v1564
      %v1649 = vpop.f32.mrf.mxu0
      %v1650 = vadd.f32 0.0, %v1649
      %v1651 = vpop.f32.mrf.mxu0
      %v1652 = vadd.f32 0.0, %v1651
      %v1653 = vpop.f32.mrf.mxu0
      %v1654 = vadd.f32 0.0, %v1653
      %v1655 = vpop.f32.mrf.mxu0
      %v1656 = vadd.f32 0.0, %v1655
      %1657 = vmatprep.mubr.bf16.mxu0 0
      %1658 = vmatmul.mubr.bf16.gmra.mxu0 %v1567
      %v1659 = vpop.f32.mrf.mxu0
      %v1660 = vadd.f32 0.0, %v1659
      %v1661 = vpop.f32.mrf.mxu0
      %v1662 = vadd.f32 0.0, %v1661
      %v1663 = vpop.f32.mrf.mxu0
      %v1664 = vadd.f32 0.0, %v1663
      %v1665 = vpop.f32.mrf.mxu0
      %v1666 = vadd.f32 0.0, %v1665
      %1667 = vmatprep.mubr.bf16.mxu0 0
      %1668 = vmatmul.mubr.bf16.gmra.mxu0 %v1570
      %v1669 = vpop.f32.mrf.mxu0
      %v1670 = vadd.f32 0.0, %v1669
      %v1671 = vpop.f32.mrf.mxu0
      %v1672 = vadd.f32 0.0, %v1671
      %v1673 = vpop.f32.mrf.mxu0
      %v1674 = vadd.f32 0.0, %v1673
      %v1675 = vpop.f32.mrf.mxu0
      %v1676 = vadd.f32 0.0, %v1675
      %1677 = vmatprep.mubr.bf16.mxu0 0
      %1678 = vmatmul.mubr.bf16.gmra.mxu0 %v1573
      %v1679 = vpop.f32.mrf.mxu0
      %v1680 = vadd.f32 0.0, %v1679
      %v1681 = vpop.f32.mrf.mxu0
      %v1682 = vadd.f32 0.0, %v1681
      %v1683 = vpop.f32.mrf.mxu0
      %v1684 = vpop.f32.mrf.mxu0
      %1685 = vdwg.mxu0
      %v1686 = vadd.f32 %v1476, %v1610
      %v1687 = vadd.f32 %v1477, %v1612
      %v1688 = vadd.f32 %v1478, %v1614
      %v1689 = vadd.f32 %v1479, %v1616
      %v1690 = vadd.f32 %v1480, %v1620
      %v1691 = vadd.f32 %v1481, %v1622
      %v1692 = vadd.f32 %v1482, %v1624
      %v1693 = vadd.f32 %v1483, %v1626
      %v1694 = vadd.f32 %v1484, %v1630
      %v1695 = vadd.f32 %v1485, %v1632
      %v1696 = vadd.f32 %v1486, %v1634
      %v1697 = vadd.f32 %v1487, %v1636
      %v1698 = vadd.f32 %v1488, %v1640
      %v1699 = vadd.f32 %v1489, %v1642
      %v1700 = vadd.f32 %v1490, %v1644
      %v1701 = vadd.f32 %v1491, %v1646
      %v1702 = vadd.f32 %v1492, %v1650
      %v1703 = vadd.f32 %v1493, %v1652
      %v1704 = vadd.f32 %v1494, %v1654
      %v1705 = vadd.f32 %v1495, %v1656
      %v1706 = vadd.f32 %v1496, %v1660
      %v1707 = vadd.f32 %v1497, %v1662
      %v1708 = vadd.f32 %v1498, %v1664
      %v1709 = vadd.f32 %v1499, %v1666
      %v1710 = vadd.f32 %v1500, %v1670
      %v1711 = vadd.f32 %v1501, %v1672
      %v1712 = vadd.f32 %v1502, %v1674
      %v1713 = vadd.f32 %v1503, %v1676
      %v1714 = vadd.f32 %v1504, %v1680
      %v1715 = vadd.f32 %v1505, %v1682
      %v1716 = vld [vmem:[%s327 + $0xc] sm:$0xf]
      %v1717 = vld [vmem:[%s327 + $0x10] sm:$0xf]
      %v1718 = vld [vmem:[%s327 + $0x14] sm:$0xf]
      %v1719 = vld [vmem:[%s327 + $0x18] sm:$0xf]
      %v1720 = vld [vmem:[%s327 + $0x1c] sm:$0xf]
      %v1721 = vld [vmem:[%s327 + $0x20] sm:$0xf]
      %v1722 = vld [vmem:[%s327 + $0x24] sm:$0xf]
      %v1723 = vld [vmem:[%s327 + $0x28] sm:$0xf]
      %v1724 = vld [vmem:[%s327 + $0x2c] sm:$0xf]
      %v1725 = vld [vmem:[%s327 + $0x30] sm:$0xf]
      %v1726 = vld [vmem:[%s327 + $0x34] sm:$0xf]
      %v1727 = vld [vmem:[%s327 + $0x38] sm:$0xf]
      %v1728 = vld [vmem:[%s327 + $0x3c] sm:$0xf]
      %v1729 = vld [vmem:[%s327 + $0x40] sm:$0xf]
      %v1730 = vld [vmem:[%s327 + $0x44] sm:$0x7]
      %s1731 = scalar_lea.vmem %s1, 192
      %v1732 = vld [vmem:[%s1731] sm:$0xff]
      %v1733 = vld [vmem:[%s1731 + $0x8] sm:$0xff]
      %v1734 = vld [vmem:[%s1731 + $0x10] sm:$0xff]
      %v1735 = vld [vmem:[%s1731 + $0x18] sm:$0xff]
      %v1751 = vunpack.c.l.b16 %v1716
      %v1752 = vunpack.c.l.b16 %v1717
      %v1753 = vunpack.c.l.b16 %v1718
      %v1754 = vunpack.c.l.b16 %v1719
      %v1755 = vunpack.c.l.b16 %v1720
      %v1756 = vunpack.c.l.b16 %v1721
      %v1757 = vunpack.c.l.b16 %v1722
      %v1758 = vunpack.c.l.b16 %v1723
      %v1759 = vunpack.c.l.b16 %v1724
      %v1760 = vunpack.c.l.b16 %v1725
      %v1761 = vunpack.c.l.b16 %v1726
      %v1762 = vunpack.c.l.b16 %v1727
      %v1763 = vunpack.c.l.b16 %v1728
      %v1764 = vunpack.c.l.b16 %v1729
      %v1765 = vunpack.c.l.b16 %v1730
      %v1766 = vpack.c.b16 %v1752, %v1751
      %v1767 = vpack.c.b16 %v1754, %v1753
      %v1768 = vpack.c.b16 %v1756, %v1755
      %v1769 = vpack.c.b16 %v1758, %v1757
      %v1770 = vpack.c.b16 %v1760, %v1759
      %v1771 = vpack.c.b16 %v1762, %v1761
      %v1772 = vpack.c.b16 %v1764, %v1763
      %v1773 = vpack.c.b16 %v1765, %v1765
      %v1778 = vunpack.c.l.b16 %v1732
      %v1779 = vunpack.c.h.b16 %v1732
      %v1780 = vunpack.c.l.b16 %v1733
      %v1781 = vunpack.c.h.b16 %v1733
      %v1782 = vunpack.c.l.b16 %v1734
      %v1783 = vunpack.c.h.b16 %v1734
      %v1784 = vunpack.c.l.b16 %v1735
      %v1785 = vunpack.c.h.b16 %v1735
      %v1786 = vpack.c.b16 %v1780, %v1778
      %v1787 = vpack.c.b16 %v1781, %v1779
      %v1788 = vpack.c.b16 %v1784, %v1782
      %v1789 = vpack.c.b16 %v1785, %v1783
      %v1795 = vsel %vm481, %v1766, 0
      %v1798 = vsel %vm481, %v1767, 0
      %v1801 = vsel %vm481, %v1768, 0
      %v1804 = vsel %vm481, %v1769, 0
      %v1807 = vsel %vm481, %v1770, 0
      %v1810 = vsel %vm481, %v1771, 0
      %v1813 = vsel %vm481, %v1772, 0
      %v1816 = vsel %vm481, %v1773, 0
      %1818 = vmatprep.subr.bf16.mxu0 0
      %1819 = vmatpush1.bf16.msra.mxu0 0
      %1820 = vmatprep.subr.bf16.mxu0 0
      %1821 = vmatpush1.bf16.msra.mxu0 0
      %1822 = vmatprep.subr.bf16.mxu0 0
      %1823 = vmatpush1.bf16.msra.mxu0 0
      %1824 = vmatprep.subr.bf16.mxu0 0
      %1825 = vmatpush1.bf16.msra.mxu0 0
      %1826 = vmatprep.subr.bf16.mxu0 0
      %1827 = vmatpush1.bf16.msra.mxu0 0
      %1828 = vmatprep.subr.bf16.mxu0 0
      %1829 = vmatpush1.bf16.msra.mxu0 0
      %1830 = vmatprep.subr.bf16.mxu0 %v1789
      %1831 = vmatpush1.bf16.msra.mxu0 %v1788
      %1832 = vmatprep.subr.bf16.mxu0 %v1787
      %1833 = vmatpush1.bf16.msra.mxu0 %v1786
      %1834 = vmatprep.subr.bf16.mxu0 0
      %1835 = vmatpush2.bf16.msra.mxu0 0
      %1836 = vmatprep.subr.bf16.mxu0 0
      %1837 = vmatpush2.bf16.msra.mxu0 0
      %1838 = vmatprep.subr.bf16.mxu0 0
      %1839 = vmatpush2.bf16.msra.mxu0 0
      %1840 = vmatprep.subr.bf16.mxu0 0
      %1841 = vmatpush2.bf16.msra.mxu0 0
      %1842 = vmatprep.subr.bf16.mxu0 0
      %1843 = vmatpush2.bf16.msra.mxu0 0
      %1844 = vmatprep.subr.bf16.mxu0 0
      %1845 = vmatpush2.bf16.msra.mxu0 0
      %1846 = vmatprep.subr.bf16.mxu0 0
      %1847 = vmatpush2.bf16.msra.mxu0 0
      %1848 = vmatprep.subr.bf16.mxu0 0
      %1849 = vmatpush2.bf16.msra.mxu0 0
      %1850 = vmatprep.mubr.bf16.mxu0 0
      %1851 = vmatmul.mubr.bf16.gmra.mxu0 %v1795
      %v1852 = vpop.f32.mrf.mxu0
      %v1853 = vadd.f32 0.0, %v1852
      %v1854 = vpop.f32.mrf.mxu0
      %v1855 = vadd.f32 0.0, %v1854
      %v1856 = vpop.f32.mrf.mxu0
      %v1857 = vadd.f32 0.0, %v1856
      %v1858 = vpop.f32.mrf.mxu0
      %v1859 = vadd.f32 0.0, %v1858
      %1860 = vmatprep.mubr.bf16.mxu0 0
      %1861 = vmatmul.mubr.bf16.gmra.mxu0 %v1798
      %v1862 = vpop.f32.mrf.mxu0
      %v1863 = vadd.f32 0.0, %v1862
      %v1864 = vpop.f32.mrf.mxu0
      %v1865 = vadd.f32 0.0, %v1864
      %v1866 = vpop.f32.mrf.mxu0
      %v1867 = vadd.f32 0.0, %v1866
      %v1868 = vpop.f32.mrf.mxu0
      %v1869 = vadd.f32 0.0, %v1868
      %1870 = vmatprep.mubr.bf16.mxu0 0
      %1871 = vmatmul.mubr.bf16.gmra.mxu0 %v1801
      %v1872 = vpop.f32.mrf.mxu0
      %v1873 = vadd.f32 0.0, %v1872
      %v1874 = vpop.f32.mrf.mxu0
      %v1875 = vadd.f32 0.0, %v1874
      %v1876 = vpop.f32.mrf.mxu0
      %v1877 = vadd.f32 0.0, %v1876
      %v1878 = vpop.f32.mrf.mxu0
      %v1879 = vadd.f32 0.0, %v1878
      %1880 = vmatprep.mubr.bf16.mxu0 0
      %1881 = vmatmul.mubr.bf16.gmra.mxu0 %v1804
      %v1882 = vpop.f32.mrf.mxu0
      %v1883 = vadd.f32 0.0, %v1882
      %v1884 = vpop.f32.mrf.mxu0
      %v1885 = vadd.f32 0.0, %v1884
      %v1886 = vpop.f32.mrf.mxu0
      %v1887 = vadd.f32 0.0, %v1886
      %v1888 = vpop.f32.mrf.mxu0
      %v1889 = vadd.f32 0.0, %v1888
      %1890 = vmatprep.mubr.bf16.mxu0 0
      %1891 = vmatmul.mubr.bf16.gmra.mxu0 %v1807
      %v1892 = vpop.f32.mrf.mxu0
      %v1893 = vadd.f32 0.0, %v1892
      %v1894 = vpop.f32.mrf.mxu0
      %v1895 = vadd.f32 0.0, %v1894
      %v1896 = vpop.f32.mrf.mxu0
      %v1897 = vadd.f32 0.0, %v1896
      %v1898 = vpop.f32.mrf.mxu0
      %v1899 = vadd.f32 0.0, %v1898
      %1900 = vmatprep.mubr.bf16.mxu0 0
      %1901 = vmatmul.mubr.bf16.gmra.mxu0 %v1810
      %v1902 = vpop.f32.mrf.mxu0
      %v1903 = vadd.f32 0.0, %v1902
      %v1904 = vpop.f32.mrf.mxu0
      %v1905 = vadd.f32 0.0, %v1904
      %v1906 = vpop.f32.mrf.mxu0
      %v1907 = vadd.f32 0.0, %v1906
      %v1908 = vpop.f32.mrf.mxu0
      %v1909 = vadd.f32 0.0, %v1908
      %1910 = vmatprep.mubr.bf16.mxu0 0
      %1911 = vmatmul.mubr.bf16.gmra.mxu0 %v1813
      %v1912 = vpop.f32.mrf.mxu0
      %v1913 = vadd.f32 0.0, %v1912
      %v1914 = vpop.f32.mrf.mxu0
      %v1915 = vadd.f32 0.0, %v1914
      %v1916 = vpop.f32.mrf.mxu0
      %v1917 = vadd.f32 0.0, %v1916
      %v1918 = vpop.f32.mrf.mxu0
      %v1919 = vadd.f32 0.0, %v1918
      %1920 = vmatprep.mubr.bf16.mxu0 0
      %1921 = vmatmul.mubr.bf16.gmra.mxu0 %v1816
      %v1922 = vpop.f32.mrf.mxu0
      %v1923 = vadd.f32 0.0, %v1922
      %v1924 = vpop.f32.mrf.mxu0
      %v1925 = vadd.f32 0.0, %v1924
      %v1926 = vpop.f32.mrf.mxu0
      %v1927 = vpop.f32.mrf.mxu0
      %1928 = vdwg.mxu0
      %v1929 = vadd.f32 %v1686, %v1853
      %v1930 = vadd.f32 %v1687, %v1855
      %v1931 = vadd.f32 %v1688, %v1857
      %v1932 = vadd.f32 %v1689, %v1859
      %v1933 = vadd.f32 %v1690, %v1863
      %v1934 = vadd.f32 %v1691, %v1865
      %v1935 = vadd.f32 %v1692, %v1867
      %v1936 = vadd.f32 %v1693, %v1869
      %v1937 = vadd.f32 %v1694, %v1873
      %v1938 = vadd.f32 %v1695, %v1875
      %v1939 = vadd.f32 %v1696, %v1877
      %v1940 = vadd.f32 %v1697, %v1879
      %v1941 = vadd.f32 %v1698, %v1883
      %v1942 = vadd.f32 %v1699, %v1885
      %v1943 = vadd.f32 %v1700, %v1887
      %v1944 = vadd.f32 %v1701, %v1889
      %v1945 = vadd.f32 %v1702, %v1893
      %v1946 = vadd.f32 %v1703, %v1895
      %v1947 = vadd.f32 %v1704, %v1897
      %v1948 = vadd.f32 %v1705, %v1899
      %v1949 = vadd.f32 %v1706, %v1903
      %v1950 = vadd.f32 %v1707, %v1905
      %v1951 = vadd.f32 %v1708, %v1907
      %v1952 = vadd.f32 %v1709, %v1909
      %v1953 = vadd.f32 %v1710, %v1913
      %v1954 = vadd.f32 %v1711, %v1915
      %v1955 = vadd.f32 %v1712, %v1917
      %v1956 = vadd.f32 %v1713, %v1919
      %v1957 = vadd.f32 %v1714, %v1923
      %v1958 = vadd.f32 %v1715, %v1925
      %v1959 = vld [vmem:[%s327 + $0x44] sm:$0xf]
      %s1960 = scalar_lea.vmem %s1, 224
      %v1961 = vld [vmem:[%s1960] sm:$0xff]
      %v1962 = vld [vmem:[%s1960 + $0x8] sm:$0xff]
      %v1963 = vld [vmem:[%s1960 + $0x10] sm:$0xff]
      %v1964 = vld [vmem:[%s1960 + $0x18] sm:$0xff]
      %v1966 = vunpack.c.l.b16 %v1959
      %v1967 = vpack.c.b16 %v1966, %v1966
      %v1968 = vshrl.u32 %v1766, 16
      %v1970 = vshll.u32 %v1766, 16
      %v1972 = vrot.slane %v1970, 1
      %v1973 = vor.u32 %v1968, %v1972
      %v1974 = vshll.u32 %v1767, 16
      %v1976 = vrot.slane %v1974, 1
      %v1977 = vsel %vm397, %v1973, %v1976
      %v1978 = vshrl.u32 %v1767, 16
      %v1980 = vor.u32 %v1978, %v1976
      %v1981 = vshll.u32 %v1768, 16
      %v1983 = vrot.slane %v1981, 1
      %v1984 = vsel %vm397, %v1980, %v1983
      %v1985 = vshrl.u32 %v1768, 16
      %v1987 = vor.u32 %v1985, %v1983
      %v1988 = vshll.u32 %v1769, 16
      %v1990 = vrot.slane %v1988, 1
      %v1991 = vsel %vm397, %v1987, %v1990
      %v1992 = vshrl.u32 %v1769, 16
      %v1994 = vor.u32 %v1992, %v1990
      %v1995 = vshll.u32 %v1770, 16
      %v1997 = vrot.slane %v1995, 1
      %v1998 = vsel %vm397, %v1994, %v1997
      %v1999 = vshrl.u32 %v1770, 16
      %v2001 = vor.u32 %v1999, %v1997
      %v2002 = vshll.u32 %v1771, 16
      %v2004 = vrot.slane %v2002, 1
      %v2005 = vsel %vm397, %v2001, %v2004
      %v2006 = vshrl.u32 %v1771, 16
      %v2008 = vor.u32 %v2006, %v2004
      %v2009 = vshll.u32 %v1772, 16
      %v2011 = vrot.slane %v2009, 1
      %v2012 = vsel %vm397, %v2008, %v2011
      %v2013 = vshrl.u32 %v1772, 16
      %v2015 = vor.u32 %v2013, %v2011
      %v2017 = vshll.u32 %v1967, 16
      %v2019 = vrot.slane %v2017, 1
      %v2020 = vsel %vm397, %v2015, %v2019
      %v2021 = vshrl.u32 %v1967, 16
      %v2023 = vor.u32 %v2021, %v2019
      %v2028 = vunpack.c.l.b16 %v1961
      %v2029 = vunpack.c.h.b16 %v1961
      %v2030 = vunpack.c.l.b16 %v1962
      %v2031 = vunpack.c.h.b16 %v1962
      %v2032 = vunpack.c.l.b16 %v1963
      %v2033 = vunpack.c.h.b16 %v1963
      %v2034 = vunpack.c.l.b16 %v1964
      %v2035 = vunpack.c.h.b16 %v1964
      %v2036 = vpack.c.b16 %v2030, %v2028
      %v2037 = vpack.c.b16 %v2031, %v2029
      %v2038 = vpack.c.b16 %v2034, %v2032
      %v2039 = vpack.c.b16 %v2035, %v2033
      %v2045 = vsel %vm481, %v1977, 0
      %v2048 = vsel %vm481, %v1984, 0
      %v2051 = vsel %vm481, %v1991, 0
      %v2054 = vsel %vm481, %v1998, 0
      %v2057 = vsel %vm481, %v2005, 0
      %v2060 = vsel %vm481, %v2012, 0
      %v2063 = vsel %vm481, %v2020, 0
      %v2066 = vsel %vm481, %v2023, 0
      %2068 = vmatprep.subr.bf16.mxu0 0
      %2069 = vmatpush1.bf16.msra.mxu0 0
      %2070 = vmatprep.subr.bf16.mxu0 0
      %2071 = vmatpush1.bf16.msra.mxu0 0
      %2072 = vmatprep.subr.bf16.mxu0 0
      %2073 = vmatpush1.bf16.msra.mxu0 0
      %2074 = vmatprep.subr.bf16.mxu0 0
      %2075 = vmatpush1.bf16.msra.mxu0 0
      %2076 = vmatprep.subr.bf16.mxu0 0
      %2077 = vmatpush1.bf16.msra.mxu0 0
      %2078 = vmatprep.subr.bf16.mxu0 0
      %2079 = vmatpush1.bf16.msra.mxu0 0
      %2080 = vmatprep.subr.bf16.mxu0 %v2039
      %2081 = vmatpush1.bf16.msra.mxu0 %v2038
      %2082 = vmatprep.subr.bf16.mxu0 %v2037
      %2083 = vmatpush1.bf16.msra.mxu0 %v2036
      %2084 = vmatprep.subr.bf16.mxu0 0
      %2085 = vmatpush2.bf16.msra.mxu0 0
      %2086 = vmatprep.subr.bf16.mxu0 0
      %2087 = vmatpush2.bf16.msra.mxu0 0
      %2088 = vmatprep.subr.bf16.mxu0 0
      %2089 = vmatpush2.bf16.msra.mxu0 0
      %2090 = vmatprep.subr.bf16.mxu0 0
      %2091 = vmatpush2.bf16.msra.mxu0 0
      %2092 = vmatprep.subr.bf16.mxu0 0
      %2093 = vmatpush2.bf16.msra.mxu0 0
      %2094 = vmatprep.subr.bf16.mxu0 0
      %2095 = vmatpush2.bf16.msra.mxu0 0
      %2096 = vmatprep.subr.bf16.mxu0 0
      %2097 = vmatpush2.bf16.msra.mxu0 0
      %2098 = vmatprep.subr.bf16.mxu0 0
      %2099 = vmatpush2.bf16.msra.mxu0 0
      %2100 = vmatprep.mubr.bf16.mxu0 0
      %2101 = vmatmul.mubr.bf16.gmra.mxu0 %v2045
      %v2102 = vpop.f32.mrf.mxu0
      %v2103 = vadd.f32 0.0, %v2102
      %v2104 = vpop.f32.mrf.mxu0
      %v2105 = vadd.f32 0.0, %v2104
      %v2106 = vpop.f32.mrf.mxu0
      %v2107 = vadd.f32 0.0, %v2106
      %v2108 = vpop.f32.mrf.mxu0
      %v2109 = vadd.f32 0.0, %v2108
      %2110 = vmatprep.mubr.bf16.mxu0 0
      %2111 = vmatmul.mubr.bf16.gmra.mxu0 %v2048
      %v2112 = vpop.f32.mrf.mxu0
      %v2113 = vadd.f32 0.0, %v2112
      %v2114 = vpop.f32.mrf.mxu0
      %v2115 = vadd.f32 0.0, %v2114
      %v2116 = vpop.f32.mrf.mxu0
      %v2117 = vadd.f32 0.0, %v2116
      %v2118 = vpop.f32.mrf.mxu0
      %v2119 = vadd.f32 0.0, %v2118
      %2120 = vmatprep.mubr.bf16.mxu0 0
      %2121 = vmatmul.mubr.bf16.gmra.mxu0 %v2051
      %v2122 = vpop.f32.mrf.mxu0
      %v2123 = vadd.f32 0.0, %v2122
      %v2124 = vpop.f32.mrf.mxu0
      %v2125 = vadd.f32 0.0, %v2124
      %v2126 = vpop.f32.mrf.mxu0
      %v2127 = vadd.f32 0.0, %v2126
      %v2128 = vpop.f32.mrf.mxu0
      %v2129 = vadd.f32 0.0, %v2128
      %2130 = vmatprep.mubr.bf16.mxu0 0
      %2131 = vmatmul.mubr.bf16.gmra.mxu0 %v2054
      %v2132 = vpop.f32.mrf.mxu0
      %v2133 = vadd.f32 0.0, %v2132
      %v2134 = vpop.f32.mrf.mxu0
      %v2135 = vadd.f32 0.0, %v2134
      %v2136 = vpop.f32.mrf.mxu0
      %v2137 = vadd.f32 0.0, %v2136
      %v2138 = vpop.f32.mrf.mxu0
      %v2139 = vadd.f32 0.0, %v2138
      %2140 = vmatprep.mubr.bf16.mxu0 0
      %2141 = vmatmul.mubr.bf16.gmra.mxu0 %v2057
      %v2142 = vpop.f32.mrf.mxu0
      %v2143 = vadd.f32 0.0, %v2142
      %v2144 = vpop.f32.mrf.mxu0
      %v2145 = vadd.f32 0.0, %v2144
      %v2146 = vpop.f32.mrf.mxu0
      %v2147 = vadd.f32 0.0, %v2146
      %v2148 = vpop.f32.mrf.mxu0
      %v2149 = vadd.f32 0.0, %v2148
      %2150 = vmatprep.mubr.bf16.mxu0 0
      %2151 = vmatmul.mubr.bf16.gmra.mxu0 %v2060
      %v2152 = vpop.f32.mrf.mxu0
      %v2153 = vadd.f32 0.0, %v2152
      %v2154 = vpop.f32.mrf.mxu0
      %v2155 = vadd.f32 0.0, %v2154
      %v2156 = vpop.f32.mrf.mxu0
      %v2157 = vadd.f32 0.0, %v2156
      %v2158 = vpop.f32.mrf.mxu0
      %v2159 = vadd.f32 0.0, %v2158
      %2160 = vmatprep.mubr.bf16.mxu0 0
      %2161 = vmatmul.mubr.bf16.gmra.mxu0 %v2063
      %v2162 = vpop.f32.mrf.mxu0
      %v2163 = vadd.f32 0.0, %v2162
      %v2164 = vpop.f32.mrf.mxu0
      %v2165 = vadd.f32 0.0, %v2164
      %v2166 = vpop.f32.mrf.mxu0
      %v2167 = vadd.f32 0.0, %v2166
      %v2168 = vpop.f32.mrf.mxu0
      %v2169 = vadd.f32 0.0, %v2168
      %2170 = vmatprep.mubr.bf16.mxu0 0
      %2171 = vmatmul.mubr.bf16.gmra.mxu0 %v2066
      %v2172 = vpop.f32.mrf.mxu0
      %v2173 = vadd.f32 0.0, %v2172
      %v2174 = vpop.f32.mrf.mxu0
      %v2175 = vadd.f32 0.0, %v2174
      %v2176 = vpop.f32.mrf.mxu0
      %v2177 = vpop.f32.mrf.mxu0
      %2178 = vdwg.mxu0
      %v2179 = vadd.f32 %v1929, %v2103
      %v2180 = vadd.f32 %v1930, %v2105
      %v2181 = vadd.f32 %v1931, %v2107
      %v2182 = vadd.f32 %v1932, %v2109
      %v2183 = vadd.f32 %v1933, %v2113
      %v2184 = vadd.f32 %v1934, %v2115
      %v2185 = vadd.f32 %v1935, %v2117
      %v2186 = vadd.f32 %v1936, %v2119
      %v2187 = vadd.f32 %v1937, %v2123
      %v2188 = vadd.f32 %v1938, %v2125
      %v2189 = vadd.f32 %v1939, %v2127
      %v2190 = vadd.f32 %v1940, %v2129
      %v2191 = vadd.f32 %v1941, %v2133
      %v2192 = vadd.f32 %v1942, %v2135
      %v2193 = vadd.f32 %v1943, %v2137
      %v2194 = vadd.f32 %v1944, %v2139
      %v2195 = vadd.f32 %v1945, %v2143
      %v2196 = vadd.f32 %v1946, %v2145
      %v2197 = vadd.f32 %v1947, %v2147
      %v2198 = vadd.f32 %v1948, %v2149
      %v2199 = vadd.f32 %v1949, %v2153
      %v2200 = vadd.f32 %v1950, %v2155
      %v2201 = vadd.f32 %v1951, %v2157
      %v2202 = vadd.f32 %v1952, %v2159
      %v2203 = vadd.f32 %v1953, %v2163
      %v2204 = vadd.f32 %v1954, %v2165
      %v2205 = vadd.f32 %v1955, %v2167
      %v2206 = vadd.f32 %v1956, %v2169
      %v2207 = vadd.f32 %v1957, %v2173
      %v2208 = vadd.f32 %v1958, %v2175
      %v2209 = vld [vmem:[%s327 + $0xc] sm:$0xe]
      %s2210 = scalar_lea.vmem %s1, 256
      %v2211 = vld [vmem:[%s2210] sm:$0xff]
      %v2212 = vld [vmem:[%s2210 + $0x8] sm:$0xff]
      %v2213 = vld [vmem:[%s2210 + $0x10] sm:$0xff]
      %v2214 = vld [vmem:[%s2210 + $0x18] sm:$0xff]
      %v2216 = vunpack.c.l.b16 %v2209
      %v2217 = vpack.c.b16 %v1752, %v2216
      %v2218 = vrot.slane %v2217, 1
      %v2219 = vrot.slane %v1767, 1
      %v2220 = vsel %vm777, %v2218, %v2219
      %v2221 = vrot.slane %v1768, 1
      %v2222 = vsel %vm777, %v2219, %v2221
      %v2223 = vrot.slane %v1769, 1
      %v2224 = vsel %vm777, %v2221, %v2223
      %v2225 = vrot.slane %v1770, 1
      %v2226 = vsel %vm777, %v2223, %v2225
      %v2227 = vrot.slane %v1771, 1
      %v2228 = vsel %vm777, %v2225, %v2227
      %v2229 = vrot.slane %v1772, 1
      %v2230 = vsel %vm777, %v2227, %v2229
      %v2231 = vrot.slane %v1967, 1
      %v2232 = vsel %vm777, %v2229, %v2231
      %v2237 = vunpack.c.l.b16 %v2211
      %v2238 = vunpack.c.h.b16 %v2211
      %v2239 = vunpack.c.l.b16 %v2212
      %v2240 = vunpack.c.h.b16 %v2212
      %v2241 = vunpack.c.l.b16 %v2213
      %v2242 = vunpack.c.h.b16 %v2213
      %v2243 = vunpack.c.l.b16 %v2214
      %v2244 = vunpack.c.h.b16 %v2214
      %v2245 = vpack.c.b16 %v2239, %v2237
      %v2246 = vpack.c.b16 %v2240, %v2238
      %v2247 = vpack.c.b16 %v2243, %v2241
      %v2248 = vpack.c.b16 %v2244, %v2242
      %v2254 = vsel %vm481, %v2220, 0
      %v2257 = vsel %vm481, %v2222, 0
      %v2260 = vsel %vm481, %v2224, 0
      %v2263 = vsel %vm481, %v2226, 0
      %v2266 = vsel %vm481, %v2228, 0
      %v2269 = vsel %vm481, %v2230, 0
      %v2272 = vsel %vm481, %v2232, 0
      %v2275 = vsel %vm481, %v2231, 0
      %2277 = vmatprep.subr.bf16.mxu0 0
      %2278 = vmatpush1.bf16.msra.mxu0 0
      %2279 = vmatprep.subr.bf16.mxu0 0
      %2280 = vmatpush1.bf16.msra.mxu0 0
      %2281 = vmatprep.subr.bf16.mxu0 0
      %2282 = vmatpush1.bf16.msra.mxu0 0
      %2283 = vmatprep.subr.bf16.mxu0 0
      %2284 = vmatpush1.bf16.msra.mxu0 0
      %2285 = vmatprep.subr.bf16.mxu0 0
      %2286 = vmatpush1.bf16.msra.mxu0 0
      %2287 = vmatprep.subr.bf16.mxu0 0
      %2288 = vmatpush1.bf16.msra.mxu0 0
      %2289 = vmatprep.subr.bf16.mxu0 %v2248
      %2290 = vmatpush1.bf16.msra.mxu0 %v2247
      %2291 = vmatprep.subr.bf16.mxu0 %v2246
      %2292 = vmatpush1.bf16.msra.mxu0 %v2245
      %2293 = vmatprep.subr.bf16.mxu0 0
      %2294 = vmatpush2.bf16.msra.mxu0 0
      %2295 = vmatprep.subr.bf16.mxu0 0
      %2296 = vmatpush2.bf16.msra.mxu0 0
      %2297 = vmatprep.subr.bf16.mxu0 0
      %2298 = vmatpush2.bf16.msra.mxu0 0
      %2299 = vmatprep.subr.bf16.mxu0 0
      %2300 = vmatpush2.bf16.msra.mxu0 0
      %2301 = vmatprep.subr.bf16.mxu0 0
      %2302 = vmatpush2.bf16.msra.mxu0 0
      %2303 = vmatprep.subr.bf16.mxu0 0
      %2304 = vmatpush2.bf16.msra.mxu0 0
      %2305 = vmatprep.subr.bf16.mxu0 0
      %2306 = vmatpush2.bf16.msra.mxu0 0
      %2307 = vmatprep.subr.bf16.mxu0 0
      %2308 = vmatpush2.bf16.msra.mxu0 0
      %2309 = vmatprep.mubr.bf16.mxu0 0
      %2310 = vmatmul.mubr.bf16.gmra.mxu0 %v2254
      %v2311 = vpop.f32.mrf.mxu0
      %v2312 = vadd.f32 0.0, %v2311
      %v2313 = vpop.f32.mrf.mxu0
      %v2314 = vadd.f32 0.0, %v2313
      %v2315 = vpop.f32.mrf.mxu0
      %v2316 = vadd.f32 0.0, %v2315
      %v2317 = vpop.f32.mrf.mxu0
      %v2318 = vadd.f32 0.0, %v2317
      %2319 = vmatprep.mubr.bf16.mxu0 0
      %2320 = vmatmul.mubr.bf16.gmra.mxu0 %v2257
      %v2321 = vpop.f32.mrf.mxu0
      %v2322 = vadd.f32 0.0, %v2321
      %v2323 = vpop.f32.mrf.mxu0
      %v2324 = vadd.f32 0.0, %v2323
      %v2325 = vpop.f32.mrf.mxu0
      %v2326 = vadd.f32 0.0, %v2325
      %v2327 = vpop.f32.mrf.mxu0
      %v2328 = vadd.f32 0.0, %v2327
      %2329 = vmatprep.mubr.bf16.mxu0 0
      %2330 = vmatmul.mubr.bf16.gmra.mxu0 %v2260
      %v2331 = vpop.f32.mrf.mxu0
      %v2332 = vadd.f32 0.0, %v2331
      %v2333 = vpop.f32.mrf.mxu0
      %v2334 = vadd.f32 0.0, %v2333
      %v2335 = vpop.f32.mrf.mxu0
      %v2336 = vadd.f32 0.0, %v2335
      %v2337 = vpop.f32.mrf.mxu0
      %v2338 = vadd.f32 0.0, %v2337
      %2339 = vmatprep.mubr.bf16.mxu0 0
      %2340 = vmatmul.mubr.bf16.gmra.mxu0 %v2263
      %v2341 = vpop.f32.mrf.mxu0
      %v2342 = vadd.f32 0.0, %v2341
      %v2343 = vpop.f32.mrf.mxu0
      %v2344 = vadd.f32 0.0, %v2343
      %v2345 = vpop.f32.mrf.mxu0
      %v2346 = vadd.f32 0.0, %v2345
      %v2347 = vpop.f32.mrf.mxu0
      %v2348 = vadd.f32 0.0, %v2347
      %2349 = vmatprep.mubr.bf16.mxu0 0
      %2350 = vmatmul.mubr.bf16.gmra.mxu0 %v2266
      %v2351 = vpop.f32.mrf.mxu0
      %v2352 = vadd.f32 0.0, %v2351
      %v2353 = vpop.f32.mrf.mxu0
      %v2354 = vadd.f32 0.0, %v2353
      %v2355 = vpop.f32.mrf.mxu0
      %v2356 = vadd.f32 0.0, %v2355
      %v2357 = vpop.f32.mrf.mxu0
      %v2358 = vadd.f32 0.0, %v2357
      %2359 = vmatprep.mubr.bf16.mxu0 0
      %2360 = vmatmul.mubr.bf16.gmra.mxu0 %v2269
      %v2361 = vpop.f32.mrf.mxu0
      %v2362 = vadd.f32 0.0, %v2361
      %v2363 = vpop.f32.mrf.mxu0
      %v2364 = vadd.f32 0.0, %v2363
      %v2365 = vpop.f32.mrf.mxu0
      %v2366 = vadd.f32 0.0, %v2365
      %v2367 = vpop.f32.mrf.mxu0
      %v2368 = vadd.f32 0.0, %v2367
      %2369 = vmatprep.mubr.bf16.mxu0 0
      %2370 = vmatmul.mubr.bf16.gmra.mxu0 %v2272
      %v2371 = vpop.f32.mrf.mxu0
      %v2372 = vadd.f32 0.0, %v2371
      %v2373 = vpop.f32.mrf.mxu0
      %v2374 = vadd.f32 0.0, %v2373
      %v2375 = vpop.f32.mrf.mxu0
      %v2376 = vadd.f32 0.0, %v2375
      %v2377 = vpop.f32.mrf.mxu0
      %v2378 = vadd.f32 0.0, %v2377
      %2379 = vmatprep.mubr.bf16.mxu0 0
      %2380 = vmatmul.mubr.bf16.gmra.mxu0 %v2275
      %v2381 = vpop.f32.mrf.mxu0
      %v2382 = vadd.f32 0.0, %v2381
      %v2383 = vpop.f32.mrf.mxu0
      %v2384 = vadd.f32 0.0, %v2383
      %v2385 = vpop.f32.mrf.mxu0
      %v2386 = vpop.f32.mrf.mxu0
      %2387 = vdwg.mxu0
      %v2388 = vadd.f32 %v2179, %v2312
      %v2389 = vadd.f32 %v2180, %v2314
      %v2390 = vadd.f32 %v2181, %v2316
      %v2391 = vadd.f32 %v2182, %v2318
      %v2392 = vadd.f32 %v2183, %v2322
      %v2393 = vadd.f32 %v2184, %v2324
      %v2394 = vadd.f32 %v2185, %v2326
      %v2395 = vadd.f32 %v2186, %v2328
      %v2396 = vadd.f32 %v2187, %v2332
      %v2397 = vadd.f32 %v2188, %v2334
      %v2398 = vadd.f32 %v2189, %v2336
      %v2399 = vadd.f32 %v2190, %v2338
      %v2400 = vadd.f32 %v2191, %v2342
      %v2401 = vadd.f32 %v2192, %v2344
      %v2402 = vadd.f32 %v2193, %v2346
      %v2403 = vadd.f32 %v2194, %v2348
      %v2404 = vadd.f32 %v2195, %v2352
      %v2405 = vadd.f32 %v2196, %v2354
      %v2406 = vadd.f32 %v2197, %v2356
      %v2407 = vadd.f32 %v2198, %v2358
      %v2408 = vadd.f32 %v2199, %v2362
      %v2409 = vadd.f32 %v2200, %v2364
      %v2410 = vadd.f32 %v2201, %v2366
      %v2411 = vadd.f32 %v2202, %v2368
      %v2412 = vadd.f32 %v2203, %v2372
      %v2413 = vadd.f32 %v2204, %v2374
      %v2414 = vadd.f32 %v2205, %v2376
      %v2415 = vadd.f32 %v2206, %v2378
      %v2416 = vadd.f32 %v2207, %v2382
      %v2417 = vadd.f32 %v2208, %v2384
      %v2418 = vld [vmem:[%s2] sm:$0x3]
      %v2420 = vlaneseq
      %v2421 = vshrl.u32 %v2420, 7
      %v2422 = vsub.s32 0, %v2421
      %v2423 = vrot.slane %v2418, %v2422
      %v2424 = vlaneseq
      %v2425 = vshrl.u32 %v2424, 7
      %v2426 = vsub.s32 1, %v2425
      %v2427 = vrot.slane %v2418, %v2426
      %v2430 = vadd.f32 %v2388, %v2423
      %v2431 = vadd.f32 %v2389, %v2427
      %v2432 = vadd.f32 %v2390, %v2423
      %v2433 = vadd.f32 %v2391, %v2427
      %v2434 = vadd.f32 %v2392, %v2423
      %v2435 = vadd.f32 %v2393, %v2427
      %v2436 = vadd.f32 %v2394, %v2423
      %v2437 = vadd.f32 %v2395, %v2427
      %v2438 = vadd.f32 %v2396, %v2423
      %v2439 = vadd.f32 %v2397, %v2427
      %v2440 = vadd.f32 %v2398, %v2423
      %v2441 = vadd.f32 %v2399, %v2427
      %v2442 = vadd.f32 %v2400, %v2423
      %v2443 = vadd.f32 %v2401, %v2427
      %v2444 = vadd.f32 %v2402, %v2423
      %v2445 = vadd.f32 %v2403, %v2427
      %v2446 = vadd.f32 %v2404, %v2423
      %v2447 = vadd.f32 %v2405, %v2427
      %v2448 = vadd.f32 %v2406, %v2423
      %v2449 = vadd.f32 %v2407, %v2427
      %v2450 = vadd.f32 %v2408, %v2423
      %v2451 = vadd.f32 %v2409, %v2427
      %v2452 = vadd.f32 %v2410, %v2423
      %v2453 = vadd.f32 %v2411, %v2427
      %v2454 = vadd.f32 %v2412, %v2423
      %v2455 = vadd.f32 %v2413, %v2427
      %v2456 = vadd.f32 %v2414, %v2423
      %v2457 = vadd.f32 %v2415, %v2427
      %v2458 = vadd.f32 %v2416, %v2423
      %v2459 = vadd.f32 %v2417, %v2427
      %vm2460 = vcmp.gt.f32.partialorder %v2430, 0.0
      %vm2461 = vcmp.gt.f32.partialorder %v2431, 0.0
      %vm2462 = vcmp.gt.f32.partialorder %v2432, 0.0
      %vm2463 = vcmp.gt.f32.partialorder %v2433, 0.0
      %vm2464 = vcmp.gt.f32.partialorder %v2434, 0.0
      %vm2465 = vcmp.gt.f32.partialorder %v2435, 0.0
      %vm2466 = vcmp.gt.f32.partialorder %v2436, 0.0
      %vm2467 = vcmp.gt.f32.partialorder %v2437, 0.0
      %vm2468 = vcmp.gt.f32.partialorder %v2438, 0.0
      %vm2469 = vcmp.gt.f32.partialorder %v2439, 0.0
      %vm2470 = vcmp.gt.f32.partialorder %v2440, 0.0
      %vm2471 = vcmp.gt.f32.partialorder %v2441, 0.0
      %vm2472 = vcmp.gt.f32.partialorder %v2442, 0.0
      %vm2473 = vcmp.gt.f32.partialorder %v2443, 0.0
      %vm2474 = vcmp.gt.f32.partialorder %v2444, 0.0
      %vm2475 = vcmp.gt.f32.partialorder %v2445, 0.0
      %vm2476 = vcmp.gt.f32.partialorder %v2446, 0.0
      %vm2477 = vcmp.gt.f32.partialorder %v2447, 0.0
      %vm2478 = vcmp.gt.f32.partialorder %v2448, 0.0
      %vm2479 = vcmp.gt.f32.partialorder %v2449, 0.0
      %vm2480 = vcmp.gt.f32.partialorder %v2450, 0.0
      %vm2481 = vcmp.gt.f32.partialorder %v2451, 0.0
      %vm2482 = vcmp.gt.f32.partialorder %v2452, 0.0
      %vm2483 = vcmp.gt.f32.partialorder %v2453, 0.0
      %vm2484 = vcmp.gt.f32.partialorder %v2454, 0.0
      %vm2485 = vcmp.gt.f32.partialorder %v2455, 0.0
      %vm2486 = vcmp.gt.f32.partialorder %v2456, 0.0
      %vm2487 = vcmp.gt.f32.partialorder %v2457, 0.0
      %vm2488 = vcmp.gt.f32.partialorder %v2458, 0.0
      %vm2489 = vcmp.gt.f32.partialorder %v2459, 0.0
      %v2490 = vmin.f32 %v2430, 0.0
      %v2491 = vmin.f32 %v2431, 0.0
      %v2492 = vmin.f32 %v2432, 0.0
      %v2493 = vmin.f32 %v2433, 0.0
      %v2494 = vmin.f32 %v2434, 0.0
      %v2495 = vmin.f32 %v2435, 0.0
      %v2496 = vmin.f32 %v2436, 0.0
      %v2497 = vmin.f32 %v2437, 0.0
      %v2498 = vmin.f32 %v2438, 0.0
      %v2499 = vmin.f32 %v2439, 0.0
      %v2500 = vmin.f32 %v2440, 0.0
      %v2501 = vmin.f32 %v2441, 0.0
      %v2502 = vmin.f32 %v2442, 0.0
      %v2503 = vmin.f32 %v2443, 0.0
      %v2504 = vmin.f32 %v2444, 0.0
      %v2505 = vmin.f32 %v2445, 0.0
      %v2506 = vmin.f32 %v2446, 0.0
      %v2507 = vmin.f32 %v2447, 0.0
      %v2508 = vmin.f32 %v2448, 0.0
      %v2509 = vmin.f32 %v2449, 0.0
      %v2510 = vmin.f32 %v2450, 0.0
      %v2511 = vmin.f32 %v2451, 0.0
      %v2512 = vmin.f32 %v2452, 0.0
      %v2513 = vmin.f32 %v2453, 0.0
      %v2514 = vmin.f32 %v2454, 0.0
      %v2515 = vmin.f32 %v2455, 0.0
      %v2516 = vmin.f32 %v2456, 0.0
      %v2517 = vmin.f32 %v2457, 0.0
      %v2518 = vmin.f32 %v2458, 0.0
      %v2519 = vmin.f32 %v2459, 0.0
      %v2520 = vmul.f32 %v2490, 1.442695
      %v2521 = vpow.pop %v2520
      %v2522 = vmul.f32 %v2491, 1.442695
      %v2523 = vpow.pop %v2522
      %v2524 = vmul.f32 %v2492, 1.442695
      %v2525 = vpow.pop %v2524
      %v2526 = vmul.f32 %v2493, 1.442695
      %v2527 = vpow.pop %v2526
      %v2528 = vmul.f32 %v2494, 1.442695
      %v2529 = vpow.pop %v2528
      %v2530 = vmul.f32 %v2495, 1.442695
      %v2531 = vpow.pop %v2530
      %v2532 = vmul.f32 %v2496, 1.442695
      %v2533 = vpow.pop %v2532
      %v2534 = vmul.f32 %v2497, 1.442695
      %v2535 = vpow.pop %v2534
      %v2536 = vmul.f32 %v2498, 1.442695
      %v2537 = vpow.pop %v2536
      %v2538 = vmul.f32 %v2499, 1.442695
      %v2539 = vpow.pop %v2538
      %v2540 = vmul.f32 %v2500, 1.442695
      %v2541 = vpow.pop %v2540
      %v2542 = vmul.f32 %v2501, 1.442695
      %v2543 = vpow.pop %v2542
      %v2544 = vmul.f32 %v2502, 1.442695
      %v2545 = vpow.pop %v2544
      %v2546 = vmul.f32 %v2503, 1.442695
      %v2547 = vpow.pop %v2546
      %v2548 = vmul.f32 %v2504, 1.442695
      %v2549 = vpow.pop %v2548
      %v2550 = vmul.f32 %v2505, 1.442695
      %v2551 = vpow.pop %v2550
      %v2552 = vmul.f32 %v2506, 1.442695
      %v2553 = vpow.pop %v2552
      %v2554 = vmul.f32 %v2507, 1.442695
      %v2555 = vpow.pop %v2554
      %v2556 = vmul.f32 %v2508, 1.442695
      %v2557 = vpow.pop %v2556
      %v2558 = vmul.f32 %v2509, 1.442695
      %v2559 = vpow.pop %v2558
      %v2560 = vmul.f32 %v2510, 1.442695
      %v2561 = vpow.pop %v2560
      %v2562 = vmul.f32 %v2511, 1.442695
      %v2563 = vpow.pop %v2562
      %v2564 = vmul.f32 %v2512, 1.442695
      %v2565 = vpow.pop %v2564
      %v2566 = vmul.f32 %v2513, 1.442695
      %v2567 = vpow.pop %v2566
      %v2568 = vmul.f32 %v2514, 1.442695
      %v2569 = vpow.pop %v2568
      %v2570 = vmul.f32 %v2515, 1.442695
      %v2571 = vpow.pop %v2570
      %v2572 = vmul.f32 %v2516, 1.442695
      %v2573 = vpow.pop %v2572
      %v2574 = vmul.f32 %v2517, 1.442695
      %v2575 = vpow.pop %v2574
      %v2576 = vmul.f32 %v2518, 1.442695
      %v2577 = vpow.pop %v2576
      %v2578 = vmul.f32 %v2519, 1.442695
      %v2579 = vpow.pop %v2578
      %v2580 = vsub.f32 %v2521, 1.0
      %v2581 = vsub.f32 %v2523, 1.0
      %v2582 = vsub.f32 %v2525, 1.0
      %v2583 = vsub.f32 %v2527, 1.0
      %v2584 = vsub.f32 %v2529, 1.0
      %v2585 = vsub.f32 %v2531, 1.0
      %v2586 = vsub.f32 %v2533, 1.0
      %v2587 = vsub.f32 %v2535, 1.0
      %v2588 = vsub.f32 %v2537, 1.0
      %v2589 = vsub.f32 %v2539, 1.0
      %v2590 = vsub.f32 %v2541, 1.0
      %v2591 = vsub.f32 %v2543, 1.0
      %v2592 = vsub.f32 %v2545, 1.0
      %v2593 = vsub.f32 %v2547, 1.0
      %v2594 = vsub.f32 %v2549, 1.0
      %v2595 = vsub.f32 %v2551, 1.0
      %v2596 = vsub.f32 %v2553, 1.0
      %v2597 = vsub.f32 %v2555, 1.0
      %v2598 = vsub.f32 %v2557, 1.0
      %v2599 = vsub.f32 %v2559, 1.0
      %v2600 = vsub.f32 %v2561, 1.0
      %v2601 = vsub.f32 %v2563, 1.0
      %v2602 = vsub.f32 %v2565, 1.0
      %v2603 = vsub.f32 %v2567, 1.0
      %v2604 = vsub.f32 %v2569, 1.0
      %v2605 = vsub.f32 %v2571, 1.0
      %v2606 = vsub.f32 %v2573, 1.0
      %v2607 = vsub.f32 %v2575, 1.0
      %v2608 = vsub.f32 %v2577, 1.0
      %v2609 = vsub.f32 %v2579, 1.0
      %v2610 = vsel %vm2460, %v2430, %v2580
      %v2611 = vsel %vm2461, %v2431, %v2581
      %v2612 = vsel %vm2462, %v2432, %v2582
      %v2613 = vsel %vm2463, %v2433, %v2583
      %v2614 = vsel %vm2464, %v2434, %v2584
      %v2615 = vsel %vm2465, %v2435, %v2585
      %v2616 = vsel %vm2466, %v2436, %v2586
      %v2617 = vsel %vm2467, %v2437, %v2587
      %v2618 = vsel %vm2468, %v2438, %v2588
      %v2619 = vsel %vm2469, %v2439, %v2589
      %v2620 = vsel %vm2470, %v2440, %v2590
      %v2621 = vsel %vm2471, %v2441, %v2591
      %v2622 = vsel %vm2472, %v2442, %v2592
      %v2623 = vsel %vm2473, %v2443, %v2593
      %v2624 = vsel %vm2474, %v2444, %v2594
      %v2625 = vsel %vm2475, %v2445, %v2595
      %v2626 = vsel %vm2476, %v2446, %v2596
      %v2627 = vsel %vm2477, %v2447, %v2597
      %v2628 = vsel %vm2478, %v2448, %v2598
      %v2629 = vsel %vm2479, %v2449, %v2599
      %v2630 = vsel %vm2480, %v2450, %v2600
      %v2631 = vsel %vm2481, %v2451, %v2601
      %v2632 = vsel %vm2482, %v2452, %v2602
      %v2633 = vsel %vm2483, %v2453, %v2603
      %v2634 = vsel %vm2484, %v2454, %v2604
      %v2635 = vsel %vm2485, %v2455, %v2605
      %v2636 = vsel %vm2486, %v2456, %v2606
      %v2637 = vsel %vm2487, %v2457, %v2607
      %v2638 = vsel %vm2488, %v2458, %v2608
      %v2639 = vsel %vm2489, %v2459, %v2609
      %v2640 = vpack.c.bf16 %v2612, %v2610
      %v2641 = vpack.c.bf16 %v2613, %v2611
      %v2642 = vpack.c.bf16 %v2616, %v2614
      %v2643 = vpack.c.bf16 %v2617, %v2615
      %v2644 = vpack.c.bf16 %v2620, %v2618
      %v2645 = vpack.c.bf16 %v2621, %v2619
      %v2646 = vpack.c.bf16 %v2624, %v2622
      %v2647 = vpack.c.bf16 %v2625, %v2623
      %v2648 = vpack.c.bf16 %v2628, %v2626
      %v2649 = vpack.c.bf16 %v2629, %v2627
      %v2650 = vpack.c.bf16 %v2632, %v2630
      %v2651 = vpack.c.bf16 %v2633, %v2631
      %v2652 = vpack.c.bf16 %v2636, %v2634
      %v2653 = vpack.c.bf16 %v2637, %v2635
      %v2654 = vpack.c.bf16 %v2638, %v2638
      %v2655 = vpack.c.bf16 %v2639, %v2639
      %v2672 = vunpack.c.l.b16 %v2640
      %v2673 = vunpack.c.l.b16 %v2641
      %v2674 = vunpack.c.h.b16 %v2640
      %v2675 = vunpack.c.h.b16 %v2641
      %v2676 = vunpack.c.l.b16 %v2642
      %v2677 = vunpack.c.l.b16 %v2643
      %v2678 = vunpack.c.h.b16 %v2642
      %v2679 = vunpack.c.h.b16 %v2643
      %v2680 = vunpack.c.l.b16 %v2644
      %v2681 = vunpack.c.l.b16 %v2645
      %v2682 = vunpack.c.h.b16 %v2644
      %v2683 = vunpack.c.h.b16 %v2645
      %v2684 = vunpack.c.l.b16 %v2646
      %v2685 = vunpack.c.l.b16 %v2647
      %v2686 = vunpack.c.h.b16 %v2646
      %v2687 = vunpack.c.h.b16 %v2647
      %v2688 = vunpack.c.l.b16 %v2648
      %v2689 = vunpack.c.l.b16 %v2649
      %v2690 = vunpack.c.h.b16 %v2648
      %v2691 = vunpack.c.h.b16 %v2649
      %v2692 = vunpack.c.l.b16 %v2650
      %v2693 = vunpack.c.l.b16 %v2651
      %v2694 = vunpack.c.h.b16 %v2650
      %v2695 = vunpack.c.h.b16 %v2651
      %v2696 = vunpack.c.l.b16 %v2652
      %v2697 = vunpack.c.l.b16 %v2653
      %v2698 = vunpack.c.h.b16 %v2652
      %v2699 = vunpack.c.h.b16 %v2653
      %v2700 = vunpack.c.l.b16 %v2654
      %v2701 = vunpack.c.l.b16 %v2655
      %v2702 = vpack.c.b16 %v2673, %v2672
      %v2703 = vpack.c.b16 %v2675, %v2674
      %v2704 = vpack.c.b16 %v2677, %v2676
      %v2705 = vpack.c.b16 %v2679, %v2678
      %v2706 = vpack.c.b16 %v2681, %v2680
      %v2707 = vpack.c.b16 %v2683, %v2682
      %v2708 = vpack.c.b16 %v2685, %v2684
      %v2709 = vpack.c.b16 %v2687, %v2686
      %v2710 = vpack.c.b16 %v2689, %v2688
      %v2711 = vpack.c.b16 %v2691, %v2690
      %v2712 = vpack.c.b16 %v2693, %v2692
      %v2713 = vpack.c.b16 %v2695, %v2694
      %v2714 = vpack.c.b16 %v2697, %v2696
      %v2715 = vpack.c.b16 %v2699, %v2698
      %v2716 = vpack.c.b16 %v2701, %v2700
      %vm2732 = vcmask 1043456
      %vm2733 = vcmask 424964
      %vm2734 = vmor %vm2733, %vm2732
      %2735 = vst.msk [vmem:[#allocation2] sm:$0xff] %vm2734, %v2702
      %2736 = vst.msk [vmem:[#allocation2 + $0x8] sm:$0xff] %vm2734, %v2703
      %2737 = vst.msk [vmem:[#allocation2 + $0x10] sm:$0xff] %vm2734, %v2704
      %2738 = vst.msk [vmem:[#allocation2 + $0x18] sm:$0xff] %vm2734, %v2705
      %2739 = vst.msk [vmem:[#allocation2 + $0x20] sm:$0xff] %vm2734, %v2706
      %2740 = vst.msk [vmem:[#allocation2 + $0x28] sm:$0xff] %vm2734, %v2707
      %2741 = vst.msk [vmem:[#allocation2 + $0x30] sm:$0xff] %vm2734, %v2708
      %2742 = vst.msk [vmem:[#allocation2 + $0x38] sm:$0xff] %vm2734, %v2709
      %2743 = vst.msk [vmem:[#allocation2 + $0x40] sm:$0xff] %vm2734, %v2710
      %2744 = vst.msk [vmem:[#allocation2 + $0x48] sm:$0xff] %vm2734, %v2711
      %2745 = vst.msk [vmem:[#allocation2 + $0x50] sm:$0xff] %vm2734, %v2712
      %2746 = vst.msk [vmem:[#allocation2 + $0x58] sm:$0xff] %vm2734, %v2713
      %2747 = vst.msk [vmem:[#allocation2 + $0x60] sm:$0xff] %vm2734, %v2714
      %2748 = vst.msk [vmem:[#allocation2 + $0x68] sm:$0xff] %vm2734, %v2715
      %vm2749 = vcmask 1042432
      %vm2750 = vcmask 423940
      %vm2751 = vmor %vm2750, %vm2749
      %2752 = vst.msk [vmem:[#allocation2 + $0x70] sm:$0x77] %vm2751, %v2716
      %vm2753 = vcmask 1043459
      %vm2754 = vcmask 424967
      %vm2755 = vmor %vm2754, %vm2753
      %2756 = vst.msk [vmem:[#allocation2 + $0x70] sm:$0x88] %vm2755, 0
      %v2757 = vld [vmem:[#allocation2] sm:$0xff]
      %v2758 = vld [vmem:[#allocation2 + $0x8] sm:$0xff]
      %v2759 = vld [vmem:[#allocation2 + $0x10] sm:$0xff]
      %v2760 = vld [vmem:[#allocation2 + $0x18] sm:$0xff]
      %v2761 = vld [vmem:[#allocation2 + $0x20] sm:$0xff]
      %v2762 = vld [vmem:[#allocation2 + $0x28] sm:$0xff]
      %v2763 = vld [vmem:[#allocation2 + $0x30] sm:$0xff]
      %v2764 = vld [vmem:[#allocation2 + $0x38] sm:$0xff]
      %v2765 = vld [vmem:[#allocation2 + $0x40] sm:$0xff]
      %v2766 = vld [vmem:[#allocation2 + $0x48] sm:$0xff]
      %v2767 = vld [vmem:[#allocation2 + $0x50] sm:$0xff]
      %v2768 = vld [vmem:[#allocation2 + $0x58] sm:$0x77]
      %v2769 = vld [vmem:[%s3] sm:$0xff]
      %v2770 = vld [vmem:[%s3 + $0x8] sm:$0xff]
      %v2771 = vld [vmem:[%s3 + $0x10] sm:$0xff]
      %v2772 = vld [vmem:[%s3 + $0x18] sm:$0xff]
      %v2773 = vld [vmem:[%s3 + $0x20] sm:$0xff]
      %v2774 = vld [vmem:[%s3 + $0x28] sm:$0xff]
      %v2775 = vld [vmem:[%s3 + $0x30] sm:$0xff]
      %v2776 = vld [vmem:[%s3 + $0x38] sm:$0xff]
      %v2777 = vld [vmem:[%s3 + $0x40] sm:$0xff]
      %v2778 = vld [vmem:[%s3 + $0x48] sm:$0xff]
      %v2779 = vld [vmem:[%s3 + $0x50] sm:$0xff]
      %v2780 = vld [vmem:[%s3 + $0x58] sm:$0xff]
      %v2781 = vld [vmem:[%s3 + $0x60] sm:$0xff]
      %v2782 = vld [vmem:[%s3 + $0x68] sm:$0xff]
      %v2783 = vld [vmem:[%s3 + $0x70] sm:$0xff]
      %v2784 = vld [vmem:[%s3 + $0x78] sm:$0xff]
      %v2785 = vld [vmem:[%s3 + $0x80] sm:$0xff]
      %v2786 = vld [vmem:[%s3 + $0x88] sm:$0xff]
      %v2787 = vld [vmem:[%s3 + $0x90] sm:$0xff]
      %v2788 = vld [vmem:[%s3 + $0x98] sm:$0xff]
      %v2789 = vld [vmem:[%s3 + $0xa0] sm:$0xff]
      %v2790 = vld [vmem:[%s3 + $0xa8] sm:$0xff]
      %v2791 = vld [vmem:[%s3 + $0xb0] sm:$0x33]
      %v2792 = vld [vmem:[#allocation2 + $0x58] sm:$0xff]
      %s2793 = scalar_lea.vmem %s3, 184
      %v2794 = vld [vmem:[%s2793] sm:$0xff]
      %v2795 = vld [vmem:[%s2793 + $0x8] sm:$0xff]
      %v2796 = vld [vmem:[%s2793 + $0x10] sm:$0xff]
      %v2797 = vld [vmem:[%s2793 + $0x18] sm:$0xff]
      %v2798 = vld [vmem:[%s2793 + $0x20] sm:$0xff]
      %v2799 = vld [vmem:[%s2793 + $0x28] sm:$0xff]
      %v2800 = vld [vmem:[%s2793 + $0x30] sm:$0xff]
      %v2801 = vld [vmem:[%s2793 + $0x38] sm:$0xff]
      %v2802 = vld [vmem:[%s2793 + $0x40] sm:$0xff]
      %v2803 = vld [vmem:[%s2793 + $0x48] sm:$0xff]
      %v2804 = vld [vmem:[%s2793 + $0x50] sm:$0xff]
      %v2805 = vld [vmem:[%s2793 + $0x58] sm:$0xff]
      %v2806 = vld [vmem:[%s2793 + $0x60] sm:$0xff]
      %v2807 = vld [vmem:[%s2793 + $0x68] sm:$0xff]
      %v2808 = vld [vmem:[%s2793 + $0x70] sm:$0xff]
      %v2809 = vld [vmem:[%s2793 + $0x78] sm:$0xff]
      %v2810 = vld [vmem:[%s2793 + $0x80] sm:$0xff]
      %v2811 = vld [vmem:[%s2793 + $0x88] sm:$0xff]
      %v2812 = vld [vmem:[%s2793 + $0x90] sm:$0xff]
      %v2813 = vld [vmem:[%s2793 + $0x98] sm:$0xff]
      %v2814 = vld [vmem:[%s2793 + $0xa0] sm:$0xff]
      %v2815 = vld [vmem:[%s2793 + $0xa8] sm:$0xff]
      %v2816 = vld [vmem:[%s2793 + $0xb0] sm:$0x33]
      %v2829 = vunpack.c.l.b16 %v2757
      %v2830 = vunpack.c.h.b16 %v2757
      %v2831 = vunpack.c.l.b16 %v2758
      %v2832 = vunpack.c.h.b16 %v2758
      %v2833 = vunpack.c.l.b16 %v2759
      %v2834 = vunpack.c.h.b16 %v2759
      %v2835 = vunpack.c.l.b16 %v2760
      %v2836 = vunpack.c.h.b16 %v2760
      %v2837 = vunpack.c.l.b16 %v2761
      %v2838 = vunpack.c.h.b16 %v2761
      %v2839 = vunpack.c.l.b16 %v2762
      %v2840 = vunpack.c.h.b16 %v2762
      %v2841 = vunpack.c.l.b16 %v2763
      %v2842 = vunpack.c.h.b16 %v2763
      %v2843 = vunpack.c.l.b16 %v2764
      %v2844 = vunpack.c.h.b16 %v2764
      %v2845 = vunpack.c.l.b16 %v2765
      %v2846 = vunpack.c.h.b16 %v2765
      %v2847 = vunpack.c.l.b16 %v2766
      %v2848 = vunpack.c.h.b16 %v2766
      %v2849 = vunpack.c.l.b16 %v2767
      %v2850 = vunpack.c.h.b16 %v2767
      %v2851 = vunpack.c.l.b16 %v2792
      %v2852 = vunpack.c.h.b16 %v2792
      %v2853 = vpack.c.b16 %v2831, %v2829
      %v2854 = vpack.c.b16 %v2832, %v2830
      %v2855 = vpack.c.b16 %v2835, %v2833
      %v2856 = vpack.c.b16 %v2836, %v2834
      %v2857 = vpack.c.b16 %v2839, %v2837
      %v2858 = vpack.c.b16 %v2840, %v2838
      %v2859 = vpack.c.b16 %v2843, %v2841
      %v2860 = vpack.c.b16 %v2844, %v2842
      %v2861 = vpack.c.b16 %v2847, %v2845
      %v2862 = vpack.c.b16 %v2848, %v2846
      %v2863 = vpack.c.b16 %v2851, %v2849
      %v2864 = vpack.c.b16 %v2852, %v2850
      %v2866 = vshrl.u32 %v2853, 16
      %v2868 = vshll.u32 %v2853, 16
      %v2870 = vrot.slane %v2868, 1
      %v2871 = vor.u32 %v2866, %v2870
      %v2873 = vshll.u32 %v2855, 16
      %v2875 = vrot.slane %v2873, 1
      %v2876 = vsel %vm397, %v2871, %v2875
      %v2878 = vshrl.u32 %v2854, 16
      %v2880 = vshll.u32 %v2854, 16
      %v2882 = vrot.slane %v2880, 1
      %v2883 = vor.u32 %v2878, %v2882
      %v2885 = vshll.u32 %v2856, 16
      %v2887 = vrot.slane %v2885, 1
      %v2888 = vsel %vm397, %v2883, %v2887
      %v2889 = vshrl.u32 %v2855, 16
      %v2891 = vor.u32 %v2889, %v2875
      %v2893 = vshll.u32 %v2857, 16
      %v2895 = vrot.slane %v2893, 1
      %v2896 = vsel %vm397, %v2891, %v2895
      %v2897 = vshrl.u32 %v2856, 16
      %v2899 = vor.u32 %v2897, %v2887
      %v2901 = vshll.u32 %v2858, 16
      %v2903 = vrot.slane %v2901, 1
      %v2904 = vsel %vm397, %v2899, %v2903
      %v2905 = vshrl.u32 %v2857, 16
      %v2907 = vor.u32 %v2905, %v2895
      %v2909 = vshll.u32 %v2859, 16
      %v2911 = vrot.slane %v2909, 1
      %v2912 = vsel %vm397, %v2907, %v2911
      %v2913 = vshrl.u32 %v2858, 16
      %v2915 = vor.u32 %v2913, %v2903
      %v2917 = vshll.u32 %v2860, 16
      %v2919 = vrot.slane %v2917, 1
      %v2920 = vsel %vm397, %v2915, %v2919
      %v2921 = vshrl.u32 %v2859, 16
      %v2923 = vor.u32 %v2921, %v2911
      %v2925 = vshll.u32 %v2861, 16
      %v2927 = vrot.slane %v2925, 1
      %v2928 = vsel %vm397, %v2923, %v2927
      %v2929 = vshrl.u32 %v2860, 16
      %v2931 = vor.u32 %v2929, %v2919
      %v2933 = vshll.u32 %v2862, 16
      %v2935 = vrot.slane %v2933, 1
      %v2936 = vsel %vm397, %v2931, %v2935
      %v2937 = vshrl.u32 %v2861, 16
      %v2939 = vor.u32 %v2937, %v2927
      %v2941 = vshll.u32 %v2863, 16
      %v2943 = vrot.slane %v2941, 1
      %v2944 = vsel %vm397, %v2939, %v2943
      %v2945 = vshrl.u32 %v2862, 16
      %v2947 = vor.u32 %v2945, %v2935
      %v2949 = vshll.u32 %v2864, 16
      %v2951 = vrot.slane %v2949, 1
      %v2952 = vsel %vm397, %v2947, %v2951
      %v2953 = vshrl.u32 %v2863, 16
      %v2955 = vor.u32 %v2953, %v2943
      %v2956 = vshrl.u32 %v2864, 16
      %v2958 = vor.u32 %v2956, %v2951
      %v2988 = vunpack.c.l.b16 %v2794
      %v2989 = vunpack.c.h.b16 %v2794
      %v2990 = vunpack.c.l.b16 %v2795
      %v2991 = vunpack.c.h.b16 %v2795
      %v2992 = vunpack.c.l.b16 %v2796
      %v2993 = vunpack.c.h.b16 %v2796
      %v2994 = vunpack.c.l.b16 %v2797
      %v2995 = vunpack.c.h.b16 %v2797
      %v2996 = vunpack.c.l.b16 %v2798
      %v2997 = vunpack.c.h.b16 %v2798
      %v2998 = vunpack.c.l.b16 %v2799
      %v2999 = vunpack.c.h.b16 %v2799
      %v3000 = vunpack.c.l.b16 %v2800
      %v3001 = vunpack.c.h.b16 %v2800
      %v3002 = vunpack.c.l.b16 %v2801
      %v3003 = vunpack.c.h.b16 %v2801
      %v3004 = vunpack.c.l.b16 %v2802
      %v3005 = vunpack.c.h.b16 %v2802
      %v3006 = vunpack.c.l.b16 %v2803
      %v3007 = vunpack.c.h.b16 %v2803
      %v3008 = vunpack.c.l.b16 %v2804
      %v3009 = vunpack.c.h.b16 %v2804
      %v3010 = vunpack.c.l.b16 %v2805
      %v3011 = vunpack.c.h.b16 %v2805
      %v3012 = vunpack.c.l.b16 %v2806
      %v3013 = vunpack.c.h.b16 %v2806
      %v3014 = vunpack.c.l.b16 %v2807
      %v3015 = vunpack.c.h.b16 %v2807
      %v3016 = vunpack.c.l.b16 %v2808
      %v3017 = vunpack.c.h.b16 %v2808
      %v3018 = vunpack.c.l.b16 %v2809
      %v3019 = vunpack.c.h.b16 %v2809
      %v3020 = vunpack.c.l.b16 %v2810
      %v3021 = vunpack.c.h.b16 %v2810
      %v3022 = vunpack.c.l.b16 %v2811
      %v3023 = vunpack.c.h.b16 %v2811
      %v3024 = vunpack.c.l.b16 %v2812
      %v3025 = vunpack.c.h.b16 %v2812
      %v3026 = vunpack.c.l.b16 %v2813
      %v3027 = vunpack.c.h.b16 %v2813
      %v3028 = vunpack.c.l.b16 %v2814
      %v3029 = vunpack.c.h.b16 %v2814
      %v3030 = vunpack.c.l.b16 %v2815
      %v3031 = vunpack.c.h.b16 %v2815
      %v3032 = vunpack.c.l.b16 %v2816
      %v3033 = vunpack.c.h.b16 %v2816
      %v3034 = vpack.c.b16 %v2990, %v2988
      %v3035 = vpack.c.b16 %v2991, %v2989
      %v3036 = vpack.c.b16 %v2994, %v2992
      %v3037 = vpack.c.b16 %v2995, %v2993
      %v3038 = vpack.c.b16 %v2998, %v2996
      %v3039 = vpack.c.b16 %v2999, %v2997
      %v3040 = vpack.c.b16 %v3002, %v3000
      %v3041 = vpack.c.b16 %v3003, %v3001
      %v3042 = vpack.c.b16 %v3006, %v3004
      %v3043 = vpack.c.b16 %v3007, %v3005
      %v3044 = vpack.c.b16 %v3010, %v3008
      %v3045 = vpack.c.b16 %v3011, %v3009
      %v3046 = vpack.c.b16 %v3014, %v3012
      %v3047 = vpack.c.b16 %v3015, %v3013
      %v3048 = vpack.c.b16 %v3018, %v3016
      %v3049 = vpack.c.b16 %v3019, %v3017
      %v3050 = vpack.c.b16 %v3022, %v3020
      %v3051 = vpack.c.b16 %v3023, %v3021
      %v3052 = vpack.c.b16 %v3026, %v3024
      %v3053 = vpack.c.b16 %v3027, %v3025
      %v3054 = vpack.c.b16 %v3030, %v3028
      %v3055 = vpack.c.b16 %v3031, %v3029
      %v3056 = vpack.c.b16 %v3032, %v3032
      %v3057 = vpack.c.b16 %v3033, %v3033
      %vm3080 = vcmask 424960
      %v3082 = vsel %vm3080, %v2888, 0
      %v3085 = vsel %vm3080, %v2904, 0
      %v3088 = vsel %vm3080, %v2920, 0
      %v3091 = vsel %vm3080, %v2936, 0
      %v3094 = vsel %vm3080, %v2952, 0
      %v3097 = vsel %vm3080, %v2958, 0
      %vm3099 = vcmask 1041408
      %v3101 = vsel %vm3099, %v3056, 0
      %v3104 = vsel %vm3099, %v3057, 0
      %3106 = vmatprep.subr.bf16.mxu0 %v3049
      %3107 = vmatpush1.bf16.msra.mxu0 %v3048
      %3108 = vmatprep.subr.bf16.mxu0 %v3047
      %3109 = vmatpush1.bf16.msra.mxu0 %v3046
      %3110 = vmatprep.subr.bf16.mxu0 %v3045
      %3111 = vmatpush1.bf16.msra.mxu0 %v3044
      %3112 = vmatprep.subr.bf16.mxu0 %v3043
      %3113 = vmatpush1.bf16.msra.mxu0 %v3042
      %3114 = vmatprep.subr.bf16.mxu0 %v3041
      %3115 = vmatpush1.bf16.msra.mxu0 %v3040
      %3116 = vmatprep.subr.bf16.mxu0 %v3039
      %3117 = vmatpush1.bf16.msra.mxu0 %v3038
      %3118 = vmatprep.subr.bf16.mxu0 %v3037
      %3119 = vmatpush1.bf16.msra.mxu0 %v3036
      %3120 = vmatprep.subr.bf16.mxu0 %v3035
      %3121 = vmatpush1.bf16.msra.mxu0 %v3034
      %3122 = vmatprep.subr.bf16.mxu0 0
      %3123 = vmatpush2.bf16.msra.mxu0 0
      %3124 = vmatprep.subr.bf16.mxu0 0
      %3125 = vmatpush2.bf16.msra.mxu0 0
      %3126 = vmatprep.subr.bf16.mxu0 0
      %3127 = vmatpush2.bf16.msra.mxu0 0
      %3128 = vmatprep.subr.bf16.mxu0 0
      %3129 = vmatpush2.bf16.msra.mxu0 0
      %3130 = vmatprep.subr.bf16.mxu0 %v3104
      %3131 = vmatpush2.bf16.msra.mxu0 %v3101
      %3132 = vmatprep.subr.bf16.mxu0 %v3055
      %3133 = vmatpush2.bf16.msra.mxu0 %v3054
      %3134 = vmatprep.subr.bf16.mxu0 %v3053
      %3135 = vmatpush2.bf16.msra.mxu0 %v3052
      %3136 = vmatprep.subr.bf16.mxu0 %v3051
      %3137 = vmatpush2.bf16.msra.mxu0 %v3050
      %3138 = vmatprep.mubr.bf16.mxu0 %v3082
      %3139 = vmatmul.mubr.bf16.gmra.mxu0 %v2876
      %v3140 = vpop.f32.mrf.mxu0
      %v3141 = vadd.f32 0.0, %v3140
      %v3142 = vpop.f32.mrf.mxu0
      %v3143 = vadd.f32 0.0, %v3142
      %v3144 = vpop.f32.mrf.mxu0
      %v3145 = vadd.f32 0.0, %v3144
      %v3146 = vpop.f32.mrf.mxu0
      %v3147 = vadd.f32 0.0, %v3146
      %3148 = vmatprep.mubr.bf16.mxu0 %v3085
      %3149 = vmatmul.mubr.bf16.gmra.mxu0 %v2896
      %v3150 = vpop.f32.mrf.mxu0
      %v3151 = vadd.f32 0.0, %v3150
      %v3152 = vpop.f32.mrf.mxu0
      %v3153 = vadd.f32 0.0, %v3152
      %v3154 = vpop.f32.mrf.mxu0
      %v3155 = vadd.f32 0.0, %v3154
      %v3156 = vpop.f32.mrf.mxu0
      %v3157 = vadd.f32 0.0, %v3156
      %3158 = vmatprep.mubr.bf16.mxu0 %v3088
      %3159 = vmatmul.mubr.bf16.gmra.mxu0 %v2912
      %v3160 = vpop.f32.mrf.mxu0
      %v3161 = vadd.f32 0.0, %v3160
      %v3162 = vpop.f32.mrf.mxu0
      %v3163 = vadd.f32 0.0, %v3162
      %v3164 = vpop.f32.mrf.mxu0
      %v3165 = vadd.f32 0.0, %v3164
      %v3166 = vpop.f32.mrf.mxu0
      %v3167 = vadd.f32 0.0, %v3166
      %3168 = vmatprep.mubr.bf16.mxu0 %v3091
      %3169 = vmatmul.mubr.bf16.gmra.mxu0 %v2928
      %v3170 = vpop.f32.mrf.mxu0
      %v3171 = vadd.f32 0.0, %v3170
      %v3172 = vpop.f32.mrf.mxu0
      %v3173 = vadd.f32 0.0, %v3172
      %v3174 = vpop.f32.mrf.mxu0
      %v3175 = vadd.f32 0.0, %v3174
      %v3176 = vpop.f32.mrf.mxu0
      %v3177 = vadd.f32 0.0, %v3176
      %3178 = vmatprep.mubr.bf16.mxu0 %v3094
      %3179 = vmatmul.mubr.bf16.gmra.mxu0 %v2944
      %v3180 = vpop.f32.mrf.mxu0
      %v3181 = vadd.f32 0.0, %v3180
      %v3182 = vpop.f32.mrf.mxu0
      %v3183 = vadd.f32 0.0, %v3182
      %v3184 = vpop.f32.mrf.mxu0
      %v3185 = vadd.f32 0.0, %v3184
      %v3186 = vpop.f32.mrf.mxu0
      %v3187 = vadd.f32 0.0, %v3186
      %3188 = vmatprep.mubr.bf16.mxu0 %v3097
      %3189 = vmatmul.mubr.bf16.gmra.mxu0 %v2955
      %v3190 = vpop.f32.mrf.mxu0
      %v3191 = vadd.f32 0.0, %v3190
      %v3192 = vpop.f32.mrf.mxu0
      %v3193 = vadd.f32 0.0, %v3192
      %v3194 = vpop.f32.mrf.mxu0
      %v3195 = vadd.f32 0.0, %v3194
      %v3196 = vpop.f32.mrf.mxu0
      %v3197 = vadd.f32 0.0, %v3196
      %3198 = vdwg.mxu0
      %v3200 = vunpack.c.l.b16 %v2768
      %v3201 = vunpack.c.h.b16 %v2768
      %v3202 = vpack.c.b16 %v3200, %v2849
      %v3203 = vpack.c.b16 %v3201, %v2850
      %v3233 = vunpack.c.l.b16 %v2769
      %v3234 = vunpack.c.h.b16 %v2769
      %v3235 = vunpack.c.l.b16 %v2770
      %v3236 = vunpack.c.h.b16 %v2770
      %v3237 = vunpack.c.l.b16 %v2771
      %v3238 = vunpack.c.h.b16 %v2771
      %v3239 = vunpack.c.l.b16 %v2772
      %v3240 = vunpack.c.h.b16 %v2772
      %v3241 = vunpack.c.l.b16 %v2773
      %v3242 = vunpack.c.h.b16 %v2773
      %v3243 = vunpack.c.l.b16 %v2774
      %v3244 = vunpack.c.h.b16 %v2774
      %v3245 = vunpack.c.l.b16 %v2775
      %v3246 = vunpack.c.h.b16 %v2775
      %v3247 = vunpack.c.l.b16 %v2776
      %v3248 = vunpack.c.h.b16 %v2776
      %v3249 = vunpack.c.l.b16 %v2777
      %v3250 = vunpack.c.h.b16 %v2777
      %v3251 = vunpack.c.l.b16 %v2778
      %v3252 = vunpack.c.h.b16 %v2778
      %v3253 = vunpack.c.l.b16 %v2779
      %v3254 = vunpack.c.h.b16 %v2779
      %v3255 = vunpack.c.l.b16 %v2780
      %v3256 = vunpack.c.h.b16 %v2780
      %v3257 = vunpack.c.l.b16 %v2781
      %v3258 = vunpack.c.h.b16 %v2781
      %v3259 = vunpack.c.l.b16 %v2782
      %v3260 = vunpack.c.h.b16 %v2782
      %v3261 = vunpack.c.l.b16 %v2783
      %v3262 = vunpack.c.h.b16 %v2783
      %v3263 = vunpack.c.l.b16 %v2784
      %v3264 = vunpack.c.h.b16 %v2784
      %v3265 = vunpack.c.l.b16 %v2785
      %v3266 = vunpack.c.h.b16 %v2785
      %v3267 = vunpack.c.l.b16 %v2786
      %v3268 = vunpack.c.h.b16 %v2786
      %v3269 = vunpack.c.l.b16 %v2787
      %v3270 = vunpack.c.h.b16 %v2787
      %v3271 = vunpack.c.l.b16 %v2788
      %v3272 = vunpack.c.h.b16 %v2788
      %v3273 = vunpack.c.l.b16 %v2789
      %v3274 = vunpack.c.h.b16 %v2789
      %v3275 = vunpack.c.l.b16 %v2790
      %v3276 = vunpack.c.h.b16 %v2790
      %v3277 = vunpack.c.l.b16 %v2791
      %v3278 = vunpack.c.h.b16 %v2791
      %v3279 = vpack.c.b16 %v3235, %v3233
      %v3280 = vpack.c.b16 %v3236, %v3234
      %v3281 = vpack.c.b16 %v3239, %v3237
      %v3282 = vpack.c.b16 %v3240, %v3238
      %v3283 = vpack.c.b16 %v3243, %v3241
      %v3284 = vpack.c.b16 %v3244, %v3242
      %v3285 = vpack.c.b16 %v3247, %v3245
      %v3286 = vpack.c.b16 %v3248, %v3246
      %v3287 = vpack.c.b16 %v3251, %v3249
      %v3288 = vpack.c.b16 %v3252, %v3250
      %v3289 = vpack.c.b16 %v3255, %v3253
      %v3290 = vpack.c.b16 %v3256, %v3254
      %v3291 = vpack.c.b16 %v3259, %v3257
      %v3292 = vpack.c.b16 %v3260, %v3258
      %v3293 = vpack.c.b16 %v3263, %v3261
      %v3294 = vpack.c.b16 %v3264, %v3262
      %v3295 = vpack.c.b16 %v3267, %v3265
      %v3296 = vpack.c.b16 %v3268, %v3266
      %v3297 = vpack.c.b16 %v3271, %v3269
      %v3298 = vpack.c.b16 %v3272, %v3270
      %v3299 = vpack.c.b16 %v3275, %v3273
      %v3300 = vpack.c.b16 %v3276, %v3274
      %v3301 = vpack.c.b16 %v3277, %v3277
      %v3302 = vpack.c.b16 %v3278, %v3278
      %v3325 = vsel %vm3080, %v2854, 0
      %v3327 = vsel %vm3080, %v2856, 0
      %v3329 = vsel %vm3080, %v2858, 0
      %v3331 = vsel %vm3080, %v2860, 0
      %v3333 = vsel %vm3080, %v2862, 0
      %v3336 = vsel %vm3080, %v3203, 0
      %v3339 = vsel %vm3099, %v3301, 0
      %v3342 = vsel %vm3099, %v3302, 0
      %3344 = vmatprep.subr.bf16.mxu0 %v3294
      %3345 = vmatpush1.bf16.msra.mxu0 %v3293
      %3346 = vmatprep.subr.bf16.mxu0 %v3292
      %3347 = vmatpush1.bf16.msra.mxu0 %v3291
      %3348 = vmatprep.subr.bf16.mxu0 %v3290
      %3349 = vmatpush1.bf16.msra.mxu0 %v3289
      %3350 = vmatprep.subr.bf16.mxu0 %v3288
      %3351 = vmatpush1.bf16.msra.mxu0 %v3287
      %3352 = vmatprep.subr.bf16.mxu0 %v3286
      %3353 = vmatpush1.bf16.msra.mxu0 %v3285
      %3354 = vmatprep.subr.bf16.mxu0 %v3284
      %3355 = vmatpush1.bf16.msra.mxu0 %v3283
      %3356 = vmatprep.subr.bf16.mxu0 %v3282
      %3357 = vmatpush1.bf16.msra.mxu0 %v3281
      %3358 = vmatprep.subr.bf16.mxu0 %v3280
      %3359 = vmatpush1.bf16.msra.mxu0 %v3279
      %3360 = vmatprep.subr.bf16.mxu0 0
      %3361 = vmatpush2.bf16.msra.mxu0 0
      %3362 = vmatprep.subr.bf16.mxu0 0
      %3363 = vmatpush2.bf16.msra.mxu0 0
      %3364 = vmatprep.subr.bf16.mxu0 0
      %3365 = vmatpush2.bf16.msra.mxu0 0
      %3366 = vmatprep.subr.bf16.mxu0 0
      %3367 = vmatpush2.bf16.msra.mxu0 0
      %3368 = vmatprep.subr.bf16.mxu0 %v3342
      %3369 = vmatpush2.bf16.msra.mxu0 %v3339
      %3370 = vmatprep.subr.bf16.mxu0 %v3300
      %3371 = vmatpush2.bf16.msra.mxu0 %v3299
      %3372 = vmatprep.subr.bf16.mxu0 %v3298
      %3373 = vmatpush2.bf16.msra.mxu0 %v3297
      %3374 = vmatprep.subr.bf16.mxu0 %v3296
      %3375 = vmatpush2.bf16.msra.mxu0 %v3295
      %3376 = vmatprep.mubr.bf16.mxu0 %v3325
      %3377 = vmatmul.mubr.bf16.gmra.mxu0 %v2853
      %v3378 = vpop.f32.mrf.mxu0
      %v3379 = vadd.f32 %v3141, %v3378
      %v3380 = vpop.f32.mrf.mxu0
      %v3381 = vadd.f32 %v3143, %v3380
      %v3382 = vpop.f32.mrf.mxu0
      %v3383 = vadd.f32 %v3145, %v3382
      %v3384 = vpop.f32.mrf.mxu0
      %v3385 = vadd.f32 %v3147, %v3384
      %3386 = vmatprep.mubr.bf16.mxu0 %v3327
      %3387 = vmatmul.mubr.bf16.gmra.mxu0 %v2855
      %v3388 = vpop.f32.mrf.mxu0
      %v3389 = vadd.f32 %v3151, %v3388
      %v3390 = vpop.f32.mrf.mxu0
      %v3391 = vadd.f32 %v3153, %v3390
      %v3392 = vpop.f32.mrf.mxu0
      %v3393 = vadd.f32 %v3155, %v3392
      %v3394 = vpop.f32.mrf.mxu0
      %v3395 = vadd.f32 %v3157, %v3394
      %3396 = vmatprep.mubr.bf16.mxu0 %v3329
      %3397 = vmatmul.mubr.bf16.gmra.mxu0 %v2857
      %v3398 = vpop.f32.mrf.mxu0
      %v3399 = vadd.f32 %v3161, %v3398
      %v3400 = vpop.f32.mrf.mxu0
      %v3401 = vadd.f32 %v3163, %v3400
      %v3402 = vpop.f32.mrf.mxu0
      %v3403 = vadd.f32 %v3165, %v3402
      %v3404 = vpop.f32.mrf.mxu0
      %v3405 = vadd.f32 %v3167, %v3404
      %3406 = vmatprep.mubr.bf16.mxu0 %v3331
      %3407 = vmatmul.mubr.bf16.gmra.mxu0 %v2859
      %v3408 = vpop.f32.mrf.mxu0
      %v3409 = vadd.f32 %v3171, %v3408
      %v3410 = vpop.f32.mrf.mxu0
      %v3411 = vadd.f32 %v3173, %v3410
      %v3412 = vpop.f32.mrf.mxu0
      %v3413 = vadd.f32 %v3175, %v3412
      %v3414 = vpop.f32.mrf.mxu0
      %v3415 = vadd.f32 %v3177, %v3414
      %3416 = vmatprep.mubr.bf16.mxu0 %v3333
      %3417 = vmatmul.mubr.bf16.gmra.mxu0 %v2861
      %v3418 = vpop.f32.mrf.mxu0
      %v3419 = vadd.f32 %v3181, %v3418
      %v3420 = vpop.f32.mrf.mxu0
      %v3421 = vadd.f32 %v3183, %v3420
      %v3422 = vpop.f32.mrf.mxu0
      %v3423 = vadd.f32 %v3185, %v3422
      %v3424 = vpop.f32.mrf.mxu0
      %v3425 = vadd.f32 %v3187, %v3424
      %3426 = vmatprep.mubr.bf16.mxu0 %v3336
      %3427 = vmatmul.mubr.bf16.gmra.mxu0 %v3202
      %v3428 = vpop.f32.mrf.mxu0
      %v3429 = vadd.f32 %v3191, %v3428
      %v3430 = vpop.f32.mrf.mxu0
      %v3431 = vadd.f32 %v3193, %v3430
      %v3432 = vpop.f32.mrf.mxu0
      %v3433 = vadd.f32 %v3195, %v3432
      %v3434 = vpop.f32.mrf.mxu0
      %v3435 = vadd.f32 %v3197, %v3434
      %3436 = vdwg.mxu0
      %v3437 = vld [vmem:[#allocation2] sm:$0xee]
      %s3438 = scalar_lea.vmem %s3, 368
      %v3439 = vld [vmem:[%s3438] sm:$0xff]
      %v3440 = vld [vmem:[%s3438 + $0x8] sm:$0xff]
      %v3441 = vld [vmem:[%s3438 + $0x10] sm:$0xff]
      %v3442 = vld [vmem:[%s3438 + $0x18] sm:$0xff]
      %v3443 = vld [vmem:[%s3438 + $0x20] sm:$0xff]
      %v3444 = vld [vmem:[%s3438 + $0x28] sm:$0xff]
      %v3445 = vld [vmem:[%s3438 + $0x30] sm:$0xff]
      %v3446 = vld [vmem:[%s3438 + $0x38] sm:$0xff]
      %v3447 = vld [vmem:[%s3438 + $0x40] sm:$0xff]
      %v3448 = vld [vmem:[%s3438 + $0x48] sm:$0xff]
      %v3449 = vld [vmem:[%s3438 + $0x50] sm:$0xff]
      %v3450 = vld [vmem:[%s3438 + $0x58] sm:$0xff]
      %v3451 = vld [vmem:[%s3438 + $0x60] sm:$0xff]
      %v3452 = vld [vmem:[%s3438 + $0x68] sm:$0xff]
      %v3453 = vld [vmem:[%s3438 + $0x70] sm:$0xff]
      %v3454 = vld [vmem:[%s3438 + $0x78] sm:$0xff]
      %v3455 = vld [vmem:[%s3438 + $0x80] sm:$0xff]
      %v3456 = vld [vmem:[%s3438 + $0x88] sm:$0xff]
      %v3457 = vld [vmem:[%s3438 + $0x90] sm:$0xff]
      %v3458 = vld [vmem:[%s3438 + $0x98] sm:$0xff]
      %v3459 = vld [vmem:[%s3438 + $0xa0] sm:$0xff]
      %v3460 = vld [vmem:[%s3438 + $0xa8] sm:$0xff]
      %v3461 = vld [vmem:[%s3438 + $0xb0] sm:$0x33]
      %v3463 = vunpack.c.l.b16 %v3437
      %v3464 = vunpack.c.h.b16 %v3437
      %v3465 = vpack.c.b16 %v2831, %v3463
      %v3466 = vpack.c.b16 %v2832, %v3464
      %v3467 = vrot.slane %v3465, 1
      %v3468 = vrot.slane %v2855, 1
      %v3469 = vsel %vm777, %v3467, %v3468
      %v3470 = vrot.slane %v3466, 1
      %v3471 = vrot.slane %v2856, 1
      %v3472 = vsel %vm777, %v3470, %v3471
      %v3473 = vrot.slane %v2857, 1
      %v3474 = vsel %vm777, %v3468, %v3473
      %v3475 = vrot.slane %v2858, 1
      %v3476 = vsel %vm777, %v3471, %v3475
      %v3477 = vrot.slane %v2859, 1
      %v3478 = vsel %vm777, %v3473, %v3477
      %v3479 = vrot.slane %v2860, 1
      %v3480 = vsel %vm777, %v3475, %v3479
      %v3481 = vrot.slane %v2861, 1
      %v3482 = vsel %vm777, %v3477, %v3481
      %v3483 = vrot.slane %v2862, 1
      %v3484 = vsel %vm777, %v3479, %v3483
      %v3485 = vrot.slane %v2863, 1
      %v3486 = vsel %vm777, %v3481, %v3485
      %v3487 = vrot.slane %v2864, 1
      %v3488 = vsel %vm777, %v3483, %v3487
      %v3518 = vunpack.c.l.b16 %v3439
      %v3519 = vunpack.c.h.b16 %v3439
      %v3520 = vunpack.c.l.b16 %v3440
      %v3521 = vunpack.c.h.b16 %v3440
      %v3522 = vunpack.c.l.b16 %v3441
      %v3523 = vunpack.c.h.b16 %v3441
      %v3524 = vunpack.c.l.b16 %v3442
      %v3525 = vunpack.c.h.b16 %v3442
      %v3526 = vunpack.c.l.b16 %v3443
      %v3527 = vunpack.c.h.b16 %v3443
      %v3528 = vunpack.c.l.b16 %v3444
      %v3529 = vunpack.c.h.b16 %v3444
      %v3530 = vunpack.c.l.b16 %v3445
      %v3531 = vunpack.c.h.b16 %v3445
      %v3532 = vunpack.c.l.b16 %v3446
      %v3533 = vunpack.c.h.b16 %v3446
      %v3534 = vunpack.c.l.b16 %v3447
      %v3535 = vunpack.c.h.b16 %v3447
      %v3536 = vunpack.c.l.b16 %v3448
      %v3537 = vunpack.c.h.b16 %v3448
      %v3538 = vunpack.c.l.b16 %v3449
      %v3539 = vunpack.c.h.b16 %v3449
      %v3540 = vunpack.c.l.b16 %v3450
      %v3541 = vunpack.c.h.b16 %v3450
      %v3542 = vunpack.c.l.b16 %v3451
      %v3543 = vunpack.c.h.b16 %v3451
      %v3544 = vunpack.c.l.b16 %v3452
      %v3545 = vunpack.c.h.b16 %v3452
      %v3546 = vunpack.c.l.b16 %v3453
      %v3547 = vunpack.c.h.b16 %v3453
      %v3548 = vunpack.c.l.b16 %v3454
      %v3549 = vunpack.c.h.b16 %v3454
      %v3550 = vunpack.c.l.b16 %v3455
      %v3551 = vunpack.c.h.b16 %v3455
      %v3552 = vunpack.c.l.b16 %v3456
      %v3553 = vunpack.c.h.b16 %v3456
      %v3554 = vunpack.c.l.b16 %v3457
      %v3555 = vunpack.c.h.b16 %v3457
      %v3556 = vunpack.c.l.b16 %v3458
      %v3557 = vunpack.c.h.b16 %v3458
      %v3558 = vunpack.c.l.b16 %v3459
      %v3559 = vunpack.c.h.b16 %v3459
      %v3560 = vunpack.c.l.b16 %v3460
      %v3561 = vunpack.c.h.b16 %v3460
      %v3562 = vunpack.c.l.b16 %v3461
      %v3563 = vunpack.c.h.b16 %v3461
      %v3564 = vpack.c.b16 %v3520, %v3518
      %v3565 = vpack.c.b16 %v3521, %v3519
      %v3566 = vpack.c.b16 %v3524, %v3522
      %v3567 = vpack.c.b16 %v3525, %v3523
      %v3568 = vpack.c.b16 %v3528, %v3526
      %v3569 = vpack.c.b16 %v3529, %v3527
      %v3570 = vpack.c.b16 %v3532, %v3530
      %v3571 = vpack.c.b16 %v3533, %v3531
      %v3572 = vpack.c.b16 %v3536, %v3534
      %v3573 = vpack.c.b16 %v3537, %v3535
      %v3574 = vpack.c.b16 %v3540, %v3538
      %v3575 = vpack.c.b16 %v3541, %v3539
      %v3576 = vpack.c.b16 %v3544, %v3542
      %v3577 = vpack.c.b16 %v3545, %v3543
      %v3578 = vpack.c.b16 %v3548, %v3546
      %v3579 = vpack.c.b16 %v3549, %v3547
      %v3580 = vpack.c.b16 %v3552, %v3550
      %v3581 = vpack.c.b16 %v3553, %v3551
      %v3582 = vpack.c.b16 %v3556, %v3554
      %v3583 = vpack.c.b16 %v3557, %v3555
      %v3584 = vpack.c.b16 %v3560, %v3558
      %v3585 = vpack.c.b16 %v3561, %v3559
      %v3586 = vpack.c.b16 %v3562, %v3562
      %v3587 = vpack.c.b16 %v3563, %v3563
      %v3611 = vsel %vm3080, %v3472, 0
      %v3614 = vsel %vm3080, %v3476, 0
      %v3617 = vsel %vm3080, %v3480, 0
      %v3620 = vsel %vm3080, %v3484, 0
      %v3623 = vsel %vm3080, %v3488, 0
      %v3626 = vsel %vm3080, %v3487, 0
      %v3629 = vsel %vm3099, %v3586, 0
      %v3632 = vsel %vm3099, %v3587, 0
      %3634 = vmatprep.subr.bf16.mxu0 %v3579
      %3635 = vmatpush1.bf16.msra.mxu0 %v3578
      %3636 = vmatprep.subr.bf16.mxu0 %v3577
      %3637 = vmatpush1.bf16.msra.mxu0 %v3576
      %3638 = vmatprep.subr.bf16.mxu0 %v3575
      %3639 = vmatpush1.bf16.msra.mxu0 %v3574
      %3640 = vmatprep.subr.bf16.mxu0 %v3573
      %3641 = vmatpush1.bf16.msra.mxu0 %v3572
      %3642 = vmatprep.subr.bf16.mxu0 %v3571
      %3643 = vmatpush1.bf16.msra.mxu0 %v3570
      %3644 = vmatprep.subr.bf16.mxu0 %v3569
      %3645 = vmatpush1.bf16.msra.mxu0 %v3568
      %3646 = vmatprep.subr.bf16.mxu0 %v3567
      %3647 = vmatpush1.bf16.msra.mxu0 %v3566
      %3648 = vmatprep.subr.bf16.mxu0 %v3565
      %3649 = vmatpush1.bf16.msra.mxu0 %v3564
      %3650 = vmatprep.subr.bf16.mxu0 0
      %3651 = vmatpush2.bf16.msra.mxu0 0
      %3652 = vmatprep.subr.bf16.mxu0 0
      %3653 = vmatpush2.bf16.msra.mxu0 0
      %3654 = vmatprep.subr.bf16.mxu0 0
      %3655 = vmatpush2.bf16.msra.mxu0 0
      %3656 = vmatprep.subr.bf16.mxu0 0
      %3657 = vmatpush2.bf16.msra.mxu0 0
      %3658 = vmatprep.subr.bf16.mxu0 %v3632
      %3659 = vmatpush2.bf16.msra.mxu0 %v3629
      %3660 = vmatprep.subr.bf16.mxu0 %v3585
      %3661 = vmatpush2.bf16.msra.mxu0 %v3584
      %3662 = vmatprep.subr.bf16.mxu0 %v3583
      %3663 = vmatpush2.bf16.msra.mxu0 %v3582
      %3664 = vmatprep.subr.bf16.mxu0 %v3581
      %3665 = vmatpush2.bf16.msra.mxu0 %v3580
      %3666 = vmatprep.mubr.bf16.mxu0 %v3611
      %3667 = vmatmul.mubr.bf16.gmra.mxu0 %v3469
      %v3668 = vpop.f32.mrf.mxu0
      %v3669 = vadd.f32 0.0, %v3668
      %v3670 = vpop.f32.mrf.mxu0
      %v3671 = vadd.f32 0.0, %v3670
      %v3672 = vpop.f32.mrf.mxu0
      %v3673 = vadd.f32 0.0, %v3672
      %v3674 = vpop.f32.mrf.mxu0
      %v3675 = vadd.f32 0.0, %v3674
      %3676 = vmatprep.mubr.bf16.mxu0 %v3614
      %3677 = vmatmul.mubr.bf16.gmra.mxu0 %v3474
      %v3678 = vpop.f32.mrf.mxu0
      %v3679 = vadd.f32 0.0, %v3678
      %v3680 = vpop.f32.mrf.mxu0
      %v3681 = vadd.f32 0.0, %v3680
      %v3682 = vpop.f32.mrf.mxu0
      %v3683 = vadd.f32 0.0, %v3682
      %v3684 = vpop.f32.mrf.mxu0
      %v3685 = vadd.f32 0.0, %v3684
      %3686 = vmatprep.mubr.bf16.mxu0 %v3617
      %3687 = vmatmul.mubr.bf16.gmra.mxu0 %v3478
      %v3688 = vpop.f32.mrf.mxu0
      %v3689 = vadd.f32 0.0, %v3688
      %v3690 = vpop.f32.mrf.mxu0
      %v3691 = vadd.f32 0.0, %v3690
      %v3692 = vpop.f32.mrf.mxu0
      %v3693 = vadd.f32 0.0, %v3692
      %v3694 = vpop.f32.mrf.mxu0
      %v3695 = vadd.f32 0.0, %v3694
      %3696 = vmatprep.mubr.bf16.mxu0 %v3620
      %3697 = vmatmul.mubr.bf16.gmra.mxu0 %v3482
      %v3698 = vpop.f32.mrf.mxu0
      %v3699 = vadd.f32 0.0, %v3698
      %v3700 = vpop.f32.mrf.mxu0
      %v3701 = vadd.f32 0.0, %v3700
      %v3702 = vpop.f32.mrf.mxu0
      %v3703 = vadd.f32 0.0, %v3702
      %v3704 = vpop.f32.mrf.mxu0
      %v3705 = vadd.f32 0.0, %v3704
      %3706 = vmatprep.mubr.bf16.mxu0 %v3623
      %3707 = vmatmul.mubr.bf16.gmra.mxu0 %v3486
      %v3708 = vpop.f32.mrf.mxu0
      %v3709 = vadd.f32 0.0, %v3708
      %v3710 = vpop.f32.mrf.mxu0
      %v3711 = vadd.f32 0.0, %v3710
      %v3712 = vpop.f32.mrf.mxu0
      %v3713 = vadd.f32 0.0, %v3712
      %v3714 = vpop.f32.mrf.mxu0
      %v3715 = vadd.f32 0.0, %v3714
      %3716 = vmatprep.mubr.bf16.mxu0 %v3626
      %3717 = vmatmul.mubr.bf16.gmra.mxu0 %v3485
      %v3718 = vpop.f32.mrf.mxu0
      %v3719 = vadd.f32 0.0, %v3718
      %v3720 = vpop.f32.mrf.mxu0
      %v3721 = vadd.f32 0.0, %v3720
      %v3722 = vpop.f32.mrf.mxu0
      %v3723 = vadd.f32 0.0, %v3722
      %v3724 = vpop.f32.mrf.mxu0
      %v3725 = vadd.f32 0.0, %v3724
      %3726 = vdwg.mxu0
      %v3727 = vadd.f32 %v3379, %v3669
      %v3728 = vadd.f32 %v3381, %v3671
      %v3729 = vadd.f32 %v3383, %v3673
      %v3730 = vadd.f32 %v3385, %v3675
      %v3731 = vadd.f32 %v3389, %v3679
      %v3732 = vadd.f32 %v3391, %v3681
      %v3733 = vadd.f32 %v3393, %v3683
      %v3734 = vadd.f32 %v3395, %v3685
      %v3735 = vadd.f32 %v3399, %v3689
      %v3736 = vadd.f32 %v3401, %v3691
      %v3737 = vadd.f32 %v3403, %v3693
      %v3738 = vadd.f32 %v3405, %v3695
      %v3739 = vadd.f32 %v3409, %v3699
      %v3740 = vadd.f32 %v3411, %v3701
      %v3741 = vadd.f32 %v3413, %v3703
      %v3742 = vadd.f32 %v3415, %v3705
      %v3743 = vadd.f32 %v3419, %v3709
      %v3744 = vadd.f32 %v3421, %v3711
      %v3745 = vadd.f32 %v3423, %v3713
      %v3746 = vadd.f32 %v3425, %v3715
      %v3747 = vadd.f32 %v3429, %v3719
      %v3748 = vadd.f32 %v3431, %v3721
      %v3749 = vadd.f32 %v3433, %v3723
      %v3750 = vadd.f32 %v3435, %v3725
      %v3751 = vld [vmem:[#allocation2 + $0x8] sm:$0xcc]
      %v3752 = vld [vmem:[#allocation2 + $0x10] sm:$0xff]
      %v3753 = vld [vmem:[#allocation2 + $0x18] sm:$0xff]
      %v3754 = vld [vmem:[#allocation2 + $0x20] sm:$0xff]
      %v3755 = vld [vmem:[#allocation2 + $0x28] sm:$0xff]
      %v3756 = vld [vmem:[#allocation2 + $0x30] sm:$0xff]
      %v3757 = vld [vmem:[#allocation2 + $0x38] sm:$0xff]
      %v3758 = vld [vmem:[#allocation2 + $0x40] sm:$0xff]
      %v3759 = vld [vmem:[#allocation2 + $0x48] sm:$0xff]
      %v3760 = vld [vmem:[#allocation2 + $0x50] sm:$0xff]
      %v3761 = vld [vmem:[#allocation2 + $0x58] sm:$0xff]
      %v3762 = vld [vmem:[#allocation2 + $0x60] sm:$0xff]
      %v3763 = vld [vmem:[#allocation2 + $0x68] sm:$0x11]
      %s3764 = scalar_lea.vmem %s3, 552
      %v3765 = vld [vmem:[%s3764] sm:$0xff]
      %v3766 = vld [vmem:[%s3764 + $0x8] sm:$0xff]
      %v3767 = vld [vmem:[%s3764 + $0x10] sm:$0xff]
      %v3768 = vld [vmem:[%s3764 + $0x18] sm:$0xff]
      %v3769 = vld [vmem:[%s3764 + $0x20] sm:$0xff]
      %v3770 = vld [vmem:[%s3764 + $0x28] sm:$0xff]
      %v3771 = vld [vmem:[%s3764 + $0x30] sm:$0xff]
      %v3772 = vld [vmem:[%s3764 + $0x38] sm:$0xff]
      %v3773 = vld [vmem:[%s3764 + $0x40] sm:$0xff]
      %v3774 = vld [vmem:[%s3764 + $0x48] sm:$0xff]
      %v3775 = vld [vmem:[%s3764 + $0x50] sm:$0xff]
      %v3776 = vld [vmem:[%s3764 + $0x58] sm:$0xff]
      %v3777 = vld [vmem:[%s3764 + $0x60] sm:$0xff]
      %v3778 = vld [vmem:[%s3764 + $0x68] sm:$0xff]
      %v3779 = vld [vmem:[%s3764 + $0x70] sm:$0xff]
      %v3780 = vld [vmem:[%s3764 + $0x78] sm:$0xff]
      %v3781 = vld [vmem:[%s3764 + $0x80] sm:$0xff]
      %v3782 = vld [vmem:[%s3764 + $0x88] sm:$0xff]
      %v3783 = vld [vmem:[%s3764 + $0x90] sm:$0xff]
      %v3784 = vld [vmem:[%s3764 + $0x98] sm:$0xff]
      %v3785 = vld [vmem:[%s3764 + $0xa0] sm:$0xff]
      %v3786 = vld [vmem:[%s3764 + $0xa8] sm:$0xff]
      %v3787 = vld [vmem:[%s3764 + $0xb0] sm:$0x33]
      %v3801 = vunpack.c.l.b16 %v3751
      %v3802 = vunpack.c.h.b16 %v3751
      %v3803 = vunpack.c.l.b16 %v3752
      %v3804 = vunpack.c.h.b16 %v3752
      %v3805 = vunpack.c.l.b16 %v3753
      %v3806 = vunpack.c.h.b16 %v3753
      %v3807 = vunpack.c.l.b16 %v3754
      %v3808 = vunpack.c.h.b16 %v3754
      %v3809 = vunpack.c.l.b16 %v3755
      %v3810 = vunpack.c.h.b16 %v3755
      %v3811 = vunpack.c.l.b16 %v3756
      %v3812 = vunpack.c.h.b16 %v3756
      %v3813 = vunpack.c.l.b16 %v3757
      %v3814 = vunpack.c.h.b16 %v3757
      %v3815 = vunpack.c.l.b16 %v3758
      %v3816 = vunpack.c.h.b16 %v3758
      %v3817 = vunpack.c.l.b16 %v3759
      %v3818 = vunpack.c.h.b16 %v3759
      %v3819 = vunpack.c.l.b16 %v3760
      %v3820 = vunpack.c.h.b16 %v3760
      %v3821 = vunpack.c.l.b16 %v3761
      %v3822 = vunpack.c.h.b16 %v3761
      %v3823 = vunpack.c.l.b16 %v3762
      %v3824 = vunpack.c.h.b16 %v3762
      %v3825 = vunpack.c.l.b16 %v3763
      %v3826 = vunpack.c.h.b16 %v3763
      %v3827 = vpack.c.b16 %v3803, %v3801
      %v3828 = vpack.c.b16 %v3804, %v3802
      %v3829 = vpack.c.b16 %v3807, %v3805
      %v3830 = vpack.c.b16 %v3808, %v3806
      %v3831 = vpack.c.b16 %v3811, %v3809
      %v3832 = vpack.c.b16 %v3812, %v3810
      %v3833 = vpack.c.b16 %v3815, %v3813
      %v3834 = vpack.c.b16 %v3816, %v3814
      %v3835 = vpack.c.b16 %v3819, %v3817
      %v3836 = vpack.c.b16 %v3820, %v3818
      %v3837 = vpack.c.b16 %v3823, %v3821
      %v3838 = vpack.c.b16 %v3824, %v3822
      %v3839 = vpack.c.b16 %v3825, %v3825
      %v3840 = vpack.c.b16 %v3826, %v3826
      %v3841 = vrot.slane %v3827, 2
      %v3842 = vrot.slane %v3829, 2
      %v3843 = vsel %vm1039, %v3841, %v3842
      %v3844 = vrot.slane %v3828, 2
      %v3845 = vrot.slane %v3830, 2
      %v3846 = vsel %vm1039, %v3844, %v3845
      %v3847 = vrot.slane %v3831, 2
      %v3848 = vsel %vm1039, %v3842, %v3847
      %v3849 = vrot.slane %v3832, 2
      %v3850 = vsel %vm1039, %v3845, %v3849
      %v3851 = vrot.slane %v3833, 2
      %v3852 = vsel %vm1039, %v3847, %v3851
      %v3853 = vrot.slane %v3834, 2
      %v3854 = vsel %vm1039, %v3849, %v3853
      %v3855 = vrot.slane %v3835, 2
      %v3856 = vsel %vm1039, %v3851, %v3855
      %v3857 = vrot.slane %v3836, 2
      %v3858 = vsel %vm1039, %v3853, %v3857
      %v3859 = vrot.slane %v3837, 2
      %v3860 = vsel %vm1039, %v3855, %v3859
      %v3861 = vrot.slane %v3838, 2
      %v3862 = vsel %vm1039, %v3857, %v3861
      %v3863 = vrot.slane %v3839, 2
      %v3864 = vsel %vm1039, %v3859, %v3863
      %v3865 = vrot.slane %v3840, 2
      %v3866 = vsel %vm1039, %v3861, %v3865
      %v3896 = vunpack.c.l.b16 %v3765
      %v3897 = vunpack.c.h.b16 %v3765
      %v3898 = vunpack.c.l.b16 %v3766
      %v3899 = vunpack.c.h.b16 %v3766
      %v3900 = vunpack.c.l.b16 %v3767
      %v3901 = vunpack.c.h.b16 %v3767
      %v3902 = vunpack.c.l.b16 %v3768
      %v3903 = vunpack.c.h.b16 %v3768
      %v3904 = vunpack.c.l.b16 %v3769
      %v3905 = vunpack.c.h.b16 %v3769
      %v3906 = vunpack.c.l.b16 %v3770
      %v3907 = vunpack.c.h.b16 %v3770
      %v3908 = vunpack.c.l.b16 %v3771
      %v3909 = vunpack.c.h.b16 %v3771
      %v3910 = vunpack.c.l.b16 %v3772
      %v3911 = vunpack.c.h.b16 %v3772
      %v3912 = vunpack.c.l.b16 %v3773
      %v3913 = vunpack.c.h.b16 %v3773
      %v3914 = vunpack.c.l.b16 %v3774
      %v3915 = vunpack.c.h.b16 %v3774
      %v3916 = vunpack.c.l.b16 %v3775
      %v3917 = vunpack.c.h.b16 %v3775
      %v3918 = vunpack.c.l.b16 %v3776
      %v3919 = vunpack.c.h.b16 %v3776
      %v3920 = vunpack.c.l.b16 %v3777
      %v3921 = vunpack.c.h.b16 %v3777
      %v3922 = vunpack.c.l.b16 %v3778
      %v3923 = vunpack.c.h.b16 %v3778
      %v3924 = vunpack.c.l.b16 %v3779
      %v3925 = vunpack.c.h.b16 %v3779
      %v3926 = vunpack.c.l.b16 %v3780
      %v3927 = vunpack.c.h.b16 %v3780
      %v3928 = vunpack.c.l.b16 %v3781
      %v3929 = vunpack.c.h.b16 %v3781
      %v3930 = vunpack.c.l.b16 %v3782
      %v3931 = vunpack.c.h.b16 %v3782
      %v3932 = vunpack.c.l.b16 %v3783
      %v3933 = vunpack.c.h.b16 %v3783
      %v3934 = vunpack.c.l.b16 %v3784
      %v3935 = vunpack.c.h.b16 %v3784
      %v3936 = vunpack.c.l.b16 %v3785
      %v3937 = vunpack.c.h.b16 %v3785
      %v3938 = vunpack.c.l.b16 %v3786
      %v3939 = vunpack.c.h.b16 %v3786
      %v3940 = vunpack.c.l.b16 %v3787
      %v3941 = vunpack.c.h.b16 %v3787
      %v3942 = vpack.c.b16 %v3898, %v3896
      %v3943 = vpack.c.b16 %v3899, %v3897
      %v3944 = vpack.c.b16 %v3902, %v3900
      %v3945 = vpack.c.b16 %v3903, %v3901
      %v3946 = vpack.c.b16 %v3906, %v3904
      %v3947 = vpack.c.b16 %v3907, %v3905
      %v3948 = vpack.c.b16 %v3910, %v3908
      %v3949 = vpack.c.b16 %v3911, %v3909
      %v3950 = vpack.c.b16 %v3914, %v3912
      %v3951 = vpack.c.b16 %v3915, %v3913
      %v3952 = vpack.c.b16 %v3918, %v3916
      %v3953 = vpack.c.b16 %v3919, %v3917
      %v3954 = vpack.c.b16 %v3922, %v3920
      %v3955 = vpack.c.b16 %v3923, %v3921
      %v3956 = vpack.c.b16 %v3926, %v3924
      %v3957 = vpack.c.b16 %v3927, %v3925
      %v3958 = vpack.c.b16 %v3930, %v3928
      %v3959 = vpack.c.b16 %v3931, %v3929
      %v3960 = vpack.c.b16 %v3934, %v3932
      %v3961 = vpack.c.b16 %v3935, %v3933
      %v3962 = vpack.c.b16 %v3938, %v3936
      %v3963 = vpack.c.b16 %v3939, %v3937
      %v3964 = vpack.c.b16 %v3940, %v3940
      %v3965 = vpack.c.b16 %v3941, %v3941
      %v3989 = vsel %vm3080, %v3846, 0
      %v3992 = vsel %vm3080, %v3850, 0
      %v3995 = vsel %vm3080, %v3854, 0
      %v3998 = vsel %vm3080, %v3858, 0
      %v4001 = vsel %vm3080, %v3862, 0
      %v4004 = vsel %vm3080, %v3866, 0
      %v4007 = vsel %vm3099, %v3964, 0
      %v4010 = vsel %vm3099, %v3965, 0
      %4012 = vmatprep.subr.bf16.mxu0 %v3957
      %4013 = vmatpush1.bf16.msra.mxu0 %v3956
      %4014 = vmatprep.subr.bf16.mxu0 %v3955
      %4015 = vmatpush1.bf16.msra.mxu0 %v3954
      %4016 = vmatprep.subr.bf16.mxu0 %v3953
      %4017 = vmatpush1.bf16.msra.mxu0 %v3952
      %4018 = vmatprep.subr.bf16.mxu0 %v3951
      %4019 = vmatpush1.bf16.msra.mxu0 %v3950
      %4020 = vmatprep.subr.bf16.mxu0 %v3949
      %4021 = vmatpush1.bf16.msra.mxu0 %v3948
      %4022 = vmatprep.subr.bf16.mxu0 %v3947
      %4023 = vmatpush1.bf16.msra.mxu0 %v3946
      %4024 = vmatprep.subr.bf16.mxu0 %v3945
      %4025 = vmatpush1.bf16.msra.mxu0 %v3944
      %4026 = vmatprep.subr.bf16.mxu0 %v3943
      %4027 = vmatpush1.bf16.msra.mxu0 %v3942
      %4028 = vmatprep.subr.bf16.mxu0 0
      %4029 = vmatpush2.bf16.msra.mxu0 0
      %4030 = vmatprep.subr.bf16.mxu0 0
      %4031 = vmatpush2.bf16.msra.mxu0 0
      %4032 = vmatprep.subr.bf16.mxu0 0
      %4033 = vmatpush2.bf16.msra.mxu0 0
      %4034 = vmatprep.subr.bf16.mxu0 0
      %4035 = vmatpush2.bf16.msra.mxu0 0
      %4036 = vmatprep.subr.bf16.mxu0 %v4010
      %4037 = vmatpush2.bf16.msra.mxu0 %v4007
      %4038 = vmatprep.subr.bf16.mxu0 %v3963
      %4039 = vmatpush2.bf16.msra.mxu0 %v3962
      %4040 = vmatprep.subr.bf16.mxu0 %v3961
      %4041 = vmatpush2.bf16.msra.mxu0 %v3960
      %4042 = vmatprep.subr.bf16.mxu0 %v3959
      %4043 = vmatpush2.bf16.msra.mxu0 %v3958
      %4044 = vmatprep.mubr.bf16.mxu0 %v3989
      %4045 = vmatmul.mubr.bf16.gmra.mxu0 %v3843
      %v4046 = vpop.f32.mrf.mxu0
      %v4047 = vadd.f32 0.0, %v4046
      %v4048 = vpop.f32.mrf.mxu0
      %v4049 = vadd.f32 0.0, %v4048
      %v4050 = vpop.f32.mrf.mxu0
      %v4051 = vadd.f32 0.0, %v4050
      %v4052 = vpop.f32.mrf.mxu0
      %v4053 = vadd.f32 0.0, %v4052
      %4054 = vmatprep.mubr.bf16.mxu0 %v3992
      %4055 = vmatmul.mubr.bf16.gmra.mxu0 %v3848
      %v4056 = vpop.f32.mrf.mxu0
      %v4057 = vadd.f32 0.0, %v4056
      %v4058 = vpop.f32.mrf.mxu0
      %v4059 = vadd.f32 0.0, %v4058
      %v4060 = vpop.f32.mrf.mxu0
      %v4061 = vadd.f32 0.0, %v4060
      %v4062 = vpop.f32.mrf.mxu0
      %v4063 = vadd.f32 0.0, %v4062
      %4064 = vmatprep.mubr.bf16.mxu0 %v3995
      %4065 = vmatmul.mubr.bf16.gmra.mxu0 %v3852
      %v4066 = vpop.f32.mrf.mxu0
      %v4067 = vadd.f32 0.0, %v4066
      %v4068 = vpop.f32.mrf.mxu0
      %v4069 = vadd.f32 0.0, %v4068
      %v4070 = vpop.f32.mrf.mxu0
      %v4071 = vadd.f32 0.0, %v4070
      %v4072 = vpop.f32.mrf.mxu0
      %v4073 = vadd.f32 0.0, %v4072
      %4074 = vmatprep.mubr.bf16.mxu0 %v3998
      %4075 = vmatmul.mubr.bf16.gmra.mxu0 %v3856
      %v4076 = vpop.f32.mrf.mxu0
      %v4077 = vadd.f32 0.0, %v4076
      %v4078 = vpop.f32.mrf.mxu0
      %v4079 = vadd.f32 0.0, %v4078
      %v4080 = vpop.f32.mrf.mxu0
      %v4081 = vadd.f32 0.0, %v4080
      %v4082 = vpop.f32.mrf.mxu0
      %v4083 = vadd.f32 0.0, %v4082
      %4084 = vmatprep.mubr.bf16.mxu0 %v4001
      %4085 = vmatmul.mubr.bf16.gmra.mxu0 %v3860
      %v4086 = vpop.f32.mrf.mxu0
      %v4087 = vadd.f32 0.0, %v4086
      %v4088 = vpop.f32.mrf.mxu0
      %v4089 = vadd.f32 0.0, %v4088
      %v4090 = vpop.f32.mrf.mxu0
      %v4091 = vadd.f32 0.0, %v4090
      %v4092 = vpop.f32.mrf.mxu0
      %v4093 = vadd.f32 0.0, %v4092
      %4094 = vmatprep.mubr.bf16.mxu0 %v4004
      %4095 = vmatmul.mubr.bf16.gmra.mxu0 %v3864
      %v4096 = vpop.f32.mrf.mxu0
      %v4097 = vadd.f32 0.0, %v4096
      %v4098 = vpop.f32.mrf.mxu0
      %v4099 = vadd.f32 0.0, %v4098
      %v4100 = vpop.f32.mrf.mxu0
      %v4101 = vadd.f32 0.0, %v4100
      %v4102 = vpop.f32.mrf.mxu0
      %v4103 = vadd.f32 0.0, %v4102
      %4104 = vdwg.mxu0
      %v4105 = vadd.f32 %v3727, %v4047
      %v4106 = vadd.f32 %v3728, %v4049
      %v4107 = vadd.f32 %v3729, %v4051
      %v4108 = vadd.f32 %v3730, %v4053
      %v4109 = vadd.f32 %v3731, %v4057
      %v4110 = vadd.f32 %v3732, %v4059
      %v4111 = vadd.f32 %v3733, %v4061
      %v4112 = vadd.f32 %v3734, %v4063
      %v4113 = vadd.f32 %v3735, %v4067
      %v4114 = vadd.f32 %v3736, %v4069
      %v4115 = vadd.f32 %v3737, %v4071
      %v4116 = vadd.f32 %v3738, %v4073
      %v4117 = vadd.f32 %v3739, %v4077
      %v4118 = vadd.f32 %v3740, %v4079
      %v4119 = vadd.f32 %v3741, %v4081
      %v4120 = vadd.f32 %v3742, %v4083
      %v4121 = vadd.f32 %v3743, %v4087
      %v4122 = vadd.f32 %v3744, %v4089
      %v4123 = vadd.f32 %v3745, %v4091
      %v4124 = vadd.f32 %v3746, %v4093
      %v4125 = vadd.f32 %v3747, %v4097
      %v4126 = vadd.f32 %v3748, %v4099
      %v4127 = vadd.f32 %v3749, %v4101
      %v4128 = vadd.f32 %v3750, %v4103
      %v4129 = vld [vmem:[#allocation2 + $0x68] sm:$0x33]
      %s4130 = scalar_lea.vmem %s3, 736
      %v4131 = vld [vmem:[%s4130] sm:$0xff]
      %v4132 = vld [vmem:[%s4130 + $0x8] sm:$0xff]
      %v4133 = vld [vmem:[%s4130 + $0x10] sm:$0xff]
      %v4134 = vld [vmem:[%s4130 + $0x18] sm:$0xff]
      %v4135 = vld [vmem:[%s4130 + $0x20] sm:$0xff]
      %v4136 = vld [vmem:[%s4130 + $0x28] sm:$0xff]
      %v4137 = vld [vmem:[%s4130 + $0x30] sm:$0xff]
      %v4138 = vld [vmem:[%s4130 + $0x38] sm:$0xff]
      %v4139 = vld [vmem:[%s4130 + $0x40] sm:$0xff]
      %v4140 = vld [vmem:[%s4130 + $0x48] sm:$0xff]
      %v4141 = vld [vmem:[%s4130 + $0x50] sm:$0xff]
      %v4142 = vld [vmem:[%s4130 + $0x58] sm:$0xff]
      %v4143 = vld [vmem:[%s4130 + $0x60] sm:$0xff]
      %v4144 = vld [vmem:[%s4130 + $0x68] sm:$0xff]
      %v4145 = vld [vmem:[%s4130 + $0x70] sm:$0xff]
      %v4146 = vld [vmem:[%s4130 + $0x78] sm:$0xff]
      %v4147 = vld [vmem:[%s4130 + $0x80] sm:$0xff]
      %v4148 = vld [vmem:[%s4130 + $0x88] sm:$0xff]
      %v4149 = vld [vmem:[%s4130 + $0x90] sm:$0xff]
      %v4150 = vld [vmem:[%s4130 + $0x98] sm:$0xff]
      %v4151 = vld [vmem:[%s4130 + $0xa0] sm:$0xff]
      %v4152 = vld [vmem:[%s4130 + $0xa8] sm:$0xff]
      %v4153 = vld [vmem:[%s4130 + $0xb0] sm:$0x33]
      %v4155 = vunpack.c.l.b16 %v4129
      %v4156 = vunpack.c.h.b16 %v4129
      %v4157 = vpack.c.b16 %v4155, %v4155
      %v4158 = vpack.c.b16 %v4156, %v4156
      %v4160 = vshrl.u32 %v3827, 16
      %v4162 = vrot.slane %v4160, 2
      %v4163 = vshll.u32 %v3827, 16
      %v4165 = vrot.slane %v4163, 3
      %v4166 = vor.u32 %v4162, %v4165
      %v4168 = vshrl.u32 %v3829, 16
      %v4170 = vrot.slane %v4168, 2
      %v4171 = vshll.u32 %v3829, 16
      %v4173 = vrot.slane %v4171, 3
      %v4174 = vor.u32 %v4170, %v4173
      %v4175 = vsel %vm1249, %v4166, %v4174
      %v4177 = vshrl.u32 %v3828, 16
      %v4179 = vrot.slane %v4177, 2
      %v4180 = vshll.u32 %v3828, 16
      %v4182 = vrot.slane %v4180, 3
      %v4183 = vor.u32 %v4179, %v4182
      %v4185 = vshrl.u32 %v3830, 16
      %v4187 = vrot.slane %v4185, 2
      %v4188 = vshll.u32 %v3830, 16
      %v4190 = vrot.slane %v4188, 3
      %v4191 = vor.u32 %v4187, %v4190
      %v4192 = vsel %vm1249, %v4183, %v4191
      %v4194 = vshrl.u32 %v3831, 16
      %v4196 = vrot.slane %v4194, 2
      %v4197 = vshll.u32 %v3831, 16
      %v4199 = vrot.slane %v4197, 3
      %v4200 = vor.u32 %v4196, %v4199
      %v4201 = vsel %vm1249, %v4174, %v4200
      %v4203 = vshrl.u32 %v3832, 16
      %v4205 = vrot.slane %v4203, 2
      %v4206 = vshll.u32 %v3832, 16
      %v4208 = vrot.slane %v4206, 3
      %v4209 = vor.u32 %v4205, %v4208
      %v4210 = vsel %vm1249, %v4191, %v4209
      %v4212 = vshrl.u32 %v3833, 16
      %v4214 = vrot.slane %v4212, 2
      %v4215 = vshll.u32 %v3833, 16
      %v4217 = vrot.slane %v4215, 3
      %v4218 = vor.u32 %v4214, %v4217
      %v4219 = vsel %vm1249, %v4200, %v4218
      %v4221 = vshrl.u32 %v3834, 16
      %v4223 = vrot.slane %v4221, 2
      %v4224 = vshll.u32 %v3834, 16
      %v4226 = vrot.slane %v4224, 3
      %v4227 = vor.u32 %v4223, %v4226
      %v4228 = vsel %vm1249, %v4209, %v4227
      %v4230 = vshrl.u32 %v3835, 16
      %v4232 = vrot.slane %v4230, 2
      %v4233 = vshll.u32 %v3835, 16
      %v4235 = vrot.slane %v4233, 3
      %v4236 = vor.u32 %v4232, %v4235
      %v4237 = vsel %vm1249, %v4218, %v4236
      %v4239 = vshrl.u32 %v3836, 16
      %v4241 = vrot.slane %v4239, 2
      %v4242 = vshll.u32 %v3836, 16
      %v4244 = vrot.slane %v4242, 3
      %v4245 = vor.u32 %v4241, %v4244
      %v4246 = vsel %vm1249, %v4227, %v4245
      %v4248 = vshrl.u32 %v3837, 16
      %v4250 = vrot.slane %v4248, 2
      %v4251 = vshll.u32 %v3837, 16
      %v4253 = vrot.slane %v4251, 3
      %v4254 = vor.u32 %v4250, %v4253
      %v4255 = vsel %vm1249, %v4236, %v4254
      %v4257 = vshrl.u32 %v3838, 16
      %v4259 = vrot.slane %v4257, 2
      %v4260 = vshll.u32 %v3838, 16
      %v4262 = vrot.slane %v4260, 3
      %v4263 = vor.u32 %v4259, %v4262
      %v4264 = vsel %vm1249, %v4245, %v4263
      %v4266 = vshrl.u32 %v4157, 16
      %v4268 = vrot.slane %v4266, 2
      %v4269 = vshll.u32 %v4157, 16
      %v4271 = vrot.slane %v4269, 3
      %v4272 = vor.u32 %v4268, %v4271
      %v4273 = vsel %vm1249, %v4254, %v4272
      %v4275 = vshrl.u32 %v4158, 16
      %v4277 = vrot.slane %v4275, 2
      %v4278 = vshll.u32 %v4158, 16
      %v4280 = vrot.slane %v4278, 3
      %v4281 = vor.u32 %v4277, %v4280
      %v4282 = vsel %vm1249, %v4263, %v4281
      %v4312 = vunpack.c.l.b16 %v4131
      %v4313 = vunpack.c.h.b16 %v4131
      %v4314 = vunpack.c.l.b16 %v4132
      %v4315 = vunpack.c.h.b16 %v4132
      %v4316 = vunpack.c.l.b16 %v4133
      %v4317 = vunpack.c.h.b16 %v4133
      %v4318 = vunpack.c.l.b16 %v4134
      %v4319 = vunpack.c.h.b16 %v4134
      %v4320 = vunpack.c.l.b16 %v4135
      %v4321 = vunpack.c.h.b16 %v4135
      %v4322 = vunpack.c.l.b16 %v4136
      %v4323 = vunpack.c.h.b16 %v4136
      %v4324 = vunpack.c.l.b16 %v4137
      %v4325 = vunpack.c.h.b16 %v4137
      %v4326 = vunpack.c.l.b16 %v4138
      %v4327 = vunpack.c.h.b16 %v4138
      %v4328 = vunpack.c.l.b16 %v4139
      %v4329 = vunpack.c.h.b16 %v4139
      %v4330 = vunpack.c.l.b16 %v4140
      %v4331 = vunpack.c.h.b16 %v4140
      %v4332 = vunpack.c.l.b16 %v4141
      %v4333 = vunpack.c.h.b16 %v4141
      %v4334 = vunpack.c.l.b16 %v4142
      %v4335 = vunpack.c.h.b16 %v4142
      %v4336 = vunpack.c.l.b16 %v4143
      %v4337 = vunpack.c.h.b16 %v4143
      %v4338 = vunpack.c.l.b16 %v4144
      %v4339 = vunpack.c.h.b16 %v4144
      %v4340 = vunpack.c.l.b16 %v4145
      %v4341 = vunpack.c.h.b16 %v4145
      %v4342 = vunpack.c.l.b16 %v4146
      %v4343 = vunpack.c.h.b16 %v4146
      %v4344 = vunpack.c.l.b16 %v4147
      %v4345 = vunpack.c.h.b16 %v4147
      %v4346 = vunpack.c.l.b16 %v4148
      %v4347 = vunpack.c.h.b16 %v4148
      %v4348 = vunpack.c.l.b16 %v4149
      %v4349 = vunpack.c.h.b16 %v4149
      %v4350 = vunpack.c.l.b16 %v4150
      %v4351 = vunpack.c.h.b16 %v4150
      %v4352 = vunpack.c.l.b16 %v4151
      %v4353 = vunpack.c.h.b16 %v4151
      %v4354 = vunpack.c.l.b16 %v4152
      %v4355 = vunpack.c.h.b16 %v4152
      %v4356 = vunpack.c.l.b16 %v4153
      %v4357 = vunpack.c.h.b16 %v4153
      %v4358 = vpack.c.b16 %v4314, %v4312
      %v4359 = vpack.c.b16 %v4315, %v4313
      %v4360 = vpack.c.b16 %v4318, %v4316
      %v4361 = vpack.c.b16 %v4319, %v4317
      %v4362 = vpack.c.b16 %v4322, %v4320
      %v4363 = vpack.c.b16 %v4323, %v4321
      %v4364 = vpack.c.b16 %v4326, %v4324
      %v4365 = vpack.c.b16 %v4327, %v4325
      %v4366 = vpack.c.b16 %v4330, %v4328
      %v4367 = vpack.c.b16 %v4331, %v4329
      %v4368 = vpack.c.b16 %v4334, %v4332
      %v4369 = vpack.c.b16 %v4335, %v4333
      %v4370 = vpack.c.b16 %v4338, %v4336
      %v4371 = vpack.c.b16 %v4339, %v4337
      %v4372 = vpack.c.b16 %v4342, %v4340
      %v4373 = vpack.c.b16 %v4343, %v4341
      %v4374 = vpack.c.b16 %v4346, %v4344
      %v4375 = vpack.c.b16 %v4347, %v4345
      %v4376 = vpack.c.b16 %v4350, %v4348
      %v4377 = vpack.c.b16 %v4351, %v4349
      %v4378 = vpack.c.b16 %v4354, %v4352
      %v4379 = vpack.c.b16 %v4355, %v4353
      %v4380 = vpack.c.b16 %v4356, %v4356
      %v4381 = vpack.c.b16 %v4357, %v4357
      %v4405 = vsel %vm3080, %v4192, 0
      %v4408 = vsel %vm3080, %v4210, 0
      %v4411 = vsel %vm3080, %v4228, 0
      %v4414 = vsel %vm3080, %v4246, 0
      %v4417 = vsel %vm3080, %v4264, 0
      %v4420 = vsel %vm3080, %v4282, 0
      %v4423 = vsel %vm3099, %v4380, 0
      %v4426 = vsel %vm3099, %v4381, 0
      %4428 = vmatprep.subr.bf16.mxu0 %v4373
      %4429 = vmatpush1.bf16.msra.mxu0 %v4372
      %4430 = vmatprep.subr.bf16.mxu0 %v4371
      %4431 = vmatpush1.bf16.msra.mxu0 %v4370
      %4432 = vmatprep.subr.bf16.mxu0 %v4369
      %4433 = vmatpush1.bf16.msra.mxu0 %v4368
      %4434 = vmatprep.subr.bf16.mxu0 %v4367
      %4435 = vmatpush1.bf16.msra.mxu0 %v4366
      %4436 = vmatprep.subr.bf16.mxu0 %v4365
      %4437 = vmatpush1.bf16.msra.mxu0 %v4364
      %4438 = vmatprep.subr.bf16.mxu0 %v4363
      %4439 = vmatpush1.bf16.msra.mxu0 %v4362
      %4440 = vmatprep.subr.bf16.mxu0 %v4361
      %4441 = vmatpush1.bf16.msra.mxu0 %v4360
      %4442 = vmatprep.subr.bf16.mxu0 %v4359
      %4443 = vmatpush1.bf16.msra.mxu0 %v4358
      %4444 = vmatprep.subr.bf16.mxu0 0
      %4445 = vmatpush2.bf16.msra.mxu0 0
      %4446 = vmatprep.subr.bf16.mxu0 0
      %4447 = vmatpush2.bf16.msra.mxu0 0
      %4448 = vmatprep.subr.bf16.mxu0 0
      %4449 = vmatpush2.bf16.msra.mxu0 0
      %4450 = vmatprep.subr.bf16.mxu0 0
      %4451 = vmatpush2.bf16.msra.mxu0 0
      %4452 = vmatprep.subr.bf16.mxu0 %v4426
      %4453 = vmatpush2.bf16.msra.mxu0 %v4423
      %4454 = vmatprep.subr.bf16.mxu0 %v4379
      %4455 = vmatpush2.bf16.msra.mxu0 %v4378
      %4456 = vmatprep.subr.bf16.mxu0 %v4377
      %4457 = vmatpush2.bf16.msra.mxu0 %v4376
      %4458 = vmatprep.subr.bf16.mxu0 %v4375
      %4459 = vmatpush2.bf16.msra.mxu0 %v4374
      %4460 = vmatprep.mubr.bf16.mxu0 %v4405
      %4461 = vmatmul.mubr.bf16.gmra.mxu0 %v4175
      %v4462 = vpop.f32.mrf.mxu0
      %v4463 = vadd.f32 0.0, %v4462
      %v4464 = vpop.f32.mrf.mxu0
      %v4465 = vadd.f32 0.0, %v4464
      %v4466 = vpop.f32.mrf.mxu0
      %v4467 = vadd.f32 0.0, %v4466
      %v4468 = vpop.f32.mrf.mxu0
      %v4469 = vadd.f32 0.0, %v4468
      %4470 = vmatprep.mubr.bf16.mxu0 %v4408
      %4471 = vmatmul.mubr.bf16.gmra.mxu0 %v4201
      %v4472 = vpop.f32.mrf.mxu0
      %v4473 = vadd.f32 0.0, %v4472
      %v4474 = vpop.f32.mrf.mxu0
      %v4475 = vadd.f32 0.0, %v4474
      %v4476 = vpop.f32.mrf.mxu0
      %v4477 = vadd.f32 0.0, %v4476
      %v4478 = vpop.f32.mrf.mxu0
      %v4479 = vadd.f32 0.0, %v4478
      %4480 = vmatprep.mubr.bf16.mxu0 %v4411
      %4481 = vmatmul.mubr.bf16.gmra.mxu0 %v4219
      %v4482 = vpop.f32.mrf.mxu0
      %v4483 = vadd.f32 0.0, %v4482
      %v4484 = vpop.f32.mrf.mxu0
      %v4485 = vadd.f32 0.0, %v4484
      %v4486 = vpop.f32.mrf.mxu0
      %v4487 = vadd.f32 0.0, %v4486
      %v4488 = vpop.f32.mrf.mxu0
      %v4489 = vadd.f32 0.0, %v4488
      %4490 = vmatprep.mubr.bf16.mxu0 %v4414
      %4491 = vmatmul.mubr.bf16.gmra.mxu0 %v4237
      %v4492 = vpop.f32.mrf.mxu0
      %v4493 = vadd.f32 0.0, %v4492
      %v4494 = vpop.f32.mrf.mxu0
      %v4495 = vadd.f32 0.0, %v4494
      %v4496 = vpop.f32.mrf.mxu0
      %v4497 = vadd.f32 0.0, %v4496
      %v4498 = vpop.f32.mrf.mxu0
      %v4499 = vadd.f32 0.0, %v4498
      %4500 = vmatprep.mubr.bf16.mxu0 %v4417
      %4501 = vmatmul.mubr.bf16.gmra.mxu0 %v4255
      %v4502 = vpop.f32.mrf.mxu0
      %v4503 = vadd.f32 0.0, %v4502
      %v4504 = vpop.f32.mrf.mxu0
      %v4505 = vadd.f32 0.0, %v4504
      %v4506 = vpop.f32.mrf.mxu0
      %v4507 = vadd.f32 0.0, %v4506
      %v4508 = vpop.f32.mrf.mxu0
      %v4509 = vadd.f32 0.0, %v4508
      %4510 = vmatprep.mubr.bf16.mxu0 %v4420
      %4511 = vmatmul.mubr.bf16.gmra.mxu0 %v4273
      %v4512 = vpop.f32.mrf.mxu0
      %v4513 = vadd.f32 0.0, %v4512
      %v4514 = vpop.f32.mrf.mxu0
      %v4515 = vadd.f32 0.0, %v4514
      %v4516 = vpop.f32.mrf.mxu0
      %v4517 = vadd.f32 0.0, %v4516
      %v4518 = vpop.f32.mrf.mxu0
      %v4519 = vadd.f32 0.0, %v4518
      %4520 = vdwg.mxu0
      %v4521 = vadd.f32 %v4105, %v4463
      %v4522 = vadd.f32 %v4106, %v4465
      %v4523 = vadd.f32 %v4107, %v4467
      %v4524 = vadd.f32 %v4108, %v4469
      %v4525 = vadd.f32 %v4109, %v4473
      %v4526 = vadd.f32 %v4110, %v4475
      %v4527 = vadd.f32 %v4111, %v4477
      %v4528 = vadd.f32 %v4112, %v4479
      %v4529 = vadd.f32 %v4113, %v4483
      %v4530 = vadd.f32 %v4114, %v4485
      %v4531 = vadd.f32 %v4115, %v4487
      %v4532 = vadd.f32 %v4116, %v4489
      %v4533 = vadd.f32 %v4117, %v4493
      %v4534 = vadd.f32 %v4118, %v4495
      %v4535 = vadd.f32 %v4119, %v4497
      %v4536 = vadd.f32 %v4120, %v4499
      %v4537 = vadd.f32 %v4121, %v4503
      %v4538 = vadd.f32 %v4122, %v4505
      %v4539 = vadd.f32 %v4123, %v4507
      %v4540 = vadd.f32 %v4124, %v4509
      %v4541 = vadd.f32 %v4125, %v4513
      %v4542 = vadd.f32 %v4126, %v4515
      %v4543 = vadd.f32 %v4127, %v4517
      %v4544 = vadd.f32 %v4128, %v4519
      %v4545 = vld [vmem:[#allocation2 + $0x8] sm:$0x88]
      %s4546 = scalar_lea.vmem %s3, 920
      %v4547 = vld [vmem:[%s4546] sm:$0xff]
      %v4548 = vld [vmem:[%s4546 + $0x8] sm:$0xff]
      %v4549 = vld [vmem:[%s4546 + $0x10] sm:$0xff]
      %v4550 = vld [vmem:[%s4546 + $0x18] sm:$0xff]
      %v4551 = vld [vmem:[%s4546 + $0x20] sm:$0xff]
      %v4552 = vld [vmem:[%s4546 + $0x28] sm:$0xff]
      %v4553 = vld [vmem:[%s4546 + $0x30] sm:$0xff]
      %v4554 = vld [vmem:[%s4546 + $0x38] sm:$0xff]
      %v4555 = vld [vmem:[%s4546 + $0x40] sm:$0xff]
      %v4556 = vld [vmem:[%s4546 + $0x48] sm:$0xff]
      %v4557 = vld [vmem:[%s4546 + $0x50] sm:$0xff]
      %v4558 = vld [vmem:[%s4546 + $0x58] sm:$0xff]
      %v4559 = vld [vmem:[%s4546 + $0x60] sm:$0xff]
      %v4560 = vld [vmem:[%s4546 + $0x68] sm:$0xff]
      %v4561 = vld [vmem:[%s4546 + $0x70] sm:$0xff]
      %v4562 = vld [vmem:[%s4546 + $0x78] sm:$0xff]
      %v4563 = vld [vmem:[%s4546 + $0x80] sm:$0xff]
      %v4564 = vld [vmem:[%s4546 + $0x88] sm:$0xff]
      %v4565 = vld [vmem:[%s4546 + $0x90] sm:$0xff]
      %v4566 = vld [vmem:[%s4546 + $0x98] sm:$0xff]
      %v4567 = vld [vmem:[%s4546 + $0xa0] sm:$0xff]
      %v4568 = vld [vmem:[%s4546 + $0xa8] sm:$0xff]
      %v4569 = vld [vmem:[%s4546 + $0xb0] sm:$0x33]
      %v4571 = vunpack.c.l.b16 %v4545
      %v4572 = vunpack.c.h.b16 %v4545
      %v4573 = vpack.c.b16 %v3803, %v4571
      %v4574 = vpack.c.b16 %v3804, %v4572
      %v4575 = vrot.slane %v4573, 3
      %v4576 = vrot.slane %v3829, 3
      %v4577 = vsel %vm1515, %v4575, %v4576
      %v4578 = vrot.slane %v4574, 3
      %v4579 = vrot.slane %v3830, 3
      %v4580 = vsel %vm1515, %v4578, %v4579
      %v4581 = vrot.slane %v3831, 3
      %v4582 = vsel %vm1515, %v4576, %v4581
      %v4583 = vrot.slane %v3832, 3
      %v4584 = vsel %vm1515, %v4579, %v4583
      %v4585 = vrot.slane %v3833, 3
      %v4586 = vsel %vm1515, %v4581, %v4585
      %v4587 = vrot.slane %v3834, 3
      %v4588 = vsel %vm1515, %v4583, %v4587
      %v4589 = vrot.slane %v3835, 3
      %v4590 = vsel %vm1515, %v4585, %v4589
      %v4591 = vrot.slane %v3836, 3
      %v4592 = vsel %vm1515, %v4587, %v4591
      %v4593 = vrot.slane %v3837, 3
      %v4594 = vsel %vm1515, %v4589, %v4593
      %v4595 = vrot.slane %v3838, 3
      %v4596 = vsel %vm1515, %v4591, %v4595
      %v4597 = vrot.slane %v4157, 3
      %v4598 = vsel %vm1515, %v4593, %v4597
      %v4599 = vrot.slane %v4158, 3
      %v4600 = vsel %vm1515, %v4595, %v4599
      %v4630 = vunpack.c.l.b16 %v4547
      %v4631 = vunpack.c.h.b16 %v4547
      %v4632 = vunpack.c.l.b16 %v4548
      %v4633 = vunpack.c.h.b16 %v4548
      %v4634 = vunpack.c.l.b16 %v4549
      %v4635 = vunpack.c.h.b16 %v4549
      %v4636 = vunpack.c.l.b16 %v4550
      %v4637 = vunpack.c.h.b16 %v4550
      %v4638 = vunpack.c.l.b16 %v4551
      %v4639 = vunpack.c.h.b16 %v4551
      %v4640 = vunpack.c.l.b16 %v4552
      %v4641 = vunpack.c.h.b16 %v4552
      %v4642 = vunpack.c.l.b16 %v4553
      %v4643 = vunpack.c.h.b16 %v4553
      %v4644 = vunpack.c.l.b16 %v4554
      %v4645 = vunpack.c.h.b16 %v4554
      %v4646 = vunpack.c.l.b16 %v4555
      %v4647 = vunpack.c.h.b16 %v4555
      %v4648 = vunpack.c.l.b16 %v4556
      %v4649 = vunpack.c.h.b16 %v4556
      %v4650 = vunpack.c.l.b16 %v4557
      %v4651 = vunpack.c.h.b16 %v4557
      %v4652 = vunpack.c.l.b16 %v4558
      %v4653 = vunpack.c.h.b16 %v4558
      %v4654 = vunpack.c.l.b16 %v4559
      %v4655 = vunpack.c.h.b16 %v4559
      %v4656 = vunpack.c.l.b16 %v4560
      %v4657 = vunpack.c.h.b16 %v4560
      %v4658 = vunpack.c.l.b16 %v4561
      %v4659 = vunpack.c.h.b16 %v4561
      %v4660 = vunpack.c.l.b16 %v4562
      %v4661 = vunpack.c.h.b16 %v4562
      %v4662 = vunpack.c.l.b16 %v4563
      %v4663 = vunpack.c.h.b16 %v4563
      %v4664 = vunpack.c.l.b16 %v4564
      %v4665 = vunpack.c.h.b16 %v4564
      %v4666 = vunpack.c.l.b16 %v4565
      %v4667 = vunpack.c.h.b16 %v4565
      %v4668 = vunpack.c.l.b16 %v4566
      %v4669 = vunpack.c.h.b16 %v4566
      %v4670 = vunpack.c.l.b16 %v4567
      %v4671 = vunpack.c.h.b16 %v4567
      %v4672 = vunpack.c.l.b16 %v4568
      %v4673 = vunpack.c.h.b16 %v4568
      %v4674 = vunpack.c.l.b16 %v4569
      %v4675 = vunpack.c.h.b16 %v4569
      %v4676 = vpack.c.b16 %v4632, %v4630
      %v4677 = vpack.c.b16 %v4633, %v4631
      %v4678 = vpack.c.b16 %v4636, %v4634
      %v4679 = vpack.c.b16 %v4637, %v4635
      %v4680 = vpack.c.b16 %v4640, %v4638
      %v4681 = vpack.c.b16 %v4641, %v4639
      %v4682 = vpack.c.b16 %v4644, %v4642
      %v4683 = vpack.c.b16 %v4645, %v4643
      %v4684 = vpack.c.b16 %v4648, %v4646
      %v4685 = vpack.c.b16 %v4649, %v4647
      %v4686 = vpack.c.b16 %v4652, %v4650
      %v4687 = vpack.c.b16 %v4653, %v4651
      %v4688 = vpack.c.b16 %v4656, %v4654
      %v4689 = vpack.c.b16 %v4657, %v4655
      %v4690 = vpack.c.b16 %v4660, %v4658
      %v4691 = vpack.c.b16 %v4661, %v4659
      %v4692 = vpack.c.b16 %v4664, %v4662
      %v4693 = vpack.c.b16 %v4665, %v4663
      %v4694 = vpack.c.b16 %v4668, %v4666
      %v4695 = vpack.c.b16 %v4669, %v4667
      %v4696 = vpack.c.b16 %v4672, %v4670
      %v4697 = vpack.c.b16 %v4673, %v4671
      %v4698 = vpack.c.b16 %v4674, %v4674
      %v4699 = vpack.c.b16 %v4675, %v4675
      %v4723 = vsel %vm3080, %v4580, 0
      %v4726 = vsel %vm3080, %v4584, 0
      %v4729 = vsel %vm3080, %v4588, 0
      %v4732 = vsel %vm3080, %v4592, 0
      %v4735 = vsel %vm3080, %v4596, 0
      %v4738 = vsel %vm3080, %v4600, 0
      %v4741 = vsel %vm3099, %v4698, 0
      %v4744 = vsel %vm3099, %v4699, 0
      %4746 = vmatprep.subr.bf16.mxu0 %v4691
      %4747 = vmatpush1.bf16.msra.mxu0 %v4690
      %4748 = vmatprep.subr.bf16.mxu0 %v4689
      %4749 = vmatpush1.bf16.msra.mxu0 %v4688
      %4750 = vmatprep.subr.bf16.mxu0 %v4687
      %4751 = vmatpush1.bf16.msra.mxu0 %v4686
      %4752 = vmatprep.subr.bf16.mxu0 %v4685
      %4753 = vmatpush1.bf16.msra.mxu0 %v4684
      %4754 = vmatprep.subr.bf16.mxu0 %v4683
      %4755 = vmatpush1.bf16.msra.mxu0 %v4682
      %4756 = vmatprep.subr.bf16.mxu0 %v4681
      %4757 = vmatpush1.bf16.msra.mxu0 %v4680
      %4758 = vmatprep.subr.bf16.mxu0 %v4679
      %4759 = vmatpush1.bf16.msra.mxu0 %v4678
      %4760 = vmatprep.subr.bf16.mxu0 %v4677
      %4761 = vmatpush1.bf16.msra.mxu0 %v4676
      %4762 = vmatprep.subr.bf16.mxu0 0
      %4763 = vmatpush2.bf16.msra.mxu0 0
      %4764 = vmatprep.subr.bf16.mxu0 0
      %4765 = vmatpush2.bf16.msra.mxu0 0
      %4766 = vmatprep.subr.bf16.mxu0 0
      %4767 = vmatpush2.bf16.msra.mxu0 0
      %4768 = vmatprep.subr.bf16.mxu0 0
      %4769 = vmatpush2.bf16.msra.mxu0 0
      %4770 = vmatprep.subr.bf16.mxu0 %v4744
      %4771 = vmatpush2.bf16.msra.mxu0 %v4741
      %4772 = vmatprep.subr.bf16.mxu0 %v4697
      %4773 = vmatpush2.bf16.msra.mxu0 %v4696
      %4774 = vmatprep.subr.bf16.mxu0 %v4695
      %4775 = vmatpush2.bf16.msra.mxu0 %v4694
      %4776 = vmatprep.subr.bf16.mxu0 %v4693
      %4777 = vmatpush2.bf16.msra.mxu0 %v4692
      %4778 = vmatprep.mubr.bf16.mxu0 %v4723
      %4779 = vmatmul.mubr.bf16.gmra.mxu0 %v4577
      %v4780 = vpop.f32.mrf.mxu0
      %v4781 = vadd.f32 0.0, %v4780
      %v4782 = vpop.f32.mrf.mxu0
      %v4783 = vadd.f32 0.0, %v4782
      %v4784 = vpop.f32.mrf.mxu0
      %v4785 = vadd.f32 0.0, %v4784
      %v4786 = vpop.f32.mrf.mxu0
      %v4787 = vadd.f32 0.0, %v4786
      %4788 = vmatprep.mubr.bf16.mxu0 %v4726
      %4789 = vmatmul.mubr.bf16.gmra.mxu0 %v4582
      %v4790 = vpop.f32.mrf.mxu0
      %v4791 = vadd.f32 0.0, %v4790
      %v4792 = vpop.f32.mrf.mxu0
      %v4793 = vadd.f32 0.0, %v4792
      %v4794 = vpop.f32.mrf.mxu0
      %v4795 = vadd.f32 0.0, %v4794
      %v4796 = vpop.f32.mrf.mxu0
      %v4797 = vadd.f32 0.0, %v4796
      %4798 = vmatprep.mubr.bf16.mxu0 %v4729
      %4799 = vmatmul.mubr.bf16.gmra.mxu0 %v4586
      %v4800 = vpop.f32.mrf.mxu0
      %v4801 = vadd.f32 0.0, %v4800
      %v4802 = vpop.f32.mrf.mxu0
      %v4803 = vadd.f32 0.0, %v4802
      %v4804 = vpop.f32.mrf.mxu0
      %v4805 = vadd.f32 0.0, %v4804
      %v4806 = vpop.f32.mrf.mxu0
      %v4807 = vadd.f32 0.0, %v4806
      %4808 = vmatprep.mubr.bf16.mxu0 %v4732
      %4809 = vmatmul.mubr.bf16.gmra.mxu0 %v4590
      %v4810 = vpop.f32.mrf.mxu0
      %v4811 = vadd.f32 0.0, %v4810
      %v4812 = vpop.f32.mrf.mxu0
      %v4813 = vadd.f32 0.0, %v4812
      %v4814 = vpop.f32.mrf.mxu0
      %v4815 = vadd.f32 0.0, %v4814
      %v4816 = vpop.f32.mrf.mxu0
      %v4817 = vadd.f32 0.0, %v4816
      %4818 = vmatprep.mubr.bf16.mxu0 %v4735
      %4819 = vmatmul.mubr.bf16.gmra.mxu0 %v4594
      %v4820 = vpop.f32.mrf.mxu0
      %v4821 = vadd.f32 0.0, %v4820
      %v4822 = vpop.f32.mrf.mxu0
      %v4823 = vadd.f32 0.0, %v4822
      %v4824 = vpop.f32.mrf.mxu0
      %v4825 = vadd.f32 0.0, %v4824
      %v4826 = vpop.f32.mrf.mxu0
      %v4827 = vadd.f32 0.0, %v4826
      %4828 = vmatprep.mubr.bf16.mxu0 %v4738
      %4829 = vmatmul.mubr.bf16.gmra.mxu0 %v4598
      %v4830 = vpop.f32.mrf.mxu0
      %v4831 = vadd.f32 0.0, %v4830
      %v4832 = vpop.f32.mrf.mxu0
      %v4833 = vadd.f32 0.0, %v4832
      %v4834 = vpop.f32.mrf.mxu0
      %v4835 = vadd.f32 0.0, %v4834
      %v4836 = vpop.f32.mrf.mxu0
      %v4837 = vadd.f32 0.0, %v4836
      %4838 = vdwg.mxu0
      %v4839 = vadd.f32 %v4521, %v4781
      %v4840 = vadd.f32 %v4522, %v4783
      %v4841 = vadd.f32 %v4523, %v4785
      %v4842 = vadd.f32 %v4524, %v4787
      %v4843 = vadd.f32 %v4525, %v4791
      %v4844 = vadd.f32 %v4526, %v4793
      %v4845 = vadd.f32 %v4527, %v4795
      %v4846 = vadd.f32 %v4528, %v4797
      %v4847 = vadd.f32 %v4529, %v4801
      %v4848 = vadd.f32 %v4530, %v4803
      %v4849 = vadd.f32 %v4531, %v4805
      %v4850 = vadd.f32 %v4532, %v4807
      %v4851 = vadd.f32 %v4533, %v4811
      %v4852 = vadd.f32 %v4534, %v4813
      %v4853 = vadd.f32 %v4535, %v4815
      %v4854 = vadd.f32 %v4536, %v4817
      %v4855 = vadd.f32 %v4537, %v4821
      %v4856 = vadd.f32 %v4538, %v4823
      %v4857 = vadd.f32 %v4539, %v4825
      %v4858 = vadd.f32 %v4540, %v4827
      %v4859 = vadd.f32 %v4541, %v4831
      %v4860 = vadd.f32 %v4542, %v4833
      %v4861 = vadd.f32 %v4543, %v4835
      %v4862 = vadd.f32 %v4544, %v4837
      %v4863 = vld [vmem:[#allocation2 + $0x18] sm:$0xff]
      %v4864 = vld [vmem:[#allocation2 + $0x20] sm:$0xff]
      %v4865 = vld [vmem:[#allocation2 + $0x28] sm:$0xff]
      %v4866 = vld [vmem:[#allocation2 + $0x30] sm:$0xff]
      %v4867 = vld [vmem:[#allocation2 + $0x38] sm:$0xff]
      %v4868 = vld [vmem:[#allocation2 + $0x40] sm:$0xff]
      %v4869 = vld [vmem:[#allocation2 + $0x48] sm:$0xff]
      %v4870 = vld [vmem:[#allocation2 + $0x50] sm:$0xff]
      %v4871 = vld [vmem:[#allocation2 + $0x58] sm:$0xff]
      %v4872 = vld [vmem:[#allocation2 + $0x60] sm:$0xff]
      %v4873 = vld [vmem:[#allocation2 + $0x68] sm:$0xff]
      %v4874 = vld [vmem:[#allocation2 + $0x70] sm:$0x77]
      %s4875 = scalar_lea.vmem %s3, 1104
      %v4876 = vld [vmem:[%s4875] sm:$0xff]
      %v4877 = vld [vmem:[%s4875 + $0x8] sm:$0xff]
      %v4878 = vld [vmem:[%s4875 + $0x10] sm:$0xff]
      %v4879 = vld [vmem:[%s4875 + $0x18] sm:$0xff]
      %v4880 = vld [vmem:[%s4875 + $0x20] sm:$0xff]
      %v4881 = vld [vmem:[%s4875 + $0x28] sm:$0xff]
      %v4882 = vld [vmem:[%s4875 + $0x30] sm:$0xff]
      %v4883 = vld [vmem:[%s4875 + $0x38] sm:$0xff]
      %v4884 = vld [vmem:[%s4875 + $0x40] sm:$0xff]
      %v4885 = vld [vmem:[%s4875 + $0x48] sm:$0xff]
      %v4886 = vld [vmem:[%s4875 + $0x50] sm:$0xff]
      %v4887 = vld [vmem:[%s4875 + $0x58] sm:$0xff]
      %v4888 = vld [vmem:[%s4875 + $0x60] sm:$0xff]
      %v4889 = vld [vmem:[%s4875 + $0x68] sm:$0xff]
      %v4890 = vld [vmem:[%s4875 + $0x70] sm:$0xff]
      %v4891 = vld [vmem:[%s4875 + $0x78] sm:$0xff]
      %v4892 = vld [vmem:[%s4875 + $0x80] sm:$0xff]
      %v4893 = vld [vmem:[%s4875 + $0x88] sm:$0xff]
      %v4894 = vld [vmem:[%s4875 + $0x90] sm:$0xff]
      %v4895 = vld [vmem:[%s4875 + $0x98] sm:$0xff]
      %v4896 = vld [vmem:[%s4875 + $0xa0] sm:$0xff]
      %v4897 = vld [vmem:[%s4875 + $0xa8] sm:$0xff]
      %v4898 = vld [vmem:[%s4875 + $0xb0] sm:$0x33]
      %v4911 = vunpack.c.l.b16 %v4863
      %v4912 = vunpack.c.h.b16 %v4863
      %v4913 = vunpack.c.l.b16 %v4864
      %v4914 = vunpack.c.h.b16 %v4864
      %v4915 = vunpack.c.l.b16 %v4865
      %v4916 = vunpack.c.h.b16 %v4865
      %v4917 = vunpack.c.l.b16 %v4866
      %v4918 = vunpack.c.h.b16 %v4866
      %v4919 = vunpack.c.l.b16 %v4867
      %v4920 = vunpack.c.h.b16 %v4867
      %v4921 = vunpack.c.l.b16 %v4868
      %v4922 = vunpack.c.h.b16 %v4868
      %v4923 = vunpack.c.l.b16 %v4869
      %v4924 = vunpack.c.h.b16 %v4869
      %v4925 = vunpack.c.l.b16 %v4870
      %v4926 = vunpack.c.h.b16 %v4870
      %v4927 = vunpack.c.l.b16 %v4871
      %v4928 = vunpack.c.h.b16 %v4871
      %v4929 = vunpack.c.l.b16 %v4872
      %v4930 = vunpack.c.h.b16 %v4872
      %v4931 = vunpack.c.l.b16 %v4873
      %v4932 = vunpack.c.h.b16 %v4873
      %v4933 = vunpack.c.l.b16 %v4874
      %v4934 = vunpack.c.h.b16 %v4874
      %v4935 = vpack.c.b16 %v4913, %v4911
      %v4936 = vpack.c.b16 %v4914, %v4912
      %v4937 = vpack.c.b16 %v4917, %v4915
      %v4938 = vpack.c.b16 %v4918, %v4916
      %v4939 = vpack.c.b16 %v4921, %v4919
      %v4940 = vpack.c.b16 %v4922, %v4920
      %v4941 = vpack.c.b16 %v4925, %v4923
      %v4942 = vpack.c.b16 %v4926, %v4924
      %v4943 = vpack.c.b16 %v4929, %v4927
      %v4944 = vpack.c.b16 %v4930, %v4928
      %v4945 = vpack.c.b16 %v4933, %v4931
      %v4946 = vpack.c.b16 %v4934, %v4932
      %v4976 = vunpack.c.l.b16 %v4876
      %v4977 = vunpack.c.h.b16 %v4876
      %v4978 = vunpack.c.l.b16 %v4877
      %v4979 = vunpack.c.h.b16 %v4877
      %v4980 = vunpack.c.l.b16 %v4878
      %v4981 = vunpack.c.h.b16 %v4878
      %v4982 = vunpack.c.l.b16 %v4879
      %v4983 = vunpack.c.h.b16 %v4879
      %v4984 = vunpack.c.l.b16 %v4880
      %v4985 = vunpack.c.h.b16 %v4880
      %v4986 = vunpack.c.l.b16 %v4881
      %v4987 = vunpack.c.h.b16 %v4881
      %v4988 = vunpack.c.l.b16 %v4882
      %v4989 = vunpack.c.h.b16 %v4882
      %v4990 = vunpack.c.l.b16 %v4883
      %v4991 = vunpack.c.h.b16 %v4883
      %v4992 = vunpack.c.l.b16 %v4884
      %v4993 = vunpack.c.h.b16 %v4884
      %v4994 = vunpack.c.l.b16 %v4885
      %v4995 = vunpack.c.h.b16 %v4885
      %v4996 = vunpack.c.l.b16 %v4886
      %v4997 = vunpack.c.h.b16 %v4886
      %v4998 = vunpack.c.l.b16 %v4887
      %v4999 = vunpack.c.h.b16 %v4887
      %v5000 = vunpack.c.l.b16 %v4888
      %v5001 = vunpack.c.h.b16 %v4888
      %v5002 = vunpack.c.l.b16 %v4889
      %v5003 = vunpack.c.h.b16 %v4889
      %v5004 = vunpack.c.l.b16 %v4890
      %v5005 = vunpack.c.h.b16 %v4890
      %v5006 = vunpack.c.l.b16 %v4891
      %v5007 = vunpack.c.h.b16 %v4891
      %v5008 = vunpack.c.l.b16 %v4892
      %v5009 = vunpack.c.h.b16 %v4892
      %v5010 = vunpack.c.l.b16 %v4893
      %v5011 = vunpack.c.h.b16 %v4893
      %v5012 = vunpack.c.l.b16 %v4894
      %v5013 = vunpack.c.h.b16 %v4894
      %v5014 = vunpack.c.l.b16 %v4895
      %v5015 = vunpack.c.h.b16 %v4895
      %v5016 = vunpack.c.l.b16 %v4896
      %v5017 = vunpack.c.h.b16 %v4896
      %v5018 = vunpack.c.l.b16 %v4897
      %v5019 = vunpack.c.h.b16 %v4897
      %v5020 = vunpack.c.l.b16 %v4898
      %v5021 = vunpack.c.h.b16 %v4898
      %v5022 = vpack.c.b16 %v4978, %v4976
      %v5023 = vpack.c.b16 %v4979, %v4977
      %v5024 = vpack.c.b16 %v4982, %v4980
      %v5025 = vpack.c.b16 %v4983, %v4981
      %v5026 = vpack.c.b16 %v4986, %v4984
      %v5027 = vpack.c.b16 %v4987, %v4985
      %v5028 = vpack.c.b16 %v4990, %v4988
      %v5029 = vpack.c.b16 %v4991, %v4989
      %v5030 = vpack.c.b16 %v4994, %v4992
      %v5031 = vpack.c.b16 %v4995, %v4993
      %v5032 = vpack.c.b16 %v4998, %v4996
      %v5033 = vpack.c.b16 %v4999, %v4997
      %v5034 = vpack.c.b16 %v5002, %v5000
      %v5035 = vpack.c.b16 %v5003, %v5001
      %v5036 = vpack.c.b16 %v5006, %v5004
      %v5037 = vpack.c.b16 %v5007, %v5005
      %v5038 = vpack.c.b16 %v5010, %v5008
      %v5039 = vpack.c.b16 %v5011, %v5009
      %v5040 = vpack.c.b16 %v5014, %v5012
      %v5041 = vpack.c.b16 %v5015, %v5013
      %v5042 = vpack.c.b16 %v5018, %v5016
      %v5043 = vpack.c.b16 %v5019, %v5017
      %v5044 = vpack.c.b16 %v5020, %v5020
      %v5045 = vpack.c.b16 %v5021, %v5021
      %v5069 = vsel %vm3080, %v4936, 0
      %v5072 = vsel %vm3080, %v4938, 0
      %v5075 = vsel %vm3080, %v4940, 0
      %v5078 = vsel %vm3080, %v4942, 0
      %v5081 = vsel %vm3080, %v4944, 0
      %v5084 = vsel %vm3080, %v4946, 0
      %v5087 = vsel %vm3099, %v5044, 0
      %v5090 = vsel %vm3099, %v5045, 0
      %5092 = vmatprep.subr.bf16.mxu0 %v5037
      %5093 = vmatpush1.bf16.msra.mxu0 %v5036
      %5094 = vmatprep.subr.bf16.mxu0 %v5035
      %5095 = vmatpush1.bf16.msra.mxu0 %v5034
      %5096 = vmatprep.subr.bf16.mxu0 %v5033
      %5097 = vmatpush1.bf16.msra.mxu0 %v5032
      %5098 = vmatprep.subr.bf16.mxu0 %v5031
      %5099 = vmatpush1.bf16.msra.mxu0 %v5030
      %5100 = vmatprep.subr.bf16.mxu0 %v5029
      %5101 = vmatpush1.bf16.msra.mxu0 %v5028
      %5102 = vmatprep.subr.bf16.mxu0 %v5027
      %5103 = vmatpush1.bf16.msra.mxu0 %v5026
      %5104 = vmatprep.subr.bf16.mxu0 %v5025
      %5105 = vmatpush1.bf16.msra.mxu0 %v5024
      %5106 = vmatprep.subr.bf16.mxu0 %v5023
      %5107 = vmatpush1.bf16.msra.mxu0 %v5022
      %5108 = vmatprep.subr.bf16.mxu0 0
      %5109 = vmatpush2.bf16.msra.mxu0 0
      %5110 = vmatprep.subr.bf16.mxu0 0
      %5111 = vmatpush2.bf16.msra.mxu0 0
      %5112 = vmatprep.subr.bf16.mxu0 0
      %5113 = vmatpush2.bf16.msra.mxu0 0
      %5114 = vmatprep.subr.bf16.mxu0 0
      %5115 = vmatpush2.bf16.msra.mxu0 0
      %5116 = vmatprep.subr.bf16.mxu0 %v5090
      %5117 = vmatpush2.bf16.msra.mxu0 %v5087
      %5118 = vmatprep.subr.bf16.mxu0 %v5043
      %5119 = vmatpush2.bf16.msra.mxu0 %v5042
      %5120 = vmatprep.subr.bf16.mxu0 %v5041
      %5121 = vmatpush2.bf16.msra.mxu0 %v5040
      %5122 = vmatprep.subr.bf16.mxu0 %v5039
      %5123 = vmatpush2.bf16.msra.mxu0 %v5038
      %5124 = vmatprep.mubr.bf16.mxu0 %v5069
      %5125 = vmatmul.mubr.bf16.gmra.mxu0 %v4935
      %v5126 = vpop.f32.mrf.mxu0
      %v5127 = vadd.f32 0.0, %v5126
      %v5128 = vpop.f32.mrf.mxu0
      %v5129 = vadd.f32 0.0, %v5128
      %v5130 = vpop.f32.mrf.mxu0
      %v5131 = vadd.f32 0.0, %v5130
      %v5132 = vpop.f32.mrf.mxu0
      %v5133 = vadd.f32 0.0, %v5132
      %5134 = vmatprep.mubr.bf16.mxu0 %v5072
      %5135 = vmatmul.mubr.bf16.gmra.mxu0 %v4937
      %v5136 = vpop.f32.mrf.mxu0
      %v5137 = vadd.f32 0.0, %v5136
      %v5138 = vpop.f32.mrf.mxu0
      %v5139 = vadd.f32 0.0, %v5138
      %v5140 = vpop.f32.mrf.mxu0
      %v5141 = vadd.f32 0.0, %v5140
      %v5142 = vpop.f32.mrf.mxu0
      %v5143 = vadd.f32 0.0, %v5142
      %5144 = vmatprep.mubr.bf16.mxu0 %v5075
      %5145 = vmatmul.mubr.bf16.gmra.mxu0 %v4939
      %v5146 = vpop.f32.mrf.mxu0
      %v5147 = vadd.f32 0.0, %v5146
      %v5148 = vpop.f32.mrf.mxu0
      %v5149 = vadd.f32 0.0, %v5148
      %v5150 = vpop.f32.mrf.mxu0
      %v5151 = vadd.f32 0.0, %v5150
      %v5152 = vpop.f32.mrf.mxu0
      %v5153 = vadd.f32 0.0, %v5152
      %5154 = vmatprep.mubr.bf16.mxu0 %v5078
      %5155 = vmatmul.mubr.bf16.gmra.mxu0 %v4941
      %v5156 = vpop.f32.mrf.mxu0
      %v5157 = vadd.f32 0.0, %v5156
      %v5158 = vpop.f32.mrf.mxu0
      %v5159 = vadd.f32 0.0, %v5158
      %v5160 = vpop.f32.mrf.mxu0
      %v5161 = vadd.f32 0.0, %v5160
      %v5162 = vpop.f32.mrf.mxu0
      %v5163 = vadd.f32 0.0, %v5162
      %5164 = vmatprep.mubr.bf16.mxu0 %v5081
      %5165 = vmatmul.mubr.bf16.gmra.mxu0 %v4943
      %v5166 = vpop.f32.mrf.mxu0
      %v5167 = vadd.f32 0.0, %v5166
      %v5168 = vpop.f32.mrf.mxu0
      %v5169 = vadd.f32 0.0, %v5168
      %v5170 = vpop.f32.mrf.mxu0
      %v5171 = vadd.f32 0.0, %v5170
      %v5172 = vpop.f32.mrf.mxu0
      %v5173 = vadd.f32 0.0, %v5172
      %5174 = vmatprep.mubr.bf16.mxu0 %v5084
      %5175 = vmatmul.mubr.bf16.gmra.mxu0 %v4945
      %v5176 = vpop.f32.mrf.mxu0
      %v5177 = vadd.f32 0.0, %v5176
      %v5178 = vpop.f32.mrf.mxu0
      %v5179 = vadd.f32 0.0, %v5178
      %v5180 = vpop.f32.mrf.mxu0
      %v5181 = vadd.f32 0.0, %v5180
      %v5182 = vpop.f32.mrf.mxu0
      %v5183 = vadd.f32 0.0, %v5182
      %5184 = vdwg.mxu0
      %v5185 = vadd.f32 %v4839, %v5127
      %v5186 = vadd.f32 %v4840, %v5129
      %v5187 = vadd.f32 %v4841, %v5131
      %v5188 = vadd.f32 %v4842, %v5133
      %v5189 = vadd.f32 %v4843, %v5137
      %v5190 = vadd.f32 %v4844, %v5139
      %v5191 = vadd.f32 %v4845, %v5141
      %v5192 = vadd.f32 %v4846, %v5143
      %v5193 = vadd.f32 %v4847, %v5147
      %v5194 = vadd.f32 %v4848, %v5149
      %v5195 = vadd.f32 %v4849, %v5151
      %v5196 = vadd.f32 %v4850, %v5153
      %v5197 = vadd.f32 %v4851, %v5157
      %v5198 = vadd.f32 %v4852, %v5159
      %v5199 = vadd.f32 %v4853, %v5161
      %v5200 = vadd.f32 %v4854, %v5163
      %v5201 = vadd.f32 %v4855, %v5167
      %v5202 = vadd.f32 %v4856, %v5169
      %v5203 = vadd.f32 %v4857, %v5171
      %v5204 = vadd.f32 %v4858, %v5173
      %v5205 = vadd.f32 %v4859, %v5177
      %v5206 = vadd.f32 %v4860, %v5179
      %v5207 = vadd.f32 %v4861, %v5181
      %v5208 = vadd.f32 %v4862, %v5183
      %v5209 = vld [vmem:[#allocation2 + $0x70] sm:$0xff]
      %s5210 = scalar_lea.vmem %s3, 1288
      %v5211 = vld [vmem:[%s5210] sm:$0xff]
      %v5212 = vld [vmem:[%s5210 + $0x8] sm:$0xff]
      %v5213 = vld [vmem:[%s5210 + $0x10] sm:$0xff]
      %v5214 = vld [vmem:[%s5210 + $0x18] sm:$0xff]
      %v5215 = vld [vmem:[%s5210 + $0x20] sm:$0xff]
      %v5216 = vld [vmem:[%s5210 + $0x28] sm:$0xff]
      %v5217 = vld [vmem:[%s5210 + $0x30] sm:$0xff]
      %v5218 = vld [vmem:[%s5210 + $0x38] sm:$0xff]
      %v5219 = vld [vmem:[%s5210 + $0x40] sm:$0xff]
      %v5220 = vld [vmem:[%s5210 + $0x48] sm:$0xff]
      %v5221 = vld [vmem:[%s5210 + $0x50] sm:$0xff]
      %v5222 = vld [vmem:[%s5210 + $0x58] sm:$0xff]
      %v5223 = vld [vmem:[%s5210 + $0x60] sm:$0xff]
      %v5224 = vld [vmem:[%s5210 + $0x68] sm:$0xff]
      %v5225 = vld [vmem:[%s5210 + $0x70] sm:$0xff]
      %v5226 = vld [vmem:[%s5210 + $0x78] sm:$0xff]
      %v5227 = vld [vmem:[%s5210 + $0x80] sm:$0xff]
      %v5228 = vld [vmem:[%s5210 + $0x88] sm:$0xff]
      %v5229 = vld [vmem:[%s5210 + $0x90] sm:$0xff]
      %v5230 = vld [vmem:[%s5210 + $0x98] sm:$0xff]
      %v5231 = vld [vmem:[%s5210 + $0xa0] sm:$0xff]
      %v5232 = vld [vmem:[%s5210 + $0xa8] sm:$0xff]
      %v5233 = vld [vmem:[%s5210 + $0xb0] sm:$0x33]
      %v5235 = vunpack.c.l.b16 %v5209
      %v5236 = vunpack.c.h.b16 %v5209
      %v5237 = vpack.c.b16 %v5235, %v4931
      %v5238 = vpack.c.b16 %v5236, %v4932
      %v5240 = vshrl.u32 %v4935, 16
      %v5242 = vshll.u32 %v4935, 16
      %v5244 = vrot.slane %v5242, 1
      %v5245 = vor.u32 %v5240, %v5244
      %v5247 = vshll.u32 %v4937, 16
      %v5249 = vrot.slane %v5247, 1
      %v5250 = vsel %vm397, %v5245, %v5249
      %v5251 = vshrl.u32 %v4936, 16
      %v5253 = vshll.u32 %v4936, 16
      %v5255 = vrot.slane %v5253, 1
      %v5256 = vor.u32 %v5251, %v5255
      %v5257 = vshll.u32 %v4938, 16
      %v5259 = vrot.slane %v5257, 1
      %v5260 = vsel %vm397, %v5256, %v5259
      %v5261 = vshrl.u32 %v4937, 16
      %v5263 = vor.u32 %v5261, %v5249
      %v5265 = vshll.u32 %v4939, 16
      %v5267 = vrot.slane %v5265, 1
      %v5268 = vsel %vm397, %v5263, %v5267
      %v5269 = vshrl.u32 %v4938, 16
      %v5271 = vor.u32 %v5269, %v5259
      %v5272 = vshll.u32 %v4940, 16
      %v5274 = vrot.slane %v5272, 1
      %v5275 = vsel %vm397, %v5271, %v5274
      %v5276 = vshrl.u32 %v4939, 16
      %v5278 = vor.u32 %v5276, %v5267
      %v5280 = vshll.u32 %v4941, 16
      %v5282 = vrot.slane %v5280, 1
      %v5283 = vsel %vm397, %v5278, %v5282
      %v5284 = vshrl.u32 %v4940, 16
      %v5286 = vor.u32 %v5284, %v5274
      %v5287 = vshll.u32 %v4942, 16
      %v5289 = vrot.slane %v5287, 1
      %v5290 = vsel %vm397, %v5286, %v5289
      %v5291 = vshrl.u32 %v4941, 16
      %v5293 = vor.u32 %v5291, %v5282
      %v5295 = vshll.u32 %v4943, 16
      %v5297 = vrot.slane %v5295, 1
      %v5298 = vsel %vm397, %v5293, %v5297
      %v5299 = vshrl.u32 %v4942, 16
      %v5301 = vor.u32 %v5299, %v5289
      %v5302 = vshll.u32 %v4944, 16
      %v5304 = vrot.slane %v5302, 1
      %v5305 = vsel %vm397, %v5301, %v5304
      %v5306 = vshrl.u32 %v4943, 16
      %v5308 = vor.u32 %v5306, %v5297
      %v5310 = vshll.u32 %v5237, 16
      %v5312 = vrot.slane %v5310, 1
      %v5313 = vsel %vm397, %v5308, %v5312
      %v5314 = vshrl.u32 %v4944, 16
      %v5316 = vor.u32 %v5314, %v5304
      %v5318 = vshll.u32 %v5238, 16
      %v5320 = vrot.slane %v5318, 1
      %v5321 = vsel %vm397, %v5316, %v5320
      %v5322 = vshrl.u32 %v5237, 16
      %v5324 = vor.u32 %v5322, %v5312
      %v5325 = vshrl.u32 %v5238, 16
      %v5327 = vor.u32 %v5325, %v5320
      %v5357 = vunpack.c.l.b16 %v5211
      %v5358 = vunpack.c.h.b16 %v5211
      %v5359 = vunpack.c.l.b16 %v5212
      %v5360 = vunpack.c.h.b16 %v5212
      %v5361 = vunpack.c.l.b16 %v5213
      %v5362 = vunpack.c.h.b16 %v5213
      %v5363 = vunpack.c.l.b16 %v5214
      %v5364 = vunpack.c.h.b16 %v5214
      %v5365 = vunpack.c.l.b16 %v5215
      %v5366 = vunpack.c.h.b16 %v5215
      %v5367 = vunpack.c.l.b16 %v5216
      %v5368 = vunpack.c.h.b16 %v5216
      %v5369 = vunpack.c.l.b16 %v5217
      %v5370 = vunpack.c.h.b16 %v5217
      %v5371 = vunpack.c.l.b16 %v5218
      %v5372 = vunpack.c.h.b16 %v5218
      %v5373 = vunpack.c.l.b16 %v5219
      %v5374 = vunpack.c.h.b16 %v5219
      %v5375 = vunpack.c.l.b16 %v5220
      %v5376 = vunpack.c.h.b16 %v5220
      %v5377 = vunpack.c.l.b16 %v5221
      %v5378 = vunpack.c.h.b16 %v5221
      %v5379 = vunpack.c.l.b16 %v5222
      %v5380 = vunpack.c.h.b16 %v5222
      %v5381 = vunpack.c.l.b16 %v5223
      %v5382 = vunpack.c.h.b16 %v5223
      %v5383 = vunpack.c.l.b16 %v5224
      %v5384 = vunpack.c.h.b16 %v5224
      %v5385 = vunpack.c.l.b16 %v5225
      %v5386 = vunpack.c.h.b16 %v5225
      %v5387 = vunpack.c.l.b16 %v5226
      %v5388 = vunpack.c.h.b16 %v5226
      %v5389 = vunpack.c.l.b16 %v5227
      %v5390 = vunpack.c.h.b16 %v5227
      %v5391 = vunpack.c.l.b16 %v5228
      %v5392 = vunpack.c.h.b16 %v5228
      %v5393 = vunpack.c.l.b16 %v5229
      %v5394 = vunpack.c.h.b16 %v5229
      %v5395 = vunpack.c.l.b16 %v5230
      %v5396 = vunpack.c.h.b16 %v5230
      %v5397 = vunpack.c.l.b16 %v5231
      %v5398 = vunpack.c.h.b16 %v5231
      %v5399 = vunpack.c.l.b16 %v5232
      %v5400 = vunpack.c.h.b16 %v5232
      %v5401 = vunpack.c.l.b16 %v5233
      %v5402 = vunpack.c.h.b16 %v5233
      %v5403 = vpack.c.b16 %v5359, %v5357
      %v5404 = vpack.c.b16 %v5360, %v5358
      %v5405 = vpack.c.b16 %v5363, %v5361
      %v5406 = vpack.c.b16 %v5364, %v5362
      %v5407 = vpack.c.b16 %v5367, %v5365
      %v5408 = vpack.c.b16 %v5368, %v5366
      %v5409 = vpack.c.b16 %v5371, %v5369
      %v5410 = vpack.c.b16 %v5372, %v5370
      %v5411 = vpack.c.b16 %v5375, %v5373
      %v5412 = vpack.c.b16 %v5376, %v5374
      %v5413 = vpack.c.b16 %v5379, %v5377
      %v5414 = vpack.c.b16 %v5380, %v5378
      %v5415 = vpack.c.b16 %v5383, %v5381
      %v5416 = vpack.c.b16 %v5384, %v5382
      %v5417 = vpack.c.b16 %v5387, %v5385
      %v5418 = vpack.c.b16 %v5388, %v5386
      %v5419 = vpack.c.b16 %v5391, %v5389
      %v5420 = vpack.c.b16 %v5392, %v5390
      %v5421 = vpack.c.b16 %v5395, %v5393
      %v5422 = vpack.c.b16 %v5396, %v5394
      %v5423 = vpack.c.b16 %v5399, %v5397
      %v5424 = vpack.c.b16 %v5400, %v5398
      %v5425 = vpack.c.b16 %v5401, %v5401
      %v5426 = vpack.c.b16 %v5402, %v5402
      %v5450 = vsel %vm3080, %v5260, 0
      %v5453 = vsel %vm3080, %v5275, 0
      %v5456 = vsel %vm3080, %v5290, 0
      %v5459 = vsel %vm3080, %v5305, 0
      %v5462 = vsel %vm3080, %v5321, 0
      %v5465 = vsel %vm3080, %v5327, 0
      %v5468 = vsel %vm3099, %v5425, 0
      %v5471 = vsel %vm3099, %v5426, 0
      %5473 = vmatprep.subr.bf16.mxu0 %v5418
      %5474 = vmatpush1.bf16.msra.mxu0 %v5417
      %5475 = vmatprep.subr.bf16.mxu0 %v5416
      %5476 = vmatpush1.bf16.msra.mxu0 %v5415
      %5477 = vmatprep.subr.bf16.mxu0 %v5414
      %5478 = vmatpush1.bf16.msra.mxu0 %v5413
      %5479 = vmatprep.subr.bf16.mxu0 %v5412
      %5480 = vmatpush1.bf16.msra.mxu0 %v5411
      %5481 = vmatprep.subr.bf16.mxu0 %v5410
      %5482 = vmatpush1.bf16.msra.mxu0 %v5409
      %5483 = vmatprep.subr.bf16.mxu0 %v5408
      %5484 = vmatpush1.bf16.msra.mxu0 %v5407
      %5485 = vmatprep.subr.bf16.mxu0 %v5406
      %5486 = vmatpush1.bf16.msra.mxu0 %v5405
      %5487 = vmatprep.subr.bf16.mxu0 %v5404
      %5488 = vmatpush1.bf16.msra.mxu0 %v5403
      %5489 = vmatprep.subr.bf16.mxu0 0
      %5490 = vmatpush2.bf16.msra.mxu0 0
      %5491 = vmatprep.subr.bf16.mxu0 0
      %5492 = vmatpush2.bf16.msra.mxu0 0
      %5493 = vmatprep.subr.bf16.mxu0 0
      %5494 = vmatpush2.bf16.msra.mxu0 0
      %5495 = vmatprep.subr.bf16.mxu0 0
      %5496 = vmatpush2.bf16.msra.mxu0 0
      %5497 = vmatprep.subr.bf16.mxu0 %v5471
      %5498 = vmatpush2.bf16.msra.mxu0 %v5468
      %5499 = vmatprep.subr.bf16.mxu0 %v5424
      %5500 = vmatpush2.bf16.msra.mxu0 %v5423
      %5501 = vmatprep.subr.bf16.mxu0 %v5422
      %5502 = vmatpush2.bf16.msra.mxu0 %v5421
      %5503 = vmatprep.subr.bf16.mxu0 %v5420
      %5504 = vmatpush2.bf16.msra.mxu0 %v5419
      %5505 = vmatprep.mubr.bf16.mxu0 %v5450
      %5506 = vmatmul.mubr.bf16.gmra.mxu0 %v5250
      %v5507 = vpop.f32.mrf.mxu0
      %v5508 = vadd.f32 0.0, %v5507
      %v5509 = vpop.f32.mrf.mxu0
      %v5510 = vadd.f32 0.0, %v5509
      %v5511 = vpop.f32.mrf.mxu0
      %v5512 = vadd.f32 0.0, %v5511
      %v5513 = vpop.f32.mrf.mxu0
      %v5514 = vadd.f32 0.0, %v5513
      %5515 = vmatprep.mubr.bf16.mxu0 %v5453
      %5516 = vmatmul.mubr.bf16.gmra.mxu0 %v5268
      %v5517 = vpop.f32.mrf.mxu0
      %v5518 = vadd.f32 0.0, %v5517
      %v5519 = vpop.f32.mrf.mxu0
      %v5520 = vadd.f32 0.0, %v5519
      %v5521 = vpop.f32.mrf.mxu0
      %v5522 = vadd.f32 0.0, %v5521
      %v5523 = vpop.f32.mrf.mxu0
      %v5524 = vadd.f32 0.0, %v5523
      %5525 = vmatprep.mubr.bf16.mxu0 %v5456
      %5526 = vmatmul.mubr.bf16.gmra.mxu0 %v5283
      %v5527 = vpop.f32.mrf.mxu0
      %v5528 = vadd.f32 0.0, %v5527
      %v5529 = vpop.f32.mrf.mxu0
      %v5530 = vadd.f32 0.0, %v5529
      %v5531 = vpop.f32.mrf.mxu0
      %v5532 = vadd.f32 0.0, %v5531
      %v5533 = vpop.f32.mrf.mxu0
      %v5534 = vadd.f32 0.0, %v5533
      %5535 = vmatprep.mubr.bf16.mxu0 %v5459
      %5536 = vmatmul.mubr.bf16.gmra.mxu0 %v5298
      %v5537 = vpop.f32.mrf.mxu0
      %v5538 = vadd.f32 0.0, %v5537
      %v5539 = vpop.f32.mrf.mxu0
      %v5540 = vadd.f32 0.0, %v5539
      %v5541 = vpop.f32.mrf.mxu0
      %v5542 = vadd.f32 0.0, %v5541
      %v5543 = vpop.f32.mrf.mxu0
      %v5544 = vadd.f32 0.0, %v5543
      %5545 = vmatprep.mubr.bf16.mxu0 %v5462
      %5546 = vmatmul.mubr.bf16.gmra.mxu0 %v5313
      %v5547 = vpop.f32.mrf.mxu0
      %v5548 = vadd.f32 0.0, %v5547
      %v5549 = vpop.f32.mrf.mxu0
      %v5550 = vadd.f32 0.0, %v5549
      %v5551 = vpop.f32.mrf.mxu0
      %v5552 = vadd.f32 0.0, %v5551
      %v5553 = vpop.f32.mrf.mxu0
      %v5554 = vadd.f32 0.0, %v5553
      %5555 = vmatprep.mubr.bf16.mxu0 %v5465
      %5556 = vmatmul.mubr.bf16.gmra.mxu0 %v5324
      %v5557 = vpop.f32.mrf.mxu0
      %v5558 = vadd.f32 0.0, %v5557
      %v5559 = vpop.f32.mrf.mxu0
      %v5560 = vadd.f32 0.0, %v5559
      %v5561 = vpop.f32.mrf.mxu0
      %v5562 = vadd.f32 0.0, %v5561
      %v5563 = vpop.f32.mrf.mxu0
      %v5564 = vadd.f32 0.0, %v5563
      %5565 = vdwg.mxu0
      %v5566 = vadd.f32 %v5185, %v5508
      %v5567 = vadd.f32 %v5186, %v5510
      %v5568 = vadd.f32 %v5187, %v5512
      %v5569 = vadd.f32 %v5188, %v5514
      %v5570 = vadd.f32 %v5189, %v5518
      %v5571 = vadd.f32 %v5190, %v5520
      %v5572 = vadd.f32 %v5191, %v5522
      %v5573 = vadd.f32 %v5192, %v5524
      %v5574 = vadd.f32 %v5193, %v5528
      %v5575 = vadd.f32 %v5194, %v5530
      %v5576 = vadd.f32 %v5195, %v5532
      %v5577 = vadd.f32 %v5196, %v5534
      %v5578 = vadd.f32 %v5197, %v5538
      %v5579 = vadd.f32 %v5198, %v5540
      %v5580 = vadd.f32 %v5199, %v5542
      %v5581 = vadd.f32 %v5200, %v5544
      %v5582 = vadd.f32 %v5201, %v5548
      %v5583 = vadd.f32 %v5202, %v5550
      %v5584 = vadd.f32 %v5203, %v5552
      %v5585 = vadd.f32 %v5204, %v5554
      %v5586 = vadd.f32 %v5205, %v5558
      %v5587 = vadd.f32 %v5206, %v5560
      %v5588 = vadd.f32 %v5207, %v5562
      %v5589 = vadd.f32 %v5208, %v5564
      %v5590 = vld [vmem:[#allocation2 + $0x18] sm:$0xee]
      %s5591 = scalar_lea.vmem %s3, 1472
      %v5592 = vld [vmem:[%s5591] sm:$0xff]
      %v5593 = vld [vmem:[%s5591 + $0x8] sm:$0xff]
      %v5594 = vld [vmem:[%s5591 + $0x10] sm:$0xff]
      %v5595 = vld [vmem:[%s5591 + $0x18] sm:$0xff]
      %v5596 = vld [vmem:[%s5591 + $0x20] sm:$0xff]
      %v5597 = vld [vmem:[%s5591 + $0x28] sm:$0xff]
      %v5598 = vld [vmem:[%s5591 + $0x30] sm:$0xff]
      %v5599 = vld [vmem:[%s5591 + $0x38] sm:$0xff]
      %v5600 = vld [vmem:[%s5591 + $0x40] sm:$0xff]
      %v5601 = vld [vmem:[%s5591 + $0x48] sm:$0xff]
      %v5602 = vld [vmem:[%s5591 + $0x50] sm:$0xff]
      %v5603 = vld [vmem:[%s5591 + $0x58] sm:$0xff]
      %v5604 = vld [vmem:[%s5591 + $0x60] sm:$0xff]
      %v5605 = vld [vmem:[%s5591 + $0x68] sm:$0xff]
      %v5606 = vld [vmem:[%s5591 + $0x70] sm:$0xff]
      %v5607 = vld [vmem:[%s5591 + $0x78] sm:$0xff]
      %v5608 = vld [vmem:[%s5591 + $0x80] sm:$0xff]
      %v5609 = vld [vmem:[%s5591 + $0x88] sm:$0xff]
      %v5610 = vld [vmem:[%s5591 + $0x90] sm:$0xff]
      %v5611 = vld [vmem:[%s5591 + $0x98] sm:$0xff]
      %v5612 = vld [vmem:[%s5591 + $0xa0] sm:$0xff]
      %v5613 = vld [vmem:[%s5591 + $0xa8] sm:$0xff]
      %v5614 = vld [vmem:[%s5591 + $0xb0] sm:$0x33]
      %v5616 = vunpack.c.l.b16 %v5590
      %v5617 = vunpack.c.h.b16 %v5590
      %v5618 = vpack.c.b16 %v4913, %v5616
      %v5619 = vpack.c.b16 %v4914, %v5617
      %v5620 = vrot.slane %v5618, 1
      %v5621 = vrot.slane %v4937, 1
      %v5622 = vsel %vm777, %v5620, %v5621
      %v5623 = vrot.slane %v5619, 1
      %v5624 = vrot.slane %v4938, 1
      %v5625 = vsel %vm777, %v5623, %v5624
      %v5626 = vrot.slane %v4939, 1
      %v5627 = vsel %vm777, %v5621, %v5626
      %v5628 = vrot.slane %v4940, 1
      %v5629 = vsel %vm777, %v5624, %v5628
      %v5630 = vrot.slane %v4941, 1
      %v5631 = vsel %vm777, %v5626, %v5630
      %v5632 = vrot.slane %v4942, 1
      %v5633 = vsel %vm777, %v5628, %v5632
      %v5634 = vrot.slane %v4943, 1
      %v5635 = vsel %vm777, %v5630, %v5634
      %v5636 = vrot.slane %v4944, 1
      %v5637 = vsel %vm777, %v5632, %v5636
      %v5638 = vrot.slane %v5237, 1
      %v5639 = vsel %vm777, %v5634, %v5638
      %v5640 = vrot.slane %v5238, 1
      %v5641 = vsel %vm777, %v5636, %v5640
      %v5671 = vunpack.c.l.b16 %v5592
      %v5672 = vunpack.c.h.b16 %v5592
      %v5673 = vunpack.c.l.b16 %v5593
      %v5674 = vunpack.c.h.b16 %v5593
      %v5675 = vunpack.c.l.b16 %v5594
      %v5676 = vunpack.c.h.b16 %v5594
      %v5677 = vunpack.c.l.b16 %v5595
      %v5678 = vunpack.c.h.b16 %v5595
      %v5679 = vunpack.c.l.b16 %v5596
      %v5680 = vunpack.c.h.b16 %v5596
      %v5681 = vunpack.c.l.b16 %v5597
      %v5682 = vunpack.c.h.b16 %v5597
      %v5683 = vunpack.c.l.b16 %v5598
      %v5684 = vunpack.c.h.b16 %v5598
      %v5685 = vunpack.c.l.b16 %v5599
      %v5686 = vunpack.c.h.b16 %v5599
      %v5687 = vunpack.c.l.b16 %v5600
      %v5688 = vunpack.c.h.b16 %v5600
      %v5689 = vunpack.c.l.b16 %v5601
      %v5690 = vunpack.c.h.b16 %v5601
      %v5691 = vunpack.c.l.b16 %v5602
      %v5692 = vunpack.c.h.b16 %v5602
      %v5693 = vunpack.c.l.b16 %v5603
      %v5694 = vunpack.c.h.b16 %v5603
      %v5695 = vunpack.c.l.b16 %v5604
      %v5696 = vunpack.c.h.b16 %v5604
      %v5697 = vunpack.c.l.b16 %v5605
      %v5698 = vunpack.c.h.b16 %v5605
      %v5699 = vunpack.c.l.b16 %v5606
      %v5700 = vunpack.c.h.b16 %v5606
      %v5701 = vunpack.c.l.b16 %v5607
      %v5702 = vunpack.c.h.b16 %v5607
      %v5703 = vunpack.c.l.b16 %v5608
      %v5704 = vunpack.c.h.b16 %v5608
      %v5705 = vunpack.c.l.b16 %v5609
      %v5706 = vunpack.c.h.b16 %v5609
      %v5707 = vunpack.c.l.b16 %v5610
      %v5708 = vunpack.c.h.b16 %v5610
      %v5709 = vunpack.c.l.b16 %v5611
      %v5710 = vunpack.c.h.b16 %v5611
      %v5711 = vunpack.c.l.b16 %v5612
      %v5712 = vunpack.c.h.b16 %v5612
      %v5713 = vunpack.c.l.b16 %v5613
      %v5714 = vunpack.c.h.b16 %v5613
      %v5715 = vunpack.c.l.b16 %v5614
      %v5716 = vunpack.c.h.b16 %v5614
      %v5717 = vpack.c.b16 %v5673, %v5671
      %v5718 = vpack.c.b16 %v5674, %v5672
      %v5719 = vpack.c.b16 %v5677, %v5675
      %v5720 = vpack.c.b16 %v5678, %v5676
      %v5721 = vpack.c.b16 %v5681, %v5679
      %v5722 = vpack.c.b16 %v5682, %v5680
      %v5723 = vpack.c.b16 %v5685, %v5683
      %v5724 = vpack.c.b16 %v5686, %v5684
      %v5725 = vpack.c.b16 %v5689, %v5687
      %v5726 = vpack.c.b16 %v5690, %v5688
      %v5727 = vpack.c.b16 %v5693, %v5691
      %v5728 = vpack.c.b16 %v5694, %v5692
      %v5729 = vpack.c.b16 %v5697, %v5695
      %v5730 = vpack.c.b16 %v5698, %v5696
      %v5731 = vpack.c.b16 %v5701, %v5699
      %v5732 = vpack.c.b16 %v5702, %v5700
      %v5733 = vpack.c.b16 %v5705, %v5703
      %v5734 = vpack.c.b16 %v5706, %v5704
      %v5735 = vpack.c.b16 %v5709, %v5707
      %v5736 = vpack.c.b16 %v5710, %v5708
      %v5737 = vpack.c.b16 %v5713, %v5711
      %v5738 = vpack.c.b16 %v5714, %v5712
      %v5739 = vpack.c.b16 %v5715, %v5715
      %v5740 = vpack.c.b16 %v5716, %v5716
      %v5764 = vsel %vm3080, %v5625, 0
      %v5767 = vsel %vm3080, %v5629, 0
      %v5770 = vsel %vm3080, %v5633, 0
      %v5773 = vsel %vm3080, %v5637, 0
      %v5776 = vsel %vm3080, %v5641, 0
      %v5779 = vsel %vm3080, %v5640, 0
      %v5782 = vsel %vm3099, %v5739, 0
      %v5785 = vsel %vm3099, %v5740, 0
      %5787 = vmatprep.subr.bf16.mxu0 %v5732
      %5788 = vmatpush1.bf16.msra.mxu0 %v5731
      %5789 = vmatprep.subr.bf16.mxu0 %v5730
      %5790 = vmatpush1.bf16.msra.mxu0 %v5729
      %5791 = vmatprep.subr.bf16.mxu0 %v5728
      %5792 = vmatpush1.bf16.msra.mxu0 %v5727
      %5793 = vmatprep.subr.bf16.mxu0 %v5726
      %5794 = vmatpush1.bf16.msra.mxu0 %v5725
      %5795 = vmatprep.subr.bf16.mxu0 %v5724
      %5796 = vmatpush1.bf16.msra.mxu0 %v5723
      %5797 = vmatprep.subr.bf16.mxu0 %v5722
      %5798 = vmatpush1.bf16.msra.mxu0 %v5721
      %5799 = vmatprep.subr.bf16.mxu0 %v5720
      %5800 = vmatpush1.bf16.msra.mxu0 %v5719
      %5801 = vmatprep.subr.bf16.mxu0 %v5718
      %5802 = vmatpush1.bf16.msra.mxu0 %v5717
      %5803 = vmatprep.subr.bf16.mxu0 0
      %5804 = vmatpush2.bf16.msra.mxu0 0
      %5805 = vmatprep.subr.bf16.mxu0 0
      %5806 = vmatpush2.bf16.msra.mxu0 0
      %5807 = vmatprep.subr.bf16.mxu0 0
      %5808 = vmatpush2.bf16.msra.mxu0 0
      %5809 = vmatprep.subr.bf16.mxu0 0
      %5810 = vmatpush2.bf16.msra.mxu0 0
      %5811 = vmatprep.subr.bf16.mxu0 %v5785
      %5812 = vmatpush2.bf16.msra.mxu0 %v5782
      %5813 = vmatprep.subr.bf16.mxu0 %v5738
      %5814 = vmatpush2.bf16.msra.mxu0 %v5737
      %5815 = vmatprep.subr.bf16.mxu0 %v5736
      %5816 = vmatpush2.bf16.msra.mxu0 %v5735
      %5817 = vmatprep.subr.bf16.mxu0 %v5734
      %5818 = vmatpush2.bf16.msra.mxu0 %v5733
      %5819 = vmatprep.mubr.bf16.mxu0 %v5764
      %5820 = vmatmul.mubr.bf16.gmra.mxu0 %v5622
      %v5821 = vpop.f32.mrf.mxu0
      %v5822 = vadd.f32 0.0, %v5821
      %v5823 = vpop.f32.mrf.mxu0
      %v5824 = vadd.f32 0.0, %v5823
      %v5825 = vpop.f32.mrf.mxu0
      %v5826 = vadd.f32 0.0, %v5825
      %v5827 = vpop.f32.mrf.mxu0
      %v5828 = vadd.f32 0.0, %v5827
      %5829 = vmatprep.mubr.bf16.mxu0 %v5767
      %5830 = vmatmul.mubr.bf16.gmra.mxu0 %v5627
      %v5831 = vpop.f32.mrf.mxu0
      %v5832 = vadd.f32 0.0, %v5831
      %v5833 = vpop.f32.mrf.mxu0
      %v5834 = vadd.f32 0.0, %v5833
      %v5835 = vpop.f32.mrf.mxu0
      %v5836 = vadd.f32 0.0, %v5835
      %v5837 = vpop.f32.mrf.mxu0
      %v5838 = vadd.f32 0.0, %v5837
      %5839 = vmatprep.mubr.bf16.mxu0 %v5770
      %5840 = vmatmul.mubr.bf16.gmra.mxu0 %v5631
      %v5841 = vpop.f32.mrf.mxu0
      %v5842 = vadd.f32 0.0, %v5841
      %v5843 = vpop.f32.mrf.mxu0
      %v5844 = vadd.f32 0.0, %v5843
      %v5845 = vpop.f32.mrf.mxu0
      %v5846 = vadd.f32 0.0, %v5845
      %v5847 = vpop.f32.mrf.mxu0
      %v5848 = vadd.f32 0.0, %v5847
      %5849 = vmatprep.mubr.bf16.mxu0 %v5773
      %5850 = vmatmul.mubr.bf16.gmra.mxu0 %v5635
      %v5851 = vpop.f32.mrf.mxu0
      %v5852 = vadd.f32 0.0, %v5851
      %v5853 = vpop.f32.mrf.mxu0
      %v5854 = vadd.f32 0.0, %v5853
      %v5855 = vpop.f32.mrf.mxu0
      %v5856 = vadd.f32 0.0, %v5855
      %v5857 = vpop.f32.mrf.mxu0
      %v5858 = vadd.f32 0.0, %v5857
      %5859 = vmatprep.mubr.bf16.mxu0 %v5776
      %5860 = vmatmul.mubr.bf16.gmra.mxu0 %v5639
      %v5861 = vpop.f32.mrf.mxu0
      %v5862 = vadd.f32 0.0, %v5861
      %v5863 = vpop.f32.mrf.mxu0
      %v5864 = vadd.f32 0.0, %v5863
      %v5865 = vpop.f32.mrf.mxu0
      %v5866 = vadd.f32 0.0, %v5865
      %v5867 = vpop.f32.mrf.mxu0
      %v5868 = vadd.f32 0.0, %v5867
      %5869 = vmatprep.mubr.bf16.mxu0 %v5779
      %5870 = vmatmul.mubr.bf16.gmra.mxu0 %v5638
      %v5871 = vpop.f32.mrf.mxu0
      %v5872 = vadd.f32 0.0, %v5871
      %v5873 = vpop.f32.mrf.mxu0
      %v5874 = vadd.f32 0.0, %v5873
      %v5875 = vpop.f32.mrf.mxu0
      %v5876 = vadd.f32 0.0, %v5875
      %v5877 = vpop.f32.mrf.mxu0
      %v5878 = vadd.f32 0.0, %v5877
      %5879 = vdwg.mxu0
      %v5880 = vadd.f32 %v5566, %v5822
      %v5881 = vadd.f32 %v5567, %v5824
      %v5882 = vadd.f32 %v5568, %v5826
      %v5883 = vadd.f32 %v5569, %v5828
      %v5884 = vadd.f32 %v5570, %v5832
      %v5885 = vadd.f32 %v5571, %v5834
      %v5886 = vadd.f32 %v5572, %v5836
      %v5887 = vadd.f32 %v5573, %v5838
      %v5888 = vadd.f32 %v5574, %v5842
      %v5889 = vadd.f32 %v5575, %v5844
      %v5890 = vadd.f32 %v5576, %v5846
      %v5891 = vadd.f32 %v5577, %v5848
      %v5892 = vadd.f32 %v5578, %v5852
      %v5893 = vadd.f32 %v5579, %v5854
      %v5894 = vadd.f32 %v5580, %v5856
      %v5895 = vadd.f32 %v5581, %v5858
      %v5896 = vadd.f32 %v5582, %v5862
      %v5897 = vadd.f32 %v5583, %v5864
      %v5898 = vadd.f32 %v5584, %v5866
      %v5899 = vadd.f32 %v5585, %v5868
      %v5900 = vadd.f32 %v5586, %v5872
      %v5901 = vadd.f32 %v5587, %v5874
      %v5902 = vadd.f32 %v5588, %v5876
      %v5903 = vadd.f32 %v5589, %v5878
      %v5904 = vld [vmem:[%s4] sm:$0x3]
      %v5906 = vlaneseq
      %v5907 = vshrl.u32 %v5906, 7
      %v5908 = vsub.s32 0, %v5907
      %v5909 = vrot.slane %v5904, %v5908
      %v5910 = vlaneseq
      %v5911 = vshrl.u32 %v5910, 7
      %v5912 = vsub.s32 1, %v5911
      %v5913 = vrot.slane %v5904, %v5912
      %v5916 = vadd.f32 %v5880, %v5909
      %v5917 = vadd.f32 %v5881, %v5913
      %v5918 = vadd.f32 %v5882, %v5909
      %v5919 = vadd.f32 %v5883, %v5913
      %v5920 = vadd.f32 %v5884, %v5909
      %v5921 = vadd.f32 %v5885, %v5913
      %v5922 = vadd.f32 %v5886, %v5909
      %v5923 = vadd.f32 %v5887, %v5913
      %v5924 = vadd.f32 %v5888, %v5909
      %v5925 = vadd.f32 %v5889, %v5913
      %v5926 = vadd.f32 %v5890, %v5909
      %v5927 = vadd.f32 %v5891, %v5913
      %v5928 = vadd.f32 %v5892, %v5909
      %v5929 = vadd.f32 %v5893, %v5913
      %v5930 = vadd.f32 %v5894, %v5909
      %v5931 = vadd.f32 %v5895, %v5913
      %v5932 = vadd.f32 %v5896, %v5909
      %v5933 = vadd.f32 %v5897, %v5913
      %v5934 = vadd.f32 %v5898, %v5909
      %v5935 = vadd.f32 %v5899, %v5913
      %v5936 = vadd.f32 %v5900, %v5909
      %v5937 = vadd.f32 %v5901, %v5913
      %v5938 = vadd.f32 %v5902, %v5909
      %v5939 = vadd.f32 %v5903, %v5913
      %vm5940 = vcmp.gt.f32.partialorder %v5916, 0.0
      %vm5941 = vcmp.gt.f32.partialorder %v5917, 0.0
      %vm5942 = vcmp.gt.f32.partialorder %v5918, 0.0
      %vm5943 = vcmp.gt.f32.partialorder %v5919, 0.0
      %vm5944 = vcmp.gt.f32.partialorder %v5920, 0.0
      %vm5945 = vcmp.gt.f32.partialorder %v5921, 0.0
      %vm5946 = vcmp.gt.f32.partialorder %v5922, 0.0
      %vm5947 = vcmp.gt.f32.partialorder %v5923, 0.0
      %vm5948 = vcmp.gt.f32.partialorder %v5924, 0.0
      %vm5949 = vcmp.gt.f32.partialorder %v5925, 0.0
      %vm5950 = vcmp.gt.f32.partialorder %v5926, 0.0
      %vm5951 = vcmp.gt.f32.partialorder %v5927, 0.0
      %vm5952 = vcmp.gt.f32.partialorder %v5928, 0.0
      %vm5953 = vcmp.gt.f32.partialorder %v5929, 0.0
      %vm5954 = vcmp.gt.f32.partialorder %v5930, 0.0
      %vm5955 = vcmp.gt.f32.partialorder %v5931, 0.0
      %vm5956 = vcmp.gt.f32.partialorder %v5932, 0.0
      %vm5957 = vcmp.gt.f32.partialorder %v5933, 0.0
      %vm5958 = vcmp.gt.f32.partialorder %v5934, 0.0
      %vm5959 = vcmp.gt.f32.partialorder %v5935, 0.0
      %vm5960 = vcmp.gt.f32.partialorder %v5936, 0.0
      %vm5961 = vcmp.gt.f32.partialorder %v5937, 0.0
      %vm5962 = vcmp.gt.f32.partialorder %v5938, 0.0
      %vm5963 = vcmp.gt.f32.partialorder %v5939, 0.0
      %v5964 = vmin.f32 %v5916, 0.0
      %v5965 = vmin.f32 %v5917, 0.0
      %v5966 = vmin.f32 %v5918, 0.0
      %v5967 = vmin.f32 %v5919, 0.0
      %v5968 = vmin.f32 %v5920, 0.0
      %v5969 = vmin.f32 %v5921, 0.0
      %v5970 = vmin.f32 %v5922, 0.0
      %v5971 = vmin.f32 %v5923, 0.0
      %v5972 = vmin.f32 %v5924, 0.0
      %v5973 = vmin.f32 %v5925, 0.0
      %v5974 = vmin.f32 %v5926, 0.0
      %v5975 = vmin.f32 %v5927, 0.0
      %v5976 = vmin.f32 %v5928, 0.0
      %v5977 = vmin.f32 %v5929, 0.0
      %v5978 = vmin.f32 %v5930, 0.0
      %v5979 = vmin.f32 %v5931, 0.0
      %v5980 = vmin.f32 %v5932, 0.0
      %v5981 = vmin.f32 %v5933, 0.0
      %v5982 = vmin.f32 %v5934, 0.0
      %v5983 = vmin.f32 %v5935, 0.0
      %v5984 = vmin.f32 %v5936, 0.0
      %v5985 = vmin.f32 %v5937, 0.0
      %v5986 = vmin.f32 %v5938, 0.0
      %v5987 = vmin.f32 %v5939, 0.0
      %v5988 = vmul.f32 %v5964, 1.442695
      %v5989 = vpow.pop %v5988
      %v5990 = vmul.f32 %v5965, 1.442695
      %v5991 = vpow.pop %v5990
      %v5992 = vmul.f32 %v5966, 1.442695
      %v5993 = vpow.pop %v5992
      %v5994 = vmul.f32 %v5967, 1.442695
      %v5995 = vpow.pop %v5994
      %v5996 = vmul.f32 %v5968, 1.442695
      %v5997 = vpow.pop %v5996
      %v5998 = vmul.f32 %v5969, 1.442695
      %v5999 = vpow.pop %v5998
      %v6000 = vmul.f32 %v5970, 1.442695
      %v6001 = vpow.pop %v6000
      %v6002 = vmul.f32 %v5971, 1.442695
      %v6003 = vpow.pop %v6002
      %v6004 = vmul.f32 %v5972, 1.442695
      %v6005 = vpow.pop %v6004
      %v6006 = vmul.f32 %v5973, 1.442695
      %v6007 = vpow.pop %v6006
      %v6008 = vmul.f32 %v5974, 1.442695
      %v6009 = vpow.pop %v6008
      %v6010 = vmul.f32 %v5975, 1.442695
      %v6011 = vpow.pop %v6010
      %v6012 = vmul.f32 %v5976, 1.442695
      %v6013 = vpow.pop %v6012
      %v6014 = vmul.f32 %v5977, 1.442695
      %v6015 = vpow.pop %v6014
      %v6016 = vmul.f32 %v5978, 1.442695
      %v6017 = vpow.pop %v6016
      %v6018 = vmul.f32 %v5979, 1.442695
      %v6019 = vpow.pop %v6018
      %v6020 = vmul.f32 %v5980, 1.442695
      %v6021 = vpow.pop %v6020
      %v6022 = vmul.f32 %v5981, 1.442695
      %v6023 = vpow.pop %v6022
      %v6024 = vmul.f32 %v5982, 1.442695
      %v6025 = vpow.pop %v6024
      %v6026 = vmul.f32 %v5983, 1.442695
      %v6027 = vpow.pop %v6026
      %v6028 = vmul.f32 %v5984, 1.442695
      %v6029 = vpow.pop %v6028
      %v6030 = vmul.f32 %v5985, 1.442695
      %v6031 = vpow.pop %v6030
      %v6032 = vmul.f32 %v5986, 1.442695
      %v6033 = vpow.pop %v6032
      %v6034 = vmul.f32 %v5987, 1.442695
      %v6035 = vpow.pop %v6034
      %v6036 = vsub.f32 %v5989, 1.0
      %v6037 = vsub.f32 %v5991, 1.0
      %v6038 = vsub.f32 %v5993, 1.0
      %v6039 = vsub.f32 %v5995, 1.0
      %v6040 = vsub.f32 %v5997, 1.0
      %v6041 = vsub.f32 %v5999, 1.0
      %v6042 = vsub.f32 %v6001, 1.0
      %v6043 = vsub.f32 %v6003, 1.0
      %v6044 = vsub.f32 %v6005, 1.0
      %v6045 = vsub.f32 %v6007, 1.0
      %v6046 = vsub.f32 %v6009, 1.0
      %v6047 = vsub.f32 %v6011, 1.0
      %v6048 = vsub.f32 %v6013, 1.0
      %v6049 = vsub.f32 %v6015, 1.0
      %v6050 = vsub.f32 %v6017, 1.0
      %v6051 = vsub.f32 %v6019, 1.0
      %v6052 = vsub.f32 %v6021, 1.0
      %v6053 = vsub.f32 %v6023, 1.0
      %v6054 = vsub.f32 %v6025, 1.0
      %v6055 = vsub.f32 %v6027, 1.0
      %v6056 = vsub.f32 %v6029, 1.0
      %v6057 = vsub.f32 %v6031, 1.0
      %v6058 = vsub.f32 %v6033, 1.0
      %v6059 = vsub.f32 %v6035, 1.0
      %v6060 = vsel %vm5940, %v5916, %v6036
      %v6061 = vsel %vm5941, %v5917, %v6037
      %v6062 = vsel %vm5942, %v5918, %v6038
      %v6063 = vsel %vm5943, %v5919, %v6039
      %v6064 = vsel %vm5944, %v5920, %v6040
      %v6065 = vsel %vm5945, %v5921, %v6041
      %v6066 = vsel %vm5946, %v5922, %v6042
      %v6067 = vsel %vm5947, %v5923, %v6043
      %v6068 = vsel %vm5948, %v5924, %v6044
      %v6069 = vsel %vm5949, %v5925, %v6045
      %v6070 = vsel %vm5950, %v5926, %v6046
      %v6071 = vsel %vm5951, %v5927, %v6047
      %v6072 = vsel %vm5952, %v5928, %v6048
      %v6073 = vsel %vm5953, %v5929, %v6049
      %v6074 = vsel %vm5954, %v5930, %v6050
      %v6075 = vsel %vm5955, %v5931, %v6051
      %v6076 = vsel %vm5956, %v5932, %v6052
      %v6077 = vsel %vm5957, %v5933, %v6053
      %v6078 = vsel %vm5958, %v5934, %v6054
      %v6079 = vsel %vm5959, %v5935, %v6055
      %v6080 = vsel %vm5960, %v5936, %v6056
      %v6081 = vsel %vm5961, %v5937, %v6057
      %v6082 = vsel %vm5962, %v5938, %v6058
      %v6083 = vsel %vm5963, %v5939, %v6059
      %v6084 = vpack.c.bf16 %v6062, %v6060
      %v6085 = vpack.c.bf16 %v6063, %v6061
      %v6086 = vpack.c.bf16 %v6066, %v6064
      %v6087 = vpack.c.bf16 %v6067, %v6065
      %v6088 = vpack.c.bf16 %v6070, %v6068
      %v6089 = vpack.c.bf16 %v6071, %v6069
      %v6090 = vpack.c.bf16 %v6074, %v6072
      %v6091 = vpack.c.bf16 %v6075, %v6073
      %v6092 = vpack.c.bf16 %v6078, %v6076
      %v6093 = vpack.c.bf16 %v6079, %v6077
      %v6094 = vpack.c.bf16 %v6082, %v6080
      %v6095 = vpack.c.bf16 %v6083, %v6081
      %v6108 = vunpack.c.l.b16 %v6084
      %v6109 = vunpack.c.l.b16 %v6085
      %v6110 = vunpack.c.h.b16 %v6084
      %v6111 = vunpack.c.h.b16 %v6085
      %v6112 = vunpack.c.l.b16 %v6086
      %v6113 = vunpack.c.l.b16 %v6087
      %v6114 = vunpack.c.h.b16 %v6086
      %v6115 = vunpack.c.h.b16 %v6087
      %v6116 = vunpack.c.l.b16 %v6088
      %v6117 = vunpack.c.l.b16 %v6089
      %v6118 = vunpack.c.h.b16 %v6088
      %v6119 = vunpack.c.h.b16 %v6089
      %v6120 = vunpack.c.l.b16 %v6090
      %v6121 = vunpack.c.l.b16 %v6091
      %v6122 = vunpack.c.h.b16 %v6090
      %v6123 = vunpack.c.h.b16 %v6091
      %v6124 = vunpack.c.l.b16 %v6092
      %v6125 = vunpack.c.l.b16 %v6093
      %v6126 = vunpack.c.h.b16 %v6092
      %v6127 = vunpack.c.h.b16 %v6093
      %v6128 = vunpack.c.l.b16 %v6094
      %v6129 = vunpack.c.l.b16 %v6095
      %v6130 = vunpack.c.h.b16 %v6094
      %v6131 = vunpack.c.h.b16 %v6095
      %v6132 = vpack.c.b16 %v6109, %v6108
      %v6133 = vpack.c.b16 %v6111, %v6110
      %v6134 = vpack.c.b16 %v6113, %v6112
      %v6135 = vpack.c.b16 %v6115, %v6114
      %v6136 = vpack.c.b16 %v6117, %v6116
      %v6137 = vpack.c.b16 %v6119, %v6118
      %v6138 = vpack.c.b16 %v6121, %v6120
      %v6139 = vpack.c.b16 %v6123, %v6122
      %v6140 = vpack.c.b16 %v6125, %v6124
      %v6141 = vpack.c.b16 %v6127, %v6126
      %v6142 = vpack.c.b16 %v6129, %v6128
      %v6143 = vpack.c.b16 %v6131, %v6130
      %vm6156 = vcmask 228356
      %vm6157 = vmor %vm6156, %vm2732
      %6158 = vst.msk [vmem:[#allocation3] sm:$0xff] %vm6157, %v6132
      %6159 = vst.msk [vmem:[#allocation3 + $0x8] sm:$0xff] %vm6157, %v6133
      %6160 = vst.msk [vmem:[#allocation3 + $0x10] sm:$0xff] %vm6157, %v6134
      %6161 = vst.msk [vmem:[#allocation3 + $0x18] sm:$0xff] %vm6157, %v6135
      %6162 = vst.msk [vmem:[#allocation3 + $0x20] sm:$0xff] %vm6157, %v6136
      %6163 = vst.msk [vmem:[#allocation3 + $0x28] sm:$0xff] %vm6157, %v6137
      %6164 = vst.msk [vmem:[#allocation3 + $0x30] sm:$0xff] %vm6157, %v6138
      %6165 = vst.msk [vmem:[#allocation3 + $0x38] sm:$0xff] %vm6157, %v6139
      %6166 = vst.msk [vmem:[#allocation3 + $0x40] sm:$0xff] %vm6157, %v6140
      %6167 = vst.msk [vmem:[#allocation3 + $0x48] sm:$0xff] %vm6157, %v6141
      %6168 = vst.msk [vmem:[#allocation3 + $0x50] sm:$0xff] %vm6157, %v6142
      %vm6169 = vcmask 227332
      %vm6170 = vmor %vm6169, %vm2749
      %6171 = vst.msk [vmem:[#allocation3 + $0x58] sm:$0x77] %vm6170, %v6143
      %vm6172 = vcmask 228359
      %vm6173 = vmor %vm6172, %vm2753
      %6174 = vst.msk [vmem:[#allocation3 + $0x58] sm:$0x88] %vm6173, 0
      %v6175 = vld [vmem:[#allocation3] sm:$0xff]
      %v6176 = vld [vmem:[#allocation3 + $0x8] sm:$0xff]
      %v6177 = vld [vmem:[#allocation3 + $0x10] sm:$0xff]
      %v6178 = vld [vmem:[#allocation3 + $0x18] sm:$0xff]
      %v6179 = vld [vmem:[#allocation3 + $0x20] sm:$0xff]
      %v6180 = vld [vmem:[#allocation3 + $0x28] sm:$0xff]
      %v6181 = vld [vmem:[#allocation3 + $0x30] sm:$0xff]
      %v6182 = vld [vmem:[#allocation3 + $0x38] sm:$0xff]
      %v6183 = vld [vmem:[#allocation3 + $0x40] sm:$0x77]
      %v6184 = vld [vmem:[%s5] sm:$0xf]
      %v6185 = vld [vmem:[%s5 + $0x4] sm:$0xf]
      %v6186 = vld [vmem:[%s5 + $0x8] sm:$0xf]
      %v6187 = vld [vmem:[%s5 + $0xc] sm:$0xf]
      %v6188 = vld [vmem:[%s5 + $0x10] sm:$0xf]
      %v6189 = vld [vmem:[%s5 + $0x14] sm:$0xf]
      %v6190 = vld [vmem:[%s5 + $0x18] sm:$0xf]
      %v6191 = vld [vmem:[%s5 + $0x1c] sm:$0xf]
      %v6192 = vld [vmem:[%s5 + $0x20] sm:$0xf]
      %v6193 = vld [vmem:[%s5 + $0x24] sm:$0xf]
      %v6194 = vld [vmem:[%s5 + $0x28] sm:$0xf]
      %v6195 = vld [vmem:[%s5 + $0x2c] sm:$0xf]
      %v6196 = vld [vmem:[%s5 + $0x30] sm:$0xf]
      %v6197 = vld [vmem:[%s5 + $0x34] sm:$0xf]
      %v6198 = vld [vmem:[%s5 + $0x38] sm:$0xf]
      %v6199 = vld [vmem:[%s5 + $0x3c] sm:$0xf]
      %v6200 = vld [vmem:[%s5 + $0x40] sm:$0xf]
      %v6201 = vld [vmem:[%s5 + $0x44] sm:$0xf]
      %v6202 = vld [vmem:[%s5 + $0x48] sm:$0xf]
      %v6203 = vld [vmem:[%s5 + $0x4c] sm:$0x3]
      %v6204 = vld [vmem:[#allocation3 + $0x40] sm:$0xff]
      %s6205 = scalar_lea.vmem %s5, 80
      %v6206 = vld [vmem:[%s6205] sm:$0xf]
      %v6207 = vld [vmem:[%s6205 + $0x4] sm:$0xf]
      %v6208 = vld [vmem:[%s6205 + $0x8] sm:$0xf]
      %v6209 = vld [vmem:[%s6205 + $0xc] sm:$0xf]
      %v6210 = vld [vmem:[%s6205 + $0x10] sm:$0xf]
      %v6211 = vld [vmem:[%s6205 + $0x14] sm:$0xf]
      %v6212 = vld [vmem:[%s6205 + $0x18] sm:$0xf]
      %v6213 = vld [vmem:[%s6205 + $0x1c] sm:$0xf]
      %v6214 = vld [vmem:[%s6205 + $0x20] sm:$0xf]
      %v6215 = vld [vmem:[%s6205 + $0x24] sm:$0xf]
      %v6216 = vld [vmem:[%s6205 + $0x28] sm:$0xf]
      %v6217 = vld [vmem:[%s6205 + $0x2c] sm:$0xf]
      %v6218 = vld [vmem:[%s6205 + $0x30] sm:$0xf]
      %v6219 = vld [vmem:[%s6205 + $0x34] sm:$0xf]
      %v6220 = vld [vmem:[%s6205 + $0x38] sm:$0xf]
      %v6221 = vld [vmem:[%s6205 + $0x3c] sm:$0xf]
      %v6222 = vld [vmem:[%s6205 + $0x40] sm:$0xf]
      %v6223 = vld [vmem:[%s6205 + $0x44] sm:$0xf]
      %v6224 = vld [vmem:[%s6205 + $0x48] sm:$0xf]
      %v6225 = vld [vmem:[%s6205 + $0x4c] sm:$0x3]
      %v6235 = vunpack.c.l.b16 %v6175
      %v6236 = vunpack.c.h.b16 %v6175
      %v6237 = vunpack.c.l.b16 %v6176
      %v6238 = vunpack.c.h.b16 %v6176
      %v6239 = vunpack.c.l.b16 %v6177
      %v6240 = vunpack.c.h.b16 %v6177
      %v6241 = vunpack.c.l.b16 %v6178
      %v6242 = vunpack.c.h.b16 %v6178
      %v6243 = vunpack.c.l.b16 %v6179
      %v6244 = vunpack.c.h.b16 %v6179
      %v6245 = vunpack.c.l.b16 %v6180
      %v6246 = vunpack.c.h.b16 %v6180
      %v6247 = vunpack.c.l.b16 %v6181
      %v6248 = vunpack.c.h.b16 %v6181
      %v6249 = vunpack.c.l.b16 %v6182
      %v6250 = vunpack.c.h.b16 %v6182
      %v6251 = vunpack.c.l.b16 %v6204
      %v6252 = vunpack.c.h.b16 %v6204
      %v6253 = vpack.c.b16 %v6237, %v6235
      %v6254 = vpack.c.b16 %v6238, %v6236
      %v6255 = vpack.c.b16 %v6241, %v6239
      %v6256 = vpack.c.b16 %v6242, %v6240
      %v6257 = vpack.c.b16 %v6245, %v6243
      %v6258 = vpack.c.b16 %v6246, %v6244
      %v6259 = vpack.c.b16 %v6249, %v6247
      %v6260 = vpack.c.b16 %v6250, %v6248
      %v6261 = vpack.c.b16 %v6251, %v6251
      %v6262 = vpack.c.b16 %v6252, %v6252
      %v6264 = vshrl.u32 %v6253, 16
      %v6266 = vshll.u32 %v6253, 16
      %v6268 = vrot.slane %v6266, 1
      %v6269 = vor.u32 %v6264, %v6268
      %v6271 = vshll.u32 %v6255, 16
      %v6273 = vrot.slane %v6271, 1
      %v6274 = vsel %vm397, %v6269, %v6273
      %v6276 = vshrl.u32 %v6254, 16
      %v6278 = vshll.u32 %v6254, 16
      %v6280 = vrot.slane %v6278, 1
      %v6281 = vor.u32 %v6276, %v6280
      %v6283 = vshll.u32 %v6256, 16
      %v6285 = vrot.slane %v6283, 1
      %v6286 = vsel %vm397, %v6281, %v6285
      %v6287 = vshrl.u32 %v6255, 16
      %v6289 = vor.u32 %v6287, %v6273
      %v6291 = vshll.u32 %v6257, 16
      %v6293 = vrot.slane %v6291, 1
      %v6294 = vsel %vm397, %v6289, %v6293
      %v6295 = vshrl.u32 %v6256, 16
      %v6297 = vor.u32 %v6295, %v6285
      %v6299 = vshll.u32 %v6258, 16
      %v6301 = vrot.slane %v6299, 1
      %v6302 = vsel %vm397, %v6297, %v6301
      %v6303 = vshrl.u32 %v6257, 16
      %v6305 = vor.u32 %v6303, %v6293
      %v6307 = vshll.u32 %v6259, 16
      %v6309 = vrot.slane %v6307, 1
      %v6310 = vsel %vm397, %v6305, %v6309
      %v6311 = vshrl.u32 %v6258, 16
      %v6313 = vor.u32 %v6311, %v6301
      %v6315 = vshll.u32 %v6260, 16
      %v6317 = vrot.slane %v6315, 1
      %v6318 = vsel %vm397, %v6313, %v6317
      %v6319 = vshrl.u32 %v6259, 16
      %v6321 = vor.u32 %v6319, %v6309
      %v6323 = vshll.u32 %v6261, 16
      %v6325 = vrot.slane %v6323, 1
      %v6326 = vsel %vm397, %v6321, %v6325
      %v6327 = vshrl.u32 %v6260, 16
      %v6329 = vor.u32 %v6327, %v6317
      %v6331 = vshll.u32 %v6262, 16
      %v6333 = vrot.slane %v6331, 1
      %v6334 = vsel %vm397, %v6329, %v6333
      %v6335 = vshrl.u32 %v6261, 16
      %v6337 = vor.u32 %v6335, %v6325
      %v6338 = vshrl.u32 %v6262, 16
      %v6340 = vor.u32 %v6338, %v6333
      %v6366 = vunpack.c.l.b16 %v6206
      %v6367 = vunpack.c.l.b16 %v6207
      %v6368 = vunpack.c.l.b16 %v6208
      %v6369 = vunpack.c.l.b16 %v6209
      %v6370 = vunpack.c.l.b16 %v6210
      %v6371 = vunpack.c.l.b16 %v6211
      %v6372 = vunpack.c.l.b16 %v6212
      %v6373 = vunpack.c.l.b16 %v6213
      %v6374 = vunpack.c.l.b16 %v6214
      %v6375 = vunpack.c.l.b16 %v6215
      %v6376 = vunpack.c.l.b16 %v6216
      %v6377 = vunpack.c.l.b16 %v6217
      %v6378 = vunpack.c.l.b16 %v6218
      %v6379 = vunpack.c.l.b16 %v6219
      %v6380 = vunpack.c.l.b16 %v6220
      %v6381 = vunpack.c.l.b16 %v6221
      %v6382 = vunpack.c.l.b16 %v6222
      %v6383 = vunpack.c.l.b16 %v6223
      %v6384 = vunpack.c.l.b16 %v6224
      %v6385 = vunpack.c.l.b16 %v6225
      %v6386 = vpack.c.b16 %v6367, %v6366
      %v6387 = vpack.c.b16 %v6369, %v6368
      %v6388 = vpack.c.b16 %v6371, %v6370
      %v6389 = vpack.c.b16 %v6373, %v6372
      %v6390 = vpack.c.b16 %v6375, %v6374
      %v6391 = vpack.c.b16 %v6377, %v6376
      %v6392 = vpack.c.b16 %v6379, %v6378
      %v6393 = vpack.c.b16 %v6381, %v6380
      %v6394 = vpack.c.b16 %v6383, %v6382
      %v6395 = vpack.c.b16 %v6385, %v6384
      %vm6405 = vcmask 228352
      %v6407 = vsel %vm6405, %v6286, 0
      %v6410 = vsel %vm6405, %v6302, 0
      %v6413 = vsel %vm6405, %v6318, 0
      %v6416 = vsel %vm6405, %v6334, 0
      %v6419 = vsel %vm6405, %v6340, 0
      %vm6421 = vcmask 1045504
      %v6423 = vsel %vm6421, %v6395, 0
      %6425 = vmatprep.subr.bf16.mxu0 0
      %6426 = vmatpush1.bf16.msra.mxu0 %v6393
      %6427 = vmatprep.subr.bf16.mxu0 0
      %6428 = vmatpush1.bf16.msra.mxu0 %v6392
      %6429 = vmatprep.subr.bf16.mxu0 0
      %6430 = vmatpush1.bf16.msra.mxu0 %v6391
      %6431 = vmatprep.subr.bf16.mxu0 0
      %6432 = vmatpush1.bf16.msra.mxu0 %v6390
      %6433 = vmatprep.subr.bf16.mxu0 0
      %6434 = vmatpush1.bf16.msra.mxu0 %v6389
      %6435 = vmatprep.subr.bf16.mxu0 0
      %6436 = vmatpush1.bf16.msra.mxu0 %v6388
      %6437 = vmatprep.subr.bf16.mxu0 0
      %6438 = vmatpush1.bf16.msra.mxu0 %v6387
      %6439 = vmatprep.subr.bf16.mxu0 0
      %6440 = vmatpush1.bf16.msra.mxu0 %v6386
      %6441 = vmatprep.subr.bf16.mxu0 0
      %6442 = vmatpush2.bf16.msra.mxu0 0
      %6443 = vmatprep.subr.bf16.mxu0 0
      %6444 = vmatpush2.bf16.msra.mxu0 0
      %6445 = vmatprep.subr.bf16.mxu0 0
      %6446 = vmatpush2.bf16.msra.mxu0 0
      %6447 = vmatprep.subr.bf16.mxu0 0
      %6448 = vmatpush2.bf16.msra.mxu0 0
      %6449 = vmatprep.subr.bf16.mxu0 0
      %6450 = vmatpush2.bf16.msra.mxu0 0
      %6451 = vmatprep.subr.bf16.mxu0 0
      %6452 = vmatpush2.bf16.msra.mxu0 0
      %6453 = vmatprep.subr.bf16.mxu0 0
      %6454 = vmatpush2.bf16.msra.mxu0 %v6423
      %6455 = vmatprep.subr.bf16.mxu0 0
      %6456 = vmatpush2.bf16.msra.mxu0 %v6394
      %6457 = vmatprep.mubr.bf16.mxu0 %v6407
      %6458 = vmatmul.mubr.bf16.gmra.mxu0 %v6274
      %v6459 = vpop.f32.mrf.mxu0
      %v6460 = vadd.f32 0.0, %v6459
      %v6461 = vpop.f32.mrf.mxu0
      %v6462 = vpop.f32.mrf.mxu0
      %v6463 = vadd.f32 0.0, %v6462
      %v6464 = vpop.f32.mrf.mxu0
      %6465 = vmatprep.mubr.bf16.mxu0 %v6410
      %6466 = vmatmul.mubr.bf16.gmra.mxu0 %v6294
      %v6467 = vpop.f32.mrf.mxu0
      %v6468 = vadd.f32 0.0, %v6467
      %v6469 = vpop.f32.mrf.mxu0
      %v6470 = vpop.f32.mrf.mxu0
      %v6471 = vadd.f32 0.0, %v6470
      %v6472 = vpop.f32.mrf.mxu0
      %6473 = vmatprep.mubr.bf16.mxu0 %v6413
      %6474 = vmatmul.mubr.bf16.gmra.mxu0 %v6310
      %v6475 = vpop.f32.mrf.mxu0
      %v6476 = vadd.f32 0.0, %v6475
      %v6477 = vpop.f32.mrf.mxu0
      %v6478 = vpop.f32.mrf.mxu0
      %v6479 = vadd.f32 0.0, %v6478
      %v6480 = vpop.f32.mrf.mxu0
      %6481 = vmatprep.mubr.bf16.mxu0 %v6416
      %6482 = vmatmul.mubr.bf16.gmra.mxu0 %v6326
      %v6483 = vpop.f32.mrf.mxu0
      %v6484 = vadd.f32 0.0, %v6483
      %v6485 = vpop.f32.mrf.mxu0
      %v6486 = vpop.f32.mrf.mxu0
      %v6487 = vadd.f32 0.0, %v6486
      %v6488 = vpop.f32.mrf.mxu0
      %6489 = vmatprep.mubr.bf16.mxu0 %v6419
      %6490 = vmatmul.mubr.bf16.gmra.mxu0 %v6337
      %v6491 = vpop.f32.mrf.mxu0
      %v6492 = vadd.f32 0.0, %v6491
      %v6493 = vpop.f32.mrf.mxu0
      %v6494 = vpop.f32.mrf.mxu0
      %v6495 = vpop.f32.mrf.mxu0
      %6496 = vdwg.mxu0
      %v6498 = vunpack.c.l.b16 %v6183
      %v6499 = vunpack.c.h.b16 %v6183
      %v6500 = vpack.c.b16 %v6498, %v6498
      %v6501 = vpack.c.b16 %v6499, %v6499
      %v6527 = vunpack.c.l.b16 %v6184
      %v6528 = vunpack.c.l.b16 %v6185
      %v6529 = vunpack.c.l.b16 %v6186
      %v6530 = vunpack.c.l.b16 %v6187
      %v6531 = vunpack.c.l.b16 %v6188
      %v6532 = vunpack.c.l.b16 %v6189
      %v6533 = vunpack.c.l.b16 %v6190
      %v6534 = vunpack.c.l.b16 %v6191
      %v6535 = vunpack.c.l.b16 %v6192
      %v6536 = vunpack.c.l.b16 %v6193
      %v6537 = vunpack.c.l.b16 %v6194
      %v6538 = vunpack.c.l.b16 %v6195
      %v6539 = vunpack.c.l.b16 %v6196
      %v6540 = vunpack.c.l.b16 %v6197
      %v6541 = vunpack.c.l.b16 %v6198
      %v6542 = vunpack.c.l.b16 %v6199
      %v6543 = vunpack.c.l.b16 %v6200
      %v6544 = vunpack.c.l.b16 %v6201
      %v6545 = vunpack.c.l.b16 %v6202
      %v6546 = vunpack.c.l.b16 %v6203
      %v6547 = vpack.c.b16 %v6528, %v6527
      %v6548 = vpack.c.b16 %v6530, %v6529
      %v6549 = vpack.c.b16 %v6532, %v6531
      %v6550 = vpack.c.b16 %v6534, %v6533
      %v6551 = vpack.c.b16 %v6536, %v6535
      %v6552 = vpack.c.b16 %v6538, %v6537
      %v6553 = vpack.c.b16 %v6540, %v6539
      %v6554 = vpack.c.b16 %v6542, %v6541
      %v6555 = vpack.c.b16 %v6544, %v6543
      %v6556 = vpack.c.b16 %v6546, %v6545
      %v6566 = vsel %vm6405, %v6254, 0
      %v6568 = vsel %vm6405, %v6256, 0
      %v6570 = vsel %vm6405, %v6258, 0
      %v6572 = vsel %vm6405, %v6260, 0
      %v6575 = vsel %vm6405, %v6501, 0
      %v6578 = vsel %vm6421, %v6556, 0
      %6580 = vmatprep.subr.bf16.mxu0 0
      %6581 = vmatpush1.bf16.msra.mxu0 %v6554
      %6582 = vmatprep.subr.bf16.mxu0 0
      %6583 = vmatpush1.bf16.msra.mxu0 %v6553
      %6584 = vmatprep.subr.bf16.mxu0 0
      %6585 = vmatpush1.bf16.msra.mxu0 %v6552
      %6586 = vmatprep.subr.bf16.mxu0 0
      %6587 = vmatpush1.bf16.msra.mxu0 %v6551
      %6588 = vmatprep.subr.bf16.mxu0 0
      %6589 = vmatpush1.bf16.msra.mxu0 %v6550
      %6590 = vmatprep.subr.bf16.mxu0 0
      %6591 = vmatpush1.bf16.msra.mxu0 %v6549
      %6592 = vmatprep.subr.bf16.mxu0 0
      %6593 = vmatpush1.bf16.msra.mxu0 %v6548
      %6594 = vmatprep.subr.bf16.mxu0 0
      %6595 = vmatpush1.bf16.msra.mxu0 %v6547
      %6596 = vmatprep.subr.bf16.mxu0 0
      %6597 = vmatpush2.bf16.msra.mxu0 0
      %6598 = vmatprep.subr.bf16.mxu0 0
      %6599 = vmatpush2.bf16.msra.mxu0 0
      %6600 = vmatprep.subr.bf16.mxu0 0
      %6601 = vmatpush2.bf16.msra.mxu0 0
      %6602 = vmatprep.subr.bf16.mxu0 0
      %6603 = vmatpush2.bf16.msra.mxu0 0
      %6604 = vmatprep.subr.bf16.mxu0 0
      %6605 = vmatpush2.bf16.msra.mxu0 0
      %6606 = vmatprep.subr.bf16.mxu0 0
      %6607 = vmatpush2.bf16.msra.mxu0 0
      %6608 = vmatprep.subr.bf16.mxu0 0
      %6609 = vmatpush2.bf16.msra.mxu0 %v6578
      %6610 = vmatprep.subr.bf16.mxu0 0
      %6611 = vmatpush2.bf16.msra.mxu0 %v6555
      %6612 = vmatprep.mubr.bf16.mxu0 %v6566
      %6613 = vmatmul.mubr.bf16.gmra.mxu0 %v6253
      %v6614 = vpop.f32.mrf.mxu0
      %v6615 = vadd.f32 %v6460, %v6614
      %v6616 = vpop.f32.mrf.mxu0
      %v6617 = vpop.f32.mrf.mxu0
      %v6618 = vadd.f32 %v6463, %v6617
      %v6619 = vpop.f32.mrf.mxu0
      %6620 = vmatprep.mubr.bf16.mxu0 %v6568
      %6621 = vmatmul.mubr.bf16.gmra.mxu0 %v6255
      %v6622 = vpop.f32.mrf.mxu0
      %v6623 = vadd.f32 %v6468, %v6622
      %v6624 = vpop.f32.mrf.mxu0
      %v6625 = vpop.f32.mrf.mxu0
      %v6626 = vadd.f32 %v6471, %v6625
      %v6627 = vpop.f32.mrf.mxu0
      %6628 = vmatprep.mubr.bf16.mxu0 %v6570
      %6629 = vmatmul.mubr.bf16.gmra.mxu0 %v6257
      %v6630 = vpop.f32.mrf.mxu0
      %v6631 = vadd.f32 %v6476, %v6630
      %v6632 = vpop.f32.mrf.mxu0
      %v6633 = vpop.f32.mrf.mxu0
      %v6634 = vadd.f32 %v6479, %v6633
      %v6635 = vpop.f32.mrf.mxu0
      %6636 = vmatprep.mubr.bf16.mxu0 %v6572
      %6637 = vmatmul.mubr.bf16.gmra.mxu0 %v6259
      %v6638 = vpop.f32.mrf.mxu0
      %v6639 = vadd.f32 %v6484, %v6638
      %v6640 = vpop.f32.mrf.mxu0
      %v6641 = vpop.f32.mrf.mxu0
      %v6642 = vadd.f32 %v6487, %v6641
      %v6643 = vpop.f32.mrf.mxu0
      %6644 = vmatprep.mubr.bf16.mxu0 %v6575
      %6645 = vmatmul.mubr.bf16.gmra.mxu0 %v6500
      %v6646 = vpop.f32.mrf.mxu0
      %v6647 = vadd.f32 %v6492, %v6646
      %v6648 = vpop.f32.mrf.mxu0
      %v6649 = vpop.f32.mrf.mxu0
      %v6650 = vpop.f32.mrf.mxu0
      %6651 = vdwg.mxu0
      %v6652 = vld [vmem:[#allocation3] sm:$0xee]
      %s6653 = scalar_lea.vmem %s5, 160
      %v6654 = vld [vmem:[%s6653] sm:$0xf]
      %v6655 = vld [vmem:[%s6653 + $0x4] sm:$0xf]
      %v6656 = vld [vmem:[%s6653 + $0x8] sm:$0xf]
      %v6657 = vld [vmem:[%s6653 + $0xc] sm:$0xf]
      %v6658 = vld [vmem:[%s6653 + $0x10] sm:$0xf]
      %v6659 = vld [vmem:[%s6653 + $0x14] sm:$0xf]
      %v6660 = vld [vmem:[%s6653 + $0x18] sm:$0xf]
      %v6661 = vld [vmem:[%s6653 + $0x1c] sm:$0xf]
      %v6662 = vld [vmem:[%s6653 + $0x20] sm:$0xf]
      %v6663 = vld [vmem:[%s6653 + $0x24] sm:$0xf]
      %v6664 = vld [vmem:[%s6653 + $0x28] sm:$0xf]
      %v6665 = vld [vmem:[%s6653 + $0x2c] sm:$0xf]
      %v6666 = vld [vmem:[%s6653 + $0x30] sm:$0xf]
      %v6667 = vld [vmem:[%s6653 + $0x34] sm:$0xf]
      %v6668 = vld [vmem:[%s6653 + $0x38] sm:$0xf]
      %v6669 = vld [vmem:[%s6653 + $0x3c] sm:$0xf]
      %v6670 = vld [vmem:[%s6653 + $0x40] sm:$0xf]
      %v6671 = vld [vmem:[%s6653 + $0x44] sm:$0xf]
      %v6672 = vld [vmem:[%s6653 + $0x48] sm:$0xf]
      %v6673 = vld [vmem:[%s6653 + $0x4c] sm:$0x3]
      %v6675 = vunpack.c.l.b16 %v6652
      %v6676 = vunpack.c.h.b16 %v6652
      %v6677 = vpack.c.b16 %v6237, %v6675
      %v6678 = vpack.c.b16 %v6238, %v6676
      %v6679 = vrot.slane %v6677, 1
      %v6680 = vrot.slane %v6255, 1
      %v6681 = vsel %vm777, %v6679, %v6680
      %v6682 = vrot.slane %v6678, 1
      %v6683 = vrot.slane %v6256, 1
      %v6684 = vsel %vm777, %v6682, %v6683
      %v6685 = vrot.slane %v6257, 1
      %v6686 = vsel %vm777, %v6680, %v6685
      %v6687 = vrot.slane %v6258, 1
      %v6688 = vsel %vm777, %v6683, %v6687
      %v6689 = vrot.slane %v6259, 1
      %v6690 = vsel %vm777, %v6685, %v6689
      %v6691 = vrot.slane %v6260, 1
      %v6692 = vsel %vm777, %v6687, %v6691
      %v6693 = vrot.slane %v6261, 1
      %v6694 = vsel %vm777, %v6689, %v6693
      %v6695 = vrot.slane %v6262, 1
      %v6696 = vsel %vm777, %v6691, %v6695
      %v6722 = vunpack.c.l.b16 %v6654
      %v6723 = vunpack.c.l.b16 %v6655
      %v6724 = vunpack.c.l.b16 %v6656
      %v6725 = vunpack.c.l.b16 %v6657
      %v6726 = vunpack.c.l.b16 %v6658
      %v6727 = vunpack.c.l.b16 %v6659
      %v6728 = vunpack.c.l.b16 %v6660
      %v6729 = vunpack.c.l.b16 %v6661
      %v6730 = vunpack.c.l.b16 %v6662
      %v6731 = vunpack.c.l.b16 %v6663
      %v6732 = vunpack.c.l.b16 %v6664
      %v6733 = vunpack.c.l.b16 %v6665
      %v6734 = vunpack.c.l.b16 %v6666
      %v6735 = vunpack.c.l.b16 %v6667
      %v6736 = vunpack.c.l.b16 %v6668
      %v6737 = vunpack.c.l.b16 %v6669
      %v6738 = vunpack.c.l.b16 %v6670
      %v6739 = vunpack.c.l.b16 %v6671
      %v6740 = vunpack.c.l.b16 %v6672
      %v6741 = vunpack.c.l.b16 %v6673
      %v6742 = vpack.c.b16 %v6723, %v6722
      %v6743 = vpack.c.b16 %v6725, %v6724
      %v6744 = vpack.c.b16 %v6727, %v6726
      %v6745 = vpack.c.b16 %v6729, %v6728
      %v6746 = vpack.c.b16 %v6731, %v6730
      %v6747 = vpack.c.b16 %v6733, %v6732
      %v6748 = vpack.c.b16 %v6735, %v6734
      %v6749 = vpack.c.b16 %v6737, %v6736
      %v6750 = vpack.c.b16 %v6739, %v6738
      %v6751 = vpack.c.b16 %v6741, %v6740
      %v6762 = vsel %vm6405, %v6684, 0
      %v6765 = vsel %vm6405, %v6688, 0
      %v6768 = vsel %vm6405, %v6692, 0
      %v6771 = vsel %vm6405, %v6696, 0
      %v6774 = vsel %vm6405, %v6695, 0
      %v6777 = vsel %vm6421, %v6751, 0
      %6779 = vmatprep.subr.bf16.mxu0 0
      %6780 = vmatpush1.bf16.msra.mxu0 %v6749
      %6781 = vmatprep.subr.bf16.mxu0 0
      %6782 = vmatpush1.bf16.msra.mxu0 %v6748
      %6783 = vmatprep.subr.bf16.mxu0 0
      %6784 = vmatpush1.bf16.msra.mxu0 %v6747
      %6785 = vmatprep.subr.bf16.mxu0 0
      %6786 = vmatpush1.bf16.msra.mxu0 %v6746
      %6787 = vmatprep.subr.bf16.mxu0 0
      %6788 = vmatpush1.bf16.msra.mxu0 %v6745
      %6789 = vmatprep.subr.bf16.mxu0 0
      %6790 = vmatpush1.bf16.msra.mxu0 %v6744
      %6791 = vmatprep.subr.bf16.mxu0 0
      %6792 = vmatpush1.bf16.msra.mxu0 %v6743
      %6793 = vmatprep.subr.bf16.mxu0 0
      %6794 = vmatpush1.bf16.msra.mxu0 %v6742
      %6795 = vmatprep.subr.bf16.mxu0 0
      %6796 = vmatpush2.bf16.msra.mxu0 0
      %6797 = vmatprep.subr.bf16.mxu0 0
      %6798 = vmatpush2.bf16.msra.mxu0 0
      %6799 = vmatprep.subr.bf16.mxu0 0
      %6800 = vmatpush2.bf16.msra.mxu0 0
      %6801 = vmatprep.subr.bf16.mxu0 0
      %6802 = vmatpush2.bf16.msra.mxu0 0
      %6803 = vmatprep.subr.bf16.mxu0 0
      %6804 = vmatpush2.bf16.msra.mxu0 0
      %6805 = vmatprep.subr.bf16.mxu0 0
      %6806 = vmatpush2.bf16.msra.mxu0 0
      %6807 = vmatprep.subr.bf16.mxu0 0
      %6808 = vmatpush2.bf16.msra.mxu0 %v6777
      %6809 = vmatprep.subr.bf16.mxu0 0
      %6810 = vmatpush2.bf16.msra.mxu0 %v6750
      %6811 = vmatprep.mubr.bf16.mxu0 %v6762
      %6812 = vmatmul.mubr.bf16.gmra.mxu0 %v6681
      %v6813 = vpop.f32.mrf.mxu0
      %v6814 = vadd.f32 0.0, %v6813
      %v6815 = vpop.f32.mrf.mxu0
      %v6816 = vpop.f32.mrf.mxu0
      %v6817 = vadd.f32 0.0, %v6816
      %v6818 = vpop.f32.mrf.mxu0
      %6819 = vmatprep.mubr.bf16.mxu0 %v6765
      %6820 = vmatmul.mubr.bf16.gmra.mxu0 %v6686
      %v6821 = vpop.f32.mrf.mxu0
      %v6822 = vadd.f32 0.0, %v6821
      %v6823 = vpop.f32.mrf.mxu0
      %v6824 = vpop.f32.mrf.mxu0
      %v6825 = vadd.f32 0.0, %v6824
      %v6826 = vpop.f32.mrf.mxu0
      %6827 = vmatprep.mubr.bf16.mxu0 %v6768
      %6828 = vmatmul.mubr.bf16.gmra.mxu0 %v6690
      %v6829 = vpop.f32.mrf.mxu0
      %v6830 = vadd.f32 0.0, %v6829
      %v6831 = vpop.f32.mrf.mxu0
      %v6832 = vpop.f32.mrf.mxu0
      %v6833 = vadd.f32 0.0, %v6832
      %v6834 = vpop.f32.mrf.mxu0
      %6835 = vmatprep.mubr.bf16.mxu0 %v6771
      %6836 = vmatmul.mubr.bf16.gmra.mxu0 %v6694
      %v6837 = vpop.f32.mrf.mxu0
      %v6838 = vadd.f32 0.0, %v6837
      %v6839 = vpop.f32.mrf.mxu0
      %v6840 = vpop.f32.mrf.mxu0
      %v6841 = vadd.f32 0.0, %v6840
      %v6842 = vpop.f32.mrf.mxu0
      %6843 = vmatprep.mubr.bf16.mxu0 %v6774
      %6844 = vmatmul.mubr.bf16.gmra.mxu0 %v6693
      %v6845 = vpop.f32.mrf.mxu0
      %v6846 = vadd.f32 0.0, %v6845
      %v6847 = vpop.f32.mrf.mxu0
      %v6848 = vpop.f32.mrf.mxu0
      %v6849 = vpop.f32.mrf.mxu0
      %6850 = vdwg.mxu0
      %v6851 = vadd.f32 %v6615, %v6814
      %v6852 = vadd.f32 %v6618, %v6817
      %v6853 = vadd.f32 %v6623, %v6822
      %v6854 = vadd.f32 %v6626, %v6825
      %v6855 = vadd.f32 %v6631, %v6830
      %v6856 = vadd.f32 %v6634, %v6833
      %v6857 = vadd.f32 %v6639, %v6838
      %v6858 = vadd.f32 %v6642, %v6841
      %v6859 = vadd.f32 %v6647, %v6846
      %v6860 = vld [vmem:[#allocation3 + $0x8] sm:$0xcc]
      %v6861 = vld [vmem:[#allocation3 + $0x10] sm:$0xff]
      %v6862 = vld [vmem:[#allocation3 + $0x18] sm:$0xff]
      %v6863 = vld [vmem:[#allocation3 + $0x20] sm:$0xff]
      %v6864 = vld [vmem:[#allocation3 + $0x28] sm:$0xff]
      %v6865 = vld [vmem:[#allocation3 + $0x30] sm:$0xff]
      %v6866 = vld [vmem:[#allocation3 + $0x38] sm:$0xff]
      %v6867 = vld [vmem:[#allocation3 + $0x40] sm:$0xff]
      %v6868 = vld [vmem:[#allocation3 + $0x48] sm:$0xff]
      %v6869 = vld [vmem:[#allocation3 + $0x50] sm:$0x11]
      %s6870 = scalar_lea.vmem %s5, 240
      %v6871 = vld [vmem:[%s6870] sm:$0xf]
      %v6872 = vld [vmem:[%s6870 + $0x4] sm:$0xf]
      %v6873 = vld [vmem:[%s6870 + $0x8] sm:$0xf]
      %v6874 = vld [vmem:[%s6870 + $0xc] sm:$0xf]
      %v6875 = vld [vmem:[%s6870 + $0x10] sm:$0xf]
      %v6876 = vld [vmem:[%s6870 + $0x14] sm:$0xf]
      %v6877 = vld [vmem:[%s6870 + $0x18] sm:$0xf]
      %v6878 = vld [vmem:[%s6870 + $0x1c] sm:$0xf]
      %v6879 = vld [vmem:[%s6870 + $0x20] sm:$0xf]
      %v6880 = vld [vmem:[%s6870 + $0x24] sm:$0xf]
      %v6881 = vld [vmem:[%s6870 + $0x28] sm:$0xf]
      %v6882 = vld [vmem:[%s6870 + $0x2c] sm:$0xf]
      %v6883 = vld [vmem:[%s6870 + $0x30] sm:$0xf]
      %v6884 = vld [vmem:[%s6870 + $0x34] sm:$0xf]
      %v6885 = vld [vmem:[%s6870 + $0x38] sm:$0xf]
      %v6886 = vld [vmem:[%s6870 + $0x3c] sm:$0xf]
      %v6887 = vld [vmem:[%s6870 + $0x40] sm:$0xf]
      %v6888 = vld [vmem:[%s6870 + $0x44] sm:$0xf]
      %v6889 = vld [vmem:[%s6870 + $0x48] sm:$0xf]
      %v6890 = vld [vmem:[%s6870 + $0x4c] sm:$0x3]
      %v6901 = vunpack.c.l.b16 %v6860
      %v6902 = vunpack.c.h.b16 %v6860
      %v6903 = vunpack.c.l.b16 %v6861
      %v6904 = vunpack.c.h.b16 %v6861
      %v6905 = vunpack.c.l.b16 %v6862
      %v6906 = vunpack.c.h.b16 %v6862
      %v6907 = vunpack.c.l.b16 %v6863
      %v6908 = vunpack.c.h.b16 %v6863
      %v6909 = vunpack.c.l.b16 %v6864
      %v6910 = vunpack.c.h.b16 %v6864
      %v6911 = vunpack.c.l.b16 %v6865
      %v6912 = vunpack.c.h.b16 %v6865
      %v6913 = vunpack.c.l.b16 %v6866
      %v6914 = vunpack.c.h.b16 %v6866
      %v6915 = vunpack.c.l.b16 %v6867
      %v6916 = vunpack.c.h.b16 %v6867
      %v6917 = vunpack.c.l.b16 %v6868
      %v6918 = vunpack.c.h.b16 %v6868
      %v6919 = vunpack.c.l.b16 %v6869
      %v6920 = vunpack.c.h.b16 %v6869
      %v6921 = vpack.c.b16 %v6903, %v6901
      %v6922 = vpack.c.b16 %v6904, %v6902
      %v6923 = vpack.c.b16 %v6907, %v6905
      %v6924 = vpack.c.b16 %v6908, %v6906
      %v6925 = vpack.c.b16 %v6911, %v6909
      %v6926 = vpack.c.b16 %v6912, %v6910
      %v6927 = vpack.c.b16 %v6915, %v6913
      %v6928 = vpack.c.b16 %v6916, %v6914
      %v6929 = vpack.c.b16 %v6919, %v6917
      %v6930 = vpack.c.b16 %v6920, %v6918
      %v6931 = vrot.slane %v6921, 2
      %v6932 = vrot.slane %v6923, 2
      %v6933 = vsel %vm1039, %v6931, %v6932
      %v6934 = vrot.slane %v6922, 2
      %v6935 = vrot.slane %v6924, 2
      %v6936 = vsel %vm1039, %v6934, %v6935
      %v6937 = vrot.slane %v6925, 2
      %v6938 = vsel %vm1039, %v6932, %v6937
      %v6939 = vrot.slane %v6926, 2
      %v6940 = vsel %vm1039, %v6935, %v6939
      %v6941 = vrot.slane %v6927, 2
      %v6942 = vsel %vm1039, %v6937, %v6941
      %v6943 = vrot.slane %v6928, 2
      %v6944 = vsel %vm1039, %v6939, %v6943
      %v6945 = vrot.slane %v6929, 2
      %v6946 = vsel %vm1039, %v6941, %v6945
      %v6947 = vrot.slane %v6930, 2
      %v6948 = vsel %vm1039, %v6943, %v6947
      %v6974 = vunpack.c.l.b16 %v6871
      %v6975 = vunpack.c.l.b16 %v6872
      %v6976 = vunpack.c.l.b16 %v6873
      %v6977 = vunpack.c.l.b16 %v6874
      %v6978 = vunpack.c.l.b16 %v6875
      %v6979 = vunpack.c.l.b16 %v6876
      %v6980 = vunpack.c.l.b16 %v6877
      %v6981 = vunpack.c.l.b16 %v6878
      %v6982 = vunpack.c.l.b16 %v6879
      %v6983 = vunpack.c.l.b16 %v6880
      %v6984 = vunpack.c.l.b16 %v6881
      %v6985 = vunpack.c.l.b16 %v6882
      %v6986 = vunpack.c.l.b16 %v6883
      %v6987 = vunpack.c.l.b16 %v6884
      %v6988 = vunpack.c.l.b16 %v6885
      %v6989 = vunpack.c.l.b16 %v6886
      %v6990 = vunpack.c.l.b16 %v6887
      %v6991 = vunpack.c.l.b16 %v6888
      %v6992 = vunpack.c.l.b16 %v6889
      %v6993 = vunpack.c.l.b16 %v6890
      %v6994 = vpack.c.b16 %v6975, %v6974
      %v6995 = vpack.c.b16 %v6977, %v6976
      %v6996 = vpack.c.b16 %v6979, %v6978
      %v6997 = vpack.c.b16 %v6981, %v6980
      %v6998 = vpack.c.b16 %v6983, %v6982
      %v6999 = vpack.c.b16 %v6985, %v6984
      %v7000 = vpack.c.b16 %v6987, %v6986
      %v7001 = vpack.c.b16 %v6989, %v6988
      %v7002 = vpack.c.b16 %v6991, %v6990
      %v7003 = vpack.c.b16 %v6993, %v6992
      %v7014 = vsel %vm6405, %v6936, 0
      %v7017 = vsel %vm6405, %v6940, 0
      %v7020 = vsel %vm6405, %v6944, 0
      %v7023 = vsel %vm6405, %v6948, 0
      %v7026 = vsel %vm6405, %v6947, 0
      %v7029 = vsel %vm6421, %v7003, 0
      %7031 = vmatprep.subr.bf16.mxu0 0
      %7032 = vmatpush1.bf16.msra.mxu0 %v7001
      %7033 = vmatprep.subr.bf16.mxu0 0
      %7034 = vmatpush1.bf16.msra.mxu0 %v7000
      %7035 = vmatprep.subr.bf16.mxu0 0
      %7036 = vmatpush1.bf16.msra.mxu0 %v6999
      %7037 = vmatprep.subr.bf16.mxu0 0
      %7038 = vmatpush1.bf16.msra.mxu0 %v6998
      %7039 = vmatprep.subr.bf16.mxu0 0
      %7040 = vmatpush1.bf16.msra.mxu0 %v6997
      %7041 = vmatprep.subr.bf16.mxu0 0
      %7042 = vmatpush1.bf16.msra.mxu0 %v6996
      %7043 = vmatprep.subr.bf16.mxu0 0
      %7044 = vmatpush1.bf16.msra.mxu0 %v6995
      %7045 = vmatprep.subr.bf16.mxu0 0
      %7046 = vmatpush1.bf16.msra.mxu0 %v6994
      %7047 = vmatprep.subr.bf16.mxu0 0
      %7048 = vmatpush2.bf16.msra.mxu0 0
      %7049 = vmatprep.subr.bf16.mxu0 0
      %7050 = vmatpush2.bf16.msra.mxu0 0
      %7051 = vmatprep.subr.bf16.mxu0 0
      %7052 = vmatpush2.bf16.msra.mxu0 0
      %7053 = vmatprep.subr.bf16.mxu0 0
      %7054 = vmatpush2.bf16.msra.mxu0 0
      %7055 = vmatprep.subr.bf16.mxu0 0
      %7056 = vmatpush2.bf16.msra.mxu0 0
      %7057 = vmatprep.subr.bf16.mxu0 0
      %7058 = vmatpush2.bf16.msra.mxu0 0
      %7059 = vmatprep.subr.bf16.mxu0 0
      %7060 = vmatpush2.bf16.msra.mxu0 %v7029
      %7061 = vmatprep.subr.bf16.mxu0 0
      %7062 = vmatpush2.bf16.msra.mxu0 %v7002
      %7063 = vmatprep.mubr.bf16.mxu0 %v7014
      %7064 = vmatmul.mubr.bf16.gmra.mxu0 %v6933
      %v7065 = vpop.f32.mrf.mxu0
      %v7066 = vadd.f32 0.0, %v7065
      %v7067 = vpop.f32.mrf.mxu0
      %v7068 = vpop.f32.mrf.mxu0
      %v7069 = vadd.f32 0.0, %v7068
      %v7070 = vpop.f32.mrf.mxu0
      %7071 = vmatprep.mubr.bf16.mxu0 %v7017
      %7072 = vmatmul.mubr.bf16.gmra.mxu0 %v6938
      %v7073 = vpop.f32.mrf.mxu0
      %v7074 = vadd.f32 0.0, %v7073
      %v7075 = vpop.f32.mrf.mxu0
      %v7076 = vpop.f32.mrf.mxu0
      %v7077 = vadd.f32 0.0, %v7076
      %v7078 = vpop.f32.mrf.mxu0
      %7079 = vmatprep.mubr.bf16.mxu0 %v7020
      %7080 = vmatmul.mubr.bf16.gmra.mxu0 %v6942
      %v7081 = vpop.f32.mrf.mxu0
      %v7082 = vadd.f32 0.0, %v7081
      %v7083 = vpop.f32.mrf.mxu0
      %v7084 = vpop.f32.mrf.mxu0
      %v7085 = vadd.f32 0.0, %v7084
      %v7086 = vpop.f32.mrf.mxu0
      %7087 = vmatprep.mubr.bf16.mxu0 %v7023
      %7088 = vmatmul.mubr.bf16.gmra.mxu0 %v6946
      %v7089 = vpop.f32.mrf.mxu0
      %v7090 = vadd.f32 0.0, %v7089
      %v7091 = vpop.f32.mrf.mxu0
      %v7092 = vpop.f32.mrf.mxu0
      %v7093 = vadd.f32 0.0, %v7092
      %v7094 = vpop.f32.mrf.mxu0
      %7095 = vmatprep.mubr.bf16.mxu0 %v7026
      %7096 = vmatmul.mubr.bf16.gmra.mxu0 %v6945
      %v7097 = vpop.f32.mrf.mxu0
      %v7098 = vadd.f32 0.0, %v7097
      %v7099 = vpop.f32.mrf.mxu0
      %v7100 = vpop.f32.mrf.mxu0
      %v7101 = vpop.f32.mrf.mxu0
      %7102 = vdwg.mxu0
      %v7103 = vadd.f32 %v6851, %v7066
      %v7104 = vadd.f32 %v6852, %v7069
      %v7105 = vadd.f32 %v6853, %v7074
      %v7106 = vadd.f32 %v6854, %v7077
      %v7107 = vadd.f32 %v6855, %v7082
      %v7108 = vadd.f32 %v6856, %v7085
      %v7109 = vadd.f32 %v6857, %v7090
      %v7110 = vadd.f32 %v6858, %v7093
      %v7111 = vadd.f32 %v6859, %v7098
      %v7112 = vld [vmem:[#allocation3 + $0x50] sm:$0x33]
      %s7113 = scalar_lea.vmem %s5, 320
      %v7114 = vld [vmem:[%s7113] sm:$0xf]
      %v7115 = vld [vmem:[%s7113 + $0x4] sm:$0xf]
      %v7116 = vld [vmem:[%s7113 + $0x8] sm:$0xf]
      %v7117 = vld [vmem:[%s7113 + $0xc] sm:$0xf]
      %v7118 = vld [vmem:[%s7113 + $0x10] sm:$0xf]
      %v7119 = vld [vmem:[%s7113 + $0x14] sm:$0xf]
      %v7120 = vld [vmem:[%s7113 + $0x18] sm:$0xf]
      %v7121 = vld [vmem:[%s7113 + $0x1c] sm:$0xf]
      %v7122 = vld [vmem:[%s7113 + $0x20] sm:$0xf]
      %v7123 = vld [vmem:[%s7113 + $0x24] sm:$0xf]
      %v7124 = vld [vmem:[%s7113 + $0x28] sm:$0xf]
      %v7125 = vld [vmem:[%s7113 + $0x2c] sm:$0xf]
      %v7126 = vld [vmem:[%s7113 + $0x30] sm:$0xf]
      %v7127 = vld [vmem:[%s7113 + $0x34] sm:$0xf]
      %v7128 = vld [vmem:[%s7113 + $0x38] sm:$0xf]
      %v7129 = vld [vmem:[%s7113 + $0x3c] sm:$0xf]
      %v7130 = vld [vmem:[%s7113 + $0x40] sm:$0xf]
      %v7131 = vld [vmem:[%s7113 + $0x44] sm:$0xf]
      %v7132 = vld [vmem:[%s7113 + $0x48] sm:$0xf]
      %v7133 = vld [vmem:[%s7113 + $0x4c] sm:$0x3]
      %v7135 = vunpack.c.l.b16 %v7112
      %v7136 = vunpack.c.h.b16 %v7112
      %v7137 = vpack.c.b16 %v7135, %v6917
      %v7138 = vpack.c.b16 %v7136, %v6918
      %v7140 = vshrl.u32 %v6921, 16
      %v7142 = vrot.slane %v7140, 2
      %v7143 = vshll.u32 %v6921, 16
      %v7145 = vrot.slane %v7143, 3
      %v7146 = vor.u32 %v7142, %v7145
      %v7148 = vshrl.u32 %v6923, 16
      %v7150 = vrot.slane %v7148, 2
      %v7151 = vshll.u32 %v6923, 16
      %v7153 = vrot.slane %v7151, 3
      %v7154 = vor.u32 %v7150, %v7153
      %v7155 = vsel %vm1249, %v7146, %v7154
      %v7157 = vshrl.u32 %v6922, 16
      %v7159 = vrot.slane %v7157, 2
      %v7160 = vshll.u32 %v6922, 16
      %v7162 = vrot.slane %v7160, 3
      %v7163 = vor.u32 %v7159, %v7162
      %v7165 = vshrl.u32 %v6924, 16
      %v7167 = vrot.slane %v7165, 2
      %v7168 = vshll.u32 %v6924, 16
      %v7170 = vrot.slane %v7168, 3
      %v7171 = vor.u32 %v7167, %v7170
      %v7172 = vsel %vm1249, %v7163, %v7171
      %v7174 = vshrl.u32 %v6925, 16
      %v7176 = vrot.slane %v7174, 2
      %v7177 = vshll.u32 %v6925, 16
      %v7179 = vrot.slane %v7177, 3
      %v7180 = vor.u32 %v7176, %v7179
      %v7181 = vsel %vm1249, %v7154, %v7180
      %v7183 = vshrl.u32 %v6926, 16
      %v7185 = vrot.slane %v7183, 2
      %v7186 = vshll.u32 %v6926, 16
      %v7188 = vrot.slane %v7186, 3
      %v7189 = vor.u32 %v7185, %v7188
      %v7190 = vsel %vm1249, %v7171, %v7189
      %v7192 = vshrl.u32 %v6927, 16
      %v7194 = vrot.slane %v7192, 2
      %v7195 = vshll.u32 %v6927, 16
      %v7197 = vrot.slane %v7195, 3
      %v7198 = vor.u32 %v7194, %v7197
      %v7199 = vsel %vm1249, %v7180, %v7198
      %v7201 = vshrl.u32 %v6928, 16
      %v7203 = vrot.slane %v7201, 2
      %v7204 = vshll.u32 %v6928, 16
      %v7206 = vrot.slane %v7204, 3
      %v7207 = vor.u32 %v7203, %v7206
      %v7208 = vsel %vm1249, %v7189, %v7207
      %v7210 = vshrl.u32 %v7137, 16
      %v7212 = vrot.slane %v7210, 2
      %v7213 = vshll.u32 %v7137, 16
      %v7215 = vrot.slane %v7213, 3
      %v7216 = vor.u32 %v7212, %v7215
      %v7217 = vsel %vm1249, %v7198, %v7216
      %v7219 = vshrl.u32 %v7138, 16
      %v7221 = vrot.slane %v7219, 2
      %v7222 = vshll.u32 %v7138, 16
      %v7224 = vrot.slane %v7222, 3
      %v7225 = vor.u32 %v7221, %v7224
      %v7226 = vsel %vm1249, %v7207, %v7225
      %v7252 = vunpack.c.l.b16 %v7114
      %v7253 = vunpack.c.l.b16 %v7115
      %v7254 = vunpack.c.l.b16 %v7116
      %v7255 = vunpack.c.l.b16 %v7117
      %v7256 = vunpack.c.l.b16 %v7118
      %v7257 = vunpack.c.l.b16 %v7119
      %v7258 = vunpack.c.l.b16 %v7120
      %v7259 = vunpack.c.l.b16 %v7121
      %v7260 = vunpack.c.l.b16 %v7122
      %v7261 = vunpack.c.l.b16 %v7123
      %v7262 = vunpack.c.l.b16 %v7124
      %v7263 = vunpack.c.l.b16 %v7125
      %v7264 = vunpack.c.l.b16 %v7126
      %v7265 = vunpack.c.l.b16 %v7127
      %v7266 = vunpack.c.l.b16 %v7128
      %v7267 = vunpack.c.l.b16 %v7129
      %v7268 = vunpack.c.l.b16 %v7130
      %v7269 = vunpack.c.l.b16 %v7131
      %v7270 = vunpack.c.l.b16 %v7132
      %v7271 = vunpack.c.l.b16 %v7133
      %v7272 = vpack.c.b16 %v7253, %v7252
      %v7273 = vpack.c.b16 %v7255, %v7254
      %v7274 = vpack.c.b16 %v7257, %v7256
      %v7275 = vpack.c.b16 %v7259, %v7258
      %v7276 = vpack.c.b16 %v7261, %v7260
      %v7277 = vpack.c.b16 %v7263, %v7262
      %v7278 = vpack.c.b16 %v7265, %v7264
      %v7279 = vpack.c.b16 %v7267, %v7266
      %v7280 = vpack.c.b16 %v7269, %v7268
      %v7281 = vpack.c.b16 %v7271, %v7270
      %v7292 = vsel %vm6405, %v7172, 0
      %v7295 = vsel %vm6405, %v7190, 0
      %v7298 = vsel %vm6405, %v7208, 0
      %v7301 = vsel %vm6405, %v7226, 0
      %v7304 = vsel %vm6405, %v7225, 0
      %v7307 = vsel %vm6421, %v7281, 0
      %7309 = vmatprep.subr.bf16.mxu0 0
      %7310 = vmatpush1.bf16.msra.mxu0 %v7279
      %7311 = vmatprep.subr.bf16.mxu0 0
      %7312 = vmatpush1.bf16.msra.mxu0 %v7278
      %7313 = vmatprep.subr.bf16.mxu0 0
      %7314 = vmatpush1.bf16.msra.mxu0 %v7277
      %7315 = vmatprep.subr.bf16.mxu0 0
      %7316 = vmatpush1.bf16.msra.mxu0 %v7276
      %7317 = vmatprep.subr.bf16.mxu0 0
      %7318 = vmatpush1.bf16.msra.mxu0 %v7275
      %7319 = vmatprep.subr.bf16.mxu0 0
      %7320 = vmatpush1.bf16.msra.mxu0 %v7274
      %7321 = vmatprep.subr.bf16.mxu0 0
      %7322 = vmatpush1.bf16.msra.mxu0 %v7273
      %7323 = vmatprep.subr.bf16.mxu0 0
      %7324 = vmatpush1.bf16.msra.mxu0 %v7272
      %7325 = vmatprep.subr.bf16.mxu0 0
      %7326 = vmatpush2.bf16.msra.mxu0 0
      %7327 = vmatprep.subr.bf16.mxu0 0
      %7328 = vmatpush2.bf16.msra.mxu0 0
      %7329 = vmatprep.subr.bf16.mxu0 0
      %7330 = vmatpush2.bf16.msra.mxu0 0
      %7331 = vmatprep.subr.bf16.mxu0 0
      %7332 = vmatpush2.bf16.msra.mxu0 0
      %7333 = vmatprep.subr.bf16.mxu0 0
      %7334 = vmatpush2.bf16.msra.mxu0 0
      %7335 = vmatprep.subr.bf16.mxu0 0
      %7336 = vmatpush2.bf16.msra.mxu0 0
      %7337 = vmatprep.subr.bf16.mxu0 0
      %7338 = vmatpush2.bf16.msra.mxu0 %v7307
      %7339 = vmatprep.subr.bf16.mxu0 0
      %7340 = vmatpush2.bf16.msra.mxu0 %v7280
      %7341 = vmatprep.mubr.bf16.mxu0 %v7292
      %7342 = vmatmul.mubr.bf16.gmra.mxu0 %v7155
      %v7343 = vpop.f32.mrf.mxu0
      %v7344 = vadd.f32 0.0, %v7343
      %v7345 = vpop.f32.mrf.mxu0
      %v7346 = vpop.f32.mrf.mxu0
      %v7347 = vadd.f32 0.0, %v7346
      %v7348 = vpop.f32.mrf.mxu0
      %7349 = vmatprep.mubr.bf16.mxu0 %v7295
      %7350 = vmatmul.mubr.bf16.gmra.mxu0 %v7181
      %v7351 = vpop.f32.mrf.mxu0
      %v7352 = vadd.f32 0.0, %v7351
      %v7353 = vpop.f32.mrf.mxu0
      %v7354 = vpop.f32.mrf.mxu0
      %v7355 = vadd.f32 0.0, %v7354
      %v7356 = vpop.f32.mrf.mxu0
      %7357 = vmatprep.mubr.bf16.mxu0 %v7298
      %7358 = vmatmul.mubr.bf16.gmra.mxu0 %v7199
      %v7359 = vpop.f32.mrf.mxu0
      %v7360 = vadd.f32 0.0, %v7359
      %v7361 = vpop.f32.mrf.mxu0
      %v7362 = vpop.f32.mrf.mxu0
      %v7363 = vadd.f32 0.0, %v7362
      %v7364 = vpop.f32.mrf.mxu0
      %7365 = vmatprep.mubr.bf16.mxu0 %v7301
      %7366 = vmatmul.mubr.bf16.gmra.mxu0 %v7217
      %v7367 = vpop.f32.mrf.mxu0
      %v7368 = vadd.f32 0.0, %v7367
      %v7369 = vpop.f32.mrf.mxu0
      %v7370 = vpop.f32.mrf.mxu0
      %v7371 = vadd.f32 0.0, %v7370
      %v7372 = vpop.f32.mrf.mxu0
      %7373 = vmatprep.mubr.bf16.mxu0 %v7304
      %7374 = vmatmul.mubr.bf16.gmra.mxu0 %v7216
      %v7375 = vpop.f32.mrf.mxu0
      %v7376 = vadd.f32 0.0, %v7375
      %v7377 = vpop.f32.mrf.mxu0
      %v7378 = vpop.f32.mrf.mxu0
      %v7379 = vpop.f32.mrf.mxu0
      %7380 = vdwg.mxu0
      %v7381 = vadd.f32 %v7103, %v7344
      %v7382 = vadd.f32 %v7104, %v7347
      %v7383 = vadd.f32 %v7105, %v7352
      %v7384 = vadd.f32 %v7106, %v7355
      %v7385 = vadd.f32 %v7107, %v7360
      %v7386 = vadd.f32 %v7108, %v7363
      %v7387 = vadd.f32 %v7109, %v7368
      %v7388 = vadd.f32 %v7110, %v7371
      %v7389 = vadd.f32 %v7111, %v7376
      %v7390 = vld [vmem:[#allocation3 + $0x8] sm:$0x88]
      %s7391 = scalar_lea.vmem %s5, 400
      %v7392 = vld [vmem:[%s7391] sm:$0xf]
      %v7393 = vld [vmem:[%s7391 + $0x4] sm:$0xf]
      %v7394 = vld [vmem:[%s7391 + $0x8] sm:$0xf]
      %v7395 = vld [vmem:[%s7391 + $0xc] sm:$0xf]
      %v7396 = vld [vmem:[%s7391 + $0x10] sm:$0xf]
      %v7397 = vld [vmem:[%s7391 + $0x14] sm:$0xf]
      %v7398 = vld [vmem:[%s7391 + $0x18] sm:$0xf]
      %v7399 = vld [vmem:[%s7391 + $0x1c] sm:$0xf]
      %v7400 = vld [vmem:[%s7391 + $0x20] sm:$0xf]
      %v7401 = vld [vmem:[%s7391 + $0x24] sm:$0xf]
      %v7402 = vld [vmem:[%s7391 + $0x28] sm:$0xf]
      %v7403 = vld [vmem:[%s7391 + $0x2c] sm:$0xf]
      %v7404 = vld [vmem:[%s7391 + $0x30] sm:$0xf]
      %v7405 = vld [vmem:[%s7391 + $0x34] sm:$0xf]
      %v7406 = vld [vmem:[%s7391 + $0x38] sm:$0xf]
      %v7407 = vld [vmem:[%s7391 + $0x3c] sm:$0xf]
      %v7408 = vld [vmem:[%s7391 + $0x40] sm:$0xf]
      %v7409 = vld [vmem:[%s7391 + $0x44] sm:$0xf]
      %v7410 = vld [vmem:[%s7391 + $0x48] sm:$0xf]
      %v7411 = vld [vmem:[%s7391 + $0x4c] sm:$0x3]
      %v7413 = vunpack.c.l.b16 %v7390
      %v7414 = vunpack.c.h.b16 %v7390
      %v7415 = vpack.c.b16 %v6903, %v7413
      %v7416 = vpack.c.b16 %v6904, %v7414
      %v7417 = vrot.slane %v7415, 3
      %v7418 = vrot.slane %v6923, 3
      %v7419 = vsel %vm1515, %v7417, %v7418
      %v7420 = vrot.slane %v7416, 3
      %v7421 = vrot.slane %v6924, 3
      %v7422 = vsel %vm1515, %v7420, %v7421
      %v7423 = vrot.slane %v6925, 3
      %v7424 = vsel %vm1515, %v7418, %v7423
      %v7425 = vrot.slane %v6926, 3
      %v7426 = vsel %vm1515, %v7421, %v7425
      %v7427 = vrot.slane %v6927, 3
      %v7428 = vsel %vm1515, %v7423, %v7427
      %v7429 = vrot.slane %v6928, 3
      %v7430 = vsel %vm1515, %v7425, %v7429
      %v7431 = vrot.slane %v7137, 3
      %v7432 = vsel %vm1515, %v7427, %v7431
      %v7433 = vrot.slane %v7138, 3
      %v7434 = vsel %vm1515, %v7429, %v7433
      %v7460 = vunpack.c.l.b16 %v7392
      %v7461 = vunpack.c.l.b16 %v7393
      %v7462 = vunpack.c.l.b16 %v7394
      %v7463 = vunpack.c.l.b16 %v7395
      %v7464 = vunpack.c.l.b16 %v7396
      %v7465 = vunpack.c.l.b16 %v7397
      %v7466 = vunpack.c.l.b16 %v7398
      %v7467 = vunpack.c.l.b16 %v7399
      %v7468 = vunpack.c.l.b16 %v7400
      %v7469 = vunpack.c.l.b16 %v7401
      %v7470 = vunpack.c.l.b16 %v7402
      %v7471 = vunpack.c.l.b16 %v7403
      %v7472 = vunpack.c.l.b16 %v7404
      %v7473 = vunpack.c.l.b16 %v7405
      %v7474 = vunpack.c.l.b16 %v7406
      %v7475 = vunpack.c.l.b16 %v7407
      %v7476 = vunpack.c.l.b16 %v7408
      %v7477 = vunpack.c.l.b16 %v7409
      %v7478 = vunpack.c.l.b16 %v7410
      %v7479 = vunpack.c.l.b16 %v7411
      %v7480 = vpack.c.b16 %v7461, %v7460
      %v7481 = vpack.c.b16 %v7463, %v7462
      %v7482 = vpack.c.b16 %v7465, %v7464
      %v7483 = vpack.c.b16 %v7467, %v7466
      %v7484 = vpack.c.b16 %v7469, %v7468
      %v7485 = vpack.c.b16 %v7471, %v7470
      %v7486 = vpack.c.b16 %v7473, %v7472
      %v7487 = vpack.c.b16 %v7475, %v7474
      %v7488 = vpack.c.b16 %v7477, %v7476
      %v7489 = vpack.c.b16 %v7479, %v7478
      %v7500 = vsel %vm6405, %v7422, 0
      %v7503 = vsel %vm6405, %v7426, 0
      %v7506 = vsel %vm6405, %v7430, 0
      %v7509 = vsel %vm6405, %v7434, 0
      %v7512 = vsel %vm6405, %v7433, 0
      %v7515 = vsel %vm6421, %v7489, 0
      %7517 = vmatprep.subr.bf16.mxu0 0
      %7518 = vmatpush1.bf16.msra.mxu0 %v7487
      %7519 = vmatprep.subr.bf16.mxu0 0
      %7520 = vmatpush1.bf16.msra.mxu0 %v7486
      %7521 = vmatprep.subr.bf16.mxu0 0
      %7522 = vmatpush1.bf16.msra.mxu0 %v7485
      %7523 = vmatprep.subr.bf16.mxu0 0
      %7524 = vmatpush1.bf16.msra.mxu0 %v7484
      %7525 = vmatprep.subr.bf16.mxu0 0
      %7526 = vmatpush1.bf16.msra.mxu0 %v7483
      %7527 = vmatprep.subr.bf16.mxu0 0
      %7528 = vmatpush1.bf16.msra.mxu0 %v7482
      %7529 = vmatprep.subr.bf16.mxu0 0
      %7530 = vmatpush1.bf16.msra.mxu0 %v7481
      %7531 = vmatprep.subr.bf16.mxu0 0
      %7532 = vmatpush1.bf16.msra.mxu0 %v7480
      %7533 = vmatprep.subr.bf16.mxu0 0
      %7534 = vmatpush2.bf16.msra.mxu0 0
      %7535 = vmatprep.subr.bf16.mxu0 0
      %7536 = vmatpush2.bf16.msra.mxu0 0
      %7537 = vmatprep.subr.bf16.mxu0 0
      %7538 = vmatpush2.bf16.msra.mxu0 0
      %7539 = vmatprep.subr.bf16.mxu0 0
      %7540 = vmatpush2.bf16.msra.mxu0 0
      %7541 = vmatprep.subr.bf16.mxu0 0
      %7542 = vmatpush2.bf16.msra.mxu0 0
      %7543 = vmatprep.subr.bf16.mxu0 0
      %7544 = vmatpush2.bf16.msra.mxu0 0
      %7545 = vmatprep.subr.bf16.mxu0 0
      %7546 = vmatpush2.bf16.msra.mxu0 %v7515
      %7547 = vmatprep.subr.bf16.mxu0 0
      %7548 = vmatpush2.bf16.msra.mxu0 %v7488
      %7549 = vmatprep.mubr.bf16.mxu0 %v7500
      %7550 = vmatmul.mubr.bf16.gmra.mxu0 %v7419
      %v7551 = vpop.f32.mrf.mxu0
      %v7552 = vadd.f32 0.0, %v7551
      %v7553 = vpop.f32.mrf.mxu0
      %v7554 = vpop.f32.mrf.mxu0
      %v7555 = vadd.f32 0.0, %v7554
      %v7556 = vpop.f32.mrf.mxu0
      %7557 = vmatprep.mubr.bf16.mxu0 %v7503
      %7558 = vmatmul.mubr.bf16.gmra.mxu0 %v7424
      %v7559 = vpop.f32.mrf.mxu0
      %v7560 = vadd.f32 0.0, %v7559
      %v7561 = vpop.f32.mrf.mxu0
      %v7562 = vpop.f32.mrf.mxu0
      %v7563 = vadd.f32 0.0, %v7562
      %v7564 = vpop.f32.mrf.mxu0
      %7565 = vmatprep.mubr.bf16.mxu0 %v7506
      %7566 = vmatmul.mubr.bf16.gmra.mxu0 %v7428
      %v7567 = vpop.f32.mrf.mxu0
      %v7568 = vadd.f32 0.0, %v7567
      %v7569 = vpop.f32.mrf.mxu0
      %v7570 = vpop.f32.mrf.mxu0
      %v7571 = vadd.f32 0.0, %v7570
      %v7572 = vpop.f32.mrf.mxu0
      %7573 = vmatprep.mubr.bf16.mxu0 %v7509
      %7574 = vmatmul.mubr.bf16.gmra.mxu0 %v7432
      %v7575 = vpop.f32.mrf.mxu0
      %v7576 = vadd.f32 0.0, %v7575
      %v7577 = vpop.f32.mrf.mxu0
      %v7578 = vpop.f32.mrf.mxu0
      %v7579 = vadd.f32 0.0, %v7578
      %v7580 = vpop.f32.mrf.mxu0
      %7581 = vmatprep.mubr.bf16.mxu0 %v7512
      %7582 = vmatmul.mubr.bf16.gmra.mxu0 %v7431
      %v7583 = vpop.f32.mrf.mxu0
      %v7584 = vadd.f32 0.0, %v7583
      %v7585 = vpop.f32.mrf.mxu0
      %v7586 = vpop.f32.mrf.mxu0
      %v7587 = vpop.f32.mrf.mxu0
      %7588 = vdwg.mxu0
      %v7589 = vadd.f32 %v7381, %v7552
      %v7590 = vadd.f32 %v7382, %v7555
      %v7591 = vadd.f32 %v7383, %v7560
      %v7592 = vadd.f32 %v7384, %v7563
      %v7593 = vadd.f32 %v7385, %v7568
      %v7594 = vadd.f32 %v7386, %v7571
      %v7595 = vadd.f32 %v7387, %v7576
      %v7596 = vadd.f32 %v7388, %v7579
      %v7597 = vadd.f32 %v7389, %v7584
      %v7598 = vld [vmem:[#allocation3 + $0x18] sm:$0xff]
      %v7599 = vld [vmem:[#allocation3 + $0x20] sm:$0xff]
      %v7600 = vld [vmem:[#allocation3 + $0x28] sm:$0xff]
      %v7601 = vld [vmem:[#allocation3 + $0x30] sm:$0xff]
      %v7602 = vld [vmem:[#allocation3 + $0x38] sm:$0xff]
      %v7603 = vld [vmem:[#allocation3 + $0x40] sm:$0xff]
      %v7604 = vld [vmem:[#allocation3 + $0x48] sm:$0xff]
      %v7605 = vld [vmem:[#allocation3 + $0x50] sm:$0xff]
      %v7606 = vld [vmem:[#allocation3 + $0x58] sm:$0x77]
      %s7607 = scalar_lea.vmem %s5, 480
      %v7608 = vld [vmem:[%s7607] sm:$0xf]
      %v7609 = vld [vmem:[%s7607 + $0x4] sm:$0xf]
      %v7610 = vld [vmem:[%s7607 + $0x8] sm:$0xf]
      %v7611 = vld [vmem:[%s7607 + $0xc] sm:$0xf]
      %v7612 = vld [vmem:[%s7607 + $0x10] sm:$0xf]
      %v7613 = vld [vmem:[%s7607 + $0x14] sm:$0xf]
      %v7614 = vld [vmem:[%s7607 + $0x18] sm:$0xf]
      %v7615 = vld [vmem:[%s7607 + $0x1c] sm:$0xf]
      %v7616 = vld [vmem:[%s7607 + $0x20] sm:$0xf]
      %v7617 = vld [vmem:[%s7607 + $0x24] sm:$0xf]
      %v7618 = vld [vmem:[%s7607 + $0x28] sm:$0xf]
      %v7619 = vld [vmem:[%s7607 + $0x2c] sm:$0xf]
      %v7620 = vld [vmem:[%s7607 + $0x30] sm:$0xf]
      %v7621 = vld [vmem:[%s7607 + $0x34] sm:$0xf]
      %v7622 = vld [vmem:[%s7607 + $0x38] sm:$0xf]
      %v7623 = vld [vmem:[%s7607 + $0x3c] sm:$0xf]
      %v7624 = vld [vmem:[%s7607 + $0x40] sm:$0xf]
      %v7625 = vld [vmem:[%s7607 + $0x44] sm:$0xf]
      %v7626 = vld [vmem:[%s7607 + $0x48] sm:$0xf]
      %v7627 = vld [vmem:[%s7607 + $0x4c] sm:$0x3]
      %v7637 = vunpack.c.l.b16 %v7598
      %v7638 = vunpack.c.h.b16 %v7598
      %v7639 = vunpack.c.l.b16 %v7599
      %v7640 = vunpack.c.h.b16 %v7599
      %v7641 = vunpack.c.l.b16 %v7600
      %v7642 = vunpack.c.h.b16 %v7600
      %v7643 = vunpack.c.l.b16 %v7601
      %v7644 = vunpack.c.h.b16 %v7601
      %v7645 = vunpack.c.l.b16 %v7602
      %v7646 = vunpack.c.h.b16 %v7602
      %v7647 = vunpack.c.l.b16 %v7603
      %v7648 = vunpack.c.h.b16 %v7603
      %v7649 = vunpack.c.l.b16 %v7604
      %v7650 = vunpack.c.h.b16 %v7604
      %v7651 = vunpack.c.l.b16 %v7605
      %v7652 = vunpack.c.h.b16 %v7605
      %v7653 = vunpack.c.l.b16 %v7606
      %v7654 = vunpack.c.h.b16 %v7606
      %v7655 = vpack.c.b16 %v7639, %v7637
      %v7656 = vpack.c.b16 %v7640, %v7638
      %v7657 = vpack.c.b16 %v7643, %v7641
      %v7658 = vpack.c.b16 %v7644, %v7642
      %v7659 = vpack.c.b16 %v7647, %v7645
      %v7660 = vpack.c.b16 %v7648, %v7646
      %v7661 = vpack.c.b16 %v7651, %v7649
      %v7662 = vpack.c.b16 %v7652, %v7650
      %v7663 = vpack.c.b16 %v7653, %v7653
      %v7664 = vpack.c.b16 %v7654, %v7654
      %v7690 = vunpack.c.l.b16 %v7608
      %v7691 = vunpack.c.l.b16 %v7609
      %v7692 = vunpack.c.l.b16 %v7610
      %v7693 = vunpack.c.l.b16 %v7611
      %v7694 = vunpack.c.l.b16 %v7612
      %v7695 = vunpack.c.l.b16 %v7613
      %v7696 = vunpack.c.l.b16 %v7614
      %v7697 = vunpack.c.l.b16 %v7615
      %v7698 = vunpack.c.l.b16 %v7616
      %v7699 = vunpack.c.l.b16 %v7617
      %v7700 = vunpack.c.l.b16 %v7618
      %v7701 = vunpack.c.l.b16 %v7619
      %v7702 = vunpack.c.l.b16 %v7620
      %v7703 = vunpack.c.l.b16 %v7621
      %v7704 = vunpack.c.l.b16 %v7622
      %v7705 = vunpack.c.l.b16 %v7623
      %v7706 = vunpack.c.l.b16 %v7624
      %v7707 = vunpack.c.l.b16 %v7625
      %v7708 = vunpack.c.l.b16 %v7626
      %v7709 = vunpack.c.l.b16 %v7627
      %v7710 = vpack.c.b16 %v7691, %v7690
      %v7711 = vpack.c.b16 %v7693, %v7692
      %v7712 = vpack.c.b16 %v7695, %v7694
      %v7713 = vpack.c.b16 %v7697, %v7696
      %v7714 = vpack.c.b16 %v7699, %v7698
      %v7715 = vpack.c.b16 %v7701, %v7700
      %v7716 = vpack.c.b16 %v7703, %v7702
      %v7717 = vpack.c.b16 %v7705, %v7704
      %v7718 = vpack.c.b16 %v7707, %v7706
      %v7719 = vpack.c.b16 %v7709, %v7708
      %v7730 = vsel %vm6405, %v7656, 0
      %v7733 = vsel %vm6405, %v7658, 0
      %v7736 = vsel %vm6405, %v7660, 0
      %v7739 = vsel %vm6405, %v7662, 0
      %v7742 = vsel %vm6405, %v7664, 0
      %v7745 = vsel %vm6421, %v7719, 0
      %7747 = vmatprep.subr.bf16.mxu0 0
      %7748 = vmatpush1.bf16.msra.mxu0 %v7717
      %7749 = vmatprep.subr.bf16.mxu0 0
      %7750 = vmatpush1.bf16.msra.mxu0 %v7716
      %7751 = vmatprep.subr.bf16.mxu0 0
      %7752 = vmatpush1.bf16.msra.mxu0 %v7715
      %7753 = vmatprep.subr.bf16.mxu0 0
      %7754 = vmatpush1.bf16.msra.mxu0 %v7714
      %7755 = vmatprep.subr.bf16.mxu0 0
      %7756 = vmatpush1.bf16.msra.mxu0 %v7713
      %7757 = vmatprep.subr.bf16.mxu0 0
      %7758 = vmatpush1.bf16.msra.mxu0 %v7712
      %7759 = vmatprep.subr.bf16.mxu0 0
      %7760 = vmatpush1.bf16.msra.mxu0 %v7711
      %7761 = vmatprep.subr.bf16.mxu0 0
      %7762 = vmatpush1.bf16.msra.mxu0 %v7710
      %7763 = vmatprep.subr.bf16.mxu0 0
      %7764 = vmatpush2.bf16.msra.mxu0 0
      %7765 = vmatprep.subr.bf16.mxu0 0
      %7766 = vmatpush2.bf16.msra.mxu0 0
      %7767 = vmatprep.subr.bf16.mxu0 0
      %7768 = vmatpush2.bf16.msra.mxu0 0
      %7769 = vmatprep.subr.bf16.mxu0 0
      %7770 = vmatpush2.bf16.msra.mxu0 0
      %7771 = vmatprep.subr.bf16.mxu0 0
      %7772 = vmatpush2.bf16.msra.mxu0 0
      %7773 = vmatprep.subr.bf16.mxu0 0
      %7774 = vmatpush2.bf16.msra.mxu0 0
      %7775 = vmatprep.subr.bf16.mxu0 0
      %7776 = vmatpush2.bf16.msra.mxu0 %v7745
      %7777 = vmatprep.subr.bf16.mxu0 0
      %7778 = vmatpush2.bf16.msra.mxu0 %v7718
      %7779 = vmatprep.mubr.bf16.mxu0 %v7730
      %7780 = vmatmul.mubr.bf16.gmra.mxu0 %v7655
      %v7781 = vpop.f32.mrf.mxu0
      %v7782 = vadd.f32 0.0, %v7781
      %v7783 = vpop.f32.mrf.mxu0
      %v7784 = vpop.f32.mrf.mxu0
      %v7785 = vadd.f32 0.0, %v7784
      %v7786 = vpop.f32.mrf.mxu0
      %7787 = vmatprep.mubr.bf16.mxu0 %v7733
      %7788 = vmatmul.mubr.bf16.gmra.mxu0 %v7657
      %v7789 = vpop.f32.mrf.mxu0
      %v7790 = vadd.f32 0.0, %v7789
      %v7791 = vpop.f32.mrf.mxu0
      %v7792 = vpop.f32.mrf.mxu0
      %v7793 = vadd.f32 0.0, %v7792
      %v7794 = vpop.f32.mrf.mxu0
      %7795 = vmatprep.mubr.bf16.mxu0 %v7736
      %7796 = vmatmul.mubr.bf16.gmra.mxu0 %v7659
      %v7797 = vpop.f32.mrf.mxu0
      %v7798 = vadd.f32 0.0, %v7797
      %v7799 = vpop.f32.mrf.mxu0
      %v7800 = vpop.f32.mrf.mxu0
      %v7801 = vadd.f32 0.0, %v7800
      %v7802 = vpop.f32.mrf.mxu0
      %7803 = vmatprep.mubr.bf16.mxu0 %v7739
      %7804 = vmatmul.mubr.bf16.gmra.mxu0 %v7661
      %v7805 = vpop.f32.mrf.mxu0
      %v7806 = vadd.f32 0.0, %v7805
      %v7807 = vpop.f32.mrf.mxu0
      %v7808 = vpop.f32.mrf.mxu0
      %v7809 = vadd.f32 0.0, %v7808
      %v7810 = vpop.f32.mrf.mxu0
      %7811 = vmatprep.mubr.bf16.mxu0 %v7742
      %7812 = vmatmul.mubr.bf16.gmra.mxu0 %v7663
      %v7813 = vpop.f32.mrf.mxu0
      %v7814 = vadd.f32 0.0, %v7813
      %v7815 = vpop.f32.mrf.mxu0
      %v7816 = vpop.f32.mrf.mxu0
      %v7817 = vpop.f32.mrf.mxu0
      %7818 = vdwg.mxu0
      %v7819 = vadd.f32 %v7589, %v7782
      %v7820 = vadd.f32 %v7590, %v7785
      %v7821 = vadd.f32 %v7591, %v7790
      %v7822 = vadd.f32 %v7592, %v7793
      %v7823 = vadd.f32 %v7593, %v7798
      %v7824 = vadd.f32 %v7594, %v7801
      %v7825 = vadd.f32 %v7595, %v7806
      %v7826 = vadd.f32 %v7596, %v7809
      %v7827 = vadd.f32 %v7597, %v7814
      %v7828 = vld [vmem:[#allocation3 + $0x58] sm:$0xff]
      %s7829 = scalar_lea.vmem %s5, 560
      %v7830 = vld [vmem:[%s7829] sm:$0xf]
      %v7831 = vld [vmem:[%s7829 + $0x4] sm:$0xf]
      %v7832 = vld [vmem:[%s7829 + $0x8] sm:$0xf]
      %v7833 = vld [vmem:[%s7829 + $0xc] sm:$0xf]
      %v7834 = vld [vmem:[%s7829 + $0x10] sm:$0xf]
      %v7835 = vld [vmem:[%s7829 + $0x14] sm:$0xf]
      %v7836 = vld [vmem:[%s7829 + $0x18] sm:$0xf]
      %v7837 = vld [vmem:[%s7829 + $0x1c] sm:$0xf]
      %v7838 = vld [vmem:[%s7829 + $0x20] sm:$0xf]
      %v7839 = vld [vmem:[%s7829 + $0x24] sm:$0xf]
      %v7840 = vld [vmem:[%s7829 + $0x28] sm:$0xf]
      %v7841 = vld [vmem:[%s7829 + $0x2c] sm:$0xf]
      %v7842 = vld [vmem:[%s7829 + $0x30] sm:$0xf]
      %v7843 = vld [vmem:[%s7829 + $0x34] sm:$0xf]
      %v7844 = vld [vmem:[%s7829 + $0x38] sm:$0xf]
      %v7845 = vld [vmem:[%s7829 + $0x3c] sm:$0xf]
      %v7846 = vld [vmem:[%s7829 + $0x40] sm:$0xf]
      %v7847 = vld [vmem:[%s7829 + $0x44] sm:$0xf]
      %v7848 = vld [vmem:[%s7829 + $0x48] sm:$0xf]
      %v7849 = vld [vmem:[%s7829 + $0x4c] sm:$0x3]
      %v7851 = vunpack.c.l.b16 %v7828
      %v7852 = vunpack.c.h.b16 %v7828
      %v7853 = vpack.c.b16 %v7851, %v7851
      %v7854 = vpack.c.b16 %v7852, %v7852
      %v7856 = vshrl.u32 %v7655, 16
      %v7858 = vshll.u32 %v7655, 16
      %v7860 = vrot.slane %v7858, 1
      %v7861 = vor.u32 %v7856, %v7860
      %v7863 = vshll.u32 %v7657, 16
      %v7865 = vrot.slane %v7863, 1
      %v7866 = vsel %vm397, %v7861, %v7865
      %v7867 = vshrl.u32 %v7656, 16
      %v7869 = vshll.u32 %v7656, 16
      %v7871 = vrot.slane %v7869, 1
      %v7872 = vor.u32 %v7867, %v7871
      %v7873 = vshll.u32 %v7658, 16
      %v7875 = vrot.slane %v7873, 1
      %v7876 = vsel %vm397, %v7872, %v7875
      %v7877 = vshrl.u32 %v7657, 16
      %v7879 = vor.u32 %v7877, %v7865
      %v7881 = vshll.u32 %v7659, 16
      %v7883 = vrot.slane %v7881, 1
      %v7884 = vsel %vm397, %v7879, %v7883
      %v7885 = vshrl.u32 %v7658, 16
      %v7887 = vor.u32 %v7885, %v7875
      %v7888 = vshll.u32 %v7660, 16
      %v7890 = vrot.slane %v7888, 1
      %v7891 = vsel %vm397, %v7887, %v7890
      %v7892 = vshrl.u32 %v7659, 16
      %v7894 = vor.u32 %v7892, %v7883
      %v7896 = vshll.u32 %v7661, 16
      %v7898 = vrot.slane %v7896, 1
      %v7899 = vsel %vm397, %v7894, %v7898
      %v7900 = vshrl.u32 %v7660, 16
      %v7902 = vor.u32 %v7900, %v7890
      %v7903 = vshll.u32 %v7662, 16
      %v7905 = vrot.slane %v7903, 1
      %v7906 = vsel %vm397, %v7902, %v7905
      %v7907 = vshrl.u32 %v7661, 16
      %v7909 = vor.u32 %v7907, %v7898
      %v7911 = vshll.u32 %v7853, 16
      %v7913 = vrot.slane %v7911, 1
      %v7914 = vsel %vm397, %v7909, %v7913
      %v7915 = vshrl.u32 %v7662, 16
      %v7917 = vor.u32 %v7915, %v7905
      %v7919 = vshll.u32 %v7854, 16
      %v7921 = vrot.slane %v7919, 1
      %v7922 = vsel %vm397, %v7917, %v7921
      %v7923 = vshrl.u32 %v7853, 16
      %v7925 = vor.u32 %v7923, %v7913
      %v7926 = vshrl.u32 %v7854, 16
      %v7928 = vor.u32 %v7926, %v7921
      %v7954 = vunpack.c.l.b16 %v7830
      %v7955 = vunpack.c.l.b16 %v7831
      %v7956 = vunpack.c.l.b16 %v7832
      %v7957 = vunpack.c.l.b16 %v7833
      %v7958 = vunpack.c.l.b16 %v7834
      %v7959 = vunpack.c.l.b16 %v7835
      %v7960 = vunpack.c.l.b16 %v7836
      %v7961 = vunpack.c.l.b16 %v7837
      %v7962 = vunpack.c.l.b16 %v7838
      %v7963 = vunpack.c.l.b16 %v7839
      %v7964 = vunpack.c.l.b16 %v7840
      %v7965 = vunpack.c.l.b16 %v7841
      %v7966 = vunpack.c.l.b16 %v7842
      %v7967 = vunpack.c.l.b16 %v7843
      %v7968 = vunpack.c.l.b16 %v7844
      %v7969 = vunpack.c.l.b16 %v7845
      %v7970 = vunpack.c.l.b16 %v7846
      %v7971 = vunpack.c.l.b16 %v7847
      %v7972 = vunpack.c.l.b16 %v7848
      %v7973 = vunpack.c.l.b16 %v7849
      %v7974 = vpack.c.b16 %v7955, %v7954
      %v7975 = vpack.c.b16 %v7957, %v7956
      %v7976 = vpack.c.b16 %v7959, %v7958
      %v7977 = vpack.c.b16 %v7961, %v7960
      %v7978 = vpack.c.b16 %v7963, %v7962
      %v7979 = vpack.c.b16 %v7965, %v7964
      %v7980 = vpack.c.b16 %v7967, %v7966
      %v7981 = vpack.c.b16 %v7969, %v7968
      %v7982 = vpack.c.b16 %v7971, %v7970
      %v7983 = vpack.c.b16 %v7973, %v7972
      %v7994 = vsel %vm6405, %v7876, 0
      %v7997 = vsel %vm6405, %v7891, 0
      %v8000 = vsel %vm6405, %v7906, 0
      %v8003 = vsel %vm6405, %v7922, 0
      %v8006 = vsel %vm6405, %v7928, 0
      %v8009 = vsel %vm6421, %v7983, 0
      %8011 = vmatprep.subr.bf16.mxu0 0
      %8012 = vmatpush1.bf16.msra.mxu0 %v7981
      %8013 = vmatprep.subr.bf16.mxu0 0
      %8014 = vmatpush1.bf16.msra.mxu0 %v7980
      %8015 = vmatprep.subr.bf16.mxu0 0
      %8016 = vmatpush1.bf16.msra.mxu0 %v7979
      %8017 = vmatprep.subr.bf16.mxu0 0
      %8018 = vmatpush1.bf16.msra.mxu0 %v7978
      %8019 = vmatprep.subr.bf16.mxu0 0
      %8020 = vmatpush1.bf16.msra.mxu0 %v7977
      %8021 = vmatprep.subr.bf16.mxu0 0
      %8022 = vmatpush1.bf16.msra.mxu0 %v7976
      %8023 = vmatprep.subr.bf16.mxu0 0
      %8024 = vmatpush1.bf16.msra.mxu0 %v7975
      %8025 = vmatprep.subr.bf16.mxu0 0
      %8026 = vmatpush1.bf16.msra.mxu0 %v7974
      %8027 = vmatprep.subr.bf16.mxu0 0
      %8028 = vmatpush2.bf16.msra.mxu0 0
      %8029 = vmatprep.subr.bf16.mxu0 0
      %8030 = vmatpush2.bf16.msra.mxu0 0
      %8031 = vmatprep.subr.bf16.mxu0 0
      %8032 = vmatpush2.bf16.msra.mxu0 0
      %8033 = vmatprep.subr.bf16.mxu0 0
      %8034 = vmatpush2.bf16.msra.mxu0 0
      %8035 = vmatprep.subr.bf16.mxu0 0
      %8036 = vmatpush2.bf16.msra.mxu0 0
      %8037 = vmatprep.subr.bf16.mxu0 0
      %8038 = vmatpush2.bf16.msra.mxu0 0
      %8039 = vmatprep.subr.bf16.mxu0 0
      %8040 = vmatpush2.bf16.msra.mxu0 %v8009
      %8041 = vmatprep.subr.bf16.mxu0 0
      %8042 = vmatpush2.bf16.msra.mxu0 %v7982
      %8043 = vmatprep.mubr.bf16.mxu0 %v7994
      %8044 = vmatmul.mubr.bf16.gmra.mxu0 %v7866
      %v8045 = vpop.f32.mrf.mxu0
      %v8046 = vadd.f32 0.0, %v8045
      %v8047 = vpop.f32.mrf.mxu0
      %v8048 = vpop.f32.mrf.mxu0
      %v8049 = vadd.f32 0.0, %v8048
      %v8050 = vpop.f32.mrf.mxu0
      %8051 = vmatprep.mubr.bf16.mxu0 %v7997
      %8052 = vmatmul.mubr.bf16.gmra.mxu0 %v7884
      %v8053 = vpop.f32.mrf.mxu0
      %v8054 = vadd.f32 0.0, %v8053
      %v8055 = vpop.f32.mrf.mxu0
      %v8056 = vpop.f32.mrf.mxu0
      %v8057 = vadd.f32 0.0, %v8056
      %v8058 = vpop.f32.mrf.mxu0
      %8059 = vmatprep.mubr.bf16.mxu0 %v8000
      %8060 = vmatmul.mubr.bf16.gmra.mxu0 %v7899
      %v8061 = vpop.f32.mrf.mxu0
      %v8062 = vadd.f32 0.0, %v8061
      %v8063 = vpop.f32.mrf.mxu0
      %v8064 = vpop.f32.mrf.mxu0
      %v8065 = vadd.f32 0.0, %v8064
      %v8066 = vpop.f32.mrf.mxu0
      %8067 = vmatprep.mubr.bf16.mxu0 %v8003
      %8068 = vmatmul.mubr.bf16.gmra.mxu0 %v7914
      %v8069 = vpop.f32.mrf.mxu0
      %v8070 = vadd.f32 0.0, %v8069
      %v8071 = vpop.f32.mrf.mxu0
      %v8072 = vpop.f32.mrf.mxu0
      %v8073 = vadd.f32 0.0, %v8072
      %v8074 = vpop.f32.mrf.mxu0
      %8075 = vmatprep.mubr.bf16.mxu0 %v8006
      %8076 = vmatmul.mubr.bf16.gmra.mxu0 %v7925
      %v8077 = vpop.f32.mrf.mxu0
      %v8078 = vadd.f32 0.0, %v8077
      %v8079 = vpop.f32.mrf.mxu0
      %v8080 = vpop.f32.mrf.mxu0
      %v8081 = vpop.f32.mrf.mxu0
      %8082 = vdwg.mxu0
      %v8083 = vadd.f32 %v7819, %v8046
      %v8084 = vadd.f32 %v7820, %v8049
      %v8085 = vadd.f32 %v7821, %v8054
      %v8086 = vadd.f32 %v7822, %v8057
      %v8087 = vadd.f32 %v7823, %v8062
      %v8088 = vadd.f32 %v7824, %v8065
      %v8089 = vadd.f32 %v7825, %v8070
      %v8090 = vadd.f32 %v7826, %v8073
      %v8091 = vadd.f32 %v7827, %v8078
      %v8092 = vld [vmem:[#allocation3 + $0x18] sm:$0xee]
      %s8093 = scalar_lea.vmem %s5, 640
      %v8094 = vld [vmem:[%s8093] sm:$0xf]
      %v8095 = vld [vmem:[%s8093 + $0x4] sm:$0xf]
      %v8096 = vld [vmem:[%s8093 + $0x8] sm:$0xf]
      %v8097 = vld [vmem:[%s8093 + $0xc] sm:$0xf]
      %v8098 = vld [vmem:[%s8093 + $0x10] sm:$0xf]
      %v8099 = vld [vmem:[%s8093 + $0x14] sm:$0xf]
      %v8100 = vld [vmem:[%s8093 + $0x18] sm:$0xf]
      %v8101 = vld [vmem:[%s8093 + $0x1c] sm:$0xf]
      %v8102 = vld [vmem:[%s8093 + $0x20] sm:$0xf]
      %v8103 = vld [vmem:[%s8093 + $0x24] sm:$0xf]
      %v8104 = vld [vmem:[%s8093 + $0x28] sm:$0xf]
      %v8105 = vld [vmem:[%s8093 + $0x2c] sm:$0xf]
      %v8106 = vld [vmem:[%s8093 + $0x30] sm:$0xf]
      %v8107 = vld [vmem:[%s8093 + $0x34] sm:$0xf]
      %v8108 = vld [vmem:[%s8093 + $0x38] sm:$0xf]
      %v8109 = vld [vmem:[%s8093 + $0x3c] sm:$0xf]
      %v8110 = vld [vmem:[%s8093 + $0x40] sm:$0xf]
      %v8111 = vld [vmem:[%s8093 + $0x44] sm:$0xf]
      %v8112 = vld [vmem:[%s8093 + $0x48] sm:$0xf]
      %v8113 = vld [vmem:[%s8093 + $0x4c] sm:$0x3]
      %v8115 = vunpack.c.l.b16 %v8092
      %v8116 = vunpack.c.h.b16 %v8092
      %v8117 = vpack.c.b16 %v7639, %v8115
      %v8118 = vpack.c.b16 %v7640, %v8116
      %v8119 = vrot.slane %v8117, 1
      %v8120 = vrot.slane %v7657, 1
      %v8121 = vsel %vm777, %v8119, %v8120
      %v8122 = vrot.slane %v8118, 1
      %v8123 = vrot.slane %v7658, 1
      %v8124 = vsel %vm777, %v8122, %v8123
      %v8125 = vrot.slane %v7659, 1
      %v8126 = vsel %vm777, %v8120, %v8125
      %v8127 = vrot.slane %v7660, 1
      %v8128 = vsel %vm777, %v8123, %v8127
      %v8129 = vrot.slane %v7661, 1
      %v8130 = vsel %vm777, %v8125, %v8129
      %v8131 = vrot.slane %v7662, 1
      %v8132 = vsel %vm777, %v8127, %v8131
      %v8133 = vrot.slane %v7853, 1
      %v8134 = vsel %vm777, %v8129, %v8133
      %v8135 = vrot.slane %v7854, 1
      %v8136 = vsel %vm777, %v8131, %v8135
      %v8162 = vunpack.c.l.b16 %v8094
      %v8163 = vunpack.c.l.b16 %v8095
      %v8164 = vunpack.c.l.b16 %v8096
      %v8165 = vunpack.c.l.b16 %v8097
      %v8166 = vunpack.c.l.b16 %v8098
      %v8167 = vunpack.c.l.b16 %v8099
      %v8168 = vunpack.c.l.b16 %v8100
      %v8169 = vunpack.c.l.b16 %v8101
      %v8170 = vunpack.c.l.b16 %v8102
      %v8171 = vunpack.c.l.b16 %v8103
      %v8172 = vunpack.c.l.b16 %v8104
      %v8173 = vunpack.c.l.b16 %v8105
      %v8174 = vunpack.c.l.b16 %v8106
      %v8175 = vunpack.c.l.b16 %v8107
      %v8176 = vunpack.c.l.b16 %v8108
      %v8177 = vunpack.c.l.b16 %v8109
      %v8178 = vunpack.c.l.b16 %v8110
      %v8179 = vunpack.c.l.b16 %v8111
      %v8180 = vunpack.c.l.b16 %v8112
      %v8181 = vunpack.c.l.b16 %v8113
      %v8182 = vpack.c.b16 %v8163, %v8162
      %v8183 = vpack.c.b16 %v8165, %v8164
      %v8184 = vpack.c.b16 %v8167, %v8166
      %v8185 = vpack.c.b16 %v8169, %v8168
      %v8186 = vpack.c.b16 %v8171, %v8170
      %v8187 = vpack.c.b16 %v8173, %v8172
      %v8188 = vpack.c.b16 %v8175, %v8174
      %v8189 = vpack.c.b16 %v8177, %v8176
      %v8190 = vpack.c.b16 %v8179, %v8178
      %v8191 = vpack.c.b16 %v8181, %v8180
      %v8202 = vsel %vm6405, %v8124, 0
      %v8205 = vsel %vm6405, %v8128, 0
      %v8208 = vsel %vm6405, %v8132, 0
      %v8211 = vsel %vm6405, %v8136, 0
      %v8214 = vsel %vm6405, %v8135, 0
      %v8217 = vsel %vm6421, %v8191, 0
      %8219 = vmatprep.subr.bf16.mxu0 0
      %8220 = vmatpush1.bf16.msra.mxu0 %v8189
      %8221 = vmatprep.subr.bf16.mxu0 0
      %8222 = vmatpush1.bf16.msra.mxu0 %v8188
      %8223 = vmatprep.subr.bf16.mxu0 0
      %8224 = vmatpush1.bf16.msra.mxu0 %v8187
      %8225 = vmatprep.subr.bf16.mxu0 0
      %8226 = vmatpush1.bf16.msra.mxu0 %v8186
      %8227 = vmatprep.subr.bf16.mxu0 0
      %8228 = vmatpush1.bf16.msra.mxu0 %v8185
      %8229 = vmatprep.subr.bf16.mxu0 0
      %8230 = vmatpush1.bf16.msra.mxu0 %v8184
      %8231 = vmatprep.subr.bf16.mxu0 0
      %8232 = vmatpush1.bf16.msra.mxu0 %v8183
      %8233 = vmatprep.subr.bf16.mxu0 0
      %8234 = vmatpush1.bf16.msra.mxu0 %v8182
      %8235 = vmatprep.subr.bf16.mxu0 0
      %8236 = vmatpush2.bf16.msra.mxu0 0
      %8237 = vmatprep.subr.bf16.mxu0 0
      %8238 = vmatpush2.bf16.msra.mxu0 0
      %8239 = vmatprep.subr.bf16.mxu0 0
      %8240 = vmatpush2.bf16.msra.mxu0 0
      %8241 = vmatprep.subr.bf16.mxu0 0
      %8242 = vmatpush2.bf16.msra.mxu0 0
      %8243 = vmatprep.subr.bf16.mxu0 0
      %8244 = vmatpush2.bf16.msra.mxu0 0
      %8245 = vmatprep.subr.bf16.mxu0 0
      %8246 = vmatpush2.bf16.msra.mxu0 0
      %8247 = vmatprep.subr.bf16.mxu0 0
      %8248 = vmatpush2.bf16.msra.mxu0 %v8217
      %8249 = vmatprep.subr.bf16.mxu0 0
      %8250 = vmatpush2.bf16.msra.mxu0 %v8190
      %8251 = vmatprep.mubr.bf16.mxu0 %v8202
      %8252 = vmatmul.mubr.bf16.gmra.mxu0 %v8121
      %v8253 = vpop.f32.mrf.mxu0
      %v8254 = vadd.f32 0.0, %v8253
      %v8255 = vpop.f32.mrf.mxu0
      %v8256 = vpop.f32.mrf.mxu0
      %v8257 = vadd.f32 0.0, %v8256
      %v8258 = vpop.f32.mrf.mxu0
      %8259 = vmatprep.mubr.bf16.mxu0 %v8205
      %8260 = vmatmul.mubr.bf16.gmra.mxu0 %v8126
      %v8261 = vpop.f32.mrf.mxu0
      %v8262 = vadd.f32 0.0, %v8261
      %v8263 = vpop.f32.mrf.mxu0
      %v8264 = vpop.f32.mrf.mxu0
      %v8265 = vadd.f32 0.0, %v8264
      %v8266 = vpop.f32.mrf.mxu0
      %8267 = vmatprep.mubr.bf16.mxu0 %v8208
      %8268 = vmatmul.mubr.bf16.gmra.mxu0 %v8130
      %v8269 = vpop.f32.mrf.mxu0
      %v8270 = vadd.f32 0.0, %v8269
      %v8271 = vpop.f32.mrf.mxu0
      %v8272 = vpop.f32.mrf.mxu0
      %v8273 = vadd.f32 0.0, %v8272
      %v8274 = vpop.f32.mrf.mxu0
      %8275 = vmatprep.mubr.bf16.mxu0 %v8211
      %8276 = vmatmul.mubr.bf16.gmra.mxu0 %v8134
      %v8277 = vpop.f32.mrf.mxu0
      %v8278 = vadd.f32 0.0, %v8277
      %v8279 = vpop.f32.mrf.mxu0
      %v8280 = vpop.f32.mrf.mxu0
      %v8281 = vadd.f32 0.0, %v8280
      %v8282 = vpop.f32.mrf.mxu0
      %8283 = vmatprep.mubr.bf16.mxu0 %v8214
      %8284 = vmatmul.mubr.bf16.gmra.mxu0 %v8133
      %v8285 = vpop.f32.mrf.mxu0
      %v8286 = vadd.f32 0.0, %v8285
      %v8287 = vpop.f32.mrf.mxu0
      %v8288 = vpop.f32.mrf.mxu0
      %v8289 = vpop.f32.mrf.mxu0
      %8290 = vdwg.mxu0
      %v8291 = vadd.f32 %v8083, %v8254
      %v8292 = vadd.f32 %v8084, %v8257
      %v8293 = vadd.f32 %v8085, %v8262
      %v8294 = vadd.f32 %v8086, %v8265
      %v8295 = vadd.f32 %v8087, %v8270
      %v8296 = vadd.f32 %v8088, %v8273
      %v8297 = vadd.f32 %v8089, %v8278
      %v8298 = vadd.f32 %v8090, %v8281
      %v8299 = vadd.f32 %v8091, %v8286
      %v8300 = vld [vmem:[%s6] sm:$0x1]
      %v8302 = vlaneseq
      %v8303 = vshrl.u32 %v8302, 7
      %v8304 = vsub.s32 0, %v8303
      %v8305 = vrot.slane %v8300, %v8304
      %v8307 = vadd.f32 %v8291, %v8305
      %v8308 = vadd.f32 %v8292, %v8305
      %v8309 = vadd.f32 %v8293, %v8305
      %v8310 = vadd.f32 %v8294, %v8305
      %v8311 = vadd.f32 %v8295, %v8305
      %v8312 = vadd.f32 %v8296, %v8305
      %v8313 = vadd.f32 %v8297, %v8305
      %v8314 = vadd.f32 %v8298, %v8305
      %v8315 = vadd.f32 %v8299, %v8305
      %vm8316 = vcmp.gt.f32.partialorder %v8307, 0.0
      %vm8317 = vcmp.gt.f32.partialorder %v8308, 0.0
      %vm8318 = vcmp.gt.f32.partialorder %v8309, 0.0
      %vm8319 = vcmp.gt.f32.partialorder %v8310, 0.0
      %vm8320 = vcmp.gt.f32.partialorder %v8311, 0.0
      %vm8321 = vcmp.gt.f32.partialorder %v8312, 0.0
      %vm8322 = vcmp.gt.f32.partialorder %v8313, 0.0
      %vm8323 = vcmp.gt.f32.partialorder %v8314, 0.0
      %vm8324 = vcmp.gt.f32.partialorder %v8315, 0.0
      %v8325 = vmin.f32 %v8307, 0.0
      %v8326 = vmin.f32 %v8308, 0.0
      %v8327 = vmin.f32 %v8309, 0.0
      %v8328 = vmin.f32 %v8310, 0.0
      %v8329 = vmin.f32 %v8311, 0.0
      %v8330 = vmin.f32 %v8312, 0.0
      %v8331 = vmin.f32 %v8313, 0.0
      %v8332 = vmin.f32 %v8314, 0.0
      %v8333 = vmin.f32 %v8315, 0.0
      %v8334 = vmul.f32 %v8325, 1.442695
      %v8335 = vpow.pop %v8334
      %v8336 = vmul.f32 %v8326, 1.442695
      %v8337 = vpow.pop %v8336
      %v8338 = vmul.f32 %v8327, 1.442695
      %v8339 = vpow.pop %v8338
      %v8340 = vmul.f32 %v8328, 1.442695
      %v8341 = vpow.pop %v8340
      %v8342 = vmul.f32 %v8329, 1.442695
      %v8343 = vpow.pop %v8342
      %v8344 = vmul.f32 %v8330, 1.442695
      %v8345 = vpow.pop %v8344
      %v8346 = vmul.f32 %v8331, 1.442695
      %v8347 = vpow.pop %v8346
      %v8348 = vmul.f32 %v8332, 1.442695
      %v8349 = vpow.pop %v8348
      %v8350 = vmul.f32 %v8333, 1.442695
      %v8351 = vpow.pop %v8350
      %v8352 = vsub.f32 %v8335, 1.0
      %v8353 = vsub.f32 %v8337, 1.0
      %v8354 = vsub.f32 %v8339, 1.0
      %v8355 = vsub.f32 %v8341, 1.0
      %v8356 = vsub.f32 %v8343, 1.0
      %v8357 = vsub.f32 %v8345, 1.0
      %v8358 = vsub.f32 %v8347, 1.0
      %v8359 = vsub.f32 %v8349, 1.0
      %v8360 = vsub.f32 %v8351, 1.0
      %v8361 = vsel %vm8316, %v8307, %v8352
      %v8362 = vsel %vm8317, %v8308, %v8353
      %v8363 = vsel %vm8318, %v8309, %v8354
      %v8364 = vsel %vm8319, %v8310, %v8355
      %v8365 = vsel %vm8320, %v8311, %v8356
      %v8366 = vsel %vm8321, %v8312, %v8357
      %v8367 = vsel %vm8322, %v8313, %v8358
      %v8368 = vsel %vm8323, %v8314, %v8359
      %v8369 = vsel %vm8324, %v8315, %v8360
      %v8370 = vpack.c.bf16 %v8362, %v8361
      %v8371 = vpack.c.bf16 %v8364, %v8363
      %v8372 = vpack.c.bf16 %v8366, %v8365
      %v8373 = vpack.c.bf16 %v8368, %v8367
      %v8374 = vpack.c.bf16 %v8369, %v8369
      %v8380 = vunpack.c.l.b16 %v8370
      %v8381 = vunpack.c.h.b16 %v8370
      %v8382 = vunpack.c.l.b16 %v8371
      %v8383 = vunpack.c.h.b16 %v8371
      %v8384 = vunpack.c.l.b16 %v8372
      %v8385 = vunpack.c.h.b16 %v8372
      %v8386 = vunpack.c.l.b16 %v8373
      %v8387 = vunpack.c.h.b16 %v8373
      %v8388 = vunpack.c.l.b16 %v8374
      %v8389 = vpack.c.b16 %v8380, %v8380
      %v8390 = vpack.c.b16 %v8381, %v8381
      %v8391 = vpack.c.b16 %v8382, %v8382
      %v8392 = vpack.c.b16 %v8383, %v8383
      %v8393 = vpack.c.b16 %v8384, %v8384
      %v8394 = vpack.c.b16 %v8385, %v8385
      %v8395 = vpack.c.b16 %v8386, %v8386
      %v8396 = vpack.c.b16 %v8387, %v8387
      %v8397 = vpack.c.b16 %v8388, %v8388
      %vm8407 = vcmask 584704
      %8408 = vst.msk [vmem:[#allocation4] sm:$0xf] %vm8407, %v8389
      %8409 = vst.msk [vmem:[#allocation4 + $0x4] sm:$0xf] %vm8407, %v8390
      %8410 = vst.msk [vmem:[#allocation4 + $0x8] sm:$0xf] %vm8407, %v8391
      %8411 = vst.msk [vmem:[#allocation4 + $0xc] sm:$0xf] %vm8407, %v8392
      %8412 = vst.msk [vmem:[#allocation4 + $0x10] sm:$0xf] %vm8407, %v8393
      %8413 = vst.msk [vmem:[#allocation4 + $0x14] sm:$0xf] %vm8407, %v8394
      %8414 = vst.msk [vmem:[#allocation4 + $0x18] sm:$0xf] %vm8407, %v8395
      %8415 = vst.msk [vmem:[#allocation4 + $0x1c] sm:$0xf] %vm8407, %v8396
      %vm8416 = vcmask 583680
      %8417 = vst.msk [vmem:[#allocation4 + $0x20] sm:$0x7] %vm8416, %v8397
      %vm8418 = vcmask 584707
      %8419 = vst.msk [vmem:[#allocation4 + $0x20] sm:$0x8] %vm8418, 0
      %v8420 = vld [vmem:[#allocation4] sm:$0xf]
      %v8421 = vld [vmem:[#allocation4 + $0x4] sm:$0xf]
      %v8422 = vld [vmem:[#allocation4 + $0x8] sm:$0xf]
      %v8423 = vld [vmem:[#allocation4 + $0xc] sm:$0xf]
      %v8424 = vld [vmem:[#allocation4 + $0x10] sm:$0xf]
      %v8425 = vld [vmem:[#allocation4 + $0x14] sm:$0x7]
      %v8426 = vld [vmem:[%s7] sm:$0xf]
      %v8427 = vld [vmem:[%s7 + $0x4] sm:$0xf]
      %v8428 = vld [vmem:[%s7 + $0x8] sm:$0xf]
      %v8429 = vld [vmem:[%s7 + $0xc] sm:$0xf]
      %v8430 = vld [vmem:[%s7 + $0x10] sm:$0xf]
      %v8431 = vld [vmem:[%s7 + $0x14] sm:$0xf]
      %v8432 = vld [vmem:[%s7 + $0x18] sm:$0xf]
      %v8433 = vld [vmem:[%s7 + $0x1c] sm:$0xf]
      %v8434 = vld [vmem:[%s7 + $0x20] sm:$0xf]
      %v8435 = vld [vmem:[#allocation4 + $0x14] sm:$0xf]
      %s8436 = scalar_lea.vmem %s7, 36
      %v8437 = vld [vmem:[%s8436] sm:$0xf]
      %v8438 = vld [vmem:[%s8436 + $0x4] sm:$0xf]
      %v8439 = vld [vmem:[%s8436 + $0x8] sm:$0xf]
      %v8440 = vld [vmem:[%s8436 + $0xc] sm:$0xf]
      %v8441 = vld [vmem:[%s8436 + $0x10] sm:$0xf]
      %v8442 = vld [vmem:[%s8436 + $0x14] sm:$0xf]
      %v8443 = vld [vmem:[%s8436 + $0x18] sm:$0xf]
      %v8444 = vld [vmem:[%s8436 + $0x1c] sm:$0xf]
      %v8445 = vld [vmem:[%s8436 + $0x20] sm:$0xf]
      %v8452 = vunpack.c.l.b16 %v8420
      %v8453 = vunpack.c.l.b16 %v8421
      %v8454 = vunpack.c.l.b16 %v8422
      %v8455 = vunpack.c.l.b16 %v8423
      %v8456 = vunpack.c.l.b16 %v8424
      %v8457 = vunpack.c.l.b16 %v8435
      %v8458 = vpack.c.b16 %v8453, %v8452
      %v8459 = vpack.c.b16 %v8455, %v8454
      %v8460 = vpack.c.b16 %v8457, %v8456
      %v8462 = vshrl.u32 %v8458, 16
      %v8464 = vshll.u32 %v8458, 16
      %v8466 = vrot.slane %v8464, 1
      %v8467 = vor.u32 %v8462, %v8466
      %v8469 = vshll.u32 %v8459, 16
      %v8471 = vrot.slane %v8469, 1
      %v8472 = vsel %vm397, %v8467, %v8471
      %v8473 = vshrl.u32 %v8459, 16
      %v8475 = vor.u32 %v8473, %v8471
      %v8477 = vshll.u32 %v8460, 16
      %v8479 = vrot.slane %v8477, 1
      %v8480 = vsel %vm397, %v8475, %v8479
      %v8481 = vshrl.u32 %v8460, 16
      %v8483 = vor.u32 %v8481, %v8479
      %v8493 = vunpack.c.l.b16 %v8437
      %v8494 = vunpack.c.l.b16 %v8438
      %v8495 = vunpack.c.l.b16 %v8439
      %v8496 = vunpack.c.l.b16 %v8440
      %v8497 = vunpack.c.l.b16 %v8441
      %v8498 = vunpack.c.l.b16 %v8442
      %v8499 = vunpack.c.l.b16 %v8443
      %v8500 = vunpack.c.l.b16 %v8444
      %v8501 = vunpack.c.l.b16 %v8445
      %v8502 = vpack.c.b16 %v8494, %v8493
      %v8503 = vpack.c.b16 %v8496, %v8495
      %v8504 = vpack.c.b16 %v8498, %v8497
      %v8505 = vpack.c.b16 %v8500, %v8499
      %v8506 = vpack.c.b16 %v8501, %v8501
      %vm8511 = vcmask 588800
      %v8513 = vsel %vm8511, %v8472, 0
      %v8516 = vsel %vm8511, %v8480, 0
      %v8519 = vsel %vm8511, %v8483, 0
      %v8522 = vsel %vm2732, %v8506, 0
      %8524 = vmatprep.subr.bf16.mxu0 0
      %8525 = vmatpush1.bf16.msra.mxu0 0
      %8526 = vmatprep.subr.bf16.mxu0 0
      %8527 = vmatpush1.bf16.msra.mxu0 0
      %8528 = vmatprep.subr.bf16.mxu0 0
      %8529 = vmatpush1.bf16.msra.mxu0 0
      %8530 = vmatprep.subr.bf16.mxu0 0
      %8531 = vmatpush1.bf16.msra.mxu0 %v8522
      %8532 = vmatprep.subr.bf16.mxu0 0
      %8533 = vmatpush1.bf16.msra.mxu0 %v8505
      %8534 = vmatprep.subr.bf16.mxu0 0
      %8535 = vmatpush1.bf16.msra.mxu0 %v8504
      %8536 = vmatprep.subr.bf16.mxu0 0
      %8537 = vmatpush1.bf16.msra.mxu0 %v8503
      %8538 = vmatprep.subr.bf16.mxu0 0
      %8539 = vmatpush1.bf16.msra.mxu0 %v8502
      %8540 = vmatprep.subr.bf16.mxu0 0
      %8541 = vmatpush2.bf16.msra.mxu0 0
      %8542 = vmatprep.subr.bf16.mxu0 0
      %8543 = vmatpush2.bf16.msra.mxu0 0
      %8544 = vmatprep.subr.bf16.mxu0 0
      %8545 = vmatpush2.bf16.msra.mxu0 0
      %8546 = vmatprep.subr.bf16.mxu0 0
      %8547 = vmatpush2.bf16.msra.mxu0 0
      %8548 = vmatprep.subr.bf16.mxu0 0
      %8549 = vmatpush2.bf16.msra.mxu0 0
      %8550 = vmatprep.subr.bf16.mxu0 0
      %8551 = vmatpush2.bf16.msra.mxu0 0
      %8552 = vmatprep.subr.bf16.mxu0 0
      %8553 = vmatpush2.bf16.msra.mxu0 0
      %8554 = vmatprep.subr.bf16.mxu0 0
      %8555 = vmatpush2.bf16.msra.mxu0 0
      %8556 = vmatprep.mubr.bf16.mxu0 0
      %8557 = vmatmul.mubr.bf16.gmra.mxu0 %v8513
      %v8558 = vpop.f32.mrf.mxu0
      %v8559 = vadd.f32 0.0, %v8558
      %v8560 = vpop.f32.mrf.mxu0
      %v8561 = vpop.f32.mrf.mxu0
      %v8562 = vadd.f32 0.0, %v8561
      %v8563 = vpop.f32.mrf.mxu0
      %8564 = vmatprep.mubr.bf16.mxu0 0
      %8565 = vmatmul.mubr.bf16.gmra.mxu0 %v8516
      %v8566 = vpop.f32.mrf.mxu0
      %v8567 = vadd.f32 0.0, %v8566
      %v8568 = vpop.f32.mrf.mxu0
      %v8569 = vpop.f32.mrf.mxu0
      %v8570 = vadd.f32 0.0, %v8569
      %v8571 = vpop.f32.mrf.mxu0
      %8572 = vmatprep.mubr.bf16.mxu0 0
      %8573 = vmatmul.mubr.bf16.gmra.mxu0 %v8519
      %v8574 = vpop.f32.mrf.mxu0
      %v8575 = vadd.f32 0.0, %v8574
      %v8576 = vpop.f32.mrf.mxu0
      %v8577 = vpop.f32.mrf.mxu0
      %v8578 = vadd.f32 0.0, %v8577
      %v8579 = vpop.f32.mrf.mxu0
      %8580 = vdwg.mxu0
      %v8582 = vunpack.c.l.b16 %v8425
      %v8583 = vpack.c.b16 %v8582, %v8456
      %v8593 = vunpack.c.l.b16 %v8426
      %v8594 = vunpack.c.l.b16 %v8427
      %v8595 = vunpack.c.l.b16 %v8428
      %v8596 = vunpack.c.l.b16 %v8429
      %v8597 = vunpack.c.l.b16 %v8430
      %v8598 = vunpack.c.l.b16 %v8431
      %v8599 = vunpack.c.l.b16 %v8432
      %v8600 = vunpack.c.l.b16 %v8433
      %v8601 = vunpack.c.l.b16 %v8434
      %v8602 = vpack.c.b16 %v8594, %v8593
      %v8603 = vpack.c.b16 %v8596, %v8595
      %v8604 = vpack.c.b16 %v8598, %v8597
      %v8605 = vpack.c.b16 %v8600, %v8599
      %v8606 = vpack.c.b16 %v8601, %v8601
      %v8611 = vsel %vm8511, %v8458, 0
      %v8613 = vsel %vm8511, %v8459, 0
      %v8616 = vsel %vm8511, %v8583, 0
      %v8619 = vsel %vm2732, %v8606, 0
      %8621 = vmatprep.subr.bf16.mxu0 0
      %8622 = vmatpush1.bf16.msra.mxu0 0
      %8623 = vmatprep.subr.bf16.mxu0 0
      %8624 = vmatpush1.bf16.msra.mxu0 0
      %8625 = vmatprep.subr.bf16.mxu0 0
      %8626 = vmatpush1.bf16.msra.mxu0 0
      %8627 = vmatprep.subr.bf16.mxu0 0
      %8628 = vmatpush1.bf16.msra.mxu0 %v8619
      %8629 = vmatprep.subr.bf16.mxu0 0
      %8630 = vmatpush1.bf16.msra.mxu0 %v8605
      %8631 = vmatprep.subr.bf16.mxu0 0
      %8632 = vmatpush1.bf16.msra.mxu0 %v8604
      %8633 = vmatprep.subr.bf16.mxu0 0
      %8634 = vmatpush1.bf16.msra.mxu0 %v8603
      %8635 = vmatprep.subr.bf16.mxu0 0
      %8636 = vmatpush1.bf16.msra.mxu0 %v8602
      %8637 = vmatprep.subr.bf16.mxu0 0
      %8638 = vmatpush2.bf16.msra.mxu0 0
      %8639 = vmatprep.subr.bf16.mxu0 0
      %8640 = vmatpush2.bf16.msra.mxu0 0
      %8641 = vmatprep.subr.bf16.mxu0 0
      %8642 = vmatpush2.bf16.msra.mxu0 0
      %8643 = vmatprep.subr.bf16.mxu0 0
      %8644 = vmatpush2.bf16.msra.mxu0 0
      %8645 = vmatprep.subr.bf16.mxu0 0
      %8646 = vmatpush2.bf16.msra.mxu0 0
      %8647 = vmatprep.subr.bf16.mxu0 0
      %8648 = vmatpush2.bf16.msra.mxu0 0
      %8649 = vmatprep.subr.bf16.mxu0 0
      %8650 = vmatpush2.bf16.msra.mxu0 0
      %8651 = vmatprep.subr.bf16.mxu0 0
      %8652 = vmatpush2.bf16.msra.mxu0 0
      %8653 = vmatprep.mubr.bf16.mxu0 0
      %8654 = vmatmul.mubr.bf16.gmra.mxu0 %v8611
      %v8655 = vpop.f32.mrf.mxu0
      %v8656 = vadd.f32 %v8559, %v8655
      %v8657 = vpop.f32.mrf.mxu0
      %v8658 = vpop.f32.mrf.mxu0
      %v8659 = vadd.f32 %v8562, %v8658
      %v8660 = vpop.f32.mrf.mxu0
      %8661 = vmatprep.mubr.bf16.mxu0 0
      %8662 = vmatmul.mubr.bf16.gmra.mxu0 %v8613
      %v8663 = vpop.f32.mrf.mxu0
      %v8664 = vadd.f32 %v8567, %v8663
      %v8665 = vpop.f32.mrf.mxu0
      %v8666 = vpop.f32.mrf.mxu0
      %v8667 = vadd.f32 %v8570, %v8666
      %v8668 = vpop.f32.mrf.mxu0
      %8669 = vmatprep.mubr.bf16.mxu0 0
      %8670 = vmatmul.mubr.bf16.gmra.mxu0 %v8616
      %v8671 = vpop.f32.mrf.mxu0
      %v8672 = vadd.f32 %v8575, %v8671
      %v8673 = vpop.f32.mrf.mxu0
      %v8674 = vpop.f32.mrf.mxu0
      %v8675 = vadd.f32 %v8578, %v8674
      %v8676 = vpop.f32.mrf.mxu0
      %8677 = vdwg.mxu0
      %v8678 = vld [vmem:[#allocation4] sm:$0xe]
      %s8679 = scalar_lea.vmem %s7, 72
      %v8680 = vld [vmem:[%s8679] sm:$0xf]
      %v8681 = vld [vmem:[%s8679 + $0x4] sm:$0xf]
      %v8682 = vld [vmem:[%s8679 + $0x8] sm:$0xf]
      %v8683 = vld [vmem:[%s8679 + $0xc] sm:$0xf]
      %v8684 = vld [vmem:[%s8679 + $0x10] sm:$0xf]
      %v8685 = vld [vmem:[%s8679 + $0x14] sm:$0xf]
      %v8686 = vld [vmem:[%s8679 + $0x18] sm:$0xf]
      %v8687 = vld [vmem:[%s8679 + $0x1c] sm:$0xf]
      %v8688 = vld [vmem:[%s8679 + $0x20] sm:$0xf]
      %v8690 = vunpack.c.l.b16 %v8678
      %v8691 = vpack.c.b16 %v8453, %v8690
      %v8692 = vrot.slane %v8691, 1
      %v8693 = vrot.slane %v8459, 1
      %v8694 = vsel %vm777, %v8692, %v8693
      %v8695 = vrot.slane %v8460, 1
      %v8696 = vsel %vm777, %v8693, %v8695
      %v8706 = vunpack.c.l.b16 %v8680
      %v8707 = vunpack.c.l.b16 %v8681
      %v8708 = vunpack.c.l.b16 %v8682
      %v8709 = vunpack.c.l.b16 %v8683
      %v8710 = vunpack.c.l.b16 %v8684
      %v8711 = vunpack.c.l.b16 %v8685
      %v8712 = vunpack.c.l.b16 %v8686
      %v8713 = vunpack.c.l.b16 %v8687
      %v8714 = vunpack.c.l.b16 %v8688
      %v8715 = vpack.c.b16 %v8707, %v8706
      %v8716 = vpack.c.b16 %v8709, %v8708
      %v8717 = vpack.c.b16 %v8711, %v8710
      %v8718 = vpack.c.b16 %v8713, %v8712
      %v8719 = vpack.c.b16 %v8714, %v8714
      %v8725 = vsel %vm8511, %v8694, 0
      %v8728 = vsel %vm8511, %v8696, 0
      %v8731 = vsel %vm8511, %v8695, 0
      %v8734 = vsel %vm2732, %v8719, 0
      %8736 = vmatprep.subr.bf16.mxu0 0
      %8737 = vmatpush1.bf16.msra.mxu0 0
      %8738 = vmatprep.subr.bf16.mxu0 0
      %8739 = vmatpush1.bf16.msra.mxu0 0
      %8740 = vmatprep.subr.bf16.mxu0 0
      %8741 = vmatpush1.bf16.msra.mxu0 0
      %8742 = vmatprep.subr.bf16.mxu0 0
      %8743 = vmatpush1.bf16.msra.mxu0 %v8734
      %8744 = vmatprep.subr.bf16.mxu0 0
      %8745 = vmatpush1.bf16.msra.mxu0 %v8718
      %8746 = vmatprep.subr.bf16.mxu0 0
      %8747 = vmatpush1.bf16.msra.mxu0 %v8717
      %8748 = vmatprep.subr.bf16.mxu0 0
      %8749 = vmatpush1.bf16.msra.mxu0 %v8716
      %8750 = vmatprep.subr.bf16.mxu0 0
      %8751 = vmatpush1.bf16.msra.mxu0 %v8715
      %8752 = vmatprep.subr.bf16.mxu0 0
      %8753 = vmatpush2.bf16.msra.mxu0 0
      %8754 = vmatprep.subr.bf16.mxu0 0
      %8755 = vmatpush2.bf16.msra.mxu0 0
      %8756 = vmatprep.subr.bf16.mxu0 0
      %8757 = vmatpush2.bf16.msra.mxu0 0
      %8758 = vmatprep.subr.bf16.mxu0 0
      %8759 = vmatpush2.bf16.msra.mxu0 0
      %8760 = vmatprep.subr.bf16.mxu0 0
      %8761 = vmatpush2.bf16.msra.mxu0 0
      %8762 = vmatprep.subr.bf16.mxu0 0
      %8763 = vmatpush2.bf16.msra.mxu0 0
      %8764 = vmatprep.subr.bf16.mxu0 0
      %8765 = vmatpush2.bf16.msra.mxu0 0
      %8766 = vmatprep.subr.bf16.mxu0 0
      %8767 = vmatpush2.bf16.msra.mxu0 0
      %8768 = vmatprep.mubr.bf16.mxu0 0
      %8769 = vmatmul.mubr.bf16.gmra.mxu0 %v8725
      %v8770 = vpop.f32.mrf.mxu0
      %v8771 = vadd.f32 0.0, %v8770
      %v8772 = vpop.f32.mrf.mxu0
      %v8773 = vpop.f32.mrf.mxu0
      %v8774 = vadd.f32 0.0, %v8773
      %v8775 = vpop.f32.mrf.mxu0
      %8776 = vmatprep.mubr.bf16.mxu0 0
      %8777 = vmatmul.mubr.bf16.gmra.mxu0 %v8728
      %v8778 = vpop.f32.mrf.mxu0
      %v8779 = vadd.f32 0.0, %v8778
      %v8780 = vpop.f32.mrf.mxu0
      %v8781 = vpop.f32.mrf.mxu0
      %v8782 = vadd.f32 0.0, %v8781
      %v8783 = vpop.f32.mrf.mxu0
      %8784 = vmatprep.mubr.bf16.mxu0 0
      %8785 = vmatmul.mubr.bf16.gmra.mxu0 %v8731
      %v8786 = vpop.f32.mrf.mxu0
      %v8787 = vadd.f32 0.0, %v8786
      %v8788 = vpop.f32.mrf.mxu0
      %v8789 = vpop.f32.mrf.mxu0
      %v8790 = vadd.f32 0.0, %v8789
      %v8791 = vpop.f32.mrf.mxu0
      %8792 = vdwg.mxu0
      %v8793 = vadd.f32 %v8656, %v8771
      %v8794 = vadd.f32 %v8659, %v8774
      %v8795 = vadd.f32 %v8664, %v8779
      %v8796 = vadd.f32 %v8667, %v8782
      %v8797 = vadd.f32 %v8672, %v8787
      %v8798 = vadd.f32 %v8675, %v8790
      %v8799 = vld [vmem:[#allocation4 + $0x4] sm:$0xc]
      %v8800 = vld [vmem:[#allocation4 + $0x8] sm:$0xf]
      %v8801 = vld [vmem:[#allocation4 + $0xc] sm:$0xf]
      %v8802 = vld [vmem:[#allocation4 + $0x10] sm:$0xf]
      %v8803 = vld [vmem:[#allocation4 + $0x14] sm:$0xf]
      %v8804 = vld [vmem:[#allocation4 + $0x18] sm:$0xf]
      %v8805 = vld [vmem:[#allocation4 + $0x1c] sm:$0x1]
      %s8806 = scalar_lea.vmem %s7, 108
      %v8807 = vld [vmem:[%s8806] sm:$0xf]
      %v8808 = vld [vmem:[%s8806 + $0x4] sm:$0xf]
      %v8809 = vld [vmem:[%s8806 + $0x8] sm:$0xf]
      %v8810 = vld [vmem:[%s8806 + $0xc] sm:$0xf]
      %v8811 = vld [vmem:[%s8806 + $0x10] sm:$0xf]
      %v8812 = vld [vmem:[%s8806 + $0x14] sm:$0xf]
      %v8813 = vld [vmem:[%s8806 + $0x18] sm:$0xf]
      %v8814 = vld [vmem:[%s8806 + $0x1c] sm:$0xf]
      %v8815 = vld [vmem:[%s8806 + $0x20] sm:$0xf]
      %v8823 = vunpack.c.l.b16 %v8799
      %v8824 = vunpack.c.l.b16 %v8800
      %v8825 = vunpack.c.l.b16 %v8801
      %v8826 = vunpack.c.l.b16 %v8802
      %v8827 = vunpack.c.l.b16 %v8803
      %v8828 = vunpack.c.l.b16 %v8804
      %v8829 = vunpack.c.l.b16 %v8805
      %v8830 = vpack.c.b16 %v8824, %v8823
      %v8831 = vpack.c.b16 %v8826, %v8825
      %v8832 = vpack.c.b16 %v8828, %v8827
      %v8833 = vpack.c.b16 %v8829, %v8829
      %v8834 = vrot.slane %v8830, 2
      %v8835 = vrot.slane %v8831, 2
      %v8836 = vsel %vm1039, %v8834, %v8835
      %v8837 = vrot.slane %v8832, 2
      %v8838 = vsel %vm1039, %v8835, %v8837
      %v8839 = vrot.slane %v8833, 2
      %v8840 = vsel %vm1039, %v8837, %v8839
      %v8850 = vunpack.c.l.b16 %v8807
      %v8851 = vunpack.c.l.b16 %v8808
      %v8852 = vunpack.c.l.b16 %v8809
      %v8853 = vunpack.c.l.b16 %v8810
      %v8854 = vunpack.c.l.b16 %v8811
      %v8855 = vunpack.c.l.b16 %v8812
      %v8856 = vunpack.c.l.b16 %v8813
      %v8857 = vunpack.c.l.b16 %v8814
      %v8858 = vunpack.c.l.b16 %v8815
      %v8859 = vpack.c.b16 %v8851, %v8850
      %v8860 = vpack.c.b16 %v8853, %v8852
      %v8861 = vpack.c.b16 %v8855, %v8854
      %v8862 = vpack.c.b16 %v8857, %v8856
      %v8863 = vpack.c.b16 %v8858, %v8858
      %v8869 = vsel %vm8511, %v8836, 0
      %v8872 = vsel %vm8511, %v8838, 0
      %v8875 = vsel %vm8511, %v8840, 0
      %v8878 = vsel %vm2732, %v8863, 0
      %8880 = vmatprep.subr.bf16.mxu0 0
      %8881 = vmatpush1.bf16.msra.mxu0 0
      %8882 = vmatprep.subr.bf16.mxu0 0
      %8883 = vmatpush1.bf16.msra.mxu0 0
      %8884 = vmatprep.subr.bf16.mxu0 0
      %8885 = vmatpush1.bf16.msra.mxu0 0
      %8886 = vmatprep.subr.bf16.mxu0 0
      %8887 = vmatpush1.bf16.msra.mxu0 %v8878
      %8888 = vmatprep.subr.bf16.mxu0 0
      %8889 = vmatpush1.bf16.msra.mxu0 %v8862
      %8890 = vmatprep.subr.bf16.mxu0 0
      %8891 = vmatpush1.bf16.msra.mxu0 %v8861
      %8892 = vmatprep.subr.bf16.mxu0 0
      %8893 = vmatpush1.bf16.msra.mxu0 %v8860
      %8894 = vmatprep.subr.bf16.mxu0 0
      %8895 = vmatpush1.bf16.msra.mxu0 %v8859
      %8896 = vmatprep.subr.bf16.mxu0 0
      %8897 = vmatpush2.bf16.msra.mxu0 0
      %8898 = vmatprep.subr.bf16.mxu0 0
      %8899 = vmatpush2.bf16.msra.mxu0 0
      %8900 = vmatprep.subr.bf16.mxu0 0
      %8901 = vmatpush2.bf16.msra.mxu0 0
      %8902 = vmatprep.subr.bf16.mxu0 0
      %8903 = vmatpush2.bf16.msra.mxu0 0
      %8904 = vmatprep.subr.bf16.mxu0 0
      %8905 = vmatpush2.bf16.msra.mxu0 0
      %8906 = vmatprep.subr.bf16.mxu0 0
      %8907 = vmatpush2.bf16.msra.mxu0 0
      %8908 = vmatprep.subr.bf16.mxu0 0
      %8909 = vmatpush2.bf16.msra.mxu0 0
      %8910 = vmatprep.subr.bf16.mxu0 0
      %8911 = vmatpush2.bf16.msra.mxu0 0
      %8912 = vmatprep.mubr.bf16.mxu0 0
      %8913 = vmatmul.mubr.bf16.gmra.mxu0 %v8869
      %v8914 = vpop.f32.mrf.mxu0
      %v8915 = vadd.f32 0.0, %v8914
      %v8916 = vpop.f32.mrf.mxu0
      %v8917 = vpop.f32.mrf.mxu0
      %v8918 = vadd.f32 0.0, %v8917
      %v8919 = vpop.f32.mrf.mxu0
      %8920 = vmatprep.mubr.bf16.mxu0 0
      %8921 = vmatmul.mubr.bf16.gmra.mxu0 %v8872
      %v8922 = vpop.f32.mrf.mxu0
      %v8923 = vadd.f32 0.0, %v8922
      %v8924 = vpop.f32.mrf.mxu0
      %v8925 = vpop.f32.mrf.mxu0
      %v8926 = vadd.f32 0.0, %v8925
      %v8927 = vpop.f32.mrf.mxu0
      %8928 = vmatprep.mubr.bf16.mxu0 0
      %8929 = vmatmul.mubr.bf16.gmra.mxu0 %v8875
      %v8930 = vpop.f32.mrf.mxu0
      %v8931 = vadd.f32 0.0, %v8930
      %v8932 = vpop.f32.mrf.mxu0
      %v8933 = vpop.f32.mrf.mxu0
      %v8934 = vadd.f32 0.0, %v8933
      %v8935 = vpop.f32.mrf.mxu0
      %8936 = vdwg.mxu0
      %v8937 = vadd.f32 %v8793, %v8915
      %v8938 = vadd.f32 %v8794, %v8918
      %v8939 = vadd.f32 %v8795, %v8923
      %v8940 = vadd.f32 %v8796, %v8926
      %v8941 = vadd.f32 %v8797, %v8931
      %v8942 = vadd.f32 %v8798, %v8934
      %v8943 = vld [vmem:[#allocation4 + $0x1c] sm:$0x3]
      %s8944 = scalar_lea.vmem %s7, 144
      %v8945 = vld [vmem:[%s8944] sm:$0xf]
      %v8946 = vld [vmem:[%s8944 + $0x4] sm:$0xf]
      %v8947 = vld [vmem:[%s8944 + $0x8] sm:$0xf]
      %v8948 = vld [vmem:[%s8944 + $0xc] sm:$0xf]
      %v8949 = vld [vmem:[%s8944 + $0x10] sm:$0xf]
      %v8950 = vld [vmem:[%s8944 + $0x14] sm:$0xf]
      %v8951 = vld [vmem:[%s8944 + $0x18] sm:$0xf]
      %v8952 = vld [vmem:[%s8944 + $0x1c] sm:$0xf]
      %v8953 = vld [vmem:[%s8944 + $0x20] sm:$0xf]
      %v8955 = vunpack.c.l.b16 %v8943
      %v8956 = vpack.c.b16 %v8955, %v8955
      %v8958 = vshrl.u32 %v8830, 16
      %v8960 = vrot.slane %v8958, 2
      %v8961 = vshll.u32 %v8830, 16
      %v8963 = vrot.slane %v8961, 3
      %v8964 = vor.u32 %v8960, %v8963
      %v8966 = vshrl.u32 %v8831, 16
      %v8968 = vrot.slane %v8966, 2
      %v8969 = vshll.u32 %v8831, 16
      %v8971 = vrot.slane %v8969, 3
      %v8972 = vor.u32 %v8968, %v8971
      %v8973 = vsel %vm1249, %v8964, %v8972
      %v8975 = vshrl.u32 %v8832, 16
      %v8977 = vrot.slane %v8975, 2
      %v8978 = vshll.u32 %v8832, 16
      %v8980 = vrot.slane %v8978, 3
      %v8981 = vor.u32 %v8977, %v8980
      %v8982 = vsel %vm1249, %v8972, %v8981
      %v8984 = vshrl.u32 %v8956, 16
      %v8986 = vrot.slane %v8984, 2
      %v8987 = vshll.u32 %v8956, 16
      %v8989 = vrot.slane %v8987, 3
      %v8990 = vor.u32 %v8986, %v8989
      %v8991 = vsel %vm1249, %v8981, %v8990
      %v9001 = vunpack.c.l.b16 %v8945
      %v9002 = vunpack.c.l.b16 %v8946
      %v9003 = vunpack.c.l.b16 %v8947
      %v9004 = vunpack.c.l.b16 %v8948
      %v9005 = vunpack.c.l.b16 %v8949
      %v9006 = vunpack.c.l.b16 %v8950
      %v9007 = vunpack.c.l.b16 %v8951
      %v9008 = vunpack.c.l.b16 %v8952
      %v9009 = vunpack.c.l.b16 %v8953
      %v9010 = vpack.c.b16 %v9002, %v9001
      %v9011 = vpack.c.b16 %v9004, %v9003
      %v9012 = vpack.c.b16 %v9006, %v9005
      %v9013 = vpack.c.b16 %v9008, %v9007
      %v9014 = vpack.c.b16 %v9009, %v9009
      %v9020 = vsel %vm8511, %v8973, 0
      %v9023 = vsel %vm8511, %v8982, 0
      %v9026 = vsel %vm8511, %v8991, 0
      %v9029 = vsel %vm2732, %v9014, 0
      %9031 = vmatprep.subr.bf16.mxu0 0
      %9032 = vmatpush1.bf16.msra.mxu0 0
      %9033 = vmatprep.subr.bf16.mxu0 0
      %9034 = vmatpush1.bf16.msra.mxu0 0
      %9035 = vmatprep.subr.bf16.mxu0 0
      %9036 = vmatpush1.bf16.msra.mxu0 0
      %9037 = vmatprep.subr.bf16.mxu0 0
      %9038 = vmatpush1.bf16.msra.mxu0 %v9029
      %9039 = vmatprep.subr.bf16.mxu0 0
      %9040 = vmatpush1.bf16.msra.mxu0 %v9013
      %9041 = vmatprep.subr.bf16.mxu0 0
      %9042 = vmatpush1.bf16.msra.mxu0 %v9012
      %9043 = vmatprep.subr.bf16.mxu0 0
      %9044 = vmatpush1.bf16.msra.mxu0 %v9011
      %9045 = vmatprep.subr.bf16.mxu0 0
      %9046 = vmatpush1.bf16.msra.mxu0 %v9010
      %9047 = vmatprep.subr.bf16.mxu0 0
      %9048 = vmatpush2.bf16.msra.mxu0 0
      %9049 = vmatprep.subr.bf16.mxu0 0
      %9050 = vmatpush2.bf16.msra.mxu0 0
      %9051 = vmatprep.subr.bf16.mxu0 0
      %9052 = vmatpush2.bf16.msra.mxu0 0
      %9053 = vmatprep.subr.bf16.mxu0 0
      %9054 = vmatpush2.bf16.msra.mxu0 0
      %9055 = vmatprep.subr.bf16.mxu0 0
      %9056 = vmatpush2.bf16.msra.mxu0 0
      %9057 = vmatprep.subr.bf16.mxu0 0
      %9058 = vmatpush2.bf16.msra.mxu0 0
      %9059 = vmatprep.subr.bf16.mxu0 0
      %9060 = vmatpush2.bf16.msra.mxu0 0
      %9061 = vmatprep.subr.bf16.mxu0 0
      %9062 = vmatpush2.bf16.msra.mxu0 0
      %9063 = vmatprep.mubr.bf16.mxu0 0
      %9064 = vmatmul.mubr.bf16.gmra.mxu0 %v9020
      %v9065 = vpop.f32.mrf.mxu0
      %v9066 = vadd.f32 0.0, %v9065
      %v9067 = vpop.f32.mrf.mxu0
      %v9068 = vpop.f32.mrf.mxu0
      %v9069 = vadd.f32 0.0, %v9068
      %v9070 = vpop.f32.mrf.mxu0
      %9071 = vmatprep.mubr.bf16.mxu0 0
      %9072 = vmatmul.mubr.bf16.gmra.mxu0 %v9023
      %v9073 = vpop.f32.mrf.mxu0
      %v9074 = vadd.f32 0.0, %v9073
      %v9075 = vpop.f32.mrf.mxu0
      %v9076 = vpop.f32.mrf.mxu0
      %v9077 = vadd.f32 0.0, %v9076
      %v9078 = vpop.f32.mrf.mxu0
      %9079 = vmatprep.mubr.bf16.mxu0 0
      %9080 = vmatmul.mubr.bf16.gmra.mxu0 %v9026
      %v9081 = vpop.f32.mrf.mxu0
      %v9082 = vadd.f32 0.0, %v9081
      %v9083 = vpop.f32.mrf.mxu0
      %v9084 = vpop.f32.mrf.mxu0
      %v9085 = vadd.f32 0.0, %v9084
      %v9086 = vpop.f32.mrf.mxu0
      %9087 = vdwg.mxu0
      %v9088 = vadd.f32 %v8937, %v9066
      %v9089 = vadd.f32 %v8938, %v9069
      %v9090 = vadd.f32 %v8939, %v9074
      %v9091 = vadd.f32 %v8940, %v9077
      %v9092 = vadd.f32 %v8941, %v9082
      %v9093 = vadd.f32 %v8942, %v9085
      %v9094 = vld [vmem:[#allocation4 + $0x4] sm:$0x8]
      %s9095 = scalar_lea.vmem %s7, 180
      %v9096 = vld [vmem:[%s9095] sm:$0xf]
      %v9097 = vld [vmem:[%s9095 + $0x4] sm:$0xf]
      %v9098 = vld [vmem:[%s9095 + $0x8] sm:$0xf]
      %v9099 = vld [vmem:[%s9095 + $0xc] sm:$0xf]
      %v9100 = vld [vmem:[%s9095 + $0x10] sm:$0xf]
      %v9101 = vld [vmem:[%s9095 + $0x14] sm:$0xf]
      %v9102 = vld [vmem:[%s9095 + $0x18] sm:$0xf]
      %v9103 = vld [vmem:[%s9095 + $0x1c] sm:$0xf]
      %v9104 = vld [vmem:[%s9095 + $0x20] sm:$0xf]
      %v9106 = vunpack.c.l.b16 %v9094
      %v9107 = vpack.c.b16 %v8824, %v9106
      %v9108 = vrot.slane %v9107, 3
      %v9109 = vrot.slane %v8831, 3
      %v9110 = vsel %vm1515, %v9108, %v9109
      %v9111 = vrot.slane %v8832, 3
      %v9112 = vsel %vm1515, %v9109, %v9111
      %v9113 = vrot.slane %v8956, 3
      %v9114 = vsel %vm1515, %v9111, %v9113
      %v9124 = vunpack.c.l.b16 %v9096
      %v9125 = vunpack.c.l.b16 %v9097
      %v9126 = vunpack.c.l.b16 %v9098
      %v9127 = vunpack.c.l.b16 %v9099
      %v9128 = vunpack.c.l.b16 %v9100
      %v9129 = vunpack.c.l.b16 %v9101
      %v9130 = vunpack.c.l.b16 %v9102
      %v9131 = vunpack.c.l.b16 %v9103
      %v9132 = vunpack.c.l.b16 %v9104
      %v9133 = vpack.c.b16 %v9125, %v9124
      %v9134 = vpack.c.b16 %v9127, %v9126
      %v9135 = vpack.c.b16 %v9129, %v9128
      %v9136 = vpack.c.b16 %v9131, %v9130
      %v9137 = vpack.c.b16 %v9132, %v9132
      %v9143 = vsel %vm8511, %v9110, 0
      %v9146 = vsel %vm8511, %v9112, 0
      %v9149 = vsel %vm8511, %v9114, 0
      %v9152 = vsel %vm2732, %v9137, 0
      %9154 = vmatprep.subr.bf16.mxu0 0
      %9155 = vmatpush1.bf16.msra.mxu0 0
      %9156 = vmatprep.subr.bf16.mxu0 0
      %9157 = vmatpush1.bf16.msra.mxu0 0
      %9158 = vmatprep.subr.bf16.mxu0 0
      %9159 = vmatpush1.bf16.msra.mxu0 0
      %9160 = vmatprep.subr.bf16.mxu0 0
      %9161 = vmatpush1.bf16.msra.mxu0 %v9152
      %9162 = vmatprep.subr.bf16.mxu0 0
      %9163 = vmatpush1.bf16.msra.mxu0 %v9136
      %9164 = vmatprep.subr.bf16.mxu0 0
      %9165 = vmatpush1.bf16.msra.mxu0 %v9135
      %9166 = vmatprep.subr.bf16.mxu0 0
      %9167 = vmatpush1.bf16.msra.mxu0 %v9134
      %9168 = vmatprep.subr.bf16.mxu0 0
      %9169 = vmatpush1.bf16.msra.mxu0 %v9133
      %9170 = vmatprep.subr.bf16.mxu0 0
      %9171 = vmatpush2.bf16.msra.mxu0 0
      %9172 = vmatprep.subr.bf16.mxu0 0
      %9173 = vmatpush2.bf16.msra.mxu0 0
      %9174 = vmatprep.subr.bf16.mxu0 0
      %9175 = vmatpush2.bf16.msra.mxu0 0
      %9176 = vmatprep.subr.bf16.mxu0 0
      %9177 = vmatpush2.bf16.msra.mxu0 0
      %9178 = vmatprep.subr.bf16.mxu0 0
      %9179 = vmatpush2.bf16.msra.mxu0 0
      %9180 = vmatprep.subr.bf16.mxu0 0
      %9181 = vmatpush2.bf16.msra.mxu0 0
      %9182 = vmatprep.subr.bf16.mxu0 0
      %9183 = vmatpush2.bf16.msra.mxu0 0
      %9184 = vmatprep.subr.bf16.mxu0 0
      %9185 = vmatpush2.bf16.msra.mxu0 0
      %9186 = vmatprep.mubr.bf16.mxu0 0
      %9187 = vmatmul.mubr.bf16.gmra.mxu0 %v9143
      %v9188 = vpop.f32.mrf.mxu0
      %v9189 = vadd.f32 0.0, %v9188
      %v9190 = vpop.f32.mrf.mxu0
      %v9191 = vpop.f32.mrf.mxu0
      %v9192 = vadd.f32 0.0, %v9191
      %v9193 = vpop.f32.mrf.mxu0
      %9194 = vmatprep.mubr.bf16.mxu0 0
      %9195 = vmatmul.mubr.bf16.gmra.mxu0 %v9146
      %v9196 = vpop.f32.mrf.mxu0
      %v9197 = vadd.f32 0.0, %v9196
      %v9198 = vpop.f32.mrf.mxu0
      %v9199 = vpop.f32.mrf.mxu0
      %v9200 = vadd.f32 0.0, %v9199
      %v9201 = vpop.f32.mrf.mxu0
      %9202 = vmatprep.mubr.bf16.mxu0 0
      %9203 = vmatmul.mubr.bf16.gmra.mxu0 %v9149
      %v9204 = vpop.f32.mrf.mxu0
      %v9205 = vadd.f32 0.0, %v9204
      %v9206 = vpop.f32.mrf.mxu0
      %v9207 = vpop.f32.mrf.mxu0
      %v9208 = vadd.f32 0.0, %v9207
      %v9209 = vpop.f32.mrf.mxu0
      %9210 = vdwg.mxu0
      %v9211 = vadd.f32 %v9088, %v9189
      %v9212 = vadd.f32 %v9089, %v9192
      %v9213 = vadd.f32 %v9090, %v9197
      %v9214 = vadd.f32 %v9091, %v9200
      %v9215 = vadd.f32 %v9092, %v9205
      %v9216 = vadd.f32 %v9093, %v9208
      %v9217 = vld [vmem:[#allocation4 + $0xc] sm:$0xf]
      %v9218 = vld [vmem:[#allocation4 + $0x10] sm:$0xf]
      %v9219 = vld [vmem:[#allocation4 + $0x14] sm:$0xf]
      %v9220 = vld [vmem:[#allocation4 + $0x18] sm:$0xf]
      %v9221 = vld [vmem:[#allocation4 + $0x1c] sm:$0xf]
      %v9222 = vld [vmem:[#allocation4 + $0x20] sm:$0x7]
      %s9223 = scalar_lea.vmem %s7, 216
      %v9224 = vld [vmem:[%s9223] sm:$0xf]
      %v9225 = vld [vmem:[%s9223 + $0x4] sm:$0xf]
      %v9226 = vld [vmem:[%s9223 + $0x8] sm:$0xf]
      %v9227 = vld [vmem:[%s9223 + $0xc] sm:$0xf]
      %v9228 = vld [vmem:[%s9223 + $0x10] sm:$0xf]
      %v9229 = vld [vmem:[%s9223 + $0x14] sm:$0xf]
      %v9230 = vld [vmem:[%s9223 + $0x18] sm:$0xf]
      %v9231 = vld [vmem:[%s9223 + $0x1c] sm:$0xf]
      %v9232 = vld [vmem:[%s9223 + $0x20] sm:$0xf]
      %v9239 = vunpack.c.l.b16 %v9217
      %v9240 = vunpack.c.l.b16 %v9218
      %v9241 = vunpack.c.l.b16 %v9219
      %v9242 = vunpack.c.l.b16 %v9220
      %v9243 = vunpack.c.l.b16 %v9221
      %v9244 = vunpack.c.l.b16 %v9222
      %v9245 = vpack.c.b16 %v9240, %v9239
      %v9246 = vpack.c.b16 %v9242, %v9241
      %v9247 = vpack.c.b16 %v9244, %v9243
      %v9257 = vunpack.c.l.b16 %v9224
      %v9258 = vunpack.c.l.b16 %v9225
      %v9259 = vunpack.c.l.b16 %v9226
      %v9260 = vunpack.c.l.b16 %v9227
      %v9261 = vunpack.c.l.b16 %v9228
      %v9262 = vunpack.c.l.b16 %v9229
      %v9263 = vunpack.c.l.b16 %v9230
      %v9264 = vunpack.c.l.b16 %v9231
      %v9265 = vunpack.c.l.b16 %v9232
      %v9266 = vpack.c.b16 %v9258, %v9257
      %v9267 = vpack.c.b16 %v9260, %v9259
      %v9268 = vpack.c.b16 %v9262, %v9261
      %v9269 = vpack.c.b16 %v9264, %v9263
      %v9270 = vpack.c.b16 %v9265, %v9265
      %v9276 = vsel %vm8511, %v9245, 0
      %v9279 = vsel %vm8511, %v9246, 0
      %v9282 = vsel %vm8511, %v9247, 0
      %v9285 = vsel %vm2732, %v9270, 0
      %9287 = vmatprep.subr.bf16.mxu0 0
      %9288 = vmatpush1.bf16.msra.mxu0 0
      %9289 = vmatprep.subr.bf16.mxu0 0
      %9290 = vmatpush1.bf16.msra.mxu0 0
      %9291 = vmatprep.subr.bf16.mxu0 0
      %9292 = vmatpush1.bf16.msra.mxu0 0
      %9293 = vmatprep.subr.bf16.mxu0 0
      %9294 = vmatpush1.bf16.msra.mxu0 %v9285
      %9295 = vmatprep.subr.bf16.mxu0 0
      %9296 = vmatpush1.bf16.msra.mxu0 %v9269
      %9297 = vmatprep.subr.bf16.mxu0 0
      %9298 = vmatpush1.bf16.msra.mxu0 %v9268
      %9299 = vmatprep.subr.bf16.mxu0 0
      %9300 = vmatpush1.bf16.msra.mxu0 %v9267
      %9301 = vmatprep.subr.bf16.mxu0 0
      %9302 = vmatpush1.bf16.msra.mxu0 %v9266
      %9303 = vmatprep.subr.bf16.mxu0 0
      %9304 = vmatpush2.bf16.msra.mxu0 0
      %9305 = vmatprep.subr.bf16.mxu0 0
      %9306 = vmatpush2.bf16.msra.mxu0 0
      %9307 = vmatprep.subr.bf16.mxu0 0
      %9308 = vmatpush2.bf16.msra.mxu0 0
      %9309 = vmatprep.subr.bf16.mxu0 0
      %9310 = vmatpush2.bf16.msra.mxu0 0
      %9311 = vmatprep.subr.bf16.mxu0 0
      %9312 = vmatpush2.bf16.msra.mxu0 0
      %9313 = vmatprep.subr.bf16.mxu0 0
      %9314 = vmatpush2.bf16.msra.mxu0 0
      %9315 = vmatprep.subr.bf16.mxu0 0
      %9316 = vmatpush2.bf16.msra.mxu0 0
      %9317 = vmatprep.subr.bf16.mxu0 0
      %9318 = vmatpush2.bf16.msra.mxu0 0
      %9319 = vmatprep.mubr.bf16.mxu0 0
      %9320 = vmatmul.mubr.bf16.gmra.mxu0 %v9276
      %v9321 = vpop.f32.mrf.mxu0
      %v9322 = vadd.f32 0.0, %v9321
      %v9323 = vpop.f32.mrf.mxu0
      %v9324 = vpop.f32.mrf.mxu0
      %v9325 = vadd.f32 0.0, %v9324
      %v9326 = vpop.f32.mrf.mxu0
      %9327 = vmatprep.mubr.bf16.mxu0 0
      %9328 = vmatmul.mubr.bf16.gmra.mxu0 %v9279
      %v9329 = vpop.f32.mrf.mxu0
      %v9330 = vadd.f32 0.0, %v9329
      %v9331 = vpop.f32.mrf.mxu0
      %v9332 = vpop.f32.mrf.mxu0
      %v9333 = vadd.f32 0.0, %v9332
      %v9334 = vpop.f32.mrf.mxu0
      %9335 = vmatprep.mubr.bf16.mxu0 0
      %9336 = vmatmul.mubr.bf16.gmra.mxu0 %v9282
      %v9337 = vpop.f32.mrf.mxu0
      %v9338 = vadd.f32 0.0, %v9337
      %v9339 = vpop.f32.mrf.mxu0
      %v9340 = vpop.f32.mrf.mxu0
      %v9341 = vadd.f32 0.0, %v9340
      %v9342 = vpop.f32.mrf.mxu0
      %9343 = vdwg.mxu0
      %v9344 = vadd.f32 %v9211, %v9322
      %v9345 = vadd.f32 %v9212, %v9325
      %v9346 = vadd.f32 %v9213, %v9330
      %v9347 = vadd.f32 %v9214, %v9333
      %v9348 = vadd.f32 %v9215, %v9338
      %v9349 = vadd.f32 %v9216, %v9341
      %v9350 = vld [vmem:[#allocation4 + $0x20] sm:$0xf]
      %s9351 = scalar_lea.vmem %s7, 252
      %v9352 = vld [vmem:[%s9351] sm:$0xf]
      %v9353 = vld [vmem:[%s9351 + $0x4] sm:$0xf]
      %v9354 = vld [vmem:[%s9351 + $0x8] sm:$0xf]
      %v9355 = vld [vmem:[%s9351 + $0xc] sm:$0xf]
      %v9356 = vld [vmem:[%s9351 + $0x10] sm:$0xf]
      %v9357 = vld [vmem:[%s9351 + $0x14] sm:$0xf]
      %v9358 = vld [vmem:[%s9351 + $0x18] sm:$0xf]
      %v9359 = vld [vmem:[%s9351 + $0x1c] sm:$0xf]
      %v9360 = vld [vmem:[%s9351 + $0x20] sm:$0xf]
      %v9362 = vunpack.c.l.b16 %v9350
      %v9363 = vpack.c.b16 %v9362, %v9243
      %v9364 = vshrl.u32 %v9245, 16
      %v9366 = vshll.u32 %v9245, 16
      %v9368 = vrot.slane %v9366, 1
      %v9369 = vor.u32 %v9364, %v9368
      %v9370 = vshll.u32 %v9246, 16
      %v9372 = vrot.slane %v9370, 1
      %v9373 = vsel %vm397, %v9369, %v9372
      %v9374 = vshrl.u32 %v9246, 16
      %v9376 = vor.u32 %v9374, %v9372
      %v9378 = vshll.u32 %v9363, 16
      %v9380 = vrot.slane %v9378, 1
      %v9381 = vsel %vm397, %v9376, %v9380
      %v9382 = vshrl.u32 %v9363, 16
      %v9384 = vor.u32 %v9382, %v9380
      %v9394 = vunpack.c.l.b16 %v9352
      %v9395 = vunpack.c.l.b16 %v9353
      %v9396 = vunpack.c.l.b16 %v9354
      %v9397 = vunpack.c.l.b16 %v9355
      %v9398 = vunpack.c.l.b16 %v9356
      %v9399 = vunpack.c.l.b16 %v9357
      %v9400 = vunpack.c.l.b16 %v9358
      %v9401 = vunpack.c.l.b16 %v9359
      %v9402 = vunpack.c.l.b16 %v9360
      %v9403 = vpack.c.b16 %v9395, %v9394
      %v9404 = vpack.c.b16 %v9397, %v9396
      %v9405 = vpack.c.b16 %v9399, %v9398
      %v9406 = vpack.c.b16 %v9401, %v9400
      %v9407 = vpack.c.b16 %v9402, %v9402
      %v9413 = vsel %vm8511, %v9373, 0
      %v9416 = vsel %vm8511, %v9381, 0
      %v9419 = vsel %vm8511, %v9384, 0
      %v9422 = vsel %vm2732, %v9407, 0
      %9424 = vmatprep.subr.bf16.mxu0 0
      %9425 = vmatpush1.bf16.msra.mxu0 0
      %9426 = vmatprep.subr.bf16.mxu0 0
      %9427 = vmatpush1.bf16.msra.mxu0 0
      %9428 = vmatprep.subr.bf16.mxu0 0
      %9429 = vmatpush1.bf16.msra.mxu0 0
      %9430 = vmatprep.subr.bf16.mxu0 0
      %9431 = vmatpush1.bf16.msra.mxu0 %v9422
      %9432 = vmatprep.subr.bf16.mxu0 0
      %9433 = vmatpush1.bf16.msra.mxu0 %v9406
      %9434 = vmatprep.subr.bf16.mxu0 0
      %9435 = vmatpush1.bf16.msra.mxu0 %v9405
      %9436 = vmatprep.subr.bf16.mxu0 0
      %9437 = vmatpush1.bf16.msra.mxu0 %v9404
      %9438 = vmatprep.subr.bf16.mxu0 0
      %9439 = vmatpush1.bf16.msra.mxu0 %v9403
      %9440 = vmatprep.subr.bf16.mxu0 0
      %9441 = vmatpush2.bf16.msra.mxu0 0
      %9442 = vmatprep.subr.bf16.mxu0 0
      %9443 = vmatpush2.bf16.msra.mxu0 0
      %9444 = vmatprep.subr.bf16.mxu0 0
      %9445 = vmatpush2.bf16.msra.mxu0 0
      %9446 = vmatprep.subr.bf16.mxu0 0
      %9447 = vmatpush2.bf16.msra.mxu0 0
      %9448 = vmatprep.subr.bf16.mxu0 0
      %9449 = vmatpush2.bf16.msra.mxu0 0
      %9450 = vmatprep.subr.bf16.mxu0 0
      %9451 = vmatpush2.bf16.msra.mxu0 0
      %9452 = vmatprep.subr.bf16.mxu0 0
      %9453 = vmatpush2.bf16.msra.mxu0 0
      %9454 = vmatprep.subr.bf16.mxu0 0
      %9455 = vmatpush2.bf16.msra.mxu0 0
      %9456 = vmatprep.mubr.bf16.mxu0 0
      %9457 = vmatmul.mubr.bf16.gmra.mxu0 %v9413
      %v9458 = vpop.f32.mrf.mxu0
      %v9459 = vadd.f32 0.0, %v9458
      %v9460 = vpop.f32.mrf.mxu0
      %v9461 = vpop.f32.mrf.mxu0
      %v9462 = vadd.f32 0.0, %v9461
      %v9463 = vpop.f32.mrf.mxu0
      %9464 = vmatprep.mubr.bf16.mxu0 0
      %9465 = vmatmul.mubr.bf16.gmra.mxu0 %v9416
      %v9466 = vpop.f32.mrf.mxu0
      %v9467 = vadd.f32 0.0, %v9466
      %v9468 = vpop.f32.mrf.mxu0
      %v9469 = vpop.f32.mrf.mxu0
      %v9470 = vadd.f32 0.0, %v9469
      %v9471 = vpop.f32.mrf.mxu0
      %9472 = vmatprep.mubr.bf16.mxu0 0
      %9473 = vmatmul.mubr.bf16.gmra.mxu0 %v9419
      %v9474 = vpop.f32.mrf.mxu0
      %v9475 = vadd.f32 0.0, %v9474
      %v9476 = vpop.f32.mrf.mxu0
      %v9477 = vpop.f32.mrf.mxu0
      %v9478 = vadd.f32 0.0, %v9477
      %v9479 = vpop.f32.mrf.mxu0
      %9480 = vdwg.mxu0
      %v9481 = vadd.f32 %v9344, %v9459
      %v9482 = vadd.f32 %v9345, %v9462
      %v9483 = vadd.f32 %v9346, %v9467
      %v9484 = vadd.f32 %v9347, %v9470
      %v9485 = vadd.f32 %v9348, %v9475
      %v9486 = vadd.f32 %v9349, %v9478
      %v9487 = vld [vmem:[#allocation4 + $0xc] sm:$0xe]
      %s9488 = scalar_lea.vmem %s7, 288
      %v9489 = vld [vmem:[%s9488] sm:$0xf]
      %v9490 = vld [vmem:[%s9488 + $0x4] sm:$0xf]
      %v9491 = vld [vmem:[%s9488 + $0x8] sm:$0xf]
      %v9492 = vld [vmem:[%s9488 + $0xc] sm:$0xf]
      %v9493 = vld [vmem:[%s9488 + $0x10] sm:$0xf]
      %v9494 = vld [vmem:[%s9488 + $0x14] sm:$0xf]
      %v9495 = vld [vmem:[%s9488 + $0x18] sm:$0xf]
      %v9496 = vld [vmem:[%s9488 + $0x1c] sm:$0xf]
      %v9497 = vld [vmem:[%s9488 + $0x20] sm:$0xf]
      %v9499 = vunpack.c.l.b16 %v9487
      %v9500 = vpack.c.b16 %v9240, %v9499
      %v9501 = vrot.slane %v9500, 1
      %v9502 = vrot.slane %v9246, 1
      %v9503 = vsel %vm777, %v9501, %v9502
      %v9504 = vrot.slane %v9363, 1
      %v9505 = vsel %vm777, %v9502, %v9504
      %v9515 = vunpack.c.l.b16 %v9489
      %v9516 = vunpack.c.l.b16 %v9490
      %v9517 = vunpack.c.l.b16 %v9491
      %v9518 = vunpack.c.l.b16 %v9492
      %v9519 = vunpack.c.l.b16 %v9493
      %v9520 = vunpack.c.l.b16 %v9494
      %v9521 = vunpack.c.l.b16 %v9495
      %v9522 = vunpack.c.l.b16 %v9496
      %v9523 = vunpack.c.l.b16 %v9497
      %v9524 = vpack.c.b16 %v9516, %v9515
      %v9525 = vpack.c.b16 %v9518, %v9517
      %v9526 = vpack.c.b16 %v9520, %v9519
      %v9527 = vpack.c.b16 %v9522, %v9521
      %v9528 = vpack.c.b16 %v9523, %v9523
      %v9534 = vsel %vm8511, %v9503, 0
      %v9537 = vsel %vm8511, %v9505, 0
      %v9540 = vsel %vm8511, %v9504, 0
      %v9543 = vsel %vm2732, %v9528, 0
      %9545 = vmatprep.subr.bf16.mxu0 0
      %9546 = vmatpush1.bf16.msra.mxu0 0
      %9547 = vmatprep.subr.bf16.mxu0 0
      %9548 = vmatpush1.bf16.msra.mxu0 0
      %9549 = vmatprep.subr.bf16.mxu0 0
      %9550 = vmatpush1.bf16.msra.mxu0 0
      %9551 = vmatprep.subr.bf16.mxu0 0
      %9552 = vmatpush1.bf16.msra.mxu0 %v9543
      %9553 = vmatprep.subr.bf16.mxu0 0
      %9554 = vmatpush1.bf16.msra.mxu0 %v9527
      %9555 = vmatprep.subr.bf16.mxu0 0
      %9556 = vmatpush1.bf16.msra.mxu0 %v9526
      %9557 = vmatprep.subr.bf16.mxu0 0
      %9558 = vmatpush1.bf16.msra.mxu0 %v9525
      %9559 = vmatprep.subr.bf16.mxu0 0
      %9560 = vmatpush1.bf16.msra.mxu0 %v9524
      %9561 = vmatprep.subr.bf16.mxu0 0
      %9562 = vmatpush2.bf16.msra.mxu0 0
      %9563 = vmatprep.subr.bf16.mxu0 0
      %9564 = vmatpush2.bf16.msra.mxu0 0
      %9565 = vmatprep.subr.bf16.mxu0 0
      %9566 = vmatpush2.bf16.msra.mxu0 0
      %9567 = vmatprep.subr.bf16.mxu0 0
      %9568 = vmatpush2.bf16.msra.mxu0 0
      %9569 = vmatprep.subr.bf16.mxu0 0
      %9570 = vmatpush2.bf16.msra.mxu0 0
      %9571 = vmatprep.subr.bf16.mxu0 0
      %9572 = vmatpush2.bf16.msra.mxu0 0
      %9573 = vmatprep.subr.bf16.mxu0 0
      %9574 = vmatpush2.bf16.msra.mxu0 0
      %9575 = vmatprep.subr.bf16.mxu0 0
      %9576 = vmatpush2.bf16.msra.mxu0 0
      %9577 = vmatprep.mubr.bf16.mxu0 0
      %9578 = vmatmul.mubr.bf16.gmra.mxu0 %v9534
      %v9579 = vpop.f32.mrf.mxu0
      %v9580 = vadd.f32 0.0, %v9579
      %v9581 = vpop.f32.mrf.mxu0
      %v9582 = vpop.f32.mrf.mxu0
      %v9583 = vadd.f32 0.0, %v9582
      %v9584 = vpop.f32.mrf.mxu0
      %9585 = vmatprep.mubr.bf16.mxu0 0
      %9586 = vmatmul.mubr.bf16.gmra.mxu0 %v9537
      %v9587 = vpop.f32.mrf.mxu0
      %v9588 = vadd.f32 0.0, %v9587
      %v9589 = vpop.f32.mrf.mxu0
      %v9590 = vpop.f32.mrf.mxu0
      %v9591 = vadd.f32 0.0, %v9590
      %v9592 = vpop.f32.mrf.mxu0
      %9593 = vmatprep.mubr.bf16.mxu0 0
      %9594 = vmatmul.mubr.bf16.gmra.mxu0 %v9540
      %v9595 = vpop.f32.mrf.mxu0
      %v9596 = vadd.f32 0.0, %v9595
      %v9597 = vpop.f32.mrf.mxu0
      %v9598 = vpop.f32.mrf.mxu0
      %v9599 = vadd.f32 0.0, %v9598
      %v9600 = vpop.f32.mrf.mxu0
      %9601 = vdwg.mxu0
      %v9602 = vadd.f32 %v9481, %v9580
      %v9603 = vadd.f32 %v9482, %v9583
      %v9604 = vadd.f32 %v9483, %v9588
      %v9605 = vadd.f32 %v9484, %v9591
      %v9606 = vadd.f32 %v9485, %v9596
      %v9607 = vadd.f32 %v9486, %v9599
      %v9608 = vld [vmem:[%s8] sm:$0x1]
      %v9610 = vlaneseq
      %v9611 = vshrl.u32 %v9610, 7
      %v9612 = vsub.s32 0, %v9611
      %v9613 = vrot.slane %v9608, %v9612
      %v9615 = vadd.f32 %v9602, %v9613
      %v9616 = vadd.f32 %v9603, %v9613
      %v9617 = vadd.f32 %v9604, %v9613
      %v9618 = vadd.f32 %v9605, %v9613
      %v9619 = vadd.f32 %v9606, %v9613
      %v9620 = vadd.f32 %v9607, %v9613
      %vm9621 = vcmp.gt.f32.partialorder %v9615, 0.0
      %vm9622 = vcmp.gt.f32.partialorder %v9616, 0.0
      %vm9623 = vcmp.gt.f32.partialorder %v9617, 0.0
      %vm9624 = vcmp.gt.f32.partialorder %v9618, 0.0
      %vm9625 = vcmp.gt.f32.partialorder %v9619, 0.0
      %vm9626 = vcmp.gt.f32.partialorder %v9620, 0.0
      %v9627 = vmin.f32 %v9615, 0.0
      %v9628 = vmin.f32 %v9616, 0.0
      %v9629 = vmin.f32 %v9617, 0.0
      %v9630 = vmin.f32 %v9618, 0.0
      %v9631 = vmin.f32 %v9619, 0.0
      %v9632 = vmin.f32 %v9620, 0.0
      %v9633 = vmul.f32 %v9627, 1.442695
      %v9634 = vpow.pop %v9633
      %v9635 = vmul.f32 %v9628, 1.442695
      %v9636 = vpow.pop %v9635
      %v9637 = vmul.f32 %v9629, 1.442695
      %v9638 = vpow.pop %v9637
      %v9639 = vmul.f32 %v9630, 1.442695
      %v9640 = vpow.pop %v9639
      %v9641 = vmul.f32 %v9631, 1.442695
      %v9642 = vpow.pop %v9641
      %v9643 = vmul.f32 %v9632, 1.442695
      %v9644 = vpow.pop %v9643
      %v9645 = vsub.f32 %v9634, 1.0
      %v9646 = vsub.f32 %v9636, 1.0
      %v9647 = vsub.f32 %v9638, 1.0
      %v9648 = vsub.f32 %v9640, 1.0
      %v9649 = vsub.f32 %v9642, 1.0
      %v9650 = vsub.f32 %v9644, 1.0
      %v9651 = vsel %vm9621, %v9615, %v9645
      %v9652 = vsel %vm9622, %v9616, %v9646
      %v9653 = vsel %vm9623, %v9617, %v9647
      %v9654 = vsel %vm9624, %v9618, %v9648
      %v9655 = vsel %vm9625, %v9619, %v9649
      %v9656 = vsel %vm9626, %v9620, %v9650
      %vm9657 = vcmask 195584
      %9658 = vst.msk [vmem:[#allocation5] sm:$0xff] %vm9657, %v9651
      %9659 = vst.msk [vmem:[#allocation5 + $0x8] sm:$0xff] %vm9657, %v9652
      %9660 = vst.msk [vmem:[#allocation5 + $0x10] sm:$0xff] %vm9657, %v9653
      %9661 = vst.msk [vmem:[#allocation5 + $0x18] sm:$0xff] %vm9657, %v9654
      %9662 = vst.msk [vmem:[#allocation5 + $0x20] sm:$0xff] %vm9657, %v9655
      %vm9663 = vcmask 193536
      %9664 = vst.msk [vmem:[#allocation5 + $0x28] sm:$0x3f] %vm9663, %v9656
      %v9665 = vld [vmem:[#allocation5] sm:$0xf]
      %vm9666 = vcmask 191488
      %9667 = vst.msk [vmem:[%s332] sm:$0xf] %vm9666, %v9665
      %v9668 = vld [vmem:[#allocation5 + $0xc] sm:$0xf]
      %9669 = vst.msk [vmem:[%s332 + $0x4] sm:$0xf] %vm9666, %v9668
      %v9670 = vld [vmem:[#allocation5 + $0x18] sm:$0xf]
      %9671 = vst.msk [vmem:[%s332 + $0x8] sm:$0xf] %vm9666, %v9670
      %v9672 = vld [vmem:[#allocation5 + $0x24] sm:$0xf]
      %9673 = vst.msk [vmem:[%s332 + $0xc] sm:$0xf] %vm9666, %v9672
      %p9674 = scmp.lt.s32.totalorder %s20, 1
      %s9675 = scalar_select %p9674, %s20, 1
      %s9676 = smul.addr %s9675, 2
      %s9677 = smul.addr %s9676, 8
      %s9678 = scalar_lea.vmem %s9, %s9677
      // Predicated region
      $region57: #{encoder3d_forward.1} parent=55 // pred_check
        %p9679 = pneg %p232
      $region58: #{encoder3d_forward.1} parent=55 // pred_check_branch
        %9681 = sbr.rel (%p9679) target = $region60
      $region59: #{encoder3d_forward.1} parent=55 // pred_region
        _
      $region60: #{encoder3d_forward.1} parent=55 // pred_fallthru
        _
    $region56: #{encoder3d_forward.1} parent=5 // pred_fallthru
      _
    %p9682 = scmp.le.s32.totalorder 2, %s15
    // Predicated region
    $region61: #{encoder3d_forward.1} parent=5 // pred_check
      %p9683 = pneg %p9682
    $region62: #{encoder3d_forward.1} parent=5 // pred_check_branch
      %9685 = sbr.rel (%p9683) target = $region64
    $region63: #{encoder3d_forward.1} parent=5 // pred_region
      %s9686 = ssub.s32 %s15, 2
      // Predicated region
      $region65: #{encoder3d_forward.1} parent=63 // pred_check
        %p9687 = pneg %p238
      $region66: #{encoder3d_forward.1} parent=63 // pred_check_branch
        %9689 = sbr.rel (%p9687) target = $region68
      $region67: #{encoder3d_forward.1} parent=63 // pred_region
        %p9690 = scmp.lt.s32.totalorder %s21, 1
        %s9691 = scalar_select %p9690, %s21, 1
        %s9692 = smul.addr %s9691, 2
        %s9693 = smul.addr %s9692, 8
        %s9694 = scalar_lea.vmem %s9, %s9693
      $region68: #{encoder3d_forward.1} parent=63 // pred_fallthru
        _
    $region64: #{encoder3d_forward.1} parent=5 // pred_fallthru
      _
  $region6: #{encoder3d_forward.1} parent=0 // loop_footer
    %s19 = sadd.s32 1, %s15
  $region7: #{encoder3d_forward.1} parent=0 // loop_footer_branch
    %14 = sbr.rel target = $region3
  $region8: #{encoder3d_forward.1} parent=0 // loop_exit
    _

</llo_original>
